<compile_context>
chip_gen: v7x
topology: tpu7x:2x2x1
jax: 0.10.0
libtpu: 0.0.40
codegen_flags: <defaults>
</compile_context>

<pallas_src>
import math

import jax
import jax.numpy as jnp
from jax.experimental import pallas as pl
from jax.experimental.pallas import tpu as pltpu

# ---------------- config (small, consistent with the module) ----------------
VOCAB_SIZE = 100
HIDDEN_DIM = 32
NUM_LAYERS = 2
NUM_HEADS = 4
HEAD_DIM = HIDDEN_DIM // NUM_HEADS          # 8
CHUNK_SIZE = 8
FF_DIM = 64
BATCH = 2
SEQ_LEN = 16                                 # divisible by CHUNK_SIZE -> no padding
NUM_CHUNKS = SEQ_LEN // CHUNK_SIZE           # 2
LN_EPS = 1e-5
NEG_INF = -1e9


# ====================== in-kernel helper math (traced) ======================

def _layer_norm(v, g, b):
    mu = jnp.mean(v, axis=-1, keepdims=True)
    var = jnp.mean(jnp.square(v - mu), axis=-1, keepdims=True)
    return (v - mu) * jax.lax.rsqrt(var + LN_EPS) * g + b


def _softmax_rows(s):
    s = s - jnp.max(s, axis=-1, keepdims=True)
    p = jnp.exp(s)
    return p * pl.reciprocal(jnp.sum(p, axis=-1, keepdims=True), approx=True)


def _erf(z):
    # TODO(synk): exact-erf GELU evaluated via Abramowitz-Stegun 7.1.26
    # (~1.5e-7 abs error) so we only rely on abs/mul/add/exp/where lowering.
    a1, a2, a3, a4, a5 = 0.254829592, -0.284496736, 1.421413741, -1.453152027, 1.061405429
    p = 0.3275911
    az = jnp.abs(z)
    t = 1.0 / (1.0 + p * az)
    poly = ((((a5 * t + a4) * t + a3) * t + a2) * t + a1) * t
    y = 1.0 - poly * jnp.exp(-az * az)
    return jnp.where(z >= 0, y, -y)


def _gelu(u):
    # nn.GELU default (exact erf form)
    return 0.5 * u * (1.0 + _erf(u * jnp.float32(1.0 / math.sqrt(2.0))))


# ============================== fused model kernel ==========================

def _bsbr_model_kernel(x_ref, m_in_ref, m_out_ref, e_ref, sel_ref,
                       ln1_g_ref, ln1_b_ref, w_qkv_ref, b_qkv_ref,
                       w_meta_ref, b_meta_ref, w_out_ref, b_out_ref,
                       ln2_g_ref, ln2_b_ref, w_ff1_ref, b_ff1_ref,
                       w_ff2_ref, b_ff2_ref, lnf_g_ref, lnf_b_ref,
                       o_ref, attn_sc):
    """One batch element end-to-end (both layers + final LN).

    x     : [1, S, H]   hidden states (embedding + positional encoding)
    m_in  : [S, S]      additive block-diag triu mask (0 allowed / -1e9 masked)
    m_out : [C, C]      additive chunk triu mask
    e     : [S, C]      one-hot token -> chunk map
    sel   : [C, S]      one-hot chunk-representative (last token) selector
    weights: stacked over layers ([L, ...]), final LN params [1, H]
    o     : [1, S, H]
    attn_sc: [S, H] VMEM scratch for lane-dense per-head attention assembly
    """
    f32 = jnp.float32
    scale = f32(1.0 / math.sqrt(HEAD_DIM))

    x = x_ref[0]             # [S, H]
    m_in = m_in_ref[...]     # [S, S]
    m_out = m_out_ref[...]   # [C, C]
    e = e_ref[...]           # [S, C]
    sel = sel_ref[...]       # [C, S]

    for l in range(NUM_LAYERS):
        # ------------------------- attention sub-block -------------------------
        y = _layer_norm(x, ln1_g_ref[l], ln1_b_ref[l])                      # [S, H]

        qkv = jnp.dot(y, w_qkv_ref[l], preferred_element_type=f32) + b_qkv_ref[l]   # [S, 3H]
        q = qkv[:, 0:HIDDEN_DIM]
        k = qkv[:, HIDDEN_DIM:2 * HIDDEN_DIM]
        v = qkv[:, 2 * HIDDEN_DIM:3 * HIDDEN_DIM]

        # chunk representatives = last token of each chunk (selection matmul)
        reps = jnp.dot(sel, y, preferred_element_type=f32)                  # [C, H]
        meta = jnp.dot(reps, w_meta_ref[l], preferred_element_type=f32) + b_meta_ref[l]  # [C, 2H]
        r_all = meta[:, 0:HIDDEN_DIM]
        h_all = meta[:, HIDDEN_DIM:2 * HIDDEN_DIM]

        for hd in range(NUM_HEADS):
            lo = hd * HEAD_DIM
            hi = lo + HEAD_DIM
            qh, kh, vh = q[:, lo:hi], k[:, lo:hi], v[:, lo:hi]              # [S, D]
            rh, hh = r_all[:, lo:hi], h_all[:, lo:hi]                       # [C, D]

            # token-level q·k^T, shared by local attention and block retrieval
            qkt = jax.lax.dot_general(qh, kh, (((1,), (1,)), ((), ())),
                                      preferred_element_type=f32)           # [S, S]

            # (1) within-chunk (local) masked attention
            p_loc = _softmax_rows(qkt * scale + m_in)
            local = jnp.dot(p_loc, vh, preferred_element_type=f32)          # [S, D]

            # (2) chunk-level block retrieval
            s_ch = jax.lax.dot_general(rh, hh, (((1,), (1,)), ((), ())),
                                       preferred_element_type=f32) * scale + m_out
            p_ch = _softmax_rows(s_ch)                                      # [C, C]
            # w_tok[t, i] = p_ch[i, chunk(t)]
            w_tok = jax.lax.dot_general(e, p_ch, (((1,), (1,)), ((), ())),
                                        preferred_element_type=f32)         # [S, C]

            for ci in range(NUM_CHUNKS):
                r0 = ci * CHUNK_SIZE
                r1 = r0 + CHUNK_SIZE
                # long_term rows of chunk ci:
                #   Q_ci @ (sum_j p_ch[ci,j] K_j^T V_j) == (Q_ci K^T) @ (diag(w_tok[:,ci]) V)
                vw = w_tok[:, ci:ci + 1] * vh                               # [S, D]
                long_ci = jnp.dot(qkt[r0:r1, :], vw,
                                  preferred_element_type=f32)               # [chunk, D]
                attn_sc[r0:r1, lo:hi] = local[r0:r1, :] + long_ci

        attn = jnp.dot(attn_sc[...], w_out_ref[l],
                       preferred_element_type=f32) + b_out_ref[l]           # [S, H]
        x = x + attn

        # ------------------------ feed-forward sub-block ------------------------
        y = _layer_norm(x, ln2_g_ref[l], ln2_b_ref[l])
        y = jnp.dot(y, w_ff1_ref[l], preferred_element_type=f32) + b_ff1_ref[l]
        y = _gelu(y)
        y = jnp.dot(y, w_ff2_ref[l], preferred_element_type=f32) + b_ff2_ref[l]
        x = x + y

    o_ref[0] = _layer_norm(x, lnf_g_ref[...], lnf_b_ref[...])


# ============================== host-side constants ==========================

def make_constants():
    idx = jnp.arange(SEQ_LEN)
    cid = idx // CHUNK_SIZE
    cidx = jnp.arange(NUM_CHUNKS)
    same = cid[:, None] == cid[None, :]
    upper = idx[None, :] >= idx[:, None]                    # triu(diagonal=0)
    m_in_add = jnp.where(same & upper, 0.0, NEG_INF).astype(jnp.float32)       # [S, S]
    m_out_add = jnp.where(cidx[None, :] >= cidx[:, None], 0.0,
                          NEG_INF).astype(jnp.float32)                          # [C, C]
    e_mat = (cid[:, None] == cidx[None, :]).astype(jnp.float32)                 # [S, C]
    rep_idx = (cidx + 1) * CHUNK_SIZE - 1
    sel_mat = (idx[None, :] == rep_idx[:, None]).astype(jnp.float32)            # [C, S]
    return m_in_add, m_out_add, e_mat, sel_mat


M_IN_ADD, M_OUT_ADD, E_MAT, SEL_MAT = make_constants()


def positional_encoding(seq_len, hidden_dim):
    pos = jnp.arange(seq_len, dtype=jnp.float32)[:, None]
    div = jnp.exp(jnp.arange(0, hidden_dim, 2, dtype=jnp.float32)
                  * (-math.log(10000.0) / hidden_dim))
    pe = jnp.zeros((seq_len, hidden_dim), jnp.float32)
    pe = pe.at[:, 0::2].set(jnp.sin(pos * div))
    pe = pe.at[:, 1::2].set(jnp.cos(pos * div))
    return pe


POS_ENC = positional_encoding(SEQ_LEN, HIDDEN_DIM)


# ================================= wrapper ==================================

def _const_spec(shape):
    if len(shape) == 2:
        return pl.BlockSpec(shape, lambda b: (0, 0))
    return pl.BlockSpec(shape, lambda b: (0, 0, 0))


def bsbr_model(params, input_ids):
    # glue: embedding gather + positional encoding (dropout = eval identity)
    x = params["embedding"][input_ids] + POS_ENC[None]                       # [B, S, H]
    batch = input_ids.shape[0]

    batch_spec = pl.BlockSpec((1, SEQ_LEN, HIDDEN_DIM), lambda b: (b, 0, 0))

    const_inputs = [M_IN_ADD, M_OUT_ADD, E_MAT, SEL_MAT]
    weight_inputs = [
        params["ln1_g"], params["ln1_b"], params["w_qkv"], params["b_qkv"],
        params["w_meta"], params["b_meta"], params["w_out"], params["b_out"],
        params["ln2_g"], params["ln2_b"], params["w_ff1"], params["b_ff1"],
        params["w_ff2"], params["b_ff2"], params["lnf_g"], params["lnf_b"],
    ]
    in_specs = ([batch_spec]
                + [_const_spec(a.shape) for a in const_inputs]
                + [_const_spec(a.shape) for a in weight_inputs])

    return pl.pallas_call(
        _bsbr_model_kernel,
        out_shape=jax.ShapeDtypeStruct((batch, SEQ_LEN, HIDDEN_DIM), jnp.float32),
        grid_spec=pltpu.PrefetchScalarGridSpec(
            num_scalar_prefetch=0,
            grid=(batch,),
            in_specs=in_specs,
            out_specs=batch_spec,
            scratch_shapes=[pltpu.VMEM((SEQ_LEN, HIDDEN_DIM), jnp.float32)],
        ),
        compiler_params=pltpu.CompilerParams(
            dimension_semantics=("parallel",)),
    )(x, *const_inputs, *weight_inputs)


# ============================== parameter init ==============================

def _uniform(key, shape, bound):
    return jax.random.uniform(key, shape, jnp.float32, -bound, bound)


def init_params(key):
    keys = jax.random.split(key, 1 + NUM_LAYERS)
    params = {
        "embedding": 0.02 * jax.random.normal(keys[0], (VOCAB_SIZE, HIDDEN_DIM),
                                              jnp.float32),
        "lnf_g": jnp.ones((1, HIDDEN_DIM), jnp.float32),
        "lnf_b": jnp.zeros((1, HIDDEN_DIM), jnp.float32),
        "ln1_g": jnp.ones((NUM_LAYERS, 1, HIDDEN_DIM), jnp.float32),
        "ln1_b": jnp.zeros((NUM_LAYERS, 1, HIDDEN_DIM), jnp.float32),
        "ln2_g": jnp.ones((NUM_LAYERS, 1, HIDDEN_DIM), jnp.float32),
        "ln2_b": jnp.zeros((NUM_LAYERS, 1, HIDDEN_DIM), jnp.float32),
    }
    b_h = 1.0 / math.sqrt(HIDDEN_DIM)   # fan_in = hidden for q/k/v/out/meta/ff1
    b_f = 1.0 / math.sqrt(FF_DIM)       # fan_in = ff_dim for ff2
    stacks = {n: [] for n in ("w_qkv", "b_qkv", "w_meta", "b_meta", "w_out",
                              "b_out", "w_ff1", "b_ff1", "w_ff2", "b_ff2")}
    for li in range(NUM_LAYERS):
        lk = jax.random.split(keys[1 + li], 10)
        stacks["w_qkv"].append(_uniform(lk[0], (HIDDEN_DIM, 3 * HIDDEN_DIM), b_h))
        stacks["b_qkv"].append(_uniform(lk[1], (1, 3 * HIDDEN_DIM), b_h))
        stacks["w_meta"].append(_uniform(lk[2], (HIDDEN_DIM, 2 * HIDDEN_DIM), b_h))
        stacks["b_meta"].append(_uniform(lk[3], (1, 2 * HIDDEN_DIM), b_h))
        stacks["w_out"].append(_uniform(lk[4], (HIDDEN_DIM, HIDDEN_DIM), b_h))
        stacks["b_out"].append(_uniform(lk[5], (1, HIDDEN_DIM), b_h))
        stacks["w_ff1"].append(_uniform(lk[6], (HIDDEN_DIM, FF_DIM), b_h))
        stacks["b_ff1"].append(_uniform(lk[7], (1, FF_DIM), b_h))
        stacks["w_ff2"].append(_uniform(lk[8], (FF_DIM, HIDDEN_DIM), b_f))
        stacks["b_ff2"].append(_uniform(lk[9], (1, HIDDEN_DIM), b_f))
    for n, lst in stacks.items():
        params[n] = jnp.stack(lst)
    return params


# =================================== main ===================================

if __name__ == "__main__":
    key = jax.random.PRNGKey(0)
    k_params, k_ids = jax.random.split(key)
    params = init_params(k_params)
    input_ids = jax.random.randint(k_ids, (BATCH, SEQ_LEN), 0, VOCAB_SIZE)

    out = jax.jit(bsbr_model)(params, input_ids)
    jax.block_until_ready(out)
    assert out.shape == (BATCH, SEQ_LEN, HIDDEN_DIM)
    assert bool(jnp.all(jnp.isfinite(out)))
    print("KERNEL_OK")
</pallas_src>

<mosaic_0001>
module attributes {stable_mosaic.version = 11 : i64} {
  func.func @_bsbr_model_kernel(%arg0: i32, %arg1: memref<1x16x32xf32, #tpu.memory_space<vmem>>, %arg2: memref<16x16xf32, #tpu.memory_space<vmem>>, %arg3: memref<2x2xf32, #tpu.memory_space<vmem>>, %arg4: memref<16x2xf32, #tpu.memory_space<vmem>>, %arg5: memref<2x16xf32, #tpu.memory_space<vmem>>, %arg6: memref<2x1x32xf32, #tpu.memory_space<vmem>>, %arg7: memref<2x1x32xf32, #tpu.memory_space<vmem>>, %arg8: memref<2x32x96xf32, #tpu.memory_space<vmem>>, %arg9: memref<2x1x96xf32, #tpu.memory_space<vmem>>, %arg10: memref<2x32x64xf32, #tpu.memory_space<vmem>>, %arg11: memref<2x1x64xf32, #tpu.memory_space<vmem>>, %arg12: memref<2x32x32xf32, #tpu.memory_space<vmem>>, %arg13: memref<2x1x32xf32, #tpu.memory_space<vmem>>, %arg14: memref<2x1x32xf32, #tpu.memory_space<vmem>>, %arg15: memref<2x1x32xf32, #tpu.memory_space<vmem>>, %arg16: memref<2x32x64xf32, #tpu.memory_space<vmem>>, %arg17: memref<2x1x64xf32, #tpu.memory_space<vmem>>, %arg18: memref<2x64x32xf32, #tpu.memory_space<vmem>>, %arg19: memref<2x1x32xf32, #tpu.memory_space<vmem>>, %arg20: memref<1x32xf32, #tpu.memory_space<vmem>>, %arg21: memref<1x32xf32, #tpu.memory_space<vmem>>, %arg22: memref<1x16x32xf32, #tpu.memory_space<vmem>>, %arg23: memref<16x32xf32, #tpu.memory_space<vmem>>) attributes {dimension_semantics = [#tpu.dimension_semantics<parallel>], iteration_bounds = array<i64: 2>, scalar_prefetch = 0 : i64, scratch_operands = 1 : i64, tpu.core_type = #tpu.core_type<tc>, window_params = [{transform_indices = @transform_0, window_bounds = array<i64: 1, 16, 32>}, {pipeline_mode = #tpu.pipeline_mode<synchronous>, transform_indices = @transform_1, window_bounds = array<i64: 16, 16>}, {pipeline_mode = #tpu.pipeline_mode<synchronous>, transform_indices = @transform_2, window_bounds = array<i64: 2, 2>}, {pipeline_mode = #tpu.pipeline_mode<synchronous>, transform_indices = @transform_3, window_bounds = array<i64: 16, 2>}, {pipeline_mode = #tpu.pipeline_mode<synchronous>, transform_indices = @transform_4, window_bounds = array<i64: 2, 16>}, {pipeline_mode = #tpu.pipeline_mode<synchronous>, transform_indices = @transform_5, window_bounds = array<i64: 2, 1, 32>}, {pipeline_mode = #tpu.pipeline_mode<synchronous>, transform_indices = @transform_6, window_bounds = array<i64: 2, 1, 32>}, {pipeline_mode = #tpu.pipeline_mode<synchronous>, transform_indices = @transform_7, window_bounds = array<i64: 2, 32, 96>}, {pipeline_mode = #tpu.pipeline_mode<synchronous>, transform_indices = @transform_8, window_bounds = array<i64: 2, 1, 96>}, {pipeline_mode = #tpu.pipeline_mode<synchronous>, transform_indices = @transform_9, window_bounds = array<i64: 2, 32, 64>}, {pipeline_mode = #tpu.pipeline_mode<synchronous>, transform_indices = @transform_10, window_bounds = array<i64: 2, 1, 64>}, {pipeline_mode = #tpu.pipeline_mode<synchronous>, transform_indices = @transform_11, window_bounds = array<i64: 2, 32, 32>}, {pipeline_mode = #tpu.pipeline_mode<synchronous>, transform_indices = @transform_12, window_bounds = array<i64: 2, 1, 32>}, {pipeline_mode = #tpu.pipeline_mode<synchronous>, transform_indices = @transform_13, window_bounds = array<i64: 2, 1, 32>}, {pipeline_mode = #tpu.pipeline_mode<synchronous>, transform_indices = @transform_14, window_bounds = array<i64: 2, 1, 32>}, {pipeline_mode = #tpu.pipeline_mode<synchronous>, transform_indices = @transform_15, window_bounds = array<i64: 2, 32, 64>}, {pipeline_mode = #tpu.pipeline_mode<synchronous>, transform_indices = @transform_16, window_bounds = array<i64: 2, 1, 64>}, {pipeline_mode = #tpu.pipeline_mode<synchronous>, transform_indices = @transform_17, window_bounds = array<i64: 2, 64, 32>}, {pipeline_mode = #tpu.pipeline_mode<synchronous>, transform_indices = @transform_18, window_bounds = array<i64: 2, 1, 32>}, {pipeline_mode = #tpu.pipeline_mode<synchronous>, transform_indices = @transform_19, window_bounds = array<i64: 1, 32>}, {pipeline_mode = #tpu.pipeline_mode<synchronous>, transform_indices = @transform_20, window_bounds = array<i64: 1, 32>}, {transform_indices = @transform_21, window_bounds = array<i64: 1, 16, 32>}]} {
    %c0 = arith.constant 0 : index
    %c0_0 = arith.constant 0 : index
    %c0_1 = arith.constant 0 : index
    %0 = vector.load %arg1[%c0, %c0_0, %c0_1] : memref<1x16x32xf32, #tpu.memory_space<vmem>>, vector<1x16x32xf32>
    %1 = vector.shape_cast %0 : vector<1x16x32xf32> to vector<16x32xf32>
    %c0_2 = arith.constant 0 : index
    %c0_3 = arith.constant 0 : index
    %2 = vector.load %arg2[%c0_2, %c0_3] : memref<16x16xf32, #tpu.memory_space<vmem>>, vector<16x16xf32>
    %c0_4 = arith.constant 0 : index
    %c0_5 = arith.constant 0 : index
    %3 = vector.load %arg3[%c0_4, %c0_5] : memref<2x2xf32, #tpu.memory_space<vmem>>, vector<2x2xf32>
    %c0_6 = arith.constant 0 : index
    %c0_7 = arith.constant 0 : index
    %4 = vector.load %arg4[%c0_6, %c0_7] : memref<16x2xf32, #tpu.memory_space<vmem>>, vector<16x2xf32>
    %c0_8 = arith.constant 0 : index
    %c0_9 = arith.constant 0 : index
    %5 = vector.load %arg5[%c0_8, %c0_9] : memref<2x16xf32, #tpu.memory_space<vmem>>, vector<2x16xf32>
    %c0_10 = arith.constant 0 : index
    %c0_11 = arith.constant 0 : index
    %c0_12 = arith.constant 0 : index
    %6 = vector.load %arg6[%c0_10, %c0_11, %c0_12] : memref<2x1x32xf32, #tpu.memory_space<vmem>>, vector<1x1x32xf32>
    %7 = vector.shape_cast %6 : vector<1x1x32xf32> to vector<1x32xf32>
    %c0_13 = arith.constant 0 : index
    %c0_14 = arith.constant 0 : index
    %c0_15 = arith.constant 0 : index
    %8 = vector.load %arg7[%c0_13, %c0_14, %c0_15] : memref<2x1x32xf32, #tpu.memory_space<vmem>>, vector<1x1x32xf32>
    %9 = vector.shape_cast %8 : vector<1x1x32xf32> to vector<1x32xf32>
    %cst = arith.constant dense<0.000000e+00> : vector<16xf32>
    %10 = vector.multi_reduction <add>, %1, %cst [1] : vector<16x32xf32> to vector<16xf32>
    %11 = vector.shape_cast %10 : vector<16xf32> to vector<16x1xf32>
    %cst_16 = arith.constant 3.200000e+01 : f32
    %12 = vector.broadcast %cst_16 : f32 to vector<16x1xf32>
    %13 = arith.divf %11, %12 : vector<16x1xf32>
    %14 = vector.broadcast %13 : vector<16x1xf32> to vector<16x32xf32>
    %15 = arith.subf %1, %14 : vector<16x32xf32>
    %16 = arith.mulf %15, %15 : vector<16x32xf32>
    %cst_17 = arith.constant dense<0.000000e+00> : vector<16xf32>
    %17 = vector.multi_reduction <add>, %16, %cst_17 [1] : vector<16x32xf32> to vector<16xf32>
    %18 = vector.shape_cast %17 : vector<16xf32> to vector<16x1xf32>
    %cst_18 = arith.constant 3.200000e+01 : f32
    %19 = vector.broadcast %cst_18 : f32 to vector<16x1xf32>
    %20 = arith.divf %18, %19 : vector<16x1xf32>
    %21 = vector.broadcast %13 : vector<16x1xf32> to vector<16x32xf32>
    %22 = arith.subf %1, %21 : vector<16x32xf32>
    %cst_19 = arith.constant 9.99999974E-6 : f32
    %23 = vector.broadcast %cst_19 : f32 to vector<16x1xf32>
    %24 = arith.addf %20, %23 : vector<16x1xf32>
    %25 = math.rsqrt %24 : vector<16x1xf32>
    %26 = vector.broadcast %25 : vector<16x1xf32> to vector<16x32xf32>
    %27 = arith.mulf %22, %26 : vector<16x32xf32>
    %28 = vector.broadcast %7 : vector<1x32xf32> to vector<16x32xf32>
    %29 = arith.mulf %27, %28 : vector<16x32xf32>
    %30 = vector.broadcast %9 : vector<1x32xf32> to vector<16x32xf32>
    %31 = arith.addf %29, %30 : vector<16x32xf32>
    %c0_20 = arith.constant 0 : index
    %c0_21 = arith.constant 0 : index
    %c0_22 = arith.constant 0 : index
    %32 = vector.load %arg8[%c0_20, %c0_21, %c0_22] : memref<2x32x96xf32, #tpu.memory_space<vmem>>, vector<1x32x96xf32>
    %33 = vector.shape_cast %32 : vector<1x32x96xf32> to vector<32x96xf32>
    %cst_23 = arith.constant dense<0.000000e+00> : vector<16x96xf32>
    %34 = tpu.matmul %31, %33, %cst_23 {dimension_numbers = #tpu.dot_dimension_numbers<[1], [0], [0], [1], [0, 0, 1, 1], [], []>} : vector<16x32xf32>, vector<32x96xf32>, vector<16x96xf32> -> vector<16x96xf32>
    %c0_24 = arith.constant 0 : index
    %c0_25 = arith.constant 0 : index
    %c0_26 = arith.constant 0 : index
    %35 = vector.load %arg9[%c0_24, %c0_25, %c0_26] : memref<2x1x96xf32, #tpu.memory_space<vmem>>, vector<1x1x96xf32>
    %36 = vector.shape_cast %35 : vector<1x1x96xf32> to vector<1x96xf32>
    %37 = vector.broadcast %36 : vector<1x96xf32> to vector<16x96xf32>
    %38 = arith.addf %34, %37 : vector<16x96xf32>
    %39 = vector.extract_strided_slice %38 {offsets = [0, 0], sizes = [16, 32], strides = [1, 1]} : vector<16x96xf32> to vector<16x32xf32>
    %40 = vector.extract_strided_slice %38 {offsets = [0, 32], sizes = [16, 32], strides = [1, 1]} : vector<16x96xf32> to vector<16x32xf32>
    %41 = vector.extract_strided_slice %38 {offsets = [0, 64], sizes = [16, 32], strides = [1, 1]} : vector<16x96xf32> to vector<16x32xf32>
    %cst_27 = arith.constant dense<0.000000e+00> : vector<2x32xf32>
    %42 = tpu.matmul %5, %31, %cst_27 {dimension_numbers = #tpu.dot_dimension_numbers<[1], [0], [0], [1], [0, 0, 1, 1], [], []>} : vector<2x16xf32>, vector<16x32xf32>, vector<2x32xf32> -> vector<2x32xf32>
    %c0_28 = arith.constant 0 : index
    %c0_29 = arith.constant 0 : index
    %c0_30 = arith.constant 0 : index
    %43 = vector.load %arg10[%c0_28, %c0_29, %c0_30] : memref<2x32x64xf32, #tpu.memory_space<vmem>>, vector<1x32x64xf32>
    %44 = vector.shape_cast %43 : vector<1x32x64xf32> to vector<32x64xf32>
    %cst_31 = arith.constant dense<0.000000e+00> : vector<2x64xf32>
    %45 = tpu.matmul %42, %44, %cst_31 {dimension_numbers = #tpu.dot_dimension_numbers<[1], [0], [0], [1], [0, 0, 1, 1], [], []>} : vector<2x32xf32>, vector<32x64xf32>, vector<2x64xf32> -> vector<2x64xf32>
    %c0_32 = arith.constant 0 : index
    %c0_33 = arith.constant 0 : index
    %c0_34 = arith.constant 0 : index
    %46 = vector.load %arg11[%c0_32, %c0_33, %c0_34] : memref<2x1x64xf32, #tpu.memory_space<vmem>>, vector<1x1x64xf32>
    %47 = vector.shape_cast %46 : vector<1x1x64xf32> to vector<1x64xf32>
    %48 = vector.broadcast %47 : vector<1x64xf32> to vector<2x64xf32>
    %49 = arith.addf %45, %48 : vector<2x64xf32>
    %50 = vector.extract_strided_slice %49 {offsets = [0, 0], sizes = [2, 32], strides = [1, 1]} : vector<2x64xf32> to vector<2x32xf32>
    %51 = vector.extract_strided_slice %49 {offsets = [0, 32], sizes = [2, 32], strides = [1, 1]} : vector<2x64xf32> to vector<2x32xf32>
    %52 = vector.extract_strided_slice %39 {offsets = [0, 0], sizes = [16, 8], strides = [1, 1]} : vector<16x32xf32> to vector<16x8xf32>
    %53 = vector.extract_strided_slice %40 {offsets = [0, 0], sizes = [16, 8], strides = [1, 1]} : vector<16x32xf32> to vector<16x8xf32>
    %54 = vector.extract_strided_slice %41 {offsets = [0, 0], sizes = [16, 8], strides = [1, 1]} : vector<16x32xf32> to vector<16x8xf32>
    %55 = vector.extract_strided_slice %50 {offsets = [0, 0], sizes = [2, 8], strides = [1, 1]} : vector<2x32xf32> to vector<2x8xf32>
    %56 = vector.extract_strided_slice %51 {offsets = [0, 0], sizes = [2, 8], strides = [1, 1]} : vector<2x32xf32> to vector<2x8xf32>
    %cst_35 = arith.constant dense<0.000000e+00> : vector<16x16xf32>
    %57 = tpu.matmul %52, %53, %cst_35 {dimension_numbers = #tpu.dot_dimension_numbers<[1], [1], [0], [0], [0, 0, 1, 0], [], []>} : vector<16x8xf32>, vector<16x8xf32>, vector<16x16xf32> -> vector<16x16xf32>
    %cst_36 = arith.constant 0.353553385 : f32
    %58 = vector.broadcast %cst_36 : f32 to vector<16x16xf32>
    %59 = arith.mulf %57, %58 : vector<16x16xf32>
    %60 = arith.addf %59, %2 : vector<16x16xf32>
    %cst_37 = arith.constant dense<0xFF800000> : vector<16xf32>
    %61 = vector.multi_reduction <maximumf>, %60, %cst_37 [1] : vector<16x16xf32> to vector<16xf32>
    %62 = vector.shape_cast %61 : vector<16xf32> to vector<16x1xf32>
    %63 = vector.broadcast %62 : vector<16x1xf32> to vector<16x16xf32>
    %64 = arith.subf %60, %63 : vector<16x16xf32>
    %65 = math.exp %64 : vector<16x16xf32>
    %cst_38 = arith.constant dense<0.000000e+00> : vector<16xf32>
    %66 = vector.multi_reduction <add>, %65, %cst_38 [1] : vector<16x16xf32> to vector<16xf32>
    %67 = vector.shape_cast %66 : vector<16xf32> to vector<16x1xf32>
    %68 = tpu.reciprocal %67 {approx = true} : vector<16x1xf32> -> vector<16x1xf32>
    %69 = vector.broadcast %68 : vector<16x1xf32> to vector<16x16xf32>
    %70 = arith.mulf %65, %69 : vector<16x16xf32>
    %cst_39 = arith.constant dense<0.000000e+00> : vector<16x8xf32>
    %71 = tpu.matmul %70, %54, %cst_39 {dimension_numbers = #tpu.dot_dimension_numbers<[1], [0], [0], [1], [0, 0, 1, 1], [], []>} : vector<16x16xf32>, vector<16x8xf32>, vector<16x8xf32> -> vector<16x8xf32>
    %cst_40 = arith.constant dense<0.000000e+00> : vector<2x2xf32>
    %72 = tpu.matmul %55, %56, %cst_40 {dimension_numbers = #tpu.dot_dimension_numbers<[1], [1], [0], [0], [0, 0, 1, 0], [], []>} : vector<2x8xf32>, vector<2x8xf32>, vector<2x2xf32> -> vector<2x2xf32>
    %cst_41 = arith.constant 0.353553385 : f32
    %73 = vector.broadcast %cst_41 : f32 to vector<2x2xf32>
    %74 = arith.mulf %72, %73 : vector<2x2xf32>
    %75 = arith.addf %74, %3 : vector<2x2xf32>
    %cst_42 = arith.constant dense<0xFF800000> : vector<2xf32>
    %76 = vector.multi_reduction <maximumf>, %75, %cst_42 [1] : vector<2x2xf32> to vector<2xf32>
    %77 = vector.shape_cast %76 : vector<2xf32> to vector<2x1xf32>
    %78 = vector.broadcast %77 : vector<2x1xf32> to vector<2x2xf32>
    %79 = arith.subf %75, %78 : vector<2x2xf32>
    %80 = math.exp %79 : vector<2x2xf32>
    %cst_43 = arith.constant dense<0.000000e+00> : vector<2xf32>
    %81 = vector.multi_reduction <add>, %80, %cst_43 [1] : vector<2x2xf32> to vector<2xf32>
    %82 = vector.shape_cast %81 : vector<2xf32> to vector<2x1xf32>
    %83 = tpu.reciprocal %82 {approx = true} : vector<2x1xf32> -> vector<2x1xf32>
    %84 = vector.broadcast %83 : vector<2x1xf32> to vector<2x2xf32>
    %85 = arith.mulf %80, %84 : vector<2x2xf32>
    %cst_44 = arith.constant dense<0.000000e+00> : vector<16x2xf32>
    %86 = tpu.matmul %4, %85, %cst_44 {dimension_numbers = #tpu.dot_dimension_numbers<[1], [1], [0], [0], [0, 0, 1, 0], [], []>} : vector<16x2xf32>, vector<2x2xf32>, vector<16x2xf32> -> vector<16x2xf32>
    %87 = vector.extract_strided_slice %86 {offsets = [0, 0], sizes = [16, 1], strides = [1, 1]} : vector<16x2xf32> to vector<16x1xf32>
    %88 = vector.broadcast %87 : vector<16x1xf32> to vector<16x8xf32>
    %89 = arith.mulf %88, %54 : vector<16x8xf32>
    %90 = vector.extract_strided_slice %57 {offsets = [0, 0], sizes = [8, 16], strides = [1, 1]} : vector<16x16xf32> to vector<8x16xf32>
    %cst_45 = arith.constant dense<0.000000e+00> : vector<8x8xf32>
    %91 = tpu.matmul %90, %89, %cst_45 {dimension_numbers = #tpu.dot_dimension_numbers<[1], [0], [0], [1], [0, 0, 1, 1], [], []>} : vector<8x16xf32>, vector<16x8xf32>, vector<8x8xf32> -> vector<8x8xf32>
    %92 = vector.extract_strided_slice %71 {offsets = [0, 0], sizes = [8, 8], strides = [1, 1]} : vector<16x8xf32> to vector<8x8xf32>
    %93 = arith.addf %92, %91 : vector<8x8xf32>
    %c0_46 = arith.constant 0 : index
    %c0_47 = arith.constant 0 : index
    %94 = vector.load %arg23[%c0_46, %c0_47] : memref<16x32xf32, #tpu.memory_space<vmem>>, vector<8x8xf32>
    tpu.vector_store %arg23[%c0_46, %c0_47], %93 {strides = array<i32>} : memref<16x32xf32, #tpu.memory_space<vmem>>, vector<8x8xf32>,
    %95 = vector.extract_strided_slice %86 {offsets = [0, 1], sizes = [16, 1], strides = [1, 1]} : vector<16x2xf32> to vector<16x1xf32>
    %96 = vector.broadcast %95 : vector<16x1xf32> to vector<16x8xf32>
    %97 = arith.mulf %96, %54 : vector<16x8xf32>
    %98 = vector.extract_strided_slice %57 {offsets = [8, 0], sizes = [8, 16], strides = [1, 1]} : vector<16x16xf32> to vector<8x16xf32>
    %cst_48 = arith.constant dense<0.000000e+00> : vector<8x8xf32>
    %99 = tpu.matmul %98, %97, %cst_48 {dimension_numbers = #tpu.dot_dimension_numbers<[1], [0], [0], [1], [0, 0, 1, 1], [], []>} : vector<8x16xf32>, vector<16x8xf32>, vector<8x8xf32> -> vector<8x8xf32>
    %100 = vector.extract_strided_slice %71 {offsets = [8, 0], sizes = [8, 8], strides = [1, 1]} : vector<16x8xf32> to vector<8x8xf32>
    %101 = arith.addf %100, %99 : vector<8x8xf32>
    %c8 = arith.constant 8 : index
    %c0_49 = arith.constant 0 : index
    %102 = vector.load %arg23[%c8, %c0_49] : memref<16x32xf32, #tpu.memory_space<vmem>>, vector<8x8xf32>
    tpu.vector_store %arg23[%c8, %c0_49], %101 {strides = array<i32>} : memref<16x32xf32, #tpu.memory_space<vmem>>, vector<8x8xf32>,
    %103 = vector.extract_strided_slice %39 {offsets = [0, 8], sizes = [16, 8], strides = [1, 1]} : vector<16x32xf32> to vector<16x8xf32>
    %104 = vector.extract_strided_slice %40 {offsets = [0, 8], sizes = [16, 8], strides = [1, 1]} : vector<16x32xf32> to vector<16x8xf32>
    %105 = vector.extract_strided_slice %41 {offsets = [0, 8], sizes = [16, 8], strides = [1, 1]} : vector<16x32xf32> to vector<16x8xf32>
    %106 = vector.extract_strided_slice %50 {offsets = [0, 8], sizes = [2, 8], strides = [1, 1]} : vector<2x32xf32> to vector<2x8xf32>
    %107 = vector.extract_strided_slice %51 {offsets = [0, 8], sizes = [2, 8], strides = [1, 1]} : vector<2x32xf32> to vector<2x8xf32>
    %cst_50 = arith.constant dense<0.000000e+00> : vector<16x16xf32>
    %108 = tpu.matmul %103, %104, %cst_50 {dimension_numbers = #tpu.dot_dimension_numbers<[1], [1], [0], [0], [0, 0, 1, 0], [], []>} : vector<16x8xf32>, vector<16x8xf32>, vector<16x16xf32> -> vector<16x16xf32>
    %cst_51 = arith.constant 0.353553385 : f32
    %109 = vector.broadcast %cst_51 : f32 to vector<16x16xf32>
    %110 = arith.mulf %108, %109 : vector<16x16xf32>
    %111 = arith.addf %110, %2 : vector<16x16xf32>
    %cst_52 = arith.constant dense<0xFF800000> : vector<16xf32>
    %112 = vector.multi_reduction <maximumf>, %111, %cst_52 [1] : vector<16x16xf32> to vector<16xf32>
    %113 = vector.shape_cast %112 : vector<16xf32> to vector<16x1xf32>
    %114 = vector.broadcast %113 : vector<16x1xf32> to vector<16x16xf32>
    %115 = arith.subf %111, %114 : vector<16x16xf32>
    %116 = math.exp %115 : vector<16x16xf32>
    %cst_53 = arith.constant dense<0.000000e+00> : vector<16xf32>
    %117 = vector.multi_reduction <add>, %116, %cst_53 [1] : vector<16x16xf32> to vector<16xf32>
    %118 = vector.shape_cast %117 : vector<16xf32> to vector<16x1xf32>
    %119 = tpu.reciprocal %118 {approx = true} : vector<16x1xf32> -> vector<16x1xf32>
    %120 = vector.broadcast %119 : vector<16x1xf32> to vector<16x16xf32>
    %121 = arith.mulf %116, %120 : vector<16x16xf32>
    %cst_54 = arith.constant dense<0.000000e+00> : vector<16x8xf32>
    %122 = tpu.matmul %121, %105, %cst_54 {dimension_numbers = #tpu.dot_dimension_numbers<[1], [0], [0], [1], [0, 0, 1, 1], [], []>} : vector<16x16xf32>, vector<16x8xf32>, vector<16x8xf32> -> vector<16x8xf32>
    %cst_55 = arith.constant dense<0.000000e+00> : vector<2x2xf32>
    %123 = tpu.matmul %106, %107, %cst_55 {dimension_numbers = #tpu.dot_dimension_numbers<[1], [1], [0], [0], [0, 0, 1, 0], [], []>} : vector<2x8xf32>, vector<2x8xf32>, vector<2x2xf32> -> vector<2x2xf32>
    %cst_56 = arith.constant 0.353553385 : f32
    %124 = vector.broadcast %cst_56 : f32 to vector<2x2xf32>
    %125 = arith.mulf %123, %124 : vector<2x2xf32>
    %126 = arith.addf %125, %3 : vector<2x2xf32>
    %cst_57 = arith.constant dense<0xFF800000> : vector<2xf32>
    %127 = vector.multi_reduction <maximumf>, %126, %cst_57 [1] : vector<2x2xf32> to vector<2xf32>
    %128 = vector.shape_cast %127 : vector<2xf32> to vector<2x1xf32>
    %129 = vector.broadcast %128 : vector<2x1xf32> to vector<2x2xf32>
    %130 = arith.subf %126, %129 : vector<2x2xf32>
    %131 = math.exp %130 : vector<2x2xf32>
    %cst_58 = arith.constant dense<0.000000e+00> : vector<2xf32>
    %132 = vector.multi_reduction <add>, %131, %cst_58 [1] : vector<2x2xf32> to vector<2xf32>
    %133 = vector.shape_cast %132 : vector<2xf32> to vector<2x1xf32>
    %134 = tpu.reciprocal %133 {approx = true} : vector<2x1xf32> -> vector<2x1xf32>
    %135 = vector.broadcast %134 : vector<2x1xf32> to vector<2x2xf32>
    %136 = arith.mulf %131, %135 : vector<2x2xf32>
    %cst_59 = arith.constant dense<0.000000e+00> : vector<16x2xf32>
    %137 = tpu.matmul %4, %136, %cst_59 {dimension_numbers = #tpu.dot_dimension_numbers<[1], [1], [0], [0], [0, 0, 1, 0], [], []>} : vector<16x2xf32>, vector<2x2xf32>, vector<16x2xf32> -> vector<16x2xf32>
    %138 = vector.extract_strided_slice %137 {offsets = [0, 0], sizes = [16, 1], strides = [1, 1]} : vector<16x2xf32> to vector<16x1xf32>
    %139 = vector.broadcast %138 : vector<16x1xf32> to vector<16x8xf32>
    %140 = arith.mulf %139, %105 : vector<16x8xf32>
    %141 = vector.extract_strided_slice %108 {offsets = [0, 0], sizes = [8, 16], strides = [1, 1]} : vector<16x16xf32> to vector<8x16xf32>
    %cst_60 = arith.constant dense<0.000000e+00> : vector<8x8xf32>
    %142 = tpu.matmul %141, %140, %cst_60 {dimension_numbers = #tpu.dot_dimension_numbers<[1], [0], [0], [1], [0, 0, 1, 1], [], []>} : vector<8x16xf32>, vector<16x8xf32>, vector<8x8xf32> -> vector<8x8xf32>
    %143 = vector.extract_strided_slice %122 {offsets = [0, 0], sizes = [8, 8], strides = [1, 1]} : vector<16x8xf32> to vector<8x8xf32>
    %144 = arith.addf %143, %142 : vector<8x8xf32>
    %c0_61 = arith.constant 0 : index
    %c8_62 = arith.constant 8 : index
    %145 = vector.load %arg23[%c0_61, %c8_62] : memref<16x32xf32, #tpu.memory_space<vmem>>, vector<8x8xf32>
    tpu.vector_store %arg23[%c0_61, %c8_62], %144 {strides = array<i32>} : memref<16x32xf32, #tpu.memory_space<vmem>>, vector<8x8xf32>,
    %146 = vector.extract_strided_slice %137 {offsets = [0, 1], sizes = [16, 1], strides = [1, 1]} : vector<16x2xf32> to vector<16x1xf32>
    %147 = vector.broadcast %146 : vector<16x1xf32> to vector<16x8xf32>
    %148 = arith.mulf %147, %105 : vector<16x8xf32>
    %149 = vector.extract_strided_slice %108 {offsets = [8, 0], sizes = [8, 16], strides = [1, 1]} : vector<16x16xf32> to vector<8x16xf32>
    %cst_63 = arith.constant dense<0.000000e+00> : vector<8x8xf32>
    %150 = tpu.matmul %149, %148, %cst_63 {dimension_numbers = #tpu.dot_dimension_numbers<[1], [0], [0], [1], [0, 0, 1, 1], [], []>} : vector<8x16xf32>, vector<16x8xf32>, vector<8x8xf32> -> vector<8x8xf32>
    %151 = vector.extract_strided_slice %122 {offsets = [8, 0], sizes = [8, 8], strides = [1, 1]} : vector<16x8xf32> to vector<8x8xf32>
    %152 = arith.addf %151, %150 : vector<8x8xf32>
    %c8_64 = arith.constant 8 : index
    %c8_65 = arith.constant 8 : index
    %153 = vector.load %arg23[%c8_64, %c8_65] : memref<16x32xf32, #tpu.memory_space<vmem>>, vector<8x8xf32>
    tpu.vector_store %arg23[%c8_64, %c8_65], %152 {strides = array<i32>} : memref<16x32xf32, #tpu.memory_space<vmem>>, vector<8x8xf32>,
    %154 = vector.extract_strided_slice %39 {offsets = [0, 16], sizes = [16, 8], strides = [1, 1]} : vector<16x32xf32> to vector<16x8xf32>
    %155 = vector.extract_strided_slice %40 {offsets = [0, 16], sizes = [16, 8], strides = [1, 1]} : vector<16x32xf32> to vector<16x8xf32>
    %156 = vector.extract_strided_slice %41 {offsets = [0, 16], sizes = [16, 8], strides = [1, 1]} : vector<16x32xf32> to vector<16x8xf32>
    %157 = vector.extract_strided_slice %50 {offsets = [0, 16], sizes = [2, 8], strides = [1, 1]} : vector<2x32xf32> to vector<2x8xf32>
    %158 = vector.extract_strided_slice %51 {offsets = [0, 16], sizes = [2, 8], strides = [1, 1]} : vector<2x32xf32> to vector<2x8xf32>
    %cst_66 = arith.constant dense<0.000000e+00> : vector<16x16xf32>
    %159 = tpu.matmul %154, %155, %cst_66 {dimension_numbers = #tpu.dot_dimension_numbers<[1], [1], [0], [0], [0, 0, 1, 0], [], []>} : vector<16x8xf32>, vector<16x8xf32>, vector<16x16xf32> -> vector<16x16xf32>
    %cst_67 = arith.constant 0.353553385 : f32
    %160 = vector.broadcast %cst_67 : f32 to vector<16x16xf32>
    %161 = arith.mulf %159, %160 : vector<16x16xf32>
    %162 = arith.addf %161, %2 : vector<16x16xf32>
    %cst_68 = arith.constant dense<0xFF800000> : vector<16xf32>
    %163 = vector.multi_reduction <maximumf>, %162, %cst_68 [1] : vector<16x16xf32> to vector<16xf32>
    %164 = vector.shape_cast %163 : vector<16xf32> to vector<16x1xf32>
    %165 = vector.broadcast %164 : vector<16x1xf32> to vector<16x16xf32>
    %166 = arith.subf %162, %165 : vector<16x16xf32>
    %167 = math.exp %166 : vector<16x16xf32>
    %cst_69 = arith.constant dense<0.000000e+00> : vector<16xf32>
    %168 = vector.multi_reduction <add>, %167, %cst_69 [1] : vector<16x16xf32> to vector<16xf32>
    %169 = vector.shape_cast %168 : vector<16xf32> to vector<16x1xf32>
    %170 = tpu.reciprocal %169 {approx = true} : vector<16x1xf32> -> vector<16x1xf32>
    %171 = vector.broadcast %170 : vector<16x1xf32> to vector<16x16xf32>
    %172 = arith.mulf %167, %171 : vector<16x16xf32>
    %cst_70 = arith.constant dense<0.000000e+00> : vector<16x8xf32>
    %173 = tpu.matmul %172, %156, %cst_70 {dimension_numbers = #tpu.dot_dimension_numbers<[1], [0], [0], [1], [0, 0, 1, 1], [], []>} : vector<16x16xf32>, vector<16x8xf32>, vector<16x8xf32> -> vector<16x8xf32>
    %cst_71 = arith.constant dense<0.000000e+00> : vector<2x2xf32>
    %174 = tpu.matmul %157, %158, %cst_71 {dimension_numbers = #tpu.dot_dimension_numbers<[1], [1], [0], [0], [0, 0, 1, 0], [], []>} : vector<2x8xf32>, vector<2x8xf32>, vector<2x2xf32> -> vector<2x2xf32>
    %cst_72 = arith.constant 0.353553385 : f32
    %175 = vector.broadcast %cst_72 : f32 to vector<2x2xf32>
    %176 = arith.mulf %174, %175 : vector<2x2xf32>
    %177 = arith.addf %176, %3 : vector<2x2xf32>
    %cst_73 = arith.constant dense<0xFF800000> : vector<2xf32>
    %178 = vector.multi_reduction <maximumf>, %177, %cst_73 [1] : vector<2x2xf32> to vector<2xf32>
    %179 = vector.shape_cast %178 : vector<2xf32> to vector<2x1xf32>
    %180 = vector.broadcast %179 : vector<2x1xf32> to vector<2x2xf32>
    %181 = arith.subf %177, %180 : vector<2x2xf32>
    %182 = math.exp %181 : vector<2x2xf32>
    %cst_74 = arith.constant dense<0.000000e+00> : vector<2xf32>
    %183 = vector.multi_reduction <add>, %182, %cst_74 [1] : vector<2x2xf32> to vector<2xf32>
    %184 = vector.shape_cast %183 : vector<2xf32> to vector<2x1xf32>
    %185 = tpu.reciprocal %184 {approx = true} : vector<2x1xf32> -> vector<2x1xf32>
    %186 = vector.broadcast %185 : vector<2x1xf32> to vector<2x2xf32>
    %187 = arith.mulf %182, %186 : vector<2x2xf32>
    %cst_75 = arith.constant dense<0.000000e+00> : vector<16x2xf32>
    %188 = tpu.matmul %4, %187, %cst_75 {dimension_numbers = #tpu.dot_dimension_numbers<[1], [1], [0], [0], [0, 0, 1, 0], [], []>} : vector<16x2xf32>, vector<2x2xf32>, vector<16x2xf32> -> vector<16x2xf32>
    %189 = vector.extract_strided_slice %188 {offsets = [0, 0], sizes = [16, 1], strides = [1, 1]} : vector<16x2xf32> to vector<16x1xf32>
    %190 = vector.broadcast %189 : vector<16x1xf32> to vector<16x8xf32>
    %191 = arith.mulf %190, %156 : vector<16x8xf32>
    %192 = vector.extract_strided_slice %159 {offsets = [0, 0], sizes = [8, 16], strides = [1, 1]} : vector<16x16xf32> to vector<8x16xf32>
    %cst_76 = arith.constant dense<0.000000e+00> : vector<8x8xf32>
    %193 = tpu.matmul %192, %191, %cst_76 {dimension_numbers = #tpu.dot_dimension_numbers<[1], [0], [0], [1], [0, 0, 1, 1], [], []>} : vector<8x16xf32>, vector<16x8xf32>, vector<8x8xf32> -> vector<8x8xf32>
    %194 = vector.extract_strided_slice %173 {offsets = [0, 0], sizes = [8, 8], strides = [1, 1]} : vector<16x8xf32> to vector<8x8xf32>
    %195 = arith.addf %194, %193 : vector<8x8xf32>
    %c0_77 = arith.constant 0 : index
    %c16 = arith.constant 16 : index
    %196 = vector.load %arg23[%c0_77, %c16] : memref<16x32xf32, #tpu.memory_space<vmem>>, vector<8x8xf32>
    tpu.vector_store %arg23[%c0_77, %c16], %195 {strides = array<i32>} : memref<16x32xf32, #tpu.memory_space<vmem>>, vector<8x8xf32>,
    %197 = vector.extract_strided_slice %188 {offsets = [0, 1], sizes = [16, 1], strides = [1, 1]} : vector<16x2xf32> to vector<16x1xf32>
    %198 = vector.broadcast %197 : vector<16x1xf32> to vector<16x8xf32>
    %199 = arith.mulf %198, %156 : vector<16x8xf32>
    %200 = vector.extract_strided_slice %159 {offsets = [8, 0], sizes = [8, 16], strides = [1, 1]} : vector<16x16xf32> to vector<8x16xf32>
    %cst_78 = arith.constant dense<0.000000e+00> : vector<8x8xf32>
    %201 = tpu.matmul %200, %199, %cst_78 {dimension_numbers = #tpu.dot_dimension_numbers<[1], [0], [0], [1], [0, 0, 1, 1], [], []>} : vector<8x16xf32>, vector<16x8xf32>, vector<8x8xf32> -> vector<8x8xf32>
    %202 = vector.extract_strided_slice %173 {offsets = [8, 0], sizes = [8, 8], strides = [1, 1]} : vector<16x8xf32> to vector<8x8xf32>
    %203 = arith.addf %202, %201 : vector<8x8xf32>
    %c8_79 = arith.constant 8 : index
    %c16_80 = arith.constant 16 : index
    %204 = vector.load %arg23[%c8_79, %c16_80] : memref<16x32xf32, #tpu.memory_space<vmem>>, vector<8x8xf32>
    tpu.vector_store %arg23[%c8_79, %c16_80], %203 {strides = array<i32>} : memref<16x32xf32, #tpu.memory_space<vmem>>, vector<8x8xf32>,
    %205 = vector.extract_strided_slice %39 {offsets = [0, 24], sizes = [16, 8], strides = [1, 1]} : vector<16x32xf32> to vector<16x8xf32>
    %206 = vector.extract_strided_slice %40 {offsets = [0, 24], sizes = [16, 8], strides = [1, 1]} : vector<16x32xf32> to vector<16x8xf32>
    %207 = vector.extract_strided_slice %41 {offsets = [0, 24], sizes = [16, 8], strides = [1, 1]} : vector<16x32xf32> to vector<16x8xf32>
    %208 = vector.extract_strided_slice %50 {offsets = [0, 24], sizes = [2, 8], strides = [1, 1]} : vector<2x32xf32> to vector<2x8xf32>
    %209 = vector.extract_strided_slice %51 {offsets = [0, 24], sizes = [2, 8], strides = [1, 1]} : vector<2x32xf32> to vector<2x8xf32>
    %cst_81 = arith.constant dense<0.000000e+00> : vector<16x16xf32>
    %210 = tpu.matmul %205, %206, %cst_81 {dimension_numbers = #tpu.dot_dimension_numbers<[1], [1], [0], [0], [0, 0, 1, 0], [], []>} : vector<16x8xf32>, vector<16x8xf32>, vector<16x16xf32> -> vector<16x16xf32>
    %cst_82 = arith.constant 0.353553385 : f32
    %211 = vector.broadcast %cst_82 : f32 to vector<16x16xf32>
    %212 = arith.mulf %210, %211 : vector<16x16xf32>
    %213 = arith.addf %212, %2 : vector<16x16xf32>
    %cst_83 = arith.constant dense<0xFF800000> : vector<16xf32>
    %214 = vector.multi_reduction <maximumf>, %213, %cst_83 [1] : vector<16x16xf32> to vector<16xf32>
    %215 = vector.shape_cast %214 : vector<16xf32> to vector<16x1xf32>
    %216 = vector.broadcast %215 : vector<16x1xf32> to vector<16x16xf32>
    %217 = arith.subf %213, %216 : vector<16x16xf32>
    %218 = math.exp %217 : vector<16x16xf32>
    %cst_84 = arith.constant dense<0.000000e+00> : vector<16xf32>
    %219 = vector.multi_reduction <add>, %218, %cst_84 [1] : vector<16x16xf32> to vector<16xf32>
    %220 = vector.shape_cast %219 : vector<16xf32> to vector<16x1xf32>
    %221 = tpu.reciprocal %220 {approx = true} : vector<16x1xf32> -> vector<16x1xf32>
    %222 = vector.broadcast %221 : vector<16x1xf32> to vector<16x16xf32>
    %223 = arith.mulf %218, %222 : vector<16x16xf32>
    %cst_85 = arith.constant dense<0.000000e+00> : vector<16x8xf32>
    %224 = tpu.matmul %223, %207, %cst_85 {dimension_numbers = #tpu.dot_dimension_numbers<[1], [0], [0], [1], [0, 0, 1, 1], [], []>} : vector<16x16xf32>, vector<16x8xf32>, vector<16x8xf32> -> vector<16x8xf32>
    %cst_86 = arith.constant dense<0.000000e+00> : vector<2x2xf32>
    %225 = tpu.matmul %208, %209, %cst_86 {dimension_numbers = #tpu.dot_dimension_numbers<[1], [1], [0], [0], [0, 0, 1, 0], [], []>} : vector<2x8xf32>, vector<2x8xf32>, vector<2x2xf32> -> vector<2x2xf32>
    %cst_87 = arith.constant 0.353553385 : f32
    %226 = vector.broadcast %cst_87 : f32 to vector<2x2xf32>
    %227 = arith.mulf %225, %226 : vector<2x2xf32>
    %228 = arith.addf %227, %3 : vector<2x2xf32>
    %cst_88 = arith.constant dense<0xFF800000> : vector<2xf32>
    %229 = vector.multi_reduction <maximumf>, %228, %cst_88 [1] : vector<2x2xf32> to vector<2xf32>
    %230 = vector.shape_cast %229 : vector<2xf32> to vector<2x1xf32>
    %231 = vector.broadcast %230 : vector<2x1xf32> to vector<2x2xf32>
    %232 = arith.subf %228, %231 : vector<2x2xf32>
    %233 = math.exp %232 : vector<2x2xf32>
    %cst_89 = arith.constant dense<0.000000e+00> : vector<2xf32>
    %234 = vector.multi_reduction <add>, %233, %cst_89 [1] : vector<2x2xf32> to vector<2xf32>
    %235 = vector.shape_cast %234 : vector<2xf32> to vector<2x1xf32>
    %236 = tpu.reciprocal %235 {approx = true} : vector<2x1xf32> -> vector<2x1xf32>
    %237 = vector.broadcast %236 : vector<2x1xf32> to vector<2x2xf32>
    %238 = arith.mulf %233, %237 : vector<2x2xf32>
    %cst_90 = arith.constant dense<0.000000e+00> : vector<16x2xf32>
    %239 = tpu.matmul %4, %238, %cst_90 {dimension_numbers = #tpu.dot_dimension_numbers<[1], [1], [0], [0], [0, 0, 1, 0], [], []>} : vector<16x2xf32>, vector<2x2xf32>, vector<16x2xf32> -> vector<16x2xf32>
    %240 = vector.extract_strided_slice %239 {offsets = [0, 0], sizes = [16, 1], strides = [1, 1]} : vector<16x2xf32> to vector<16x1xf32>
    %241 = vector.broadcast %240 : vector<16x1xf32> to vector<16x8xf32>
    %242 = arith.mulf %241, %207 : vector<16x8xf32>
    %243 = vector.extract_strided_slice %210 {offsets = [0, 0], sizes = [8, 16], strides = [1, 1]} : vector<16x16xf32> to vector<8x16xf32>
    %cst_91 = arith.constant dense<0.000000e+00> : vector<8x8xf32>
    %244 = tpu.matmul %243, %242, %cst_91 {dimension_numbers = #tpu.dot_dimension_numbers<[1], [0], [0], [1], [0, 0, 1, 1], [], []>} : vector<8x16xf32>, vector<16x8xf32>, vector<8x8xf32> -> vector<8x8xf32>
    %245 = vector.extract_strided_slice %224 {offsets = [0, 0], sizes = [8, 8], strides = [1, 1]} : vector<16x8xf32> to vector<8x8xf32>
    %246 = arith.addf %245, %244 : vector<8x8xf32>
    %c0_92 = arith.constant 0 : index
    %c24 = arith.constant 24 : index
    %247 = vector.load %arg23[%c0_92, %c24] : memref<16x32xf32, #tpu.memory_space<vmem>>, vector<8x8xf32>
    tpu.vector_store %arg23[%c0_92, %c24], %246 {strides = array<i32>} : memref<16x32xf32, #tpu.memory_space<vmem>>, vector<8x8xf32>,
    %248 = vector.extract_strided_slice %239 {offsets = [0, 1], sizes = [16, 1], strides = [1, 1]} : vector<16x2xf32> to vector<16x1xf32>
    %249 = vector.broadcast %248 : vector<16x1xf32> to vector<16x8xf32>
    %250 = arith.mulf %249, %207 : vector<16x8xf32>
    %251 = vector.extract_strided_slice %210 {offsets = [8, 0], sizes = [8, 16], strides = [1, 1]} : vector<16x16xf32> to vector<8x16xf32>
    %cst_93 = arith.constant dense<0.000000e+00> : vector<8x8xf32>
    %252 = tpu.matmul %251, %250, %cst_93 {dimension_numbers = #tpu.dot_dimension_numbers<[1], [0], [0], [1], [0, 0, 1, 1], [], []>} : vector<8x16xf32>, vector<16x8xf32>, vector<8x8xf32> -> vector<8x8xf32>
    %253 = vector.extract_strided_slice %224 {offsets = [8, 0], sizes = [8, 8], strides = [1, 1]} : vector<16x8xf32> to vector<8x8xf32>
    %254 = arith.addf %253, %252 : vector<8x8xf32>
    %c8_94 = arith.constant 8 : index
    %c24_95 = arith.constant 24 : index
    %255 = vector.load %arg23[%c8_94, %c24_95] : memref<16x32xf32, #tpu.memory_space<vmem>>, vector<8x8xf32>
    tpu.vector_store %arg23[%c8_94, %c24_95], %254 {strides = array<i32>} : memref<16x32xf32, #tpu.memory_space<vmem>>, vector<8x8xf32>,
    %c0_96 = arith.constant 0 : index
    %c0_97 = arith.constant 0 : index
    %256 = vector.load %arg23[%c0_96, %c0_97] : memref<16x32xf32, #tpu.memory_space<vmem>>, vector<16x32xf32>
    %c0_98 = arith.constant 0 : index
    %c0_99 = arith.constant 0 : index
    %c0_100 = arith.constant 0 : index
    %257 = vector.load %arg12[%c0_98, %c0_99, %c0_100] : memref<2x32x32xf32, #tpu.memory_space<vmem>>, vector<1x32x32xf32>
    %258 = vector.shape_cast %257 : vector<1x32x32xf32> to vector<32x32xf32>
    %cst_101 = arith.constant dense<0.000000e+00> : vector<16x32xf32>
    %259 = tpu.matmul %256, %258, %cst_101 {dimension_numbers = #tpu.dot_dimension_numbers<[1], [0], [0], [1], [0, 0, 1, 1], [], []>} : vector<16x32xf32>, vector<32x32xf32>, vector<16x32xf32> -> vector<16x32xf32>
    %c0_102 = arith.constant 0 : index
    %c0_103 = arith.constant 0 : index
    %c0_104 = arith.constant 0 : index
    %260 = vector.load %arg13[%c0_102, %c0_103, %c0_104] : memref<2x1x32xf32, #tpu.memory_space<vmem>>, vector<1x1x32xf32>
    %261 = vector.shape_cast %260 : vector<1x1x32xf32> to vector<1x32xf32>
    %262 = vector.broadcast %261 : vector<1x32xf32> to vector<16x32xf32>
    %263 = arith.addf %259, %262 : vector<16x32xf32>
    %264 = arith.addf %1, %263 : vector<16x32xf32>
    %c0_105 = arith.constant 0 : index
    %c0_106 = arith.constant 0 : index
    %c0_107 = arith.constant 0 : index
    %265 = vector.load %arg14[%c0_105, %c0_106, %c0_107] : memref<2x1x32xf32, #tpu.memory_space<vmem>>, vector<1x1x32xf32>
    %266 = vector.shape_cast %265 : vector<1x1x32xf32> to vector<1x32xf32>
    %c0_108 = arith.constant 0 : index
    %c0_109 = arith.constant 0 : index
    %c0_110 = arith.constant 0 : index
    %267 = vector.load %arg15[%c0_108, %c0_109, %c0_110] : memref<2x1x32xf32, #tpu.memory_space<vmem>>, vector<1x1x32xf32>
    %268 = vector.shape_cast %267 : vector<1x1x32xf32> to vector<1x32xf32>
    %cst_111 = arith.constant dense<0.000000e+00> : vector<16xf32>
    %269 = vector.multi_reduction <add>, %264, %cst_111 [1] : vector<16x32xf32> to vector<16xf32>
    %270 = vector.shape_cast %269 : vector<16xf32> to vector<16x1xf32>
    %cst_112 = arith.constant 3.200000e+01 : f32
    %271 = vector.broadcast %cst_112 : f32 to vector<16x1xf32>
    %272 = arith.divf %270, %271 : vector<16x1xf32>
    %273 = vector.broadcast %272 : vector<16x1xf32> to vector<16x32xf32>
    %274 = arith.subf %264, %273 : vector<16x32xf32>
    %275 = arith.mulf %274, %274 : vector<16x32xf32>
    %cst_113 = arith.constant dense<0.000000e+00> : vector<16xf32>
    %276 = vector.multi_reduction <add>, %275, %cst_113 [1] : vector<16x32xf32> to vector<16xf32>
    %277 = vector.shape_cast %276 : vector<16xf32> to vector<16x1xf32>
    %cst_114 = arith.constant 3.200000e+01 : f32
    %278 = vector.broadcast %cst_114 : f32 to vector<16x1xf32>
    %279 = arith.divf %277, %278 : vector<16x1xf32>
    %280 = vector.broadcast %272 : vector<16x1xf32> to vector<16x32xf32>
    %281 = arith.subf %264, %280 : vector<16x32xf32>
    %cst_115 = arith.constant 9.99999974E-6 : f32
    %282 = vector.broadcast %cst_115 : f32 to vector<16x1xf32>
    %283 = arith.addf %279, %282 : vector<16x1xf32>
    %284 = math.rsqrt %283 : vector<16x1xf32>
    %285 = vector.broadcast %284 : vector<16x1xf32> to vector<16x32xf32>
    %286 = arith.mulf %281, %285 : vector<16x32xf32>
    %287 = vector.broadcast %266 : vector<1x32xf32> to vector<16x32xf32>
    %288 = arith.mulf %286, %287 : vector<16x32xf32>
    %289 = vector.broadcast %268 : vector<1x32xf32> to vector<16x32xf32>
    %290 = arith.addf %288, %289 : vector<16x32xf32>
    %c0_116 = arith.constant 0 : index
    %c0_117 = arith.constant 0 : index
    %c0_118 = arith.constant 0 : index
    %291 = vector.load %arg16[%c0_116, %c0_117, %c0_118] : memref<2x32x64xf32, #tpu.memory_space<vmem>>, vector<1x32x64xf32>
    %292 = vector.shape_cast %291 : vector<1x32x64xf32> to vector<32x64xf32>
    %cst_119 = arith.constant dense<0.000000e+00> : vector<16x64xf32>
    %293 = tpu.matmul %290, %292, %cst_119 {dimension_numbers = #tpu.dot_dimension_numbers<[1], [0], [0], [1], [0, 0, 1, 1], [], []>} : vector<16x32xf32>, vector<32x64xf32>, vector<16x64xf32> -> vector<16x64xf32>
    %c0_120 = arith.constant 0 : index
    %c0_121 = arith.constant 0 : index
    %c0_122 = arith.constant 0 : index
    %294 = vector.load %arg17[%c0_120, %c0_121, %c0_122] : memref<2x1x64xf32, #tpu.memory_space<vmem>>, vector<1x1x64xf32>
    %295 = vector.shape_cast %294 : vector<1x1x64xf32> to vector<1x64xf32>
    %296 = vector.broadcast %295 : vector<1x64xf32> to vector<16x64xf32>
    %297 = arith.addf %293, %296 : vector<16x64xf32>
    %cst_123 = arith.constant 5.000000e-01 : f32
    %298 = vector.broadcast %cst_123 : f32 to vector<16x64xf32>
    %299 = arith.mulf %298, %297 : vector<16x64xf32>
    %cst_124 = arith.constant 0.707106769 : f32
    %300 = vector.broadcast %cst_124 : f32 to vector<16x64xf32>
    %301 = arith.mulf %297, %300 : vector<16x64xf32>
    %302 = math.absf %301 : vector<16x64xf32>
    %cst_125 = arith.constant 0.327591091 : f32
    %303 = vector.broadcast %cst_125 : f32 to vector<16x64xf32>
    %304 = arith.mulf %303, %302 : vector<16x64xf32>
    %cst_126 = arith.constant 1.000000e+00 : f32
    %305 = vector.broadcast %cst_126 : f32 to vector<16x64xf32>
    %306 = arith.addf %305, %304 : vector<16x64xf32>
    %cst_127 = arith.constant 1.000000e+00 : f32
    %307 = vector.broadcast %cst_127 : f32 to vector<16x64xf32>
    %308 = arith.divf %307, %306 : vector<16x64xf32>
    %cst_128 = arith.constant 1.06140542 : f32
    %309 = vector.broadcast %cst_128 : f32 to vector<16x64xf32>
    %310 = arith.mulf %309, %308 : vector<16x64xf32>
    %cst_129 = arith.constant -1.45315206 : f32
    %311 = vector.broadcast %cst_129 : f32 to vector<16x64xf32>
    %312 = arith.addf %310, %311 : vector<16x64xf32>
    %313 = arith.mulf %312, %308 : vector<16x64xf32>
    %cst_130 = arith.constant 1.42141378 : f32
    %314 = vector.broadcast %cst_130 : f32 to vector<16x64xf32>
    %315 = arith.addf %313, %314 : vector<16x64xf32>
    %316 = arith.mulf %315, %308 : vector<16x64xf32>
    %cst_131 = arith.constant -0.284496725 : f32
    %317 = vector.broadcast %cst_131 : f32 to vector<16x64xf32>
    %318 = arith.addf %316, %317 : vector<16x64xf32>
    %319 = arith.mulf %318, %308 : vector<16x64xf32>
    %cst_132 = arith.constant 0.254829586 : f32
    %320 = vector.broadcast %cst_132 : f32 to vector<16x64xf32>
    %321 = arith.addf %319, %320 : vector<16x64xf32>
    %322 = arith.mulf %321, %308 : vector<16x64xf32>
    %cst_133 = arith.constant 0.000000e+00 : f32
    %323 = vector.broadcast %cst_133 : f32 to vector<16x64xf32>
    %324 = arith.subf %323, %302 : vector<16x64xf32>
    %325 = arith.mulf %324, %302 : vector<16x64xf32>
    %326 = math.exp %325 : vector<16x64xf32>
    %327 = arith.mulf %322, %326 : vector<16x64xf32>
    %cst_134 = arith.constant 1.000000e+00 : f32
    %328 = vector.broadcast %cst_134 : f32 to vector<16x64xf32>
    %329 = arith.subf %328, %327 : vector<16x64xf32>
    %cst_135 = arith.constant 0.000000e+00 : f32
    %330 = vector.broadcast %cst_135 : f32 to vector<16x64xf32>
    %331 = arith.cmpf oge, %301, %330 : vector<16x64xf32>
    %cst_136 = arith.constant 0.000000e+00 : f32
    %332 = vector.broadcast %cst_136 : f32 to vector<16x64xf32>
    %333 = arith.subf %332, %329 : vector<16x64xf32>
    %334 = arith.select %331, %329, %333 : vector<16x64xi1>, vector<16x64xf32>
    %cst_137 = arith.constant 1.000000e+00 : f32
    %335 = vector.broadcast %cst_137 : f32 to vector<16x64xf32>
    %336 = arith.addf %335, %334 : vector<16x64xf32>
    %337 = arith.mulf %299, %336 : vector<16x64xf32>
    %c0_138 = arith.constant 0 : index
    %c0_139 = arith.constant 0 : index
    %c0_140 = arith.constant 0 : index
    %338 = vector.load %arg18[%c0_138, %c0_139, %c0_140] : memref<2x64x32xf32, #tpu.memory_space<vmem>>, vector<1x64x32xf32>
    %339 = vector.shape_cast %338 : vector<1x64x32xf32> to vector<64x32xf32>
    %cst_141 = arith.constant dense<0.000000e+00> : vector<16x32xf32>
    %340 = tpu.matmul %337, %339, %cst_141 {dimension_numbers = #tpu.dot_dimension_numbers<[1], [0], [0], [1], [0, 0, 1, 1], [], []>} : vector<16x64xf32>, vector<64x32xf32>, vector<16x32xf32> -> vector<16x32xf32>
    %c0_142 = arith.constant 0 : index
    %c0_143 = arith.constant 0 : index
    %c0_144 = arith.constant 0 : index
    %341 = vector.load %arg19[%c0_142, %c0_143, %c0_144] : memref<2x1x32xf32, #tpu.memory_space<vmem>>, vector<1x1x32xf32>
    %342 = vector.shape_cast %341 : vector<1x1x32xf32> to vector<1x32xf32>
    %343 = vector.broadcast %342 : vector<1x32xf32> to vector<16x32xf32>
    %344 = arith.addf %340, %343 : vector<16x32xf32>
    %345 = arith.addf %264, %344 : vector<16x32xf32>
    %c1 = arith.constant 1 : index
    %c0_145 = arith.constant 0 : index
    %c0_146 = arith.constant 0 : index
    %346 = vector.load %arg6[%c1, %c0_145, %c0_146] : memref<2x1x32xf32, #tpu.memory_space<vmem>>, vector<1x1x32xf32>
    %347 = vector.shape_cast %346 : vector<1x1x32xf32> to vector<1x32xf32>
    %c1_147 = arith.constant 1 : index
    %c0_148 = arith.constant 0 : index
    %c0_149 = arith.constant 0 : index
    %348 = vector.load %arg7[%c1_147, %c0_148, %c0_149] : memref<2x1x32xf32, #tpu.memory_space<vmem>>, vector<1x1x32xf32>
    %349 = vector.shape_cast %348 : vector<1x1x32xf32> to vector<1x32xf32>
    %cst_150 = arith.constant dense<0.000000e+00> : vector<16xf32>
    %350 = vector.multi_reduction <add>, %345, %cst_150 [1] : vector<16x32xf32> to vector<16xf32>
    %351 = vector.shape_cast %350 : vector<16xf32> to vector<16x1xf32>
    %cst_151 = arith.constant 3.200000e+01 : f32
    %352 = vector.broadcast %cst_151 : f32 to vector<16x1xf32>
    %353 = arith.divf %351, %352 : vector<16x1xf32>
    %354 = vector.broadcast %353 : vector<16x1xf32> to vector<16x32xf32>
    %355 = arith.subf %345, %354 : vector<16x32xf32>
    %356 = arith.mulf %355, %355 : vector<16x32xf32>
    %cst_152 = arith.constant dense<0.000000e+00> : vector<16xf32>
    %357 = vector.multi_reduction <add>, %356, %cst_152 [1] : vector<16x32xf32> to vector<16xf32>
    %358 = vector.shape_cast %357 : vector<16xf32> to vector<16x1xf32>
    %cst_153 = arith.constant 3.200000e+01 : f32
    %359 = vector.broadcast %cst_153 : f32 to vector<16x1xf32>
    %360 = arith.divf %358, %359 : vector<16x1xf32>
    %361 = vector.broadcast %353 : vector<16x1xf32> to vector<16x32xf32>
    %362 = arith.subf %345, %361 : vector<16x32xf32>
    %cst_154 = arith.constant 9.99999974E-6 : f32
    %363 = vector.broadcast %cst_154 : f32 to vector<16x1xf32>
    %364 = arith.addf %360, %363 : vector<16x1xf32>
    %365 = math.rsqrt %364 : vector<16x1xf32>
    %366 = vector.broadcast %365 : vector<16x1xf32> to vector<16x32xf32>
    %367 = arith.mulf %362, %366 : vector<16x32xf32>
    %368 = vector.broadcast %347 : vector<1x32xf32> to vector<16x32xf32>
    %369 = arith.mulf %367, %368 : vector<16x32xf32>
    %370 = vector.broadcast %349 : vector<1x32xf32> to vector<16x32xf32>
    %371 = arith.addf %369, %370 : vector<16x32xf32>
    %c1_155 = arith.constant 1 : index
    %c0_156 = arith.constant 0 : index
    %c0_157 = arith.constant 0 : index
    %372 = vector.load %arg8[%c1_155, %c0_156, %c0_157] : memref<2x32x96xf32, #tpu.memory_space<vmem>>, vector<1x32x96xf32>
    %373 = vector.shape_cast %372 : vector<1x32x96xf32> to vector<32x96xf32>
    %cst_158 = arith.constant dense<0.000000e+00> : vector<16x96xf32>
    %374 = tpu.matmul %371, %373, %cst_158 {dimension_numbers = #tpu.dot_dimension_numbers<[1], [0], [0], [1], [0, 0, 1, 1], [], []>} : vector<16x32xf32>, vector<32x96xf32>, vector<16x96xf32> -> vector<16x96xf32>
    %c1_159 = arith.constant 1 : index
    %c0_160 = arith.constant 0 : index
    %c0_161 = arith.constant 0 : index
    %375 = vector.load %arg9[%c1_159, %c0_160, %c0_161] : memref<2x1x96xf32, #tpu.memory_space<vmem>>, vector<1x1x96xf32>
    %376 = vector.shape_cast %375 : vector<1x1x96xf32> to vector<1x96xf32>
    %377 = vector.broadcast %376 : vector<1x96xf32> to vector<16x96xf32>
    %378 = arith.addf %374, %377 : vector<16x96xf32>
    %379 = vector.extract_strided_slice %378 {offsets = [0, 0], sizes = [16, 32], strides = [1, 1]} : vector<16x96xf32> to vector<16x32xf32>
    %380 = vector.extract_strided_slice %378 {offsets = [0, 32], sizes = [16, 32], strides = [1, 1]} : vector<16x96xf32> to vector<16x32xf32>
    %381 = vector.extract_strided_slice %378 {offsets = [0, 64], sizes = [16, 32], strides = [1, 1]} : vector<16x96xf32> to vector<16x32xf32>
    %cst_162 = arith.constant dense<0.000000e+00> : vector<2x32xf32>
    %382 = tpu.matmul %5, %371, %cst_162 {dimension_numbers = #tpu.dot_dimension_numbers<[1], [0], [0], [1], [0, 0, 1, 1], [], []>} : vector<2x16xf32>, vector<16x32xf32>, vector<2x32xf32> -> vector<2x32xf32>
    %c1_163 = arith.constant 1 : index
    %c0_164 = arith.constant 0 : index
    %c0_165 = arith.constant 0 : index
    %383 = vector.load %arg10[%c1_163, %c0_164, %c0_165] : memref<2x32x64xf32, #tpu.memory_space<vmem>>, vector<1x32x64xf32>
    %384 = vector.shape_cast %383 : vector<1x32x64xf32> to vector<32x64xf32>
    %cst_166 = arith.constant dense<0.000000e+00> : vector<2x64xf32>
    %385 = tpu.matmul %382, %384, %cst_166 {dimension_numbers = #tpu.dot_dimension_numbers<[1], [0], [0], [1], [0, 0, 1, 1], [], []>} : vector<2x32xf32>, vector<32x64xf32>, vector<2x64xf32> -> vector<2x64xf32>
    %c1_167 = arith.constant 1 : index
    %c0_168 = arith.constant 0 : index
    %c0_169 = arith.constant 0 : index
    %386 = vector.load %arg11[%c1_167, %c0_168, %c0_169] : memref<2x1x64xf32, #tpu.memory_space<vmem>>, vector<1x1x64xf32>
    %387 = vector.shape_cast %386 : vector<1x1x64xf32> to vector<1x64xf32>
    %388 = vector.broadcast %387 : vector<1x64xf32> to vector<2x64xf32>
    %389 = arith.addf %385, %388 : vector<2x64xf32>
    %390 = vector.extract_strided_slice %389 {offsets = [0, 0], sizes = [2, 32], strides = [1, 1]} : vector<2x64xf32> to vector<2x32xf32>
    %391 = vector.extract_strided_slice %389 {offsets = [0, 32], sizes = [2, 32], strides = [1, 1]} : vector<2x64xf32> to vector<2x32xf32>
    %392 = vector.extract_strided_slice %379 {offsets = [0, 0], sizes = [16, 8], strides = [1, 1]} : vector<16x32xf32> to vector<16x8xf32>
    %393 = vector.extract_strided_slice %380 {offsets = [0, 0], sizes = [16, 8], strides = [1, 1]} : vector<16x32xf32> to vector<16x8xf32>
    %394 = vector.extract_strided_slice %381 {offsets = [0, 0], sizes = [16, 8], strides = [1, 1]} : vector<16x32xf32> to vector<16x8xf32>
    %395 = vector.extract_strided_slice %390 {offsets = [0, 0], sizes = [2, 8], strides = [1, 1]} : vector<2x32xf32> to vector<2x8xf32>
    %396 = vector.extract_strided_slice %391 {offsets = [0, 0], sizes = [2, 8], strides = [1, 1]} : vector<2x32xf32> to vector<2x8xf32>
    %cst_170 = arith.constant dense<0.000000e+00> : vector<16x16xf32>
    %397 = tpu.matmul %392, %393, %cst_170 {dimension_numbers = #tpu.dot_dimension_numbers<[1], [1], [0], [0], [0, 0, 1, 0], [], []>} : vector<16x8xf32>, vector<16x8xf32>, vector<16x16xf32> -> vector<16x16xf32>
    %cst_171 = arith.constant 0.353553385 : f32
    %398 = vector.broadcast %cst_171 : f32 to vector<16x16xf32>
    %399 = arith.mulf %397, %398 : vector<16x16xf32>
    %400 = arith.addf %399, %2 : vector<16x16xf32>
    %cst_172 = arith.constant dense<0xFF800000> : vector<16xf32>
    %401 = vector.multi_reduction <maximumf>, %400, %cst_172 [1] : vector<16x16xf32> to vector<16xf32>
    %402 = vector.shape_cast %401 : vector<16xf32> to vector<16x1xf32>
    %403 = vector.broadcast %402 : vector<16x1xf32> to vector<16x16xf32>
    %404 = arith.subf %400, %403 : vector<16x16xf32>
    %405 = math.exp %404 : vector<16x16xf32>
    %cst_173 = arith.constant dense<0.000000e+00> : vector<16xf32>
    %406 = vector.multi_reduction <add>, %405, %cst_173 [1] : vector<16x16xf32> to vector<16xf32>
    %407 = vector.shape_cast %406 : vector<16xf32> to vector<16x1xf32>
    %408 = tpu.reciprocal %407 {approx = true} : vector<16x1xf32> -> vector<16x1xf32>
    %409 = vector.broadcast %408 : vector<16x1xf32> to vector<16x16xf32>
    %410 = arith.mulf %405, %409 : vector<16x16xf32>
    %cst_174 = arith.constant dense<0.000000e+00> : vector<16x8xf32>
    %411 = tpu.matmul %410, %394, %cst_174 {dimension_numbers = #tpu.dot_dimension_numbers<[1], [0], [0], [1], [0, 0, 1, 1], [], []>} : vector<16x16xf32>, vector<16x8xf32>, vector<16x8xf32> -> vector<16x8xf32>
    %cst_175 = arith.constant dense<0.000000e+00> : vector<2x2xf32>
    %412 = tpu.matmul %395, %396, %cst_175 {dimension_numbers = #tpu.dot_dimension_numbers<[1], [1], [0], [0], [0, 0, 1, 0], [], []>} : vector<2x8xf32>, vector<2x8xf32>, vector<2x2xf32> -> vector<2x2xf32>
    %cst_176 = arith.constant 0.353553385 : f32
    %413 = vector.broadcast %cst_176 : f32 to vector<2x2xf32>
    %414 = arith.mulf %412, %413 : vector<2x2xf32>
    %415 = arith.addf %414, %3 : vector<2x2xf32>
    %cst_177 = arith.constant dense<0xFF800000> : vector<2xf32>
    %416 = vector.multi_reduction <maximumf>, %415, %cst_177 [1] : vector<2x2xf32> to vector<2xf32>
    %417 = vector.shape_cast %416 : vector<2xf32> to vector<2x1xf32>
    %418 = vector.broadcast %417 : vector<2x1xf32> to vector<2x2xf32>
    %419 = arith.subf %415, %418 : vector<2x2xf32>
    %420 = math.exp %419 : vector<2x2xf32>
    %cst_178 = arith.constant dense<0.000000e+00> : vector<2xf32>
    %421 = vector.multi_reduction <add>, %420, %cst_178 [1] : vector<2x2xf32> to vector<2xf32>
    %422 = vector.shape_cast %421 : vector<2xf32> to vector<2x1xf32>
    %423 = tpu.reciprocal %422 {approx = true} : vector<2x1xf32> -> vector<2x1xf32>
    %424 = vector.broadcast %423 : vector<2x1xf32> to vector<2x2xf32>
    %425 = arith.mulf %420, %424 : vector<2x2xf32>
    %cst_179 = arith.constant dense<0.000000e+00> : vector<16x2xf32>
    %426 = tpu.matmul %4, %425, %cst_179 {dimension_numbers = #tpu.dot_dimension_numbers<[1], [1], [0], [0], [0, 0, 1, 0], [], []>} : vector<16x2xf32>, vector<2x2xf32>, vector<16x2xf32> -> vector<16x2xf32>
    %427 = vector.extract_strided_slice %426 {offsets = [0, 0], sizes = [16, 1], strides = [1, 1]} : vector<16x2xf32> to vector<16x1xf32>
    %428 = vector.broadcast %427 : vector<16x1xf32> to vector<16x8xf32>
    %429 = arith.mulf %428, %394 : vector<16x8xf32>
    %430 = vector.extract_strided_slice %397 {offsets = [0, 0], sizes = [8, 16], strides = [1, 1]} : vector<16x16xf32> to vector<8x16xf32>
    %cst_180 = arith.constant dense<0.000000e+00> : vector<8x8xf32>
    %431 = tpu.matmul %430, %429, %cst_180 {dimension_numbers = #tpu.dot_dimension_numbers<[1], [0], [0], [1], [0, 0, 1, 1], [], []>} : vector<8x16xf32>, vector<16x8xf32>, vector<8x8xf32> -> vector<8x8xf32>
    %432 = vector.extract_strided_slice %411 {offsets = [0, 0], sizes = [8, 8], strides = [1, 1]} : vector<16x8xf32> to vector<8x8xf32>
    %433 = arith.addf %432, %431 : vector<8x8xf32>
    %c0_181 = arith.constant 0 : index
    %c0_182 = arith.constant 0 : index
    %434 = vector.load %arg23[%c0_181, %c0_182] : memref<16x32xf32, #tpu.memory_space<vmem>>, vector<8x8xf32>
    tpu.vector_store %arg23[%c0_181, %c0_182], %433 {strides = array<i32>} : memref<16x32xf32, #tpu.memory_space<vmem>>, vector<8x8xf32>,
    %435 = vector.extract_strided_slice %426 {offsets = [0, 1], sizes = [16, 1], strides = [1, 1]} : vector<16x2xf32> to vector<16x1xf32>
    %436 = vector.broadcast %435 : vector<16x1xf32> to vector<16x8xf32>
    %437 = arith.mulf %436, %394 : vector<16x8xf32>
    %438 = vector.extract_strided_slice %397 {offsets = [8, 0], sizes = [8, 16], strides = [1, 1]} : vector<16x16xf32> to vector<8x16xf32>
    %cst_183 = arith.constant dense<0.000000e+00> : vector<8x8xf32>
    %439 = tpu.matmul %438, %437, %cst_183 {dimension_numbers = #tpu.dot_dimension_numbers<[1], [0], [0], [1], [0, 0, 1, 1], [], []>} : vector<8x16xf32>, vector<16x8xf32>, vector<8x8xf32> -> vector<8x8xf32>
    %440 = vector.extract_strided_slice %411 {offsets = [8, 0], sizes = [8, 8], strides = [1, 1]} : vector<16x8xf32> to vector<8x8xf32>
    %441 = arith.addf %440, %439 : vector<8x8xf32>
    %c8_184 = arith.constant 8 : index
    %c0_185 = arith.constant 0 : index
    %442 = vector.load %arg23[%c8_184, %c0_185] : memref<16x32xf32, #tpu.memory_space<vmem>>, vector<8x8xf32>
    tpu.vector_store %arg23[%c8_184, %c0_185], %441 {strides = array<i32>} : memref<16x32xf32, #tpu.memory_space<vmem>>, vector<8x8xf32>,
    %443 = vector.extract_strided_slice %379 {offsets = [0, 8], sizes = [16, 8], strides = [1, 1]} : vector<16x32xf32> to vector<16x8xf32>
    %444 = vector.extract_strided_slice %380 {offsets = [0, 8], sizes = [16, 8], strides = [1, 1]} : vector<16x32xf32> to vector<16x8xf32>
    %445 = vector.extract_strided_slice %381 {offsets = [0, 8], sizes = [16, 8], strides = [1, 1]} : vector<16x32xf32> to vector<16x8xf32>
    %446 = vector.extract_strided_slice %390 {offsets = [0, 8], sizes = [2, 8], strides = [1, 1]} : vector<2x32xf32> to vector<2x8xf32>
    %447 = vector.extract_strided_slice %391 {offsets = [0, 8], sizes = [2, 8], strides = [1, 1]} : vector<2x32xf32> to vector<2x8xf32>
    %cst_186 = arith.constant dense<0.000000e+00> : vector<16x16xf32>
    %448 = tpu.matmul %443, %444, %cst_186 {dimension_numbers = #tpu.dot_dimension_numbers<[1], [1], [0], [0], [0, 0, 1, 0], [], []>} : vector<16x8xf32>, vector<16x8xf32>, vector<16x16xf32> -> vector<16x16xf32>
    %cst_187 = arith.constant 0.353553385 : f32
    %449 = vector.broadcast %cst_187 : f32 to vector<16x16xf32>
    %450 = arith.mulf %448, %449 : vector<16x16xf32>
    %451 = arith.addf %450, %2 : vector<16x16xf32>
    %cst_188 = arith.constant dense<0xFF800000> : vector<16xf32>
    %452 = vector.multi_reduction <maximumf>, %451, %cst_188 [1] : vector<16x16xf32> to vector<16xf32>
    %453 = vector.shape_cast %452 : vector<16xf32> to vector<16x1xf32>
    %454 = vector.broadcast %453 : vector<16x1xf32> to vector<16x16xf32>
    %455 = arith.subf %451, %454 : vector<16x16xf32>
    %456 = math.exp %455 : vector<16x16xf32>
    %cst_189 = arith.constant dense<0.000000e+00> : vector<16xf32>
    %457 = vector.multi_reduction <add>, %456, %cst_189 [1] : vector<16x16xf32> to vector<16xf32>
    %458 = vector.shape_cast %457 : vector<16xf32> to vector<16x1xf32>
    %459 = tpu.reciprocal %458 {approx = true} : vector<16x1xf32> -> vector<16x1xf32>
    %460 = vector.broadcast %459 : vector<16x1xf32> to vector<16x16xf32>
    %461 = arith.mulf %456, %460 : vector<16x16xf32>
    %cst_190 = arith.constant dense<0.000000e+00> : vector<16x8xf32>
    %462 = tpu.matmul %461, %445, %cst_190 {dimension_numbers = #tpu.dot_dimension_numbers<[1], [0], [0], [1], [0, 0, 1, 1], [], []>} : vector<16x16xf32>, vector<16x8xf32>, vector<16x8xf32> -> vector<16x8xf32>
    %cst_191 = arith.constant dense<0.000000e+00> : vector<2x2xf32>
    %463 = tpu.matmul %446, %447, %cst_191 {dimension_numbers = #tpu.dot_dimension_numbers<[1], [1], [0], [0], [0, 0, 1, 0], [], []>} : vector<2x8xf32>, vector<2x8xf32>, vector<2x2xf32> -> vector<2x2xf32>
    %cst_192 = arith.constant 0.353553385 : f32
    %464 = vector.broadcast %cst_192 : f32 to vector<2x2xf32>
    %465 = arith.mulf %463, %464 : vector<2x2xf32>
    %466 = arith.addf %465, %3 : vector<2x2xf32>
    %cst_193 = arith.constant dense<0xFF800000> : vector<2xf32>
    %467 = vector.multi_reduction <maximumf>, %466, %cst_193 [1] : vector<2x2xf32> to vector<2xf32>
    %468 = vector.shape_cast %467 : vector<2xf32> to vector<2x1xf32>
    %469 = vector.broadcast %468 : vector<2x1xf32> to vector<2x2xf32>
    %470 = arith.subf %466, %469 : vector<2x2xf32>
    %471 = math.exp %470 : vector<2x2xf32>
    %cst_194 = arith.constant dense<0.000000e+00> : vector<2xf32>
    %472 = vector.multi_reduction <add>, %471, %cst_194 [1] : vector<2x2xf32> to vector<2xf32>
    %473 = vector.shape_cast %472 : vector<2xf32> to vector<2x1xf32>
    %474 = tpu.reciprocal %473 {approx = true} : vector<2x1xf32> -> vector<2x1xf32>
    %475 = vector.broadcast %474 : vector<2x1xf32> to vector<2x2xf32>
    %476 = arith.mulf %471, %475 : vector<2x2xf32>
    %cst_195 = arith.constant dense<0.000000e+00> : vector<16x2xf32>
    %477 = tpu.matmul %4, %476, %cst_195 {dimension_numbers = #tpu.dot_dimension_numbers<[1], [1], [0], [0], [0, 0, 1, 0], [], []>} : vector<16x2xf32>, vector<2x2xf32>, vector<16x2xf32> -> vector<16x2xf32>
    %478 = vector.extract_strided_slice %477 {offsets = [0, 0], sizes = [16, 1], strides = [1, 1]} : vector<16x2xf32> to vector<16x1xf32>
    %479 = vector.broadcast %478 : vector<16x1xf32> to vector<16x8xf32>
    %480 = arith.mulf %479, %445 : vector<16x8xf32>
    %481 = vector.extract_strided_slice %448 {offsets = [0, 0], sizes = [8, 16], strides = [1, 1]} : vector<16x16xf32> to vector<8x16xf32>
    %cst_196 = arith.constant dense<0.000000e+00> : vector<8x8xf32>
    %482 = tpu.matmul %481, %480, %cst_196 {dimension_numbers = #tpu.dot_dimension_numbers<[1], [0], [0], [1], [0, 0, 1, 1], [], []>} : vector<8x16xf32>, vector<16x8xf32>, vector<8x8xf32> -> vector<8x8xf32>
    %483 = vector.extract_strided_slice %462 {offsets = [0, 0], sizes = [8, 8], strides = [1, 1]} : vector<16x8xf32> to vector<8x8xf32>
    %484 = arith.addf %483, %482 : vector<8x8xf32>
    %c0_197 = arith.constant 0 : index
    %c8_198 = arith.constant 8 : index
    %485 = vector.load %arg23[%c0_197, %c8_198] : memref<16x32xf32, #tpu.memory_space<vmem>>, vector<8x8xf32>
    tpu.vector_store %arg23[%c0_197, %c8_198], %484 {strides = array<i32>} : memref<16x32xf32, #tpu.memory_space<vmem>>, vector<8x8xf32>,
    %486 = vector.extract_strided_slice %477 {offsets = [0, 1], sizes = [16, 1], strides = [1, 1]} : vector<16x2xf32> to vector<16x1xf32>
    %487 = vector.broadcast %486 : vector<16x1xf32> to vector<16x8xf32>
    %488 = arith.mulf %487, %445 : vector<16x8xf32>
    %489 = vector.extract_strided_slice %448 {offsets = [8, 0], sizes = [8, 16], strides = [1, 1]} : vector<16x16xf32> to vector<8x16xf32>
    %cst_199 = arith.constant dense<0.000000e+00> : vector<8x8xf32>
    %490 = tpu.matmul %489, %488, %cst_199 {dimension_numbers = #tpu.dot_dimension_numbers<[1], [0], [0], [1], [0, 0, 1, 1], [], []>} : vector<8x16xf32>, vector<16x8xf32>, vector<8x8xf32> -> vector<8x8xf32>
    %491 = vector.extract_strided_slice %462 {offsets = [8, 0], sizes = [8, 8], strides = [1, 1]} : vector<16x8xf32> to vector<8x8xf32>
    %492 = arith.addf %491, %490 : vector<8x8xf32>
    %c8_200 = arith.constant 8 : index
    %c8_201 = arith.constant 8 : index
    %493 = vector.load %arg23[%c8_200, %c8_201] : memref<16x32xf32, #tpu.memory_space<vmem>>, vector<8x8xf32>
    tpu.vector_store %arg23[%c8_200, %c8_201], %492 {strides = array<i32>} : memref<16x32xf32, #tpu.memory_space<vmem>>, vector<8x8xf32>,
    %494 = vector.extract_strided_slice %379 {offsets = [0, 16], sizes = [16, 8], strides = [1, 1]} : vector<16x32xf32> to vector<16x8xf32>
    %495 = vector.extract_strided_slice %380 {offsets = [0, 16], sizes = [16, 8], strides = [1, 1]} : vector<16x32xf32> to vector<16x8xf32>
    %496 = vector.extract_strided_slice %381 {offsets = [0, 16], sizes = [16, 8], strides = [1, 1]} : vector<16x32xf32> to vector<16x8xf32>
    %497 = vector.extract_strided_slice %390 {offsets = [0, 16], sizes = [2, 8], strides = [1, 1]} : vector<2x32xf32> to vector<2x8xf32>
    %498 = vector.extract_strided_slice %391 {offsets = [0, 16], sizes = [2, 8], strides = [1, 1]} : vector<2x32xf32> to vector<2x8xf32>
    %cst_202 = arith.constant dense<0.000000e+00> : vector<16x16xf32>
    %499 = tpu.matmul %494, %495, %cst_202 {dimension_numbers = #tpu.dot_dimension_numbers<[1], [1], [0], [0], [0, 0, 1, 0], [], []>} : vector<16x8xf32>, vector<16x8xf32>, vector<16x16xf32> -> vector<16x16xf32>
    %cst_203 = arith.constant 0.353553385 : f32
    %500 = vector.broadcast %cst_203 : f32 to vector<16x16xf32>
    %501 = arith.mulf %499, %500 : vector<16x16xf32>
    %502 = arith.addf %501, %2 : vector<16x16xf32>
    %cst_204 = arith.constant dense<0xFF800000> : vector<16xf32>
    %503 = vector.multi_reduction <maximumf>, %502, %cst_204 [1] : vector<16x16xf32> to vector<16xf32>
    %504 = vector.shape_cast %503 : vector<16xf32> to vector<16x1xf32>
    %505 = vector.broadcast %504 : vector<16x1xf32> to vector<16x16xf32>
    %506 = arith.subf %502, %505 : vector<16x16xf32>
    %507 = math.exp %506 : vector<16x16xf32>
    %cst_205 = arith.constant dense<0.000000e+00> : vector<16xf32>
    %508 = vector.multi_reduction <add>, %507, %cst_205 [1] : vector<16x16xf32> to vector<16xf32>
    %509 = vector.shape_cast %508 : vector<16xf32> to vector<16x1xf32>
    %510 = tpu.reciprocal %509 {approx = true} : vector<16x1xf32> -> vector<16x1xf32>
    %511 = vector.broadcast %510 : vector<16x1xf32> to vector<16x16xf32>
    %512 = arith.mulf %507, %511 : vector<16x16xf32>
    %cst_206 = arith.constant dense<0.000000e+00> : vector<16x8xf32>
    %513 = tpu.matmul %512, %496, %cst_206 {dimension_numbers = #tpu.dot_dimension_numbers<[1], [0], [0], [1], [0, 0, 1, 1], [], []>} : vector<16x16xf32>, vector<16x8xf32>, vector<16x8xf32> -> vector<16x8xf32>
    %cst_207 = arith.constant dense<0.000000e+00> : vector<2x2xf32>
    %514 = tpu.matmul %497, %498, %cst_207 {dimension_numbers = #tpu.dot_dimension_numbers<[1], [1], [0], [0], [0, 0, 1, 0], [], []>} : vector<2x8xf32>, vector<2x8xf32>, vector<2x2xf32> -> vector<2x2xf32>
    %cst_208 = arith.constant 0.353553385 : f32
    %515 = vector.broadcast %cst_208 : f32 to vector<2x2xf32>
    %516 = arith.mulf %514, %515 : vector<2x2xf32>
    %517 = arith.addf %516, %3 : vector<2x2xf32>
    %cst_209 = arith.constant dense<0xFF800000> : vector<2xf32>
    %518 = vector.multi_reduction <maximumf>, %517, %cst_209 [1] : vector<2x2xf32> to vector<2xf32>
    %519 = vector.shape_cast %518 : vector<2xf32> to vector<2x1xf32>
    %520 = vector.broadcast %519 : vector<2x1xf32> to vector<2x2xf32>
    %521 = arith.subf %517, %520 : vector<2x2xf32>
    %522 = math.exp %521 : vector<2x2xf32>
    %cst_210 = arith.constant dense<0.000000e+00> : vector<2xf32>
    %523 = vector.multi_reduction <add>, %522, %cst_210 [1] : vector<2x2xf32> to vector<2xf32>
    %524 = vector.shape_cast %523 : vector<2xf32> to vector<2x1xf32>
    %525 = tpu.reciprocal %524 {approx = true} : vector<2x1xf32> -> vector<2x1xf32>
    %526 = vector.broadcast %525 : vector<2x1xf32> to vector<2x2xf32>
    %527 = arith.mulf %522, %526 : vector<2x2xf32>
    %cst_211 = arith.constant dense<0.000000e+00> : vector<16x2xf32>
    %528 = tpu.matmul %4, %527, %cst_211 {dimension_numbers = #tpu.dot_dimension_numbers<[1], [1], [0], [0], [0, 0, 1, 0], [], []>} : vector<16x2xf32>, vector<2x2xf32>, vector<16x2xf32> -> vector<16x2xf32>
    %529 = vector.extract_strided_slice %528 {offsets = [0, 0], sizes = [16, 1], strides = [1, 1]} : vector<16x2xf32> to vector<16x1xf32>
    %530 = vector.broadcast %529 : vector<16x1xf32> to vector<16x8xf32>
    %531 = arith.mulf %530, %496 : vector<16x8xf32>
    %532 = vector.extract_strided_slice %499 {offsets = [0, 0], sizes = [8, 16], strides = [1, 1]} : vector<16x16xf32> to vector<8x16xf32>
    %cst_212 = arith.constant dense<0.000000e+00> : vector<8x8xf32>
    %533 = tpu.matmul %532, %531, %cst_212 {dimension_numbers = #tpu.dot_dimension_numbers<[1], [0], [0], [1], [0, 0, 1, 1], [], []>} : vector<8x16xf32>, vector<16x8xf32>, vector<8x8xf32> -> vector<8x8xf32>
    %534 = vector.extract_strided_slice %513 {offsets = [0, 0], sizes = [8, 8], strides = [1, 1]} : vector<16x8xf32> to vector<8x8xf32>
    %535 = arith.addf %534, %533 : vector<8x8xf32>
    %c0_213 = arith.constant 0 : index
    %c16_214 = arith.constant 16 : index
    %536 = vector.load %arg23[%c0_213, %c16_214] : memref<16x32xf32, #tpu.memory_space<vmem>>, vector<8x8xf32>
    tpu.vector_store %arg23[%c0_213, %c16_214], %535 {strides = array<i32>} : memref<16x32xf32, #tpu.memory_space<vmem>>, vector<8x8xf32>,
    %537 = vector.extract_strided_slice %528 {offsets = [0, 1], sizes = [16, 1], strides = [1, 1]} : vector<16x2xf32> to vector<16x1xf32>
    %538 = vector.broadcast %537 : vector<16x1xf32> to vector<16x8xf32>
    %539 = arith.mulf %538, %496 : vector<16x8xf32>
    %540 = vector.extract_strided_slice %499 {offsets = [8, 0], sizes = [8, 16], strides = [1, 1]} : vector<16x16xf32> to vector<8x16xf32>
    %cst_215 = arith.constant dense<0.000000e+00> : vector<8x8xf32>
    %541 = tpu.matmul %540, %539, %cst_215 {dimension_numbers = #tpu.dot_dimension_numbers<[1], [0], [0], [1], [0, 0, 1, 1], [], []>} : vector<8x16xf32>, vector<16x8xf32>, vector<8x8xf32> -> vector<8x8xf32>
    %542 = vector.extract_strided_slice %513 {offsets = [8, 0], sizes = [8, 8], strides = [1, 1]} : vector<16x8xf32> to vector<8x8xf32>
    %543 = arith.addf %542, %541 : vector<8x8xf32>
    %c8_216 = arith.constant 8 : index
    %c16_217 = arith.constant 16 : index
    %544 = vector.load %arg23[%c8_216, %c16_217] : memref<16x32xf32, #tpu.memory_space<vmem>>, vector<8x8xf32>
    tpu.vector_store %arg23[%c8_216, %c16_217], %543 {strides = array<i32>} : memref<16x32xf32, #tpu.memory_space<vmem>>, vector<8x8xf32>,
    %545 = vector.extract_strided_slice %379 {offsets = [0, 24], sizes = [16, 8], strides = [1, 1]} : vector<16x32xf32> to vector<16x8xf32>
    %546 = vector.extract_strided_slice %380 {offsets = [0, 24], sizes = [16, 8], strides = [1, 1]} : vector<16x32xf32> to vector<16x8xf32>
    %547 = vector.extract_strided_slice %381 {offsets = [0, 24], sizes = [16, 8], strides = [1, 1]} : vector<16x32xf32> to vector<16x8xf32>
    %548 = vector.extract_strided_slice %390 {offsets = [0, 24], sizes = [2, 8], strides = [1, 1]} : vector<2x32xf32> to vector<2x8xf32>
    %549 = vector.extract_strided_slice %391 {offsets = [0, 24], sizes = [2, 8], strides = [1, 1]} : vector<2x32xf32> to vector<2x8xf32>
    %cst_218 = arith.constant dense<0.000000e+00> : vector<16x16xf32>
    %550 = tpu.matmul %545, %546, %cst_218 {dimension_numbers = #tpu.dot_dimension_numbers<[1], [1], [0], [0], [0, 0, 1, 0], [], []>} : vector<16x8xf32>, vector<16x8xf32>, vector<16x16xf32> -> vector<16x16xf32>
    %cst_219 = arith.constant 0.353553385 : f32
    %551 = vector.broadcast %cst_219 : f32 to vector<16x16xf32>
    %552 = arith.mulf %550, %551 : vector<16x16xf32>
    %553 = arith.addf %552, %2 : vector<16x16xf32>
    %cst_220 = arith.constant dense<0xFF800000> : vector<16xf32>
    %554 = vector.multi_reduction <maximumf>, %553, %cst_220 [1] : vector<16x16xf32> to vector<16xf32>
    %555 = vector.shape_cast %554 : vector<16xf32> to vector<16x1xf32>
    %556 = vector.broadcast %555 : vector<16x1xf32> to vector<16x16xf32>
    %557 = arith.subf %553, %556 : vector<16x16xf32>
    %558 = math.exp %557 : vector<16x16xf32>
    %cst_221 = arith.constant dense<0.000000e+00> : vector<16xf32>
    %559 = vector.multi_reduction <add>, %558, %cst_221 [1] : vector<16x16xf32> to vector<16xf32>
    %560 = vector.shape_cast %559 : vector<16xf32> to vector<16x1xf32>
    %561 = tpu.reciprocal %560 {approx = true} : vector<16x1xf32> -> vector<16x1xf32>
    %562 = vector.broadcast %561 : vector<16x1xf32> to vector<16x16xf32>
    %563 = arith.mulf %558, %562 : vector<16x16xf32>
    %cst_222 = arith.constant dense<0.000000e+00> : vector<16x8xf32>
    %564 = tpu.matmul %563, %547, %cst_222 {dimension_numbers = #tpu.dot_dimension_numbers<[1], [0], [0], [1], [0, 0, 1, 1], [], []>} : vector<16x16xf32>, vector<16x8xf32>, vector<16x8xf32> -> vector<16x8xf32>
    %cst_223 = arith.constant dense<0.000000e+00> : vector<2x2xf32>
    %565 = tpu.matmul %548, %549, %cst_223 {dimension_numbers = #tpu.dot_dimension_numbers<[1], [1], [0], [0], [0, 0, 1, 0], [], []>} : vector<2x8xf32>, vector<2x8xf32>, vector<2x2xf32> -> vector<2x2xf32>
    %cst_224 = arith.constant 0.353553385 : f32
    %566 = vector.broadcast %cst_224 : f32 to vector<2x2xf32>
    %567 = arith.mulf %565, %566 : vector<2x2xf32>
    %568 = arith.addf %567, %3 : vector<2x2xf32>
    %cst_225 = arith.constant dense<0xFF800000> : vector<2xf32>
    %569 = vector.multi_reduction <maximumf>, %568, %cst_225 [1] : vector<2x2xf32> to vector<2xf32>
    %570 = vector.shape_cast %569 : vector<2xf32> to vector<2x1xf32>
    %571 = vector.broadcast %570 : vector<2x1xf32> to vector<2x2xf32>
    %572 = arith.subf %568, %571 : vector<2x2xf32>
    %573 = math.exp %572 : vector<2x2xf32>
    %cst_226 = arith.constant dense<0.000000e+00> : vector<2xf32>
    %574 = vector.multi_reduction <add>, %573, %cst_226 [1] : vector<2x2xf32> to vector<2xf32>
    %575 = vector.shape_cast %574 : vector<2xf32> to vector<2x1xf32>
    %576 = tpu.reciprocal %575 {approx = true} : vector<2x1xf32> -> vector<2x1xf32>
    %577 = vector.broadcast %576 : vector<2x1xf32> to vector<2x2xf32>
    %578 = arith.mulf %573, %577 : vector<2x2xf32>
    %cst_227 = arith.constant dense<0.000000e+00> : vector<16x2xf32>
    %579 = tpu.matmul %4, %578, %cst_227 {dimension_numbers = #tpu.dot_dimension_numbers<[1], [1], [0], [0], [0, 0, 1, 0], [], []>} : vector<16x2xf32>, vector<2x2xf32>, vector<16x2xf32> -> vector<16x2xf32>
    %580 = vector.extract_strided_slice %579 {offsets = [0, 0], sizes = [16, 1], strides = [1, 1]} : vector<16x2xf32> to vector<16x1xf32>
    %581 = vector.broadcast %580 : vector<16x1xf32> to vector<16x8xf32>
    %582 = arith.mulf %581, %547 : vector<16x8xf32>
    %583 = vector.extract_strided_slice %550 {offsets = [0, 0], sizes = [8, 16], strides = [1, 1]} : vector<16x16xf32> to vector<8x16xf32>
    %cst_228 = arith.constant dense<0.000000e+00> : vector<8x8xf32>
    %584 = tpu.matmul %583, %582, %cst_228 {dimension_numbers = #tpu.dot_dimension_numbers<[1], [0], [0], [1], [0, 0, 1, 1], [], []>} : vector<8x16xf32>, vector<16x8xf32>, vector<8x8xf32> -> vector<8x8xf32>
    %585 = vector.extract_strided_slice %564 {offsets = [0, 0], sizes = [8, 8], strides = [1, 1]} : vector<16x8xf32> to vector<8x8xf32>
    %586 = arith.addf %585, %584 : vector<8x8xf32>
    %c0_229 = arith.constant 0 : index
    %c24_230 = arith.constant 24 : index
    %587 = vector.load %arg23[%c0_229, %c24_230] : memref<16x32xf32, #tpu.memory_space<vmem>>, vector<8x8xf32>
    tpu.vector_store %arg23[%c0_229, %c24_230], %586 {strides = array<i32>} : memref<16x32xf32, #tpu.memory_space<vmem>>, vector<8x8xf32>,
    %588 = vector.extract_strided_slice %579 {offsets = [0, 1], sizes = [16, 1], strides = [1, 1]} : vector<16x2xf32> to vector<16x1xf32>
    %589 = vector.broadcast %588 : vector<16x1xf32> to vector<16x8xf32>
    %590 = arith.mulf %589, %547 : vector<16x8xf32>
    %591 = vector.extract_strided_slice %550 {offsets = [8, 0], sizes = [8, 16], strides = [1, 1]} : vector<16x16xf32> to vector<8x16xf32>
    %cst_231 = arith.constant dense<0.000000e+00> : vector<8x8xf32>
    %592 = tpu.matmul %591, %590, %cst_231 {dimension_numbers = #tpu.dot_dimension_numbers<[1], [0], [0], [1], [0, 0, 1, 1], [], []>} : vector<8x16xf32>, vector<16x8xf32>, vector<8x8xf32> -> vector<8x8xf32>
    %593 = vector.extract_strided_slice %564 {offsets = [8, 0], sizes = [8, 8], strides = [1, 1]} : vector<16x8xf32> to vector<8x8xf32>
    %594 = arith.addf %593, %592 : vector<8x8xf32>
    %c8_232 = arith.constant 8 : index
    %c24_233 = arith.constant 24 : index
    %595 = vector.load %arg23[%c8_232, %c24_233] : memref<16x32xf32, #tpu.memory_space<vmem>>, vector<8x8xf32>
    tpu.vector_store %arg23[%c8_232, %c24_233], %594 {strides = array<i32>} : memref<16x32xf32, #tpu.memory_space<vmem>>, vector<8x8xf32>,
    %c0_234 = arith.constant 0 : index
    %c0_235 = arith.constant 0 : index
    %596 = vector.load %arg23[%c0_234, %c0_235] : memref<16x32xf32, #tpu.memory_space<vmem>>, vector<16x32xf32>
    %c1_236 = arith.constant 1 : index
    %c0_237 = arith.constant 0 : index
    %c0_238 = arith.constant 0 : index
    %597 = vector.load %arg12[%c1_236, %c0_237, %c0_238] : memref<2x32x32xf32, #tpu.memory_space<vmem>>, vector<1x32x32xf32>
    %598 = vector.shape_cast %597 : vector<1x32x32xf32> to vector<32x32xf32>
    %cst_239 = arith.constant dense<0.000000e+00> : vector<16x32xf32>
    %599 = tpu.matmul %596, %598, %cst_239 {dimension_numbers = #tpu.dot_dimension_numbers<[1], [0], [0], [1], [0, 0, 1, 1], [], []>} : vector<16x32xf32>, vector<32x32xf32>, vector<16x32xf32> -> vector<16x32xf32>
    %c1_240 = arith.constant 1 : index
    %c0_241 = arith.constant 0 : index
    %c0_242 = arith.constant 0 : index
    %600 = vector.load %arg13[%c1_240, %c0_241, %c0_242] : memref<2x1x32xf32, #tpu.memory_space<vmem>>, vector<1x1x32xf32>
    %601 = vector.shape_cast %600 : vector<1x1x32xf32> to vector<1x32xf32>
    %602 = vector.broadcast %601 : vector<1x32xf32> to vector<16x32xf32>
    %603 = arith.addf %599, %602 : vector<16x32xf32>
    %604 = arith.addf %345, %603 : vector<16x32xf32>
    %c1_243 = arith.constant 1 : index
    %c0_244 = arith.constant 0 : index
    %c0_245 = arith.constant 0 : index
    %605 = vector.load %arg14[%c1_243, %c0_244, %c0_245] : memref<2x1x32xf32, #tpu.memory_space<vmem>>, vector<1x1x32xf32>
    %606 = vector.shape_cast %605 : vector<1x1x32xf32> to vector<1x32xf32>
    %c1_246 = arith.constant 1 : index
    %c0_247 = arith.constant 0 : index
    %c0_248 = arith.constant 0 : index
    %607 = vector.load %arg15[%c1_246, %c0_247, %c0_248] : memref<2x1x32xf32, #tpu.memory_space<vmem>>, vector<1x1x32xf32>
    %608 = vector.shape_cast %607 : vector<1x1x32xf32> to vector<1x32xf32>
    %cst_249 = arith.constant dense<0.000000e+00> : vector<16xf32>
    %609 = vector.multi_reduction <add>, %604, %cst_249 [1] : vector<16x32xf32> to vector<16xf32>
    %610 = vector.shape_cast %609 : vector<16xf32> to vector<16x1xf32>
    %cst_250 = arith.constant 3.200000e+01 : f32
    %611 = vector.broadcast %cst_250 : f32 to vector<16x1xf32>
    %612 = arith.divf %610, %611 : vector<16x1xf32>
    %613 = vector.broadcast %612 : vector<16x1xf32> to vector<16x32xf32>
    %614 = arith.subf %604, %613 : vector<16x32xf32>
    %615 = arith.mulf %614, %614 : vector<16x32xf32>
    %cst_251 = arith.constant dense<0.000000e+00> : vector<16xf32>
    %616 = vector.multi_reduction <add>, %615, %cst_251 [1] : vector<16x32xf32> to vector<16xf32>
    %617 = vector.shape_cast %616 : vector<16xf32> to vector<16x1xf32>
    %cst_252 = arith.constant 3.200000e+01 : f32
    %618 = vector.broadcast %cst_252 : f32 to vector<16x1xf32>
    %619 = arith.divf %617, %618 : vector<16x1xf32>
    %620 = vector.broadcast %612 : vector<16x1xf32> to vector<16x32xf32>
    %621 = arith.subf %604, %620 : vector<16x32xf32>
    %cst_253 = arith.constant 9.99999974E-6 : f32
    %622 = vector.broadcast %cst_253 : f32 to vector<16x1xf32>
    %623 = arith.addf %619, %622 : vector<16x1xf32>
    %624 = math.rsqrt %623 : vector<16x1xf32>
    %625 = vector.broadcast %624 : vector<16x1xf32> to vector<16x32xf32>
    %626 = arith.mulf %621, %625 : vector<16x32xf32>
    %627 = vector.broadcast %606 : vector<1x32xf32> to vector<16x32xf32>
    %628 = arith.mulf %626, %627 : vector<16x32xf32>
    %629 = vector.broadcast %608 : vector<1x32xf32> to vector<16x32xf32>
    %630 = arith.addf %628, %629 : vector<16x32xf32>
    %c1_254 = arith.constant 1 : index
    %c0_255 = arith.constant 0 : index
    %c0_256 = arith.constant 0 : index
    %631 = vector.load %arg16[%c1_254, %c0_255, %c0_256] : memref<2x32x64xf32, #tpu.memory_space<vmem>>, vector<1x32x64xf32>
    %632 = vector.shape_cast %631 : vector<1x32x64xf32> to vector<32x64xf32>
    %cst_257 = arith.constant dense<0.000000e+00> : vector<16x64xf32>
    %633 = tpu.matmul %630, %632, %cst_257 {dimension_numbers = #tpu.dot_dimension_numbers<[1], [0], [0], [1], [0, 0, 1, 1], [], []>} : vector<16x32xf32>, vector<32x64xf32>, vector<16x64xf32> -> vector<16x64xf32>
    %c1_258 = arith.constant 1 : index
    %c0_259 = arith.constant 0 : index
    %c0_260 = arith.constant 0 : index
    %634 = vector.load %arg17[%c1_258, %c0_259, %c0_260] : memref<2x1x64xf32, #tpu.memory_space<vmem>>, vector<1x1x64xf32>
    %635 = vector.shape_cast %634 : vector<1x1x64xf32> to vector<1x64xf32>
    %636 = vector.broadcast %635 : vector<1x64xf32> to vector<16x64xf32>
    %637 = arith.addf %633, %636 : vector<16x64xf32>
    %cst_261 = arith.constant 5.000000e-01 : f32
    %638 = vector.broadcast %cst_261 : f32 to vector<16x64xf32>
    %639 = arith.mulf %638, %637 : vector<16x64xf32>
    %cst_262 = arith.constant 0.707106769 : f32
    %640 = vector.broadcast %cst_262 : f32 to vector<16x64xf32>
    %641 = arith.mulf %637, %640 : vector<16x64xf32>
    %642 = math.absf %641 : vector<16x64xf32>
    %cst_263 = arith.constant 0.327591091 : f32
    %643 = vector.broadcast %cst_263 : f32 to vector<16x64xf32>
    %644 = arith.mulf %643, %642 : vector<16x64xf32>
    %cst_264 = arith.constant 1.000000e+00 : f32
    %645 = vector.broadcast %cst_264 : f32 to vector<16x64xf32>
    %646 = arith.addf %645, %644 : vector<16x64xf32>
    %cst_265 = arith.constant 1.000000e+00 : f32
    %647 = vector.broadcast %cst_265 : f32 to vector<16x64xf32>
    %648 = arith.divf %647, %646 : vector<16x64xf32>
    %cst_266 = arith.constant 1.06140542 : f32
    %649 = vector.broadcast %cst_266 : f32 to vector<16x64xf32>
    %650 = arith.mulf %649, %648 : vector<16x64xf32>
    %cst_267 = arith.constant -1.45315206 : f32
    %651 = vector.broadcast %cst_267 : f32 to vector<16x64xf32>
    %652 = arith.addf %650, %651 : vector<16x64xf32>
    %653 = arith.mulf %652, %648 : vector<16x64xf32>
    %cst_268 = arith.constant 1.42141378 : f32
    %654 = vector.broadcast %cst_268 : f32 to vector<16x64xf32>
    %655 = arith.addf %653, %654 : vector<16x64xf32>
    %656 = arith.mulf %655, %648 : vector<16x64xf32>
    %cst_269 = arith.constant -0.284496725 : f32
    %657 = vector.broadcast %cst_269 : f32 to vector<16x64xf32>
    %658 = arith.addf %656, %657 : vector<16x64xf32>
    %659 = arith.mulf %658, %648 : vector<16x64xf32>
    %cst_270 = arith.constant 0.254829586 : f32
    %660 = vector.broadcast %cst_270 : f32 to vector<16x64xf32>
    %661 = arith.addf %659, %660 : vector<16x64xf32>
    %662 = arith.mulf %661, %648 : vector<16x64xf32>
    %cst_271 = arith.constant 0.000000e+00 : f32
    %663 = vector.broadcast %cst_271 : f32 to vector<16x64xf32>
    %664 = arith.subf %663, %642 : vector<16x64xf32>
    %665 = arith.mulf %664, %642 : vector<16x64xf32>
    %666 = math.exp %665 : vector<16x64xf32>
    %667 = arith.mulf %662, %666 : vector<16x64xf32>
    %cst_272 = arith.constant 1.000000e+00 : f32
    %668 = vector.broadcast %cst_272 : f32 to vector<16x64xf32>
    %669 = arith.subf %668, %667 : vector<16x64xf32>
    %cst_273 = arith.constant 0.000000e+00 : f32
    %670 = vector.broadcast %cst_273 : f32 to vector<16x64xf32>
    %671 = arith.cmpf oge, %641, %670 : vector<16x64xf32>
    %cst_274 = arith.constant 0.000000e+00 : f32
    %672 = vector.broadcast %cst_274 : f32 to vector<16x64xf32>
    %673 = arith.subf %672, %669 : vector<16x64xf32>
    %674 = arith.select %671, %669, %673 : vector<16x64xi1>, vector<16x64xf32>
    %cst_275 = arith.constant 1.000000e+00 : f32
    %675 = vector.broadcast %cst_275 : f32 to vector<16x64xf32>
    %676 = arith.addf %675, %674 : vector<16x64xf32>
    %677 = arith.mulf %639, %676 : vector<16x64xf32>
    %c1_276 = arith.constant 1 : index
    %c0_277 = arith.constant 0 : index
    %c0_278 = arith.constant 0 : index
    %678 = vector.load %arg18[%c1_276, %c0_277, %c0_278] : memref<2x64x32xf32, #tpu.memory_space<vmem>>, vector<1x64x32xf32>
    %679 = vector.shape_cast %678 : vector<1x64x32xf32> to vector<64x32xf32>
    %cst_279 = arith.constant dense<0.000000e+00> : vector<16x32xf32>
    %680 = tpu.matmul %677, %679, %cst_279 {dimension_numbers = #tpu.dot_dimension_numbers<[1], [0], [0], [1], [0, 0, 1, 1], [], []>} : vector<16x64xf32>, vector<64x32xf32>, vector<16x32xf32> -> vector<16x32xf32>
    %c1_280 = arith.constant 1 : index
    %c0_281 = arith.constant 0 : index
    %c0_282 = arith.constant 0 : index
    %681 = vector.load %arg19[%c1_280, %c0_281, %c0_282] : memref<2x1x32xf32, #tpu.memory_space<vmem>>, vector<1x1x32xf32>
    %682 = vector.shape_cast %681 : vector<1x1x32xf32> to vector<1x32xf32>
    %683 = vector.broadcast %682 : vector<1x32xf32> to vector<16x32xf32>
    %684 = arith.addf %680, %683 : vector<16x32xf32>
    %685 = arith.addf %604, %684 : vector<16x32xf32>
    %c0_283 = arith.constant 0 : index
    %c0_284 = arith.constant 0 : index
    %686 = vector.load %arg20[%c0_283, %c0_284] : memref<1x32xf32, #tpu.memory_space<vmem>>, vector<1x32xf32>
    %c0_285 = arith.constant 0 : index
    %c0_286 = arith.constant 0 : index
    %687 = vector.load %arg21[%c0_285, %c0_286] : memref<1x32xf32, #tpu.memory_space<vmem>>, vector<1x32xf32>
    %cst_287 = arith.constant dense<0.000000e+00> : vector<16xf32>
    %688 = vector.multi_reduction <add>, %685, %cst_287 [1] : vector<16x32xf32> to vector<16xf32>
    %689 = vector.shape_cast %688 : vector<16xf32> to vector<16x1xf32>
    %cst_288 = arith.constant 3.200000e+01 : f32
    %690 = vector.broadcast %cst_288 : f32 to vector<16x1xf32>
    %691 = arith.divf %689, %690 : vector<16x1xf32>
    %692 = vector.broadcast %691 : vector<16x1xf32> to vector<16x32xf32>
    %693 = arith.subf %685, %692 : vector<16x32xf32>
    %694 = arith.mulf %693, %693 : vector<16x32xf32>
    %cst_289 = arith.constant dense<0.000000e+00> : vector<16xf32>
    %695 = vector.multi_reduction <add>, %694, %cst_289 [1] : vector<16x32xf32> to vector<16xf32>
    %696 = vector.shape_cast %695 : vector<16xf32> to vector<16x1xf32>
    %cst_290 = arith.constant 3.200000e+01 : f32
    %697 = vector.broadcast %cst_290 : f32 to vector<16x1xf32>
    %698 = arith.divf %696, %697 : vector<16x1xf32>
    %699 = vector.broadcast %691 : vector<16x1xf32> to vector<16x32xf32>
    %700 = arith.subf %685, %699 : vector<16x32xf32>
    %cst_291 = arith.constant 9.99999974E-6 : f32
    %701 = vector.broadcast %cst_291 : f32 to vector<16x1xf32>
    %702 = arith.addf %698, %701 : vector<16x1xf32>
    %703 = math.rsqrt %702 : vector<16x1xf32>
    %704 = vector.broadcast %703 : vector<16x1xf32> to vector<16x32xf32>
    %705 = arith.mulf %700, %704 : vector<16x32xf32>
    %706 = vector.broadcast %686 : vector<1x32xf32> to vector<16x32xf32>
    %707 = arith.mulf %705, %706 : vector<16x32xf32>
    %708 = vector.broadcast %687 : vector<1x32xf32> to vector<16x32xf32>
    %709 = arith.addf %707, %708 : vector<16x32xf32>
    %c0_292 = arith.constant 0 : index
    %c0_293 = arith.constant 0 : index
    %c0_294 = arith.constant 0 : index
    %710 = vector.load %arg22[%c0_292, %c0_293, %c0_294] : memref<1x16x32xf32, #tpu.memory_space<vmem>>, vector<1x16x32xf32>
    %711 = vector.shape_cast %710 : vector<1x16x32xf32> to vector<16x32xf32>
    %712 = vector.shape_cast %709 : vector<16x32xf32> to vector<1x16x32xf32>
    tpu.vector_store %arg22[%c0_292, %c0_293, %c0_294], %712 {strides = array<i32>} : memref<1x16x32xf32, #tpu.memory_space<vmem>>, vector<1x16x32xf32>,
    return
  }
  func.func @transform_0(%arg0: i32) -> (i32, i32, i32) {
    %c0_i32 = arith.constant 0 : i32
    %c0_i32_0 = arith.constant 0 : i32
    %c0_i32_1 = arith.constant 0 : i32
    return %arg0, %c0_i32, %c0_i32_0 : i32, i32, i32
  }
  func.func @transform_1(%arg0: i32) -> (i32, i32) {
    %c0_i32 = arith.constant 0 : i32
    %c0_i32_0 = arith.constant 0 : i32
    %c0_i32_1 = arith.constant 0 : i32
    return %c0_i32, %c0_i32_0 : i32, i32
  }
  func.func @transform_2(%arg0: i32) -> (i32, i32) {
    %c0_i32 = arith.constant 0 : i32
    %c0_i32_0 = arith.constant 0 : i32
    %c0_i32_1 = arith.constant 0 : i32
    return %c0_i32, %c0_i32_0 : i32, i32
  }
  func.func @transform_3(%arg0: i32) -> (i32, i32) {
    %c0_i32 = arith.constant 0 : i32
    %c0_i32_0 = arith.constant 0 : i32
    %c0_i32_1 = arith.constant 0 : i32
    return %c0_i32, %c0_i32_0 : i32, i32
  }
  func.func @transform_4(%arg0: i32) -> (i32, i32) {
    %c0_i32 = arith.constant 0 : i32
    %c0_i32_0 = arith.constant 0 : i32
    %c0_i32_1 = arith.constant 0 : i32
    return %c0_i32, %c0_i32_0 : i32, i32
  }
  func.func @transform_5(%arg0: i32) -> (i32, i32, i32) {
    %c0_i32 = arith.constant 0 : i32
    %c0_i32_0 = arith.constant 0 : i32
    %c0_i32_1 = arith.constant 0 : i32
    %c0_i32_2 = arith.constant 0 : i32
    return %c0_i32, %c0_i32_0, %c0_i32_1 : i32, i32, i32
  }
  func.func @transform_6(%arg0: i32) -> (i32, i32, i32) {
    %c0_i32 = arith.constant 0 : i32
    %c0_i32_0 = arith.constant 0 : i32
    %c0_i32_1 = arith.constant 0 : i32
    %c0_i32_2 = arith.constant 0 : i32
    return %c0_i32, %c0_i32_0, %c0_i32_1 : i32, i32, i32
  }
  func.func @transform_7(%arg0: i32) -> (i32, i32, i32) {
    %c0_i32 = arith.constant 0 : i32
    %c0_i32_0 = arith.constant 0 : i32
    %c0_i32_1 = arith.constant 0 : i32
    %c0_i32_2 = arith.constant 0 : i32
    return %c0_i32, %c0_i32_0, %c0_i32_1 : i32, i32, i32
  }
  func.func @transform_8(%arg0: i32) -> (i32, i32, i32) {
    %c0_i32 = arith.constant 0 : i32
    %c0_i32_0 = arith.constant 0 : i32
    %c0_i32_1 = arith.constant 0 : i32
    %c0_i32_2 = arith.constant 0 : i32
    return %c0_i32, %c0_i32_0, %c0_i32_1 : i32, i32, i32
  }
  func.func @transform_9(%arg0: i32) -> (i32, i32, i32) {
    %c0_i32 = arith.constant 0 : i32
    %c0_i32_0 = arith.constant 0 : i32
    %c0_i32_1 = arith.constant 0 : i32
    %c0_i32_2 = arith.constant 0 : i32
    return %c0_i32, %c0_i32_0, %c0_i32_1 : i32, i32, i32
  }
  func.func @transform_10(%arg0: i32) -> (i32, i32, i32) {
    %c0_i32 = arith.constant 0 : i32
    %c0_i32_0 = arith.constant 0 : i32
    %c0_i32_1 = arith.constant 0 : i32
    %c0_i32_2 = arith.constant 0 : i32
    return %c0_i32, %c0_i32_0, %c0_i32_1 : i32, i32, i32
  }
  func.func @transform_11(%arg0: i32) -> (i32, i32, i32) {
    %c0_i32 = arith.constant 0 : i32
    %c0_i32_0 = arith.constant 0 : i32
    %c0_i32_1 = arith.constant 0 : i32
    %c0_i32_2 = arith.constant 0 : i32
    return %c0_i32, %c0_i32_0, %c0_i32_1 : i32, i32, i32
  }
  func.func @transform_12(%arg0: i32) -> (i32, i32, i32) {
    %c0_i32 = arith.constant 0 : i32
    %c0_i32_0 = arith.constant 0 : i32
    %c0_i32_1 = arith.constant 0 : i32
    %c0_i32_2 = arith.constant 0 : i32
    return %c0_i32, %c0_i32_0, %c0_i32_1 : i32, i32, i32
  }
  func.func @transform_13(%arg0: i32) -> (i32, i32, i32) {
    %c0_i32 = arith.constant 0 : i32
    %c0_i32_0 = arith.constant 0 : i32
    %c0_i32_1 = arith.constant 0 : i32
    %c0_i32_2 = arith.constant 0 : i32
    return %c0_i32, %c0_i32_0, %c0_i32_1 : i32, i32, i32
  }
  func.func @transform_14(%arg0: i32) -> (i32, i32, i32) {
    %c0_i32 = arith.constant 0 : i32
    %c0_i32_0 = arith.constant 0 : i32
    %c0_i32_1 = arith.constant 0 : i32
    %c0_i32_2 = arith.constant 0 : i32
    return %c0_i32, %c0_i32_0, %c0_i32_1 : i32, i32, i32
  }
  func.func @transform_15(%arg0: i32) -> (i32, i32, i32) {
    %c0_i32 = arith.constant 0 : i32
    %c0_i32_0 = arith.constant 0 : i32
    %c0_i32_1 = arith.constant 0 : i32
    %c0_i32_2 = arith.constant 0 : i32
    return %c0_i32, %c0_i32_0, %c0_i32_1 : i32, i32, i32
  }
  func.func @transform_16(%arg0: i32) -> (i32, i32, i32) {
    %c0_i32 = arith.constant 0 : i32
    %c0_i32_0 = arith.constant 0 : i32
    %c0_i32_1 = arith.constant 0 : i32
    %c0_i32_2 = arith.constant 0 : i32
    return %c0_i32, %c0_i32_0, %c0_i32_1 : i32, i32, i32
  }
  func.func @transform_17(%arg0: i32) -> (i32, i32, i32) {
    %c0_i32 = arith.constant 0 : i32
    %c0_i32_0 = arith.constant 0 : i32
    %c0_i32_1 = arith.constant 0 : i32
    %c0_i32_2 = arith.constant 0 : i32
    return %c0_i32, %c0_i32_0, %c0_i32_1 : i32, i32, i32
  }
  func.func @transform_18(%arg0: i32) -> (i32, i32, i32) {
    %c0_i32 = arith.constant 0 : i32
    %c0_i32_0 = arith.constant 0 : i32
    %c0_i32_1 = arith.constant 0 : i32
    %c0_i32_2 = arith.constant 0 : i32
    return %c0_i32, %c0_i32_0, %c0_i32_1 : i32, i32, i32
  }
  func.func @transform_19(%arg0: i32) -> (i32, i32) {
    %c0_i32 = arith.constant 0 : i32
    %c0_i32_0 = arith.constant 0 : i32
    %c0_i32_1 = arith.constant 0 : i32
    return %c0_i32, %c0_i32_0 : i32, i32
  }
  func.func @transform_20(%arg0: i32) -> (i32, i32) {
    %c0_i32 = arith.constant 0 : i32
    %c0_i32_0 = arith.constant 0 : i32
    %c0_i32_1 = arith.constant 0 : i32
    return %c0_i32, %c0_i32_0 : i32, i32
  }
  func.func @transform_21(%arg0: i32) -> (i32, i32, i32) {
    %c0_i32 = arith.constant 0 : i32
    %c0_i32_0 = arith.constant 0 : i32
    %c0_i32_1 = arith.constant 0 : i32
    return %arg0, %c0_i32, %c0_i32_0 : i32, i32, i32
  }
}

</mosaic_0001>

<llo_original>
// kernel: bsbr_model.1
$region0: #{bsbr_model.1}
  #allocation0 [shape = 'u32[]', space=smem, size = 0x4, offset = 0x4, fixed_abs, tag = 'smem constant byte address 0x4 - core index']
  #allocation1 [shape = 'u32[144,128]{1,0:T(1,128)}', space=vmem, size = 0x12000, scoped, tag = 'internal scratch']
  #allocation2 [shape = 'f32[16,32]{1,0:T(8,128)}', space=vmem, size = 0x2000, scoped, tag = 'scratch operand']
  %s0 = inlined_call_operand.vmem [shape: f32[2,16,32], index: 0, kind: input, shape index: {}]
  %s1 = inlined_call_operand.vmem [shape: f32[16,16], index: 1, kind: input, shape index: {}]
  %s2 = inlined_call_operand.vmem [shape: f32[2,2], index: 2, kind: input, shape index: {}]
  %s3 = inlined_call_operand.vmem [shape: f32[16,2], index: 3, kind: input, shape index: {}]
  %s4 = inlined_call_operand.vmem [shape: f32[2,16], index: 4, kind: input, shape index: {}]
  %s5 = inlined_call_operand.vmem [shape: f32[2,1,32], index: 5, kind: input, shape index: {}]
  %s6 = inlined_call_operand.vmem [shape: f32[2,1,32], index: 6, kind: input, shape index: {}]
  %s7 = inlined_call_operand.vmem [shape: f32[2,32,96], index: 7, kind: input, shape index: {}]
  %s8 = inlined_call_operand.vmem [shape: f32[2,1,96], index: 8, kind: input, shape index: {}]
  %s9 = inlined_call_operand.vmem [shape: f32[2,32,64], index: 9, kind: input, shape index: {}]
  %s10 = inlined_call_operand.vmem [shape: f32[2,1,64], index: 10, kind: input, shape index: {}]
  %s11 = inlined_call_operand.vmem [shape: f32[2,32,32], index: 11, kind: input, shape index: {}]
  %s12 = inlined_call_operand.vmem [shape: f32[2,1,32], index: 12, kind: input, shape index: {}]
  %s13 = inlined_call_operand.vmem [shape: f32[2,1,32], index: 13, kind: input, shape index: {}]
  %s14 = inlined_call_operand.vmem [shape: f32[2,1,32], index: 14, kind: input, shape index: {}]
  %s15 = inlined_call_operand.vmem [shape: f32[2,32,64], index: 15, kind: input, shape index: {}]
  %s16 = inlined_call_operand.vmem [shape: f32[2,1,64], index: 16, kind: input, shape index: {}]
  %s17 = inlined_call_operand.vmem [shape: f32[2,64,32], index: 17, kind: input, shape index: {}]
  %s18 = inlined_call_operand.vmem [shape: f32[2,1,32], index: 18, kind: input, shape index: {}]
  %s19 = inlined_call_operand.vmem [shape: f32[1,32], index: 19, kind: input, shape index: {}]
  %s20 = inlined_call_operand.vmem [shape: f32[1,32], index: 20, kind: input, shape index: {}]
  %s21 = inlined_call_operand.hbm [shape: f32[2,16,32], index: 21, kind: output, shape index: {}]
  %s22 = sld [smem:[#allocation0]]
  $region117: #{bsbr_model.1} parent=0
    _
  %s24 = ssub.s32 1, %s22
  %s25 = scalar_select 0, %s24, %s22
  $region1: #{bsbr_model.1} parent=0
    #allocation3 [shape = 'u8[16384]{0}', space=vmem, size = 0x4000, scoped, tag = 'output window, operand 0']
    #allocation4 [shape = 's32[2]{0}', space=sflag, size = 0x8, scoped, tag = 'scoped memory for bsbr_model.1']
    %26 = vsyncpa [#allocation4], 0
    %s27 = scalar_lea.sflag [#allocation4], 1
    %28 = vsyncpa %s27, 0
    loop: start=0, step=1, limit=4
    $region2: #{bsbr_model.1} parent=1 // loop_pre_header
      _
    $region3: #{bsbr_model.1} parent=1 // loop_header
      %s30 = sphi 0, %s34
      %p31 = scmp.ge.s32.totalorder %s30, 4
      %s40 = sphi 0, %s42
      %s43 = sphi 0, %s40
      %s44 = sphi 0, %s43
      %s60 = sphi 0, %s44
      %s64 = sphi 0, %s64
      %s66 = sphi 0, %s64
      %s67 = sphi 0, %s66
      %s81 = sphi 0, %s67
      %s85 = sphi 0, %s85
      %s87 = sphi 0, %s85
      %s88 = sphi 0, %s87
      %s102 = sphi 0, %s88
      %s106 = sphi 0, %s106
      %s108 = sphi 0, %s106
      %s109 = sphi 0, %s108
      %s123 = sphi 0, %s109
      %s127 = sphi 0, %s127
      %s129 = sphi 0, %s127
      %s130 = sphi 0, %s129
      %s144 = sphi 0, %s130
      %s148 = sphi 0, %s148
      %s150 = sphi 0, %s148
      %s151 = sphi 0, %s150
      %s165 = sphi 0, %s151
      %s169 = sphi 0, %s169
      %s171 = sphi 0, %s169
      %s172 = sphi 0, %s171
      %s186 = sphi 0, %s172
      %s190 = sphi 0, %s190
      %s192 = sphi 0, %s190
      %s193 = sphi 0, %s192
      %s207 = sphi 0, %s193
      %s211 = sphi 0, %s211
      %s213 = sphi 0, %s211
      %s214 = sphi 0, %s213
      %s228 = sphi 0, %s214
      %s232 = sphi 0, %s232
      %s234 = sphi 0, %s232
      %s235 = sphi 0, %s234
      %s249 = sphi 0, %s235
      %s253 = sphi 0, %s253
      %s255 = sphi 0, %s253
      %s256 = sphi 0, %s255
      %s270 = sphi 0, %s256
      %s274 = sphi 0, %s274
      %s276 = sphi 0, %s274
      %s277 = sphi 0, %s276
      %s291 = sphi 0, %s277
      %s295 = sphi 0, %s295
      %s297 = sphi 0, %s295
      %s298 = sphi 0, %s297
      %s312 = sphi 0, %s298
      %s316 = sphi 0, %s316
      %s318 = sphi 0, %s316
      %s319 = sphi 0, %s318
      %s333 = sphi 0, %s319
      %s337 = sphi 0, %s337
      %s339 = sphi 0, %s337
      %s340 = sphi 0, %s339
      %s354 = sphi 0, %s340
      %s358 = sphi 0, %s358
      %s360 = sphi 0, %s358
      %s361 = sphi 0, %s360
      %s375 = sphi 0, %s361
      %s379 = sphi 0, %s379
      %s381 = sphi 0, %s379
      %s382 = sphi 0, %s381
      %s396 = sphi 0, %s382
      %s400 = sphi 0, %s400
      %s402 = sphi 0, %s400
      %s403 = sphi 0, %s402
      %s417 = sphi 0, %s403
      %s421 = sphi 0, %s421
      %s423 = sphi 0, %s421
      %s424 = sphi 0, %s423
      %s438 = sphi 0, %s424
      %s442 = sphi 0, %s442
      %s444 = sphi 0, %s442
      %s445 = sphi 0, %s444
      %s459 = sphi 0, %s445
      %s463 = sphi 0, %s463
      %s465 = sphi 0, %s463
      %s466 = sphi 0, %s465
      %s480 = sphi 0, %s466
      %s486 = sphi 0, %s488
      %s489 = sphi 0, %s486
      %s490 = sphi 0, %s489
      %s506 = sphi 0, %s490
    $region4: #{bsbr_model.1} parent=1 // loop_header_branch
      %33 = sbr.rel (%p31) target = $region8
    $region5: #{bsbr_model.1} parent=1 // loop_body
      %s35 = ssub.s32 %s30, 1
      %s36 = ssub.s32 %s30, 2
      %s37 = sadd.s32 %s30, 1
      %s38 = ssub.s32 %s30, %s37
      %p39 = scmp.eq.s32.totalorder %s38, 0
      %s41 = sadd.s32 %s40, 1
      %s42 = scalar_select %p39, %s40, %s41
      %p45 = pneg %p39
      %p46 = scmp.eq.s32.totalorder %s30, 1
      %p47 = por %p45, %p46
      %p48 = scmp.ne.s32.totalorder %s40, %s43
      %p49 = scmp.eq.s32.totalorder %s30, 0
      %p50 = por %p48, %p49
      %p51 = scmp.ne.s32.totalorder %s40, %s43
      %p52 = scmp.eq.s32.totalorder %s35, 1
      %p53 = por %p51, %p52
      %p54 = scmp.ne.s32.totalorder %s43, %s44
      %p55 = scmp.eq.s32.totalorder %s35, 0
      %p56 = por %p54, %p55
      %p57 = scmp.ne.s32.totalorder %s43, %s44
      %p58 = scmp.eq.s32.totalorder %s36, 1
      %p59 = por %p57, %p58
      %p61 = scmp.ne.s32.totalorder %s44, %s60
      %p62 = scmp.eq.s32.totalorder %s36, 0
      %p63 = por %p61, %p62
      %s65 = sadd.s32 %s64, 1
      %p68 = scmp.eq.s32.totalorder %s30, 1
      %p69 = scmp.ne.s32.totalorder %s64, %s66
      %p70 = scmp.eq.s32.totalorder %s30, 0
      %p71 = por %p69, %p70
      %p72 = scmp.ne.s32.totalorder %s64, %s66
      %p73 = scmp.eq.s32.totalorder %s35, 1
      %p74 = por %p72, %p73
      %p75 = scmp.ne.s32.totalorder %s66, %s67
      %p76 = scmp.eq.s32.totalorder %s35, 0
      %p77 = por %p75, %p76
      %p78 = scmp.ne.s32.totalorder %s66, %s67
      %p79 = scmp.eq.s32.totalorder %s36, 1
      %p80 = por %p78, %p79
      %p82 = scmp.ne.s32.totalorder %s67, %s81
      %p83 = scmp.eq.s32.totalorder %s36, 0
      %p84 = por %p82, %p83
      %s86 = sadd.s32 %s85, 1
      %p89 = scmp.eq.s32.totalorder %s30, 1
      %p90 = scmp.ne.s32.totalorder %s85, %s87
      %p91 = scmp.eq.s32.totalorder %s30, 0
      %p92 = por %p90, %p91
      %p93 = scmp.ne.s32.totalorder %s85, %s87
      %p94 = scmp.eq.s32.totalorder %s35, 1
      %p95 = por %p93, %p94
      %p96 = scmp.ne.s32.totalorder %s87, %s88
      %p97 = scmp.eq.s32.totalorder %s35, 0
      %p98 = por %p96, %p97
      %p99 = scmp.ne.s32.totalorder %s87, %s88
      %p100 = scmp.eq.s32.totalorder %s36, 1
      %p101 = por %p99, %p100
      %p103 = scmp.ne.s32.totalorder %s88, %s102
      %p104 = scmp.eq.s32.totalorder %s36, 0
      %p105 = por %p103, %p104
      %s107 = sadd.s32 %s106, 1
      %p110 = scmp.eq.s32.totalorder %s30, 1
      %p111 = scmp.ne.s32.totalorder %s106, %s108
      %p112 = scmp.eq.s32.totalorder %s30, 0
      %p113 = por %p111, %p112
      %p114 = scmp.ne.s32.totalorder %s106, %s108
      %p115 = scmp.eq.s32.totalorder %s35, 1
      %p116 = por %p114, %p115
      %p117 = scmp.ne.s32.totalorder %s108, %s109
      %p118 = scmp.eq.s32.totalorder %s35, 0
      %p119 = por %p117, %p118
      %p120 = scmp.ne.s32.totalorder %s108, %s109
      %p121 = scmp.eq.s32.totalorder %s36, 1
      %p122 = por %p120, %p121
      %p124 = scmp.ne.s32.totalorder %s109, %s123
      %p125 = scmp.eq.s32.totalorder %s36, 0
      %p126 = por %p124, %p125
      %s128 = sadd.s32 %s127, 1
      %p131 = scmp.eq.s32.totalorder %s30, 1
      %p132 = scmp.ne.s32.totalorder %s127, %s129
      %p133 = scmp.eq.s32.totalorder %s30, 0
      %p134 = por %p132, %p133
      %p135 = scmp.ne.s32.totalorder %s127, %s129
      %p136 = scmp.eq.s32.totalorder %s35, 1
      %p137 = por %p135, %p136
      %p138 = scmp.ne.s32.totalorder %s129, %s130
      %p139 = scmp.eq.s32.totalorder %s35, 0
      %p140 = por %p138, %p139
      %p141 = scmp.ne.s32.totalorder %s129, %s130
      %p142 = scmp.eq.s32.totalorder %s36, 1
      %p143 = por %p141, %p142
      %p145 = scmp.ne.s32.totalorder %s130, %s144
      %p146 = scmp.eq.s32.totalorder %s36, 0
      %p147 = por %p145, %p146
      %s149 = sadd.s32 %s148, 1
      %p152 = scmp.eq.s32.totalorder %s30, 1
      %p153 = scmp.ne.s32.totalorder %s148, %s150
      %p154 = scmp.eq.s32.totalorder %s30, 0
      %p155 = por %p153, %p154
      %p156 = scmp.ne.s32.totalorder %s148, %s150
      %p157 = scmp.eq.s32.totalorder %s35, 1
      %p158 = por %p156, %p157
      %p159 = scmp.ne.s32.totalorder %s150, %s151
      %p160 = scmp.eq.s32.totalorder %s35, 0
      %p161 = por %p159, %p160
      %p162 = scmp.ne.s32.totalorder %s150, %s151
      %p163 = scmp.eq.s32.totalorder %s36, 1
      %p164 = por %p162, %p163
      %p166 = scmp.ne.s32.totalorder %s151, %s165
      %p167 = scmp.eq.s32.totalorder %s36, 0
      %p168 = por %p166, %p167
      %s170 = sadd.s32 %s169, 1
      %p173 = scmp.eq.s32.totalorder %s30, 1
      %p174 = scmp.ne.s32.totalorder %s169, %s171
      %p175 = scmp.eq.s32.totalorder %s30, 0
      %p176 = por %p174, %p175
      %p177 = scmp.ne.s32.totalorder %s169, %s171
      %p178 = scmp.eq.s32.totalorder %s35, 1
      %p179 = por %p177, %p178
      %p180 = scmp.ne.s32.totalorder %s171, %s172
      %p181 = scmp.eq.s32.totalorder %s35, 0
      %p182 = por %p180, %p181
      %p183 = scmp.ne.s32.totalorder %s171, %s172
      %p184 = scmp.eq.s32.totalorder %s36, 1
      %p185 = por %p183, %p184
      %p187 = scmp.ne.s32.totalorder %s172, %s186
      %p188 = scmp.eq.s32.totalorder %s36, 0
      %p189 = por %p187, %p188
      %s191 = sadd.s32 %s190, 1
      %p194 = scmp.eq.s32.totalorder %s30, 1
      %p195 = scmp.ne.s32.totalorder %s190, %s192
      %p196 = scmp.eq.s32.totalorder %s30, 0
      %p197 = por %p195, %p196
      %p198 = scmp.ne.s32.totalorder %s190, %s192
      %p199 = scmp.eq.s32.totalorder %s35, 1
      %p200 = por %p198, %p199
      %p201 = scmp.ne.s32.totalorder %s192, %s193
      %p202 = scmp.eq.s32.totalorder %s35, 0
      %p203 = por %p201, %p202
      %p204 = scmp.ne.s32.totalorder %s192, %s193
      %p205 = scmp.eq.s32.totalorder %s36, 1
      %p206 = por %p204, %p205
      %p208 = scmp.ne.s32.totalorder %s193, %s207
      %p209 = scmp.eq.s32.totalorder %s36, 0
      %p210 = por %p208, %p209
      %s212 = sadd.s32 %s211, 1
      %p215 = scmp.eq.s32.totalorder %s30, 1
      %p216 = scmp.ne.s32.totalorder %s211, %s213
      %p217 = scmp.eq.s32.totalorder %s30, 0
      %p218 = por %p216, %p217
      %p219 = scmp.ne.s32.totalorder %s211, %s213
      %p220 = scmp.eq.s32.totalorder %s35, 1
      %p221 = por %p219, %p220
      %p222 = scmp.ne.s32.totalorder %s213, %s214
      %p223 = scmp.eq.s32.totalorder %s35, 0
      %p224 = por %p222, %p223
      %p225 = scmp.ne.s32.totalorder %s213, %s214
      %p226 = scmp.eq.s32.totalorder %s36, 1
      %p227 = por %p225, %p226
      %p229 = scmp.ne.s32.totalorder %s214, %s228
      %p230 = scmp.eq.s32.totalorder %s36, 0
      %p231 = por %p229, %p230
      %s233 = sadd.s32 %s232, 1
      %p236 = scmp.eq.s32.totalorder %s30, 1
      %p237 = scmp.ne.s32.totalorder %s232, %s234
      %p238 = scmp.eq.s32.totalorder %s30, 0
      %p239 = por %p237, %p238
      %p240 = scmp.ne.s32.totalorder %s232, %s234
      %p241 = scmp.eq.s32.totalorder %s35, 1
      %p242 = por %p240, %p241
      %p243 = scmp.ne.s32.totalorder %s234, %s235
      %p244 = scmp.eq.s32.totalorder %s35, 0
      %p245 = por %p243, %p244
      %p246 = scmp.ne.s32.totalorder %s234, %s235
      %p247 = scmp.eq.s32.totalorder %s36, 1
      %p248 = por %p246, %p247
      %p250 = scmp.ne.s32.totalorder %s235, %s249
      %p251 = scmp.eq.s32.totalorder %s36, 0
      %p252 = por %p250, %p251
      %s254 = sadd.s32 %s253, 1
      %p257 = scmp.eq.s32.totalorder %s30, 1
      %p258 = scmp.ne.s32.totalorder %s253, %s255
      %p259 = scmp.eq.s32.totalorder %s30, 0
      %p260 = por %p258, %p259
      %p261 = scmp.ne.s32.totalorder %s253, %s255
      %p262 = scmp.eq.s32.totalorder %s35, 1
      %p263 = por %p261, %p262
      %p264 = scmp.ne.s32.totalorder %s255, %s256
      %p265 = scmp.eq.s32.totalorder %s35, 0
      %p266 = por %p264, %p265
      %p267 = scmp.ne.s32.totalorder %s255, %s256
      %p268 = scmp.eq.s32.totalorder %s36, 1
      %p269 = por %p267, %p268
      %p271 = scmp.ne.s32.totalorder %s256, %s270
      %p272 = scmp.eq.s32.totalorder %s36, 0
      %p273 = por %p271, %p272
      %s275 = sadd.s32 %s274, 1
      %p278 = scmp.eq.s32.totalorder %s30, 1
      %p279 = scmp.ne.s32.totalorder %s274, %s276
      %p280 = scmp.eq.s32.totalorder %s30, 0
      %p281 = por %p279, %p280
      %p282 = scmp.ne.s32.totalorder %s274, %s276
      %p283 = scmp.eq.s32.totalorder %s35, 1
      %p284 = por %p282, %p283
      %p285 = scmp.ne.s32.totalorder %s276, %s277
      %p286 = scmp.eq.s32.totalorder %s35, 0
      %p287 = por %p285, %p286
      %p288 = scmp.ne.s32.totalorder %s276, %s277
      %p289 = scmp.eq.s32.totalorder %s36, 1
      %p290 = por %p288, %p289
      %p292 = scmp.ne.s32.totalorder %s277, %s291
      %p293 = scmp.eq.s32.totalorder %s36, 0
      %p294 = por %p292, %p293
      %s296 = sadd.s32 %s295, 1
      %p299 = scmp.eq.s32.totalorder %s30, 1
      %p300 = scmp.ne.s32.totalorder %s295, %s297
      %p301 = scmp.eq.s32.totalorder %s30, 0
      %p302 = por %p300, %p301
      %p303 = scmp.ne.s32.totalorder %s295, %s297
      %p304 = scmp.eq.s32.totalorder %s35, 1
      %p305 = por %p303, %p304
      %p306 = scmp.ne.s32.totalorder %s297, %s298
      %p307 = scmp.eq.s32.totalorder %s35, 0
      %p308 = por %p306, %p307
      %p309 = scmp.ne.s32.totalorder %s297, %s298
      %p310 = scmp.eq.s32.totalorder %s36, 1
      %p311 = por %p309, %p310
      %p313 = scmp.ne.s32.totalorder %s298, %s312
      %p314 = scmp.eq.s32.totalorder %s36, 0
      %p315 = por %p313, %p314
      %s317 = sadd.s32 %s316, 1
      %p320 = scmp.eq.s32.totalorder %s30, 1
      %p321 = scmp.ne.s32.totalorder %s316, %s318
      %p322 = scmp.eq.s32.totalorder %s30, 0
      %p323 = por %p321, %p322
      %p324 = scmp.ne.s32.totalorder %s316, %s318
      %p325 = scmp.eq.s32.totalorder %s35, 1
      %p326 = por %p324, %p325
      %p327 = scmp.ne.s32.totalorder %s318, %s319
      %p328 = scmp.eq.s32.totalorder %s35, 0
      %p329 = por %p327, %p328
      %p330 = scmp.ne.s32.totalorder %s318, %s319
      %p331 = scmp.eq.s32.totalorder %s36, 1
      %p332 = por %p330, %p331
      %p334 = scmp.ne.s32.totalorder %s319, %s333
      %p335 = scmp.eq.s32.totalorder %s36, 0
      %p336 = por %p334, %p335
      %s338 = sadd.s32 %s337, 1
      %p341 = scmp.eq.s32.totalorder %s30, 1
      %p342 = scmp.ne.s32.totalorder %s337, %s339
      %p343 = scmp.eq.s32.totalorder %s30, 0
      %p344 = por %p342, %p343
      %p345 = scmp.ne.s32.totalorder %s337, %s339
      %p346 = scmp.eq.s32.totalorder %s35, 1
      %p347 = por %p345, %p346
      %p348 = scmp.ne.s32.totalorder %s339, %s340
      %p349 = scmp.eq.s32.totalorder %s35, 0
      %p350 = por %p348, %p349
      %p351 = scmp.ne.s32.totalorder %s339, %s340
      %p352 = scmp.eq.s32.totalorder %s36, 1
      %p353 = por %p351, %p352
      %p355 = scmp.ne.s32.totalorder %s340, %s354
      %p356 = scmp.eq.s32.totalorder %s36, 0
      %p357 = por %p355, %p356
      %s359 = sadd.s32 %s358, 1
      %p362 = scmp.eq.s32.totalorder %s30, 1
      %p363 = scmp.ne.s32.totalorder %s358, %s360
      %p364 = scmp.eq.s32.totalorder %s30, 0
      %p365 = por %p363, %p364
      %p366 = scmp.ne.s32.totalorder %s358, %s360
      %p367 = scmp.eq.s32.totalorder %s35, 1
      %p368 = por %p366, %p367
      %p369 = scmp.ne.s32.totalorder %s360, %s361
      %p370 = scmp.eq.s32.totalorder %s35, 0
      %p371 = por %p369, %p370
      %p372 = scmp.ne.s32.totalorder %s360, %s361
      %p373 = scmp.eq.s32.totalorder %s36, 1
      %p374 = por %p372, %p373
      %p376 = scmp.ne.s32.totalorder %s361, %s375
      %p377 = scmp.eq.s32.totalorder %s36, 0
      %p378 = por %p376, %p377
      %s380 = sadd.s32 %s379, 1
      %p383 = scmp.eq.s32.totalorder %s30, 1
      %p384 = scmp.ne.s32.totalorder %s379, %s381
      %p385 = scmp.eq.s32.totalorder %s30, 0
      %p386 = por %p384, %p385
      %p387 = scmp.ne.s32.totalorder %s379, %s381
      %p388 = scmp.eq.s32.totalorder %s35, 1
      %p389 = por %p387, %p388
      %p390 = scmp.ne.s32.totalorder %s381, %s382
      %p391 = scmp.eq.s32.totalorder %s35, 0
      %p392 = por %p390, %p391
      %p393 = scmp.ne.s32.totalorder %s381, %s382
      %p394 = scmp.eq.s32.totalorder %s36, 1
      %p395 = por %p393, %p394
      %p397 = scmp.ne.s32.totalorder %s382, %s396
      %p398 = scmp.eq.s32.totalorder %s36, 0
      %p399 = por %p397, %p398
      %s401 = sadd.s32 %s400, 1
      %p404 = scmp.eq.s32.totalorder %s30, 1
      %p405 = scmp.ne.s32.totalorder %s400, %s402
      %p406 = scmp.eq.s32.totalorder %s30, 0
      %p407 = por %p405, %p406
      %p408 = scmp.ne.s32.totalorder %s400, %s402
      %p409 = scmp.eq.s32.totalorder %s35, 1
      %p410 = por %p408, %p409
      %p411 = scmp.ne.s32.totalorder %s402, %s403
      %p412 = scmp.eq.s32.totalorder %s35, 0
      %p413 = por %p411, %p412
      %p414 = scmp.ne.s32.totalorder %s402, %s403
      %p415 = scmp.eq.s32.totalorder %s36, 1
      %p416 = por %p414, %p415
      %p418 = scmp.ne.s32.totalorder %s403, %s417
      %p419 = scmp.eq.s32.totalorder %s36, 0
      %p420 = por %p418, %p419
      %s422 = sadd.s32 %s421, 1
      %p425 = scmp.eq.s32.totalorder %s30, 1
      %p426 = scmp.ne.s32.totalorder %s421, %s423
      %p427 = scmp.eq.s32.totalorder %s30, 0
      %p428 = por %p426, %p427
      %p429 = scmp.ne.s32.totalorder %s421, %s423
      %p430 = scmp.eq.s32.totalorder %s35, 1
      %p431 = por %p429, %p430
      %p432 = scmp.ne.s32.totalorder %s423, %s424
      %p433 = scmp.eq.s32.totalorder %s35, 0
      %p434 = por %p432, %p433
      %p435 = scmp.ne.s32.totalorder %s423, %s424
      %p436 = scmp.eq.s32.totalorder %s36, 1
      %p437 = por %p435, %p436
      %p439 = scmp.ne.s32.totalorder %s424, %s438
      %p440 = scmp.eq.s32.totalorder %s36, 0
      %p441 = por %p439, %p440
      %s443 = sadd.s32 %s442, 1
      %p446 = scmp.eq.s32.totalorder %s30, 1
      %p447 = scmp.ne.s32.totalorder %s442, %s444
      %p448 = scmp.eq.s32.totalorder %s30, 0
      %p449 = por %p447, %p448
      %p450 = scmp.ne.s32.totalorder %s442, %s444
      %p451 = scmp.eq.s32.totalorder %s35, 1
      %p452 = por %p450, %p451
      %p453 = scmp.ne.s32.totalorder %s444, %s445
      %p454 = scmp.eq.s32.totalorder %s35, 0
      %p455 = por %p453, %p454
      %p456 = scmp.ne.s32.totalorder %s444, %s445
      %p457 = scmp.eq.s32.totalorder %s36, 1
      %p458 = por %p456, %p457
      %p460 = scmp.ne.s32.totalorder %s445, %s459
      %p461 = scmp.eq.s32.totalorder %s36, 0
      %p462 = por %p460, %p461
      %s464 = sadd.s32 %s463, 1
      %p467 = scmp.eq.s32.totalorder %s30, 1
      %p468 = scmp.ne.s32.totalorder %s463, %s465
      %p469 = scmp.eq.s32.totalorder %s30, 0
      %p470 = por %p468, %p469
      %p471 = scmp.ne.s32.totalorder %s463, %s465
      %p472 = scmp.eq.s32.totalorder %s35, 1
      %p473 = por %p471, %p472
      %p474 = scmp.ne.s32.totalorder %s465, %s466
      %p475 = scmp.eq.s32.totalorder %s35, 0
      %p476 = por %p474, %p475
      %p477 = scmp.ne.s32.totalorder %s465, %s466
      %p478 = scmp.eq.s32.totalorder %s36, 1
      %p479 = por %p477, %p478
      %p481 = scmp.ne.s32.totalorder %s466, %s480
      %p482 = scmp.eq.s32.totalorder %s36, 0
      %p483 = por %p481, %p482
      %s484 = ssub.s32 %s30, %s37
      %p485 = scmp.eq.s32.totalorder %s484, 0
      %s487 = sadd.s32 %s486, 1
      %s488 = scalar_select %p485, %s486, %s487
      %p491 = pneg %p485
      %p492 = scmp.eq.s32.totalorder %s30, 1
      %p493 = por %p491, %p492
      %p494 = scmp.ne.s32.totalorder %s486, %s489
      %p495 = scmp.eq.s32.totalorder %s30, 0
      %p496 = por %p494, %p495
      %p497 = scmp.ne.s32.totalorder %s486, %s489
      %p498 = scmp.eq.s32.totalorder %s35, 1
      %p499 = por %p497, %p498
      %p500 = scmp.ne.s32.totalorder %s489, %s490
      %p501 = scmp.eq.s32.totalorder %s35, 0
      %p502 = por %p500, %p501
      %p503 = scmp.ne.s32.totalorder %s489, %s490
      %p504 = scmp.eq.s32.totalorder %s36, 1
      %p505 = por %p503, %p504
      %p507 = scmp.ne.s32.totalorder %s490, %s506
      %p508 = scmp.eq.s32.totalorder %s36, 0
      %p509 = por %p507, %p508
      %p510 = scmp.le.s32.totalorder 1, %s30
      %p511 = scmp.lt.s32.totalorder %s30, 3
      %p512 = pnand %p510, %p511
      %p513 = pneg %p512
      // Predicated region
      $region9: #{bsbr_model.1} parent=5 // pred_check
        _
      $region10: #{bsbr_model.1} parent=5 // pred_check_branch
        %515 = sbr.rel (%p512) target = $region12
      $region11: #{bsbr_model.1} parent=5 // pred_region
        %s516 = ssub.s32 %s30, 1
        // Predicated region
        $region13: #{bsbr_model.1} parent=11 // pred_check
          %p517 = pneg %p77
        $region14: #{bsbr_model.1} parent=11 // pred_check_branch
          %519 = sbr.rel (%p517) target = $region16
        $region15: #{bsbr_model.1} parent=11 // pred_region
          _
        $region16: #{bsbr_model.1} parent=11 // pred_fallthru
          _
        // Predicated region
        $region17: #{bsbr_model.1} parent=11 // pred_check
          %p520 = pneg %p98
        $region18: #{bsbr_model.1} parent=11 // pred_check_branch
          %522 = sbr.rel (%p520) target = $region20
        $region19: #{bsbr_model.1} parent=11 // pred_region
          _
        $region20: #{bsbr_model.1} parent=11 // pred_fallthru
          _
        // Predicated region
        $region21: #{bsbr_model.1} parent=11 // pred_check
          %p523 = pneg %p119
        $region22: #{bsbr_model.1} parent=11 // pred_check_branch
          %525 = sbr.rel (%p523) target = $region24
        $region23: #{bsbr_model.1} parent=11 // pred_region
          _
        $region24: #{bsbr_model.1} parent=11 // pred_fallthru
          _
        // Predicated region
        $region25: #{bsbr_model.1} parent=11 // pred_check
          %p526 = pneg %p140
        $region26: #{bsbr_model.1} parent=11 // pred_check_branch
          %528 = sbr.rel (%p526) target = $region28
        $region27: #{bsbr_model.1} parent=11 // pred_region
          _
        $region28: #{bsbr_model.1} parent=11 // pred_fallthru
          _
        // Predicated region
        $region29: #{bsbr_model.1} parent=11 // pred_check
          %p529 = pneg %p161
        $region30: #{bsbr_model.1} parent=11 // pred_check_branch
          %531 = sbr.rel (%p529) target = $region32
        $region31: #{bsbr_model.1} parent=11 // pred_region
          _
        $region32: #{bsbr_model.1} parent=11 // pred_fallthru
          _
        // Predicated region
        $region33: #{bsbr_model.1} parent=11 // pred_check
          %p532 = pneg %p182
        $region34: #{bsbr_model.1} parent=11 // pred_check_branch
          %534 = sbr.rel (%p532) target = $region36
        $region35: #{bsbr_model.1} parent=11 // pred_region
          _
        $region36: #{bsbr_model.1} parent=11 // pred_fallthru
          _
        // Predicated region
        $region37: #{bsbr_model.1} parent=11 // pred_check
          %p535 = pneg %p203
        $region38: #{bsbr_model.1} parent=11 // pred_check_branch
          %537 = sbr.rel (%p535) target = $region40
        $region39: #{bsbr_model.1} parent=11 // pred_region
          _
        $region40: #{bsbr_model.1} parent=11 // pred_fallthru
          _
        // Predicated region
        $region41: #{bsbr_model.1} parent=11 // pred_check
          %p538 = pneg %p224
        $region42: #{bsbr_model.1} parent=11 // pred_check_branch
          %540 = sbr.rel (%p538) target = $region44
        $region43: #{bsbr_model.1} parent=11 // pred_region
          _
        $region44: #{bsbr_model.1} parent=11 // pred_fallthru
          _
        // Predicated region
        $region45: #{bsbr_model.1} parent=11 // pred_check
          %p541 = pneg %p245
        $region46: #{bsbr_model.1} parent=11 // pred_check_branch
          %543 = sbr.rel (%p541) target = $region48
        $region47: #{bsbr_model.1} parent=11 // pred_region
          _
        $region48: #{bsbr_model.1} parent=11 // pred_fallthru
          _
        // Predicated region
        $region49: #{bsbr_model.1} parent=11 // pred_check
          %p544 = pneg %p266
        $region50: #{bsbr_model.1} parent=11 // pred_check_branch
          %546 = sbr.rel (%p544) target = $region52
        $region51: #{bsbr_model.1} parent=11 // pred_region
          _
        $region52: #{bsbr_model.1} parent=11 // pred_fallthru
          _
        // Predicated region
        $region53: #{bsbr_model.1} parent=11 // pred_check
          %p547 = pneg %p287
        $region54: #{bsbr_model.1} parent=11 // pred_check_branch
          %549 = sbr.rel (%p547) target = $region56
        $region55: #{bsbr_model.1} parent=11 // pred_region
          _
        $region56: #{bsbr_model.1} parent=11 // pred_fallthru
          _
        // Predicated region
        $region57: #{bsbr_model.1} parent=11 // pred_check
          %p550 = pneg %p308
        $region58: #{bsbr_model.1} parent=11 // pred_check_branch
          %552 = sbr.rel (%p550) target = $region60
        $region59: #{bsbr_model.1} parent=11 // pred_region
          _
        $region60: #{bsbr_model.1} parent=11 // pred_fallthru
          _
        // Predicated region
        $region61: #{bsbr_model.1} parent=11 // pred_check
          %p553 = pneg %p329
        $region62: #{bsbr_model.1} parent=11 // pred_check_branch
          %555 = sbr.rel (%p553) target = $region64
        $region63: #{bsbr_model.1} parent=11 // pred_region
          _
        $region64: #{bsbr_model.1} parent=11 // pred_fallthru
          _
        // Predicated region
        $region65: #{bsbr_model.1} parent=11 // pred_check
          %p556 = pneg %p350
        $region66: #{bsbr_model.1} parent=11 // pred_check_branch
          %558 = sbr.rel (%p556) target = $region68
        $region67: #{bsbr_model.1} parent=11 // pred_region
          _
        $region68: #{bsbr_model.1} parent=11 // pred_fallthru
          _
        // Predicated region
        $region69: #{bsbr_model.1} parent=11 // pred_check
          %p559 = pneg %p371
        $region70: #{bsbr_model.1} parent=11 // pred_check_branch
          %561 = sbr.rel (%p559) target = $region72
        $region71: #{bsbr_model.1} parent=11 // pred_region
          _
        $region72: #{bsbr_model.1} parent=11 // pred_fallthru
          _
        // Predicated region
        $region73: #{bsbr_model.1} parent=11 // pred_check
          %p562 = pneg %p392
        $region74: #{bsbr_model.1} parent=11 // pred_check_branch
          %564 = sbr.rel (%p562) target = $region76
        $region75: #{bsbr_model.1} parent=11 // pred_region
          _
        $region76: #{bsbr_model.1} parent=11 // pred_fallthru
          _
        // Predicated region
        $region77: #{bsbr_model.1} parent=11 // pred_check
          %p565 = pneg %p413
        $region78: #{bsbr_model.1} parent=11 // pred_check_branch
          %567 = sbr.rel (%p565) target = $region80
        $region79: #{bsbr_model.1} parent=11 // pred_region
          _
        $region80: #{bsbr_model.1} parent=11 // pred_fallthru
          _
        // Predicated region
        $region81: #{bsbr_model.1} parent=11 // pred_check
          %p568 = pneg %p434
        $region82: #{bsbr_model.1} parent=11 // pred_check_branch
          %570 = sbr.rel (%p568) target = $region84
        $region83: #{bsbr_model.1} parent=11 // pred_region
          _
        $region84: #{bsbr_model.1} parent=11 // pred_fallthru
          _
        // Predicated region
        $region85: #{bsbr_model.1} parent=11 // pred_check
          %p571 = pneg %p455
        $region86: #{bsbr_model.1} parent=11 // pred_check_branch
          %573 = sbr.rel (%p571) target = $region88
        $region87: #{bsbr_model.1} parent=11 // pred_region
          _
        $region88: #{bsbr_model.1} parent=11 // pred_fallthru
          _
        // Predicated region
        $region89: #{bsbr_model.1} parent=11 // pred_check
          %p574 = pneg %p476
        $region90: #{bsbr_model.1} parent=11 // pred_check_branch
          %576 = sbr.rel (%p574) target = $region92
        $region91: #{bsbr_model.1} parent=11 // pred_region
          _
        $region92: #{bsbr_model.1} parent=11 // pred_fallthru
          _
      $region12: #{bsbr_model.1} parent=5 // pred_fallthru
        _
      %p577 = scmp.lt.s32.totalorder %s30, 2
      // Predicated region
      $region93: #{bsbr_model.1} parent=5 // pred_check
        %p578 = pneg %p577
      $region94: #{bsbr_model.1} parent=5 // pred_check_branch
        %580 = sbr.rel (%p578) target = $region96
      $region95: #{bsbr_model.1} parent=5 // pred_region
        // Predicated region
        $region97: #{bsbr_model.1} parent=95 // pred_check
          %p581 = pneg %p50
        $region98: #{bsbr_model.1} parent=95 // pred_check_branch
          %583 = sbr.rel (%p581) target = $region100
        $region99: #{bsbr_model.1} parent=95 // pred_region
          %p584 = scmp.lt.s32.totalorder %s30, 1
          %s585 = scalar_select %p584, %s30, 1
          %s586 = smul.addr %s585, 2
          %s587 = smul.addr %s586, 8
          %s588 = scalar_lea.vmem %s0, %s587
        $region100: #{bsbr_model.1} parent=95 // pred_fallthru
          _
      $region96: #{bsbr_model.1} parent=5 // pred_fallthru
        _
      %p589 = scmp.le.s32.totalorder 1, %s30
      %p590 = scmp.lt.s32.totalorder %s30, 3
      %p591 = pnand %p589, %p590
      %p592 = pneg %p591
      // Predicated region
      $region101: #{bsbr_model.1} parent=5 // pred_check
        _
      $region102: #{bsbr_model.1} parent=5 // pred_check_branch
        %594 = sbr.rel (%p591) target = $region104
      $region103: #{bsbr_model.1} parent=5 // pred_region
        %s595 = ssub.s32 %s30, 1
        %p596 = scmp.lt.s32.totalorder %s35, 1
        %s597 = scalar_select %p596, %s35, 1
        %s598 = smul.addr %s597, 2
        %s599 = smul.addr %s598, 8
        %s600 = scalar_lea.vmem %s0, %s599
        %p601 = pneg %p56
        %p602 = pneg %p53
        %p603 = pneg %p77
        %p604 = pneg %p74
        %p605 = pneg %p98
        %p606 = pneg %p95
        %p607 = pneg %p119
        %p608 = pneg %p116
        %p609 = pneg %p140
        %p610 = pneg %p137
        %p611 = pneg %p161
        %p612 = pneg %p158
        %p613 = pneg %p182
        %p614 = pneg %p179
        %p615 = pneg %p203
        %p616 = pneg %p200
        %p617 = pneg %p224
        %p618 = pneg %p221
        %p619 = pneg %p245
        %p620 = pneg %p242
        %p621 = pneg %p266
        %p622 = pneg %p263
        %p623 = pneg %p287
        %p624 = pneg %p284
        %p625 = pneg %p308
        %p626 = pneg %p305
        %p627 = pneg %p329
        %p628 = pneg %p326
        %p629 = pneg %p350
        %p630 = pneg %p347
        %p631 = pneg %p371
        %p632 = pneg %p368
        %p633 = pneg %p392
        %p634 = pneg %p389
        %p635 = pneg %p413
        %p636 = pneg %p410
        %p637 = pneg %p434
        %p638 = pneg %p431
        %p639 = pneg %p455
        %p640 = pneg %p452
        %p641 = pneg %p476
        %p642 = pneg %p473
        %p643 = pneg %p502
        %p644 = pneg %p499
        %s645 = sand.u32 %s489, 1
        %s646 = scalar_lea.sflag [#allocation4], %s645
        %s647 = sand.u32 %s489, 1
        %s648 = smul.addr %s647, 16
        %s649 = scalar_lea.vmem [#allocation3], %s648
        %p650 = scmp.lt.s32.totalorder %s35, 1
        %s651 = scalar_select %p650, %s35, 1
        %s652 = smul.addr %s651, 2
        %s653 = smul.addr %s652, 8
        %s654 = scalar_lea.vmem %s0, %s653
        %v655 = vld [vmem:[%s654] sm:$0xff]
        %v656 = vld [vmem:[%s654 + $0x8] sm:$0xff]
        %v657 = vld [vmem:[%s1] sm:$0xff]
        %v658 = vld [vmem:[%s1 + $0x8] sm:$0xff]
        %v659 = vld [vmem:[%s2] sm:$0x3]
        %v660 = vld [vmem:[%s3] sm:$0xff]
        %v661 = vld [vmem:[%s3 + $0x8] sm:$0xff]
        %v662 = vld [vmem:[%s4] sm:$0x3]
        %v663 = vld [vmem:[%s5] sm:$0x1]
        %v664 = vld [vmem:[%s6] sm:$0x1]
        %vm665 = vcmask 261120
        %v666 = vsel %vm665, %v655, 0.0
        %667 = vadd.xlane.f32.xlu0 %v666
        %v668 = vpop.xlane.xlu0 %667
        %v669 = vsel %vm665, %v656, 0.0
        %670 = vadd.xlane.f32.xlu0 %v669
        %v671 = vpop.xlane.xlu0 %670
        %v672 = vrcp.pop 32.0
        %v673 = vmul.f32 %v668, %v672
        %v674 = vmul.f32 %v671, %v672
        %v675 = vsub.f32 %v655, %v673
        %v676 = vsub.f32 %v656, %v674
        %v677 = vmul.f32 %v675, %v675
        %v678 = vmul.f32 %v676, %v676
        %v679 = vsel %vm665, %v677, 0.0
        %680 = vadd.xlane.f32.xlu0 %v679
        %v681 = vpop.xlane.xlu0 %680
        %v682 = vsel %vm665, %v678, 0.0
        %683 = vadd.xlane.f32.xlu0 %v682
        %v684 = vpop.xlane.xlu0 %683
        %v685 = vmul.f32 %v681, %v672
        %v686 = vmul.f32 %v684, %v672
        %v687 = vadd.f32 %v685, 1e-05
        %v688 = vadd.f32 %v686, 1e-05
        %v689 = vrsqrt.pop %v687
        %v690 = vrsqrt.pop %v688
        %v691 = vmul.f32 %v675, %v689
        %v692 = vmul.f32 %v676, %v690
        %v694 = vlaneseq
        %v695 = vshrl.u32 %v694, 7
        %v696 = vsub.s32 0, %v695
        %v697 = vrot.slane %v663, %v696
        %v699 = vmul.f32 %v691, %v697
        %v700 = vmul.f32 %v692, %v697
        %v702 = vlaneseq
        %v703 = vshrl.u32 %v702, 7
        %v704 = vsub.s32 0, %v703
        %v705 = vrot.slane %v664, %v704
        %v707 = vadd.f32 %v699, %v705
        %v708 = vadd.f32 %v700, %v705
        %v709 = vld [vmem:[%s7] sm:$0xff]
        %v710 = vld [vmem:[%s7 + $0x8] sm:$0xff]
        %v711 = vld [vmem:[%s7 + $0x10] sm:$0xff]
        %v712 = vld [vmem:[%s7 + $0x18] sm:$0xff]
        %v713 = vld [vmem:[%s8] sm:$0x1]
        %v715 = vlaneseq
        %v716 = vshrl.u32 %v715, 7
        %v717 = vsub.s32 0, %v716
        %v718 = vrot.slane %v713, %v717
        %v721 = vsel %vm665, %v707, 0
        %v724 = vsel %vm665, %v708, 0
        %726 = vmatprep.subr.mxu0 0.0
        %727 = vmatpush1.msra.mxu0 %v709
        %728 = vmatprep.subr.mxu0 0.0
        %729 = vmatpush1.msra.mxu0 %v710
        %730 = vmatprep.subr.mxu0 0.0
        %731 = vmatpush1.msra.mxu0 %v711
        %732 = vmatprep.subr.mxu0 0.0
        %733 = vmatpush1.msra.mxu0 %v712
        %734 = vmatprep.subr.mxu0 0.0
        %735 = vmatpush1.msra.mxu0 0.0
        %736 = vmatprep.subr.mxu0 0.0
        %737 = vmatpush1.msra.mxu0 0.0
        %738 = vmatprep.subr.mxu0 0.0
        %739 = vmatpush1.msra.mxu0 0.0
        %740 = vmatprep.subr.mxu0 0.0
        %741 = vmatpush1.msra.mxu0 0.0
        %742 = vmatprep.subr.mxu0 0.0
        %743 = vmatpush1.msra.mxu0 0.0
        %744 = vmatprep.subr.mxu0 0.0
        %745 = vmatpush1.msra.mxu0 0.0
        %746 = vmatprep.subr.mxu0 0.0
        %747 = vmatpush1.msra.mxu0 0.0
        %748 = vmatprep.subr.mxu0 0.0
        %749 = vmatpush1.msra.mxu0 0.0
        %750 = vmatprep.subr.mxu0 0.0
        %751 = vmatpush1.msra.mxu0 0.0
        %752 = vmatprep.subr.mxu0 0.0
        %753 = vmatpush1.msra.mxu0 0.0
        %754 = vmatprep.subr.mxu0 0.0
        %755 = vmatpush1.msra.mxu0 0.0
        %756 = vmatprep.subr.mxu0 0.0
        %757 = vmatpush1.msra.mxu0 0.0
        %758 = vmatprep.subr.mxu0 0.0
        %759 = vmatpush1.msra.mxu0 0.0
        %760 = vmatprep.subr.mxu0 0.0
        %761 = vmatpush1.msra.mxu0 0.0
        %762 = vmatprep.subr.mxu0 0.0
        %763 = vmatpush1.msra.mxu0 0.0
        %764 = vmatprep.subr.mxu0 0.0
        %765 = vmatpush1.msra.mxu0 0.0
        %766 = vmatprep.subr.mxu0 0.0
        %767 = vmatpush1.msra.mxu0 0.0
        %768 = vmatprep.subr.mxu0 0.0
        %769 = vmatpush1.msra.mxu0 0.0
        %770 = vmatprep.subr.mxu0 0.0
        %771 = vmatpush1.msra.mxu0 0.0
        %772 = vmatprep.subr.mxu0 0.0
        %773 = vmatpush1.msra.mxu0 0.0
        %774 = vmatprep.subr.mxu0 0.0
        %775 = vmatpush1.msra.mxu0 0.0
        %776 = vmatprep.subr.mxu0 0.0
        %777 = vmatpush1.msra.mxu0 0.0
        %778 = vmatprep.subr.mxu0 0.0
        %779 = vmatpush1.msra.mxu0 0.0
        %780 = vmatprep.subr.mxu0 0.0
        %781 = vmatpush1.msra.mxu0 0.0
        %782 = vmatprep.subr.mxu0 0.0
        %783 = vmatpush1.msra.mxu0 0.0
        %784 = vmatprep.subr.mxu0 0.0
        %785 = vmatpush1.msra.mxu0 0.0
        %786 = vmatprep.subr.mxu0 0.0
        %787 = vmatpush1.msra.mxu0 0.0
        %788 = vmatprep.subr.mxu0 0.0
        %789 = vmatpush1.msra.mxu0 0.0
        %790 = vmatprep.mubr.f32.mxu0 0.0
        %791 = vmatmul.mubr.f32.gmra.mrb[0].mxu0 %v721
        %v792 = vpop.f32.mrb[0].mxu0
        %v793 = vadd.f32 %v718, %v792
        %v794 = vpop.f32.mrb[0].mxu0
        %795 = vmatprep.mubr.f32.mxu0 0.0
        %796 = vmatmul.mubr.f32.gmra.mrb[0].mxu0 %v724
        %v797 = vpop.f32.mrb[0].mxu0
        %v798 = vadd.f32 %v718, %v797
        %v799 = vpop.f32.mrb[0].mxu0
        %800 = vdwg.mxu0
        %vm801 = vcmask 130048
        %v803 = vsel %vm801, %v662, 0
        %805 = vmatprep.subr.mxu0 0.0
        %806 = vmatpush1.msra.mxu0 %v707
        %807 = vmatprep.subr.mxu0 0.0
        %808 = vmatpush1.msra.mxu0 %v708
        %809 = vmatprep.subr.mxu0 0.0
        %810 = vmatpush1.msra.mxu0 0.0
        %811 = vmatprep.subr.mxu0 0.0
        %812 = vmatpush1.msra.mxu0 0.0
        %813 = vmatprep.subr.mxu0 0.0
        %814 = vmatpush1.msra.mxu0 0.0
        %815 = vmatprep.subr.mxu0 0.0
        %816 = vmatpush1.msra.mxu0 0.0
        %817 = vmatprep.subr.mxu0 0.0
        %818 = vmatpush1.msra.mxu0 0.0
        %819 = vmatprep.subr.mxu0 0.0
        %820 = vmatpush1.msra.mxu0 0.0
        %821 = vmatprep.subr.mxu0 0.0
        %822 = vmatpush1.msra.mxu0 0.0
        %823 = vmatprep.subr.mxu0 0.0
        %824 = vmatpush1.msra.mxu0 0.0
        %825 = vmatprep.subr.mxu0 0.0
        %826 = vmatpush1.msra.mxu0 0.0
        %827 = vmatprep.subr.mxu0 0.0
        %828 = vmatpush1.msra.mxu0 0.0
        %829 = vmatprep.subr.mxu0 0.0
        %830 = vmatpush1.msra.mxu0 0.0
        %831 = vmatprep.subr.mxu0 0.0
        %832 = vmatpush1.msra.mxu0 0.0
        %833 = vmatprep.subr.mxu0 0.0
        %834 = vmatpush1.msra.mxu0 0.0
        %835 = vmatprep.subr.mxu0 0.0
        %836 = vmatpush1.msra.mxu0 0.0
        %837 = vmatprep.subr.mxu0 0.0
        %838 = vmatpush1.msra.mxu0 0.0
        %839 = vmatprep.subr.mxu0 0.0
        %840 = vmatpush1.msra.mxu0 0.0
        %841 = vmatprep.subr.mxu0 0.0
        %842 = vmatpush1.msra.mxu0 0.0
        %843 = vmatprep.subr.mxu0 0.0
        %844 = vmatpush1.msra.mxu0 0.0
        %845 = vmatprep.subr.mxu0 0.0
        %846 = vmatpush1.msra.mxu0 0.0
        %847 = vmatprep.subr.mxu0 0.0
        %848 = vmatpush1.msra.mxu0 0.0
        %849 = vmatprep.subr.mxu0 0.0
        %850 = vmatpush1.msra.mxu0 0.0
        %851 = vmatprep.subr.mxu0 0.0
        %852 = vmatpush1.msra.mxu0 0.0
        %853 = vmatprep.subr.mxu0 0.0
        %854 = vmatpush1.msra.mxu0 0.0
        %855 = vmatprep.subr.mxu0 0.0
        %856 = vmatpush1.msra.mxu0 0.0
        %857 = vmatprep.subr.mxu0 0.0
        %858 = vmatpush1.msra.mxu0 0.0
        %859 = vmatprep.subr.mxu0 0.0
        %860 = vmatpush1.msra.mxu0 0.0
        %861 = vmatprep.subr.mxu0 0.0
        %862 = vmatpush1.msra.mxu0 0.0
        %863 = vmatprep.subr.mxu0 0.0
        %864 = vmatpush1.msra.mxu0 0.0
        %865 = vmatprep.subr.mxu0 0.0
        %866 = vmatpush1.msra.mxu0 0.0
        %867 = vmatprep.subr.mxu0 0.0
        %868 = vmatpush1.msra.mxu0 0.0
        %869 = vmatprep.mubr.f32.mxu0 0.0
        %870 = vmatmul.mubr.f32.gmra.mrb[0].mxu0 %v803
        %v871 = vpop.f32.mrb[0].mxu0
        %v872 = vadd.f32 0.0, %v871
        %v873 = vpop.f32.mrb[0].mxu0
        %874 = vdwg.mxu0
        %v875 = vld [vmem:[%s9] sm:$0xff]
        %v876 = vld [vmem:[%s9 + $0x8] sm:$0xff]
        %v877 = vld [vmem:[%s9 + $0x10] sm:$0xff]
        %v878 = vld [vmem:[%s9 + $0x18] sm:$0xff]
        %v879 = vld [vmem:[%s10] sm:$0x1]
        %v881 = vlaneseq
        %v882 = vshrl.u32 %v881, 7
        %v883 = vsub.s32 0, %v882
        %v884 = vrot.slane %v879, %v883
        %v887 = vsel %vm665, %v872, 0
        %889 = vmatprep.subr.mxu0 0.0
        %890 = vmatpush1.msra.mxu0 %v875
        %891 = vmatprep.subr.mxu0 0.0
        %892 = vmatpush1.msra.mxu0 %v876
        %893 = vmatprep.subr.mxu0 0.0
        %894 = vmatpush1.msra.mxu0 %v877
        %895 = vmatprep.subr.mxu0 0.0
        %896 = vmatpush1.msra.mxu0 %v878
        %897 = vmatprep.subr.mxu0 0.0
        %898 = vmatpush1.msra.mxu0 0.0
        %899 = vmatprep.subr.mxu0 0.0
        %900 = vmatpush1.msra.mxu0 0.0
        %901 = vmatprep.subr.mxu0 0.0
        %902 = vmatpush1.msra.mxu0 0.0
        %903 = vmatprep.subr.mxu0 0.0
        %904 = vmatpush1.msra.mxu0 0.0
        %905 = vmatprep.subr.mxu0 0.0
        %906 = vmatpush1.msra.mxu0 0.0
        %907 = vmatprep.subr.mxu0 0.0
        %908 = vmatpush1.msra.mxu0 0.0
        %909 = vmatprep.subr.mxu0 0.0
        %910 = vmatpush1.msra.mxu0 0.0
        %911 = vmatprep.subr.mxu0 0.0
        %912 = vmatpush1.msra.mxu0 0.0
        %913 = vmatprep.subr.mxu0 0.0
        %914 = vmatpush1.msra.mxu0 0.0
        %915 = vmatprep.subr.mxu0 0.0
        %916 = vmatpush1.msra.mxu0 0.0
        %917 = vmatprep.subr.mxu0 0.0
        %918 = vmatpush1.msra.mxu0 0.0
        %919 = vmatprep.subr.mxu0 0.0
        %920 = vmatpush1.msra.mxu0 0.0
        %921 = vmatprep.subr.mxu0 0.0
        %922 = vmatpush1.msra.mxu0 0.0
        %923 = vmatprep.subr.mxu0 0.0
        %924 = vmatpush1.msra.mxu0 0.0
        %925 = vmatprep.subr.mxu0 0.0
        %926 = vmatpush1.msra.mxu0 0.0
        %927 = vmatprep.subr.mxu0 0.0
        %928 = vmatpush1.msra.mxu0 0.0
        %929 = vmatprep.subr.mxu0 0.0
        %930 = vmatpush1.msra.mxu0 0.0
        %931 = vmatprep.subr.mxu0 0.0
        %932 = vmatpush1.msra.mxu0 0.0
        %933 = vmatprep.subr.mxu0 0.0
        %934 = vmatpush1.msra.mxu0 0.0
        %935 = vmatprep.subr.mxu0 0.0
        %936 = vmatpush1.msra.mxu0 0.0
        %937 = vmatprep.subr.mxu0 0.0
        %938 = vmatpush1.msra.mxu0 0.0
        %939 = vmatprep.subr.mxu0 0.0
        %940 = vmatpush1.msra.mxu0 0.0
        %941 = vmatprep.subr.mxu0 0.0
        %942 = vmatpush1.msra.mxu0 0.0
        %943 = vmatprep.subr.mxu0 0.0
        %944 = vmatpush1.msra.mxu0 0.0
        %945 = vmatprep.subr.mxu0 0.0
        %946 = vmatpush1.msra.mxu0 0.0
        %947 = vmatprep.subr.mxu0 0.0
        %948 = vmatpush1.msra.mxu0 0.0
        %949 = vmatprep.subr.mxu0 0.0
        %950 = vmatpush1.msra.mxu0 0.0
        %951 = vmatprep.subr.mxu0 0.0
        %952 = vmatpush1.msra.mxu0 0.0
        %953 = vmatprep.mubr.f32.mxu0 0.0
        %954 = vmatmul.mubr.f32.gmra.mrb[0].mxu0 %v887
        %v955 = vpop.f32.mrb[0].mxu0
        %v956 = vadd.f32 %v884, %v955
        %v957 = vpop.f32.mrb[0].mxu0
        %958 = vdwg.mxu0
        %961 = vrot.lane.b32.xlu0 %v793, 96
        %v962 = vpop.permute.xlu0 %961
        %963 = vrot.lane.b32.xlu0 %v798, 96
        %v964 = vpop.permute.xlu0 %963
        %vm965 = vcmask 64512
        %v966 = vsel %vm965, %v793, 0
        %v968 = vsel %vm965, %v798, 0
        %v970 = vsel %vm965, %v962, 0
        %v972 = vsel %vm965, %v964, 0
        %974 = vmatprep.subr.mxu0 0.0
        %975 = vmatpush1.xpose.msra.mxu0 %v970
        %976 = vmatprep.subr.mxu0 0.0
        %977 = vmatpush1.xpose.msra.mxu0 %v972
        %978 = vmatprep.subr.mxu0 0.0
        %979 = vmatpush1.xpose.msra.mxu0 0.0
        %980 = vmatprep.subr.mxu0 0.0
        %981 = vmatpush1.xpose.msra.mxu0 0.0
        %982 = vmatprep.subr.mxu0 0.0
        %983 = vmatpush1.xpose.msra.mxu0 0.0
        %984 = vmatprep.subr.mxu0 0.0
        %985 = vmatpush1.xpose.msra.mxu0 0.0
        %986 = vmatprep.subr.mxu0 0.0
        %987 = vmatpush1.xpose.msra.mxu0 0.0
        %988 = vmatprep.subr.mxu0 0.0
        %989 = vmatpush1.xpose.msra.mxu0 0.0
        %990 = vmatprep.subr.mxu0 0.0
        %991 = vmatpush1.xpose.msra.mxu0 0.0
        %992 = vmatprep.subr.mxu0 0.0
        %993 = vmatpush1.xpose.msra.mxu0 0.0
        %994 = vmatprep.subr.mxu0 0.0
        %995 = vmatpush1.xpose.msra.mxu0 0.0
        %996 = vmatprep.subr.mxu0 0.0
        %997 = vmatpush1.xpose.msra.mxu0 0.0
        %998 = vmatprep.subr.mxu0 0.0
        %999 = vmatpush1.xpose.msra.mxu0 0.0
        %1000 = vmatprep.subr.mxu0 0.0
        %1001 = vmatpush1.xpose.msra.mxu0 0.0
        %1002 = vmatprep.subr.mxu0 0.0
        %1003 = vmatpush1.xpose.msra.mxu0 0.0
        %1004 = vmatprep.subr.mxu0 0.0
        %1005 = vmatpush1.xpose.msra.mxu0 0.0
        %1006 = vmatprep.subr.mxu0 0.0
        %1007 = vmatpush1.xpose.msra.mxu0 0.0
        %1008 = vmatprep.subr.mxu0 0.0
        %1009 = vmatpush1.xpose.msra.mxu0 0.0
        %1010 = vmatprep.subr.mxu0 0.0
        %1011 = vmatpush1.xpose.msra.mxu0 0.0
        %1012 = vmatprep.subr.mxu0 0.0
        %1013 = vmatpush1.xpose.msra.mxu0 0.0
        %1014 = vmatprep.subr.mxu0 0.0
        %1015 = vmatpush1.xpose.msra.mxu0 0.0
        %1016 = vmatprep.subr.mxu0 0.0
        %1017 = vmatpush1.xpose.msra.mxu0 0.0
        %1018 = vmatprep.subr.mxu0 0.0
        %1019 = vmatpush1.xpose.msra.mxu0 0.0
        %1020 = vmatprep.subr.mxu0 0.0
        %1021 = vmatpush1.xpose.msra.mxu0 0.0
        %1022 = vmatprep.subr.mxu0 0.0
        %1023 = vmatpush1.xpose.msra.mxu0 0.0
        %1024 = vmatprep.subr.mxu0 0.0
        %1025 = vmatpush1.xpose.msra.mxu0 0.0
        %1026 = vmatprep.subr.mxu0 0.0
        %1027 = vmatpush1.xpose.msra.mxu0 0.0
        %1028 = vmatprep.subr.mxu0 0.0
        %1029 = vmatpush1.xpose.msra.mxu0 0.0
        %1030 = vmatprep.subr.mxu0 0.0
        %1031 = vmatpush1.xpose.msra.mxu0 0.0
        %1032 = vmatprep.subr.mxu0 0.0
        %1033 = vmatpush1.xpose.msra.mxu0 0.0
        %1034 = vmatprep.subr.mxu0 0.0
        %1035 = vmatpush1.xpose.msra.mxu0 0.0
        %1036 = vmatprep.subr.mxu0 0.0
        %1037 = vmatpush1.xpose.msra.mxu0 0.0
        %1038 = vmatprep.mubr.f32.mxu0 0.0
        %1039 = vmatmul.mubr.f32.gmra.mrb[0].mxu0 %v966
        %v1040 = vpop.f32.mrb[0].mxu0
        %v1041 = vadd.f32 0.0, %v1040
        %v1042 = vpop.f32.mrb[0].mxu0
        %1043 = vmatprep.mubr.f32.mxu0 0.0
        %1044 = vmatmul.mubr.f32.gmra.mrb[0].mxu0 %v968
        %v1045 = vpop.f32.mrb[0].mxu0
        %v1046 = vadd.f32 0.0, %v1045
        %v1047 = vpop.f32.mrb[0].mxu0
        %1048 = vdwg.mxu0
        %v1049 = vmul.f32 %v1041, 0.35355338
        %v1050 = vmul.f32 %v1046, 0.35355338
        %v1051 = vadd.f32 %v1049, %v657
        %v1052 = vadd.f32 %v1050, %v658
        %v1053 = vsel %vm801, %v1051, -inf
        %1054 = vmax.xlane.f32.xlu0 %v1053
        %v1055 = vpop.xlane.xlu0 %1054
        %v1056 = vsel %vm801, %v1052, -inf
        %1057 = vmax.xlane.f32.xlu0 %v1056
        %v1058 = vpop.xlane.xlu0 %1057
        %v1059 = vsub.f32 %v1051, %v1055
        %v1060 = vsub.f32 %v1052, %v1058
        %v1061 = vmul.f32 %v1059, 1.442695
        %v1062 = vpow.pop %v1061
        %v1063 = vmul.f32 %v1060, 1.442695
        %v1064 = vpow.pop %v1063
        %v1065 = vsel %vm801, %v1062, 0.0
        %1066 = vadd.xlane.f32.xlu0 %v1065
        %v1067 = vpop.xlane.xlu0 %1066
        %v1068 = vsel %vm801, %v1064, 0.0
        %1069 = vadd.xlane.f32.xlu0 %v1068
        %v1070 = vpop.xlane.xlu0 %1069
        %v1071 = vrcp.pop %v1067
        %v1072 = vrcp.pop %v1070
        %v1073 = vmul.f32 %v1062, %v1071
        %v1074 = vmul.f32 %v1064, %v1072
        %1075 = vrot.lane.b32.xlu0 %v793, 64
        %v1076 = vpop.permute.xlu0 %1075
        %1077 = vrot.lane.b32.xlu0 %v798, 64
        %v1078 = vpop.permute.xlu0 %1077
        %v1082 = vsel %vm801, %v1073, 0
        %v1085 = vsel %vm801, %v1074, 0
        %1087 = vmatprep.subr.mxu0 0.0
        %1088 = vmatpush1.msra.mxu0 %v1076
        %1089 = vmatprep.subr.mxu0 0.0
        %1090 = vmatpush1.msra.mxu0 %v1078
        %1091 = vmatprep.subr.mxu0 0.0
        %1092 = vmatpush1.msra.mxu0 0.0
        %1093 = vmatprep.subr.mxu0 0.0
        %1094 = vmatpush1.msra.mxu0 0.0
        %1095 = vmatprep.subr.mxu0 0.0
        %1096 = vmatpush1.msra.mxu0 0.0
        %1097 = vmatprep.subr.mxu0 0.0
        %1098 = vmatpush1.msra.mxu0 0.0
        %1099 = vmatprep.subr.mxu0 0.0
        %1100 = vmatpush1.msra.mxu0 0.0
        %1101 = vmatprep.subr.mxu0 0.0
        %1102 = vmatpush1.msra.mxu0 0.0
        %1103 = vmatprep.subr.mxu0 0.0
        %1104 = vmatpush1.msra.mxu0 0.0
        %1105 = vmatprep.subr.mxu0 0.0
        %1106 = vmatpush1.msra.mxu0 0.0
        %1107 = vmatprep.subr.mxu0 0.0
        %1108 = vmatpush1.msra.mxu0 0.0
        %1109 = vmatprep.subr.mxu0 0.0
        %1110 = vmatpush1.msra.mxu0 0.0
        %1111 = vmatprep.subr.mxu0 0.0
        %1112 = vmatpush1.msra.mxu0 0.0
        %1113 = vmatprep.subr.mxu0 0.0
        %1114 = vmatpush1.msra.mxu0 0.0
        %1115 = vmatprep.subr.mxu0 0.0
        %1116 = vmatpush1.msra.mxu0 0.0
        %1117 = vmatprep.subr.mxu0 0.0
        %1118 = vmatpush1.msra.mxu0 0.0
        %1119 = vmatprep.subr.mxu0 0.0
        %1120 = vmatpush1.msra.mxu0 0.0
        %1121 = vmatprep.subr.mxu0 0.0
        %1122 = vmatpush1.msra.mxu0 0.0
        %1123 = vmatprep.subr.mxu0 0.0
        %1124 = vmatpush1.msra.mxu0 0.0
        %1125 = vmatprep.subr.mxu0 0.0
        %1126 = vmatpush1.msra.mxu0 0.0
        %1127 = vmatprep.subr.mxu0 0.0
        %1128 = vmatpush1.msra.mxu0 0.0
        %1129 = vmatprep.subr.mxu0 0.0
        %1130 = vmatpush1.msra.mxu0 0.0
        %1131 = vmatprep.subr.mxu0 0.0
        %1132 = vmatpush1.msra.mxu0 0.0
        %1133 = vmatprep.subr.mxu0 0.0
        %1134 = vmatpush1.msra.mxu0 0.0
        %1135 = vmatprep.subr.mxu0 0.0
        %1136 = vmatpush1.msra.mxu0 0.0
        %1137 = vmatprep.subr.mxu0 0.0
        %1138 = vmatpush1.msra.mxu0 0.0
        %1139 = vmatprep.subr.mxu0 0.0
        %1140 = vmatpush1.msra.mxu0 0.0
        %1141 = vmatprep.subr.mxu0 0.0
        %1142 = vmatpush1.msra.mxu0 0.0
        %1143 = vmatprep.subr.mxu0 0.0
        %1144 = vmatpush1.msra.mxu0 0.0
        %1145 = vmatprep.subr.mxu0 0.0
        %1146 = vmatpush1.msra.mxu0 0.0
        %1147 = vmatprep.subr.mxu0 0.0
        %1148 = vmatpush1.msra.mxu0 0.0
        %1149 = vmatprep.subr.mxu0 0.0
        %1150 = vmatpush1.msra.mxu0 0.0
        %1151 = vmatprep.mubr.f32.mxu0 0.0
        %1152 = vmatmul.mubr.f32.gmra.mrb[0].mxu0 %v1082
        %v1153 = vpop.f32.mrb[0].mxu0
        %v1154 = vadd.f32 0.0, %v1153
        %v1155 = vpop.f32.mrb[0].mxu0
        %1156 = vmatprep.mubr.f32.mxu0 0.0
        %1157 = vmatmul.mubr.f32.gmra.mrb[0].mxu0 %v1085
        %v1158 = vpop.f32.mrb[0].mxu0
        %v1159 = vadd.f32 0.0, %v1158
        %v1160 = vpop.f32.mrb[0].mxu0
        %1161 = vdwg.mxu0
        %1163 = vrot.lane.b32.xlu0 %v956, 96
        %v1164 = vpop.permute.xlu0 %1163
        %v1165 = vsel %vm965, %v956, 0
        %v1167 = vsel %vm965, %v1164, 0
        %1169 = vmatprep.subr.mxu0 0.0
        %1170 = vmatpush1.xpose.msra.mxu0 %v1167
        %1171 = vmatprep.subr.mxu0 0.0
        %1172 = vmatpush1.xpose.msra.mxu0 0.0
        %1173 = vmatprep.subr.mxu0 0.0
        %1174 = vmatpush1.xpose.msra.mxu0 0.0
        %1175 = vmatprep.subr.mxu0 0.0
        %1176 = vmatpush1.xpose.msra.mxu0 0.0
        %1177 = vmatprep.subr.mxu0 0.0
        %1178 = vmatpush1.xpose.msra.mxu0 0.0
        %1179 = vmatprep.subr.mxu0 0.0
        %1180 = vmatpush1.xpose.msra.mxu0 0.0
        %1181 = vmatprep.subr.mxu0 0.0
        %1182 = vmatpush1.xpose.msra.mxu0 0.0
        %1183 = vmatprep.subr.mxu0 0.0
        %1184 = vmatpush1.xpose.msra.mxu0 0.0
        %1185 = vmatprep.subr.mxu0 0.0
        %1186 = vmatpush1.xpose.msra.mxu0 0.0
        %1187 = vmatprep.subr.mxu0 0.0
        %1188 = vmatpush1.xpose.msra.mxu0 0.0
        %1189 = vmatprep.subr.mxu0 0.0
        %1190 = vmatpush1.xpose.msra.mxu0 0.0
        %1191 = vmatprep.subr.mxu0 0.0
        %1192 = vmatpush1.xpose.msra.mxu0 0.0
        %1193 = vmatprep.subr.mxu0 0.0
        %1194 = vmatpush1.xpose.msra.mxu0 0.0
        %1195 = vmatprep.subr.mxu0 0.0
        %1196 = vmatpush1.xpose.msra.mxu0 0.0
        %1197 = vmatprep.subr.mxu0 0.0
        %1198 = vmatpush1.xpose.msra.mxu0 0.0
        %1199 = vmatprep.subr.mxu0 0.0
        %1200 = vmatpush1.xpose.msra.mxu0 0.0
        %1201 = vmatprep.subr.mxu0 0.0
        %1202 = vmatpush1.xpose.msra.mxu0 0.0
        %1203 = vmatprep.subr.mxu0 0.0
        %1204 = vmatpush1.xpose.msra.mxu0 0.0
        %1205 = vmatprep.subr.mxu0 0.0
        %1206 = vmatpush1.xpose.msra.mxu0 0.0
        %1207 = vmatprep.subr.mxu0 0.0
        %1208 = vmatpush1.xpose.msra.mxu0 0.0
        %1209 = vmatprep.subr.mxu0 0.0
        %1210 = vmatpush1.xpose.msra.mxu0 0.0
        %1211 = vmatprep.subr.mxu0 0.0
        %1212 = vmatpush1.xpose.msra.mxu0 0.0
        %1213 = vmatprep.subr.mxu0 0.0
        %1214 = vmatpush1.xpose.msra.mxu0 0.0
        %1215 = vmatprep.subr.mxu0 0.0
        %1216 = vmatpush1.xpose.msra.mxu0 0.0
        %1217 = vmatprep.subr.mxu0 0.0
        %1218 = vmatpush1.xpose.msra.mxu0 0.0
        %1219 = vmatprep.subr.mxu0 0.0
        %1220 = vmatpush1.xpose.msra.mxu0 0.0
        %1221 = vmatprep.subr.mxu0 0.0
        %1222 = vmatpush1.xpose.msra.mxu0 0.0
        %1223 = vmatprep.subr.mxu0 0.0
        %1224 = vmatpush1.xpose.msra.mxu0 0.0
        %1225 = vmatprep.subr.mxu0 0.0
        %1226 = vmatpush1.xpose.msra.mxu0 0.0
        %1227 = vmatprep.subr.mxu0 0.0
        %1228 = vmatpush1.xpose.msra.mxu0 0.0
        %1229 = vmatprep.subr.mxu0 0.0
        %1230 = vmatpush1.xpose.msra.mxu0 0.0
        %1231 = vmatprep.subr.mxu0 0.0
        %1232 = vmatpush1.xpose.msra.mxu0 0.0
        %1233 = vmatprep.mubr.f32.mxu0 0.0
        %1234 = vmatmul.mubr.f32.gmra.mrb[0].mxu0 %v1165
        %v1235 = vpop.f32.mrb[0].mxu0
        %v1236 = vadd.f32 0.0, %v1235
        %v1237 = vpop.f32.mrb[0].mxu0
        %1238 = vdwg.mxu0
        %v1239 = vmul.f32 %v1236, 0.35355338
        %v1240 = vadd.f32 %v1239, %v659
        %vm1241 = vcmask 9216
        %v1242 = vsel %vm1241, %v1240, -inf
        %1243 = vmax.xlane.f32.xlu0 %v1242
        %v1244 = vpop.xlane.xlu0 %1243
        %v1245 = vsub.f32 %v1240, %v1244
        %v1246 = vmul.f32 %v1245, 1.442695
        %v1247 = vpow.pop %v1246
        %v1248 = vsel %vm1241, %v1247, 0.0
        %1249 = vadd.xlane.f32.xlu0 %v1248
        %v1250 = vpop.xlane.xlu0 %1249
        %v1251 = vrcp.pop %v1250
        %v1252 = vmul.f32 %v1247, %v1251
        %vm1253 = vcmask 15360
        %v1255 = vsel %vm1253, %v660, 0
        %v1258 = vsel %vm1253, %v661, 0
        %v1261 = vsel %vm1253, %v1252, 0
        %1263 = vmatprep.subr.mxu0 0.0
        %1264 = vmatpush1.xpose.msra.mxu0 %v1261
        %1265 = vmatprep.subr.mxu0 0.0
        %1266 = vmatpush1.xpose.msra.mxu0 0.0
        %1267 = vmatprep.subr.mxu0 0.0
        %1268 = vmatpush1.xpose.msra.mxu0 0.0
        %1269 = vmatprep.subr.mxu0 0.0
        %1270 = vmatpush1.xpose.msra.mxu0 0.0
        %1271 = vmatprep.subr.mxu0 0.0
        %1272 = vmatpush1.xpose.msra.mxu0 0.0
        %1273 = vmatprep.subr.mxu0 0.0
        %1274 = vmatpush1.xpose.msra.mxu0 0.0
        %1275 = vmatprep.subr.mxu0 0.0
        %1276 = vmatpush1.xpose.msra.mxu0 0.0
        %1277 = vmatprep.subr.mxu0 0.0
        %1278 = vmatpush1.xpose.msra.mxu0 0.0
        %1279 = vmatprep.subr.mxu0 0.0
        %1280 = vmatpush1.xpose.msra.mxu0 0.0
        %1281 = vmatprep.subr.mxu0 0.0
        %1282 = vmatpush1.xpose.msra.mxu0 0.0
        %1283 = vmatprep.subr.mxu0 0.0
        %1284 = vmatpush1.xpose.msra.mxu0 0.0
        %1285 = vmatprep.subr.mxu0 0.0
        %1286 = vmatpush1.xpose.msra.mxu0 0.0
        %1287 = vmatprep.subr.mxu0 0.0
        %1288 = vmatpush1.xpose.msra.mxu0 0.0
        %1289 = vmatprep.subr.mxu0 0.0
        %1290 = vmatpush1.xpose.msra.mxu0 0.0
        %1291 = vmatprep.subr.mxu0 0.0
        %1292 = vmatpush1.xpose.msra.mxu0 0.0
        %1293 = vmatprep.subr.mxu0 0.0
        %1294 = vmatpush1.xpose.msra.mxu0 0.0
        %1295 = vmatprep.subr.mxu0 0.0
        %1296 = vmatpush1.xpose.msra.mxu0 0.0
        %1297 = vmatprep.subr.mxu0 0.0
        %1298 = vmatpush1.xpose.msra.mxu0 0.0
        %1299 = vmatprep.subr.mxu0 0.0
        %1300 = vmatpush1.xpose.msra.mxu0 0.0
        %1301 = vmatprep.subr.mxu0 0.0
        %1302 = vmatpush1.xpose.msra.mxu0 0.0
        %1303 = vmatprep.subr.mxu0 0.0
        %1304 = vmatpush1.xpose.msra.mxu0 0.0
        %1305 = vmatprep.subr.mxu0 0.0
        %1306 = vmatpush1.xpose.msra.mxu0 0.0
        %1307 = vmatprep.subr.mxu0 0.0
        %1308 = vmatpush1.xpose.msra.mxu0 0.0
        %1309 = vmatprep.subr.mxu0 0.0
        %1310 = vmatpush1.xpose.msra.mxu0 0.0
        %1311 = vmatprep.subr.mxu0 0.0
        %1312 = vmatpush1.xpose.msra.mxu0 0.0
        %1313 = vmatprep.subr.mxu0 0.0
        %1314 = vmatpush1.xpose.msra.mxu0 0.0
        %1315 = vmatprep.subr.mxu0 0.0
        %1316 = vmatpush1.xpose.msra.mxu0 0.0
        %1317 = vmatprep.subr.mxu0 0.0
        %1318 = vmatpush1.xpose.msra.mxu0 0.0
        %1319 = vmatprep.subr.mxu0 0.0
        %1320 = vmatpush1.xpose.msra.mxu0 0.0
        %1321 = vmatprep.subr.mxu0 0.0
        %1322 = vmatpush1.xpose.msra.mxu0 0.0
        %1323 = vmatprep.subr.mxu0 0.0
        %1324 = vmatpush1.xpose.msra.mxu0 0.0
        %1325 = vmatprep.subr.mxu0 0.0
        %1326 = vmatpush1.xpose.msra.mxu0 0.0
        %1327 = vmatprep.mubr.f32.mxu0 0.0
        %1328 = vmatmul.mubr.f32.gmra.mrb[0].mxu0 %v1255
        %v1329 = vpop.f32.mrb[0].mxu0
        %v1330 = vadd.f32 0.0, %v1329
        %v1331 = vpop.f32.mrb[0].mxu0
        %1332 = vmatprep.mubr.f32.mxu0 0.0
        %1333 = vmatmul.mubr.f32.gmra.mrb[0].mxu0 %v1258
        %v1334 = vpop.f32.mrb[0].mxu0
        %v1335 = vadd.f32 0.0, %v1334
        %v1336 = vpop.f32.mrb[0].mxu0
        %1337 = vdwg.mxu0
        %1339 = vset.pattern.permute.xlu0 0
        %1340 = vperm.xlu0 %1339, %v1330
        %v1341 = vpop.permute.xlu0 %1340
        %1344 = vset.pattern.permute.xlu0 0
        %1345 = vperm.xlu0 %1344, %v1335
        %v1346 = vpop.permute.xlu0 %1345
        %v1348 = vmul.f32 %v1341, %v793
        %v1349 = vmul.f32 %v1346, %v798
        %1352 = vrot.lane.b32.xlu0 %v1348, 64
        %v1353 = vpop.permute.xlu0 %1352
        %1354 = vrot.lane.b32.xlu0 %v1349, 64
        %v1355 = vpop.permute.xlu0 %1354
        %v1359 = vsel %vm801, %v1041, 0
        %1361 = vmatprep.subr.mxu0 0.0
        %1362 = vmatpush1.msra.mxu0 %v1353
        %1363 = vmatprep.subr.mxu0 0.0
        %1364 = vmatpush1.msra.mxu0 %v1355
        %1365 = vmatprep.subr.mxu0 0.0
        %1366 = vmatpush1.msra.mxu0 0.0
        %1367 = vmatprep.subr.mxu0 0.0
        %1368 = vmatpush1.msra.mxu0 0.0
        %1369 = vmatprep.subr.mxu0 0.0
        %1370 = vmatpush1.msra.mxu0 0.0
        %1371 = vmatprep.subr.mxu0 0.0
        %1372 = vmatpush1.msra.mxu0 0.0
        %1373 = vmatprep.subr.mxu0 0.0
        %1374 = vmatpush1.msra.mxu0 0.0
        %1375 = vmatprep.subr.mxu0 0.0
        %1376 = vmatpush1.msra.mxu0 0.0
        %1377 = vmatprep.subr.mxu0 0.0
        %1378 = vmatpush1.msra.mxu0 0.0
        %1379 = vmatprep.subr.mxu0 0.0
        %1380 = vmatpush1.msra.mxu0 0.0
        %1381 = vmatprep.subr.mxu0 0.0
        %1382 = vmatpush1.msra.mxu0 0.0
        %1383 = vmatprep.subr.mxu0 0.0
        %1384 = vmatpush1.msra.mxu0 0.0
        %1385 = vmatprep.subr.mxu0 0.0
        %1386 = vmatpush1.msra.mxu0 0.0
        %1387 = vmatprep.subr.mxu0 0.0
        %1388 = vmatpush1.msra.mxu0 0.0
        %1389 = vmatprep.subr.mxu0 0.0
        %1390 = vmatpush1.msra.mxu0 0.0
        %1391 = vmatprep.subr.mxu0 0.0
        %1392 = vmatpush1.msra.mxu0 0.0
        %1393 = vmatprep.subr.mxu0 0.0
        %1394 = vmatpush1.msra.mxu0 0.0
        %1395 = vmatprep.subr.mxu0 0.0
        %1396 = vmatpush1.msra.mxu0 0.0
        %1397 = vmatprep.subr.mxu0 0.0
        %1398 = vmatpush1.msra.mxu0 0.0
        %1399 = vmatprep.subr.mxu0 0.0
        %1400 = vmatpush1.msra.mxu0 0.0
        %1401 = vmatprep.subr.mxu0 0.0
        %1402 = vmatpush1.msra.mxu0 0.0
        %1403 = vmatprep.subr.mxu0 0.0
        %1404 = vmatpush1.msra.mxu0 0.0
        %1405 = vmatprep.subr.mxu0 0.0
        %1406 = vmatpush1.msra.mxu0 0.0
        %1407 = vmatprep.subr.mxu0 0.0
        %1408 = vmatpush1.msra.mxu0 0.0
        %1409 = vmatprep.subr.mxu0 0.0
        %1410 = vmatpush1.msra.mxu0 0.0
        %1411 = vmatprep.subr.mxu0 0.0
        %1412 = vmatpush1.msra.mxu0 0.0
        %1413 = vmatprep.subr.mxu0 0.0
        %1414 = vmatpush1.msra.mxu0 0.0
        %1415 = vmatprep.subr.mxu0 0.0
        %1416 = vmatpush1.msra.mxu0 0.0
        %1417 = vmatprep.subr.mxu0 0.0
        %1418 = vmatpush1.msra.mxu0 0.0
        %1419 = vmatprep.subr.mxu0 0.0
        %1420 = vmatpush1.msra.mxu0 0.0
        %1421 = vmatprep.subr.mxu0 0.0
        %1422 = vmatpush1.msra.mxu0 0.0
        %1423 = vmatprep.subr.mxu0 0.0
        %1424 = vmatpush1.msra.mxu0 0.0
        %1425 = vmatprep.mubr.f32.mxu0 0.0
        %1426 = vmatmul.mubr.f32.gmra.mrb[0].mxu0 %v1359
        %v1427 = vpop.f32.mrb[0].mxu0
        %v1428 = vadd.f32 0.0, %v1427
        %v1429 = vpop.f32.mrb[0].mxu0
        %1430 = vdwg.mxu0
        %v1431 = vadd.f32 %v1154, %v1428
        %1432 = vst.msk [vmem:[#allocation2] sm:$0xff] %vm965, %v1431
        %1433 = vset.pattern.permute.xlu0 1
        %1434 = vperm.xlu0 %1433, %v1330
        %v1435 = vpop.permute.xlu0 %1434
        %1437 = vset.pattern.permute.xlu0 1
        %1438 = vperm.xlu0 %1437, %v1335
        %v1439 = vpop.permute.xlu0 %1438
        %v1441 = vmul.f32 %v1435, %v793
        %v1442 = vmul.f32 %v1439, %v798
        %1445 = vrot.lane.b32.xlu0 %v1441, 64
        %v1446 = vpop.permute.xlu0 %1445
        %1447 = vrot.lane.b32.xlu0 %v1442, 64
        %v1448 = vpop.permute.xlu0 %1447
        %v1452 = vsel %vm801, %v1046, 0
        %1454 = vmatprep.subr.mxu0 0.0
        %1455 = vmatpush1.msra.mxu0 %v1446
        %1456 = vmatprep.subr.mxu0 0.0
        %1457 = vmatpush1.msra.mxu0 %v1448
        %1458 = vmatprep.subr.mxu0 0.0
        %1459 = vmatpush1.msra.mxu0 0.0
        %1460 = vmatprep.subr.mxu0 0.0
        %1461 = vmatpush1.msra.mxu0 0.0
        %1462 = vmatprep.subr.mxu0 0.0
        %1463 = vmatpush1.msra.mxu0 0.0
        %1464 = vmatprep.subr.mxu0 0.0
        %1465 = vmatpush1.msra.mxu0 0.0
        %1466 = vmatprep.subr.mxu0 0.0
        %1467 = vmatpush1.msra.mxu0 0.0
        %1468 = vmatprep.subr.mxu0 0.0
        %1469 = vmatpush1.msra.mxu0 0.0
        %1470 = vmatprep.subr.mxu0 0.0
        %1471 = vmatpush1.msra.mxu0 0.0
        %1472 = vmatprep.subr.mxu0 0.0
        %1473 = vmatpush1.msra.mxu0 0.0
        %1474 = vmatprep.subr.mxu0 0.0
        %1475 = vmatpush1.msra.mxu0 0.0
        %1476 = vmatprep.subr.mxu0 0.0
        %1477 = vmatpush1.msra.mxu0 0.0
        %1478 = vmatprep.subr.mxu0 0.0
        %1479 = vmatpush1.msra.mxu0 0.0
        %1480 = vmatprep.subr.mxu0 0.0
        %1481 = vmatpush1.msra.mxu0 0.0
        %1482 = vmatprep.subr.mxu0 0.0
        %1483 = vmatpush1.msra.mxu0 0.0
        %1484 = vmatprep.subr.mxu0 0.0
        %1485 = vmatpush1.msra.mxu0 0.0
        %1486 = vmatprep.subr.mxu0 0.0
        %1487 = vmatpush1.msra.mxu0 0.0
        %1488 = vmatprep.subr.mxu0 0.0
        %1489 = vmatpush1.msra.mxu0 0.0
        %1490 = vmatprep.subr.mxu0 0.0
        %1491 = vmatpush1.msra.mxu0 0.0
        %1492 = vmatprep.subr.mxu0 0.0
        %1493 = vmatpush1.msra.mxu0 0.0
        %1494 = vmatprep.subr.mxu0 0.0
        %1495 = vmatpush1.msra.mxu0 0.0
        %1496 = vmatprep.subr.mxu0 0.0
        %1497 = vmatpush1.msra.mxu0 0.0
        %1498 = vmatprep.subr.mxu0 0.0
        %1499 = vmatpush1.msra.mxu0 0.0
        %1500 = vmatprep.subr.mxu0 0.0
        %1501 = vmatpush1.msra.mxu0 0.0
        %1502 = vmatprep.subr.mxu0 0.0
        %1503 = vmatpush1.msra.mxu0 0.0
        %1504 = vmatprep.subr.mxu0 0.0
        %1505 = vmatpush1.msra.mxu0 0.0
        %1506 = vmatprep.subr.mxu0 0.0
        %1507 = vmatpush1.msra.mxu0 0.0
        %1508 = vmatprep.subr.mxu0 0.0
        %1509 = vmatpush1.msra.mxu0 0.0
        %1510 = vmatprep.subr.mxu0 0.0
        %1511 = vmatpush1.msra.mxu0 0.0
        %1512 = vmatprep.subr.mxu0 0.0
        %1513 = vmatpush1.msra.mxu0 0.0
        %1514 = vmatprep.subr.mxu0 0.0
        %1515 = vmatpush1.msra.mxu0 0.0
        %1516 = vmatprep.subr.mxu0 0.0
        %1517 = vmatpush1.msra.mxu0 0.0
        %1518 = vmatprep.mubr.f32.mxu0 0.0
        %1519 = vmatmul.mubr.f32.gmra.mrb[0].mxu0 %v1452
        %v1520 = vpop.f32.mrb[0].mxu0
        %v1521 = vadd.f32 0.0, %v1520
        %v1522 = vpop.f32.mrb[0].mxu0
        %1523 = vdwg.mxu0
        %v1524 = vadd.f32 %v1159, %v1521
        %1525 = vst.msk [vmem:[#allocation2 + $0x8] sm:$0xff] %vm965, %v1524
        %1526 = vrot.lane.b32.xlu0 %v793, 120
        %v1527 = vpop.permute.xlu0 %1526
        %1528 = vrot.lane.b32.xlu0 %v798, 120
        %v1529 = vpop.permute.xlu0 %1528
        %1530 = vrot.lane.b32.xlu0 %v793, 88
        %v1531 = vpop.permute.xlu0 %1530
        %1532 = vrot.lane.b32.xlu0 %v798, 88
        %v1533 = vpop.permute.xlu0 %1532
        %v1534 = vsel %vm965, %v1527, 0
        %v1536 = vsel %vm965, %v1529, 0
        %v1538 = vsel %vm965, %v1531, 0
        %v1540 = vsel %vm965, %v1533, 0
        %1542 = vmatprep.subr.mxu0 0.0
        %1543 = vmatpush1.xpose.msra.mxu0 %v1538
        %1544 = vmatprep.subr.mxu0 0.0
        %1545 = vmatpush1.xpose.msra.mxu0 %v1540
        %1546 = vmatprep.subr.mxu0 0.0
        %1547 = vmatpush1.xpose.msra.mxu0 0.0
        %1548 = vmatprep.subr.mxu0 0.0
        %1549 = vmatpush1.xpose.msra.mxu0 0.0
        %1550 = vmatprep.subr.mxu0 0.0
        %1551 = vmatpush1.xpose.msra.mxu0 0.0
        %1552 = vmatprep.subr.mxu0 0.0
        %1553 = vmatpush1.xpose.msra.mxu0 0.0
        %1554 = vmatprep.subr.mxu0 0.0
        %1555 = vmatpush1.xpose.msra.mxu0 0.0
        %1556 = vmatprep.subr.mxu0 0.0
        %1557 = vmatpush1.xpose.msra.mxu0 0.0
        %1558 = vmatprep.subr.mxu0 0.0
        %1559 = vmatpush1.xpose.msra.mxu0 0.0
        %1560 = vmatprep.subr.mxu0 0.0
        %1561 = vmatpush1.xpose.msra.mxu0 0.0
        %1562 = vmatprep.subr.mxu0 0.0
        %1563 = vmatpush1.xpose.msra.mxu0 0.0
        %1564 = vmatprep.subr.mxu0 0.0
        %1565 = vmatpush1.xpose.msra.mxu0 0.0
        %1566 = vmatprep.subr.mxu0 0.0
        %1567 = vmatpush1.xpose.msra.mxu0 0.0
        %1568 = vmatprep.subr.mxu0 0.0
        %1569 = vmatpush1.xpose.msra.mxu0 0.0
        %1570 = vmatprep.subr.mxu0 0.0
        %1571 = vmatpush1.xpose.msra.mxu0 0.0
        %1572 = vmatprep.subr.mxu0 0.0
        %1573 = vmatpush1.xpose.msra.mxu0 0.0
        %1574 = vmatprep.subr.mxu0 0.0
        %1575 = vmatpush1.xpose.msra.mxu0 0.0
        %1576 = vmatprep.subr.mxu0 0.0
        %1577 = vmatpush1.xpose.msra.mxu0 0.0
        %1578 = vmatprep.subr.mxu0 0.0
        %1579 = vmatpush1.xpose.msra.mxu0 0.0
        %1580 = vmatprep.subr.mxu0 0.0
        %1581 = vmatpush1.xpose.msra.mxu0 0.0
        %1582 = vmatprep.subr.mxu0 0.0
        %1583 = vmatpush1.xpose.msra.mxu0 0.0
        %1584 = vmatprep.subr.mxu0 0.0
        %1585 = vmatpush1.xpose.msra.mxu0 0.0
        %1586 = vmatprep.subr.mxu0 0.0
        %1587 = vmatpush1.xpose.msra.mxu0 0.0
        %1588 = vmatprep.subr.mxu0 0.0
        %1589 = vmatpush1.xpose.msra.mxu0 0.0
        %1590 = vmatprep.subr.mxu0 0.0
        %1591 = vmatpush1.xpose.msra.mxu0 0.0
        %1592 = vmatprep.subr.mxu0 0.0
        %1593 = vmatpush1.xpose.msra.mxu0 0.0
        %1594 = vmatprep.subr.mxu0 0.0
        %1595 = vmatpush1.xpose.msra.mxu0 0.0
        %1596 = vmatprep.subr.mxu0 0.0
        %1597 = vmatpush1.xpose.msra.mxu0 0.0
        %1598 = vmatprep.subr.mxu0 0.0
        %1599 = vmatpush1.xpose.msra.mxu0 0.0
        %1600 = vmatprep.subr.mxu0 0.0
        %1601 = vmatpush1.xpose.msra.mxu0 0.0
        %1602 = vmatprep.subr.mxu0 0.0
        %1603 = vmatpush1.xpose.msra.mxu0 0.0
        %1604 = vmatprep.subr.mxu0 0.0
        %1605 = vmatpush1.xpose.msra.mxu0 0.0
        %1606 = vmatprep.mubr.f32.mxu0 0.0
        %1607 = vmatmul.mubr.f32.gmra.mrb[0].mxu0 %v1534
        %v1608 = vpop.f32.mrb[0].mxu0
        %v1609 = vadd.f32 0.0, %v1608
        %v1610 = vpop.f32.mrb[0].mxu0
        %1611 = vmatprep.mubr.f32.mxu0 0.0
        %1612 = vmatmul.mubr.f32.gmra.mrb[0].mxu0 %v1536
        %v1613 = vpop.f32.mrb[0].mxu0
        %v1614 = vadd.f32 0.0, %v1613
        %v1615 = vpop.f32.mrb[0].mxu0
        %1616 = vdwg.mxu0
        %v1617 = vmul.f32 %v1609, 0.35355338
        %v1618 = vmul.f32 %v1614, 0.35355338
        %v1619 = vadd.f32 %v1617, %v657
        %v1620 = vadd.f32 %v1618, %v658
        %v1621 = vsel %vm801, %v1619, -inf
        %1622 = vmax.xlane.f32.xlu0 %v1621
        %v1623 = vpop.xlane.xlu0 %1622
        %v1624 = vsel %vm801, %v1620, -inf
        %1625 = vmax.xlane.f32.xlu0 %v1624
        %v1626 = vpop.xlane.xlu0 %1625
        %v1627 = vsub.f32 %v1619, %v1623
        %v1628 = vsub.f32 %v1620, %v1626
        %v1629 = vmul.f32 %v1627, 1.442695
        %v1630 = vpow.pop %v1629
        %v1631 = vmul.f32 %v1628, 1.442695
        %v1632 = vpow.pop %v1631
        %v1633 = vsel %vm801, %v1630, 0.0
        %1634 = vadd.xlane.f32.xlu0 %v1633
        %v1635 = vpop.xlane.xlu0 %1634
        %v1636 = vsel %vm801, %v1632, 0.0
        %1637 = vadd.xlane.f32.xlu0 %v1636
        %v1638 = vpop.xlane.xlu0 %1637
        %v1639 = vrcp.pop %v1635
        %v1640 = vrcp.pop %v1638
        %v1641 = vmul.f32 %v1630, %v1639
        %v1642 = vmul.f32 %v1632, %v1640
        %1643 = vrot.lane.b32.xlu0 %v793, 56
        %v1644 = vpop.permute.xlu0 %1643
        %1645 = vrot.lane.b32.xlu0 %v798, 56
        %v1646 = vpop.permute.xlu0 %1645
        %v1650 = vsel %vm801, %v1641, 0
        %v1653 = vsel %vm801, %v1642, 0
        %1655 = vmatprep.subr.mxu0 0.0
        %1656 = vmatpush1.msra.mxu0 %v1644
        %1657 = vmatprep.subr.mxu0 0.0
        %1658 = vmatpush1.msra.mxu0 %v1646
        %1659 = vmatprep.subr.mxu0 0.0
        %1660 = vmatpush1.msra.mxu0 0.0
        %1661 = vmatprep.subr.mxu0 0.0
        %1662 = vmatpush1.msra.mxu0 0.0
        %1663 = vmatprep.subr.mxu0 0.0
        %1664 = vmatpush1.msra.mxu0 0.0
        %1665 = vmatprep.subr.mxu0 0.0
        %1666 = vmatpush1.msra.mxu0 0.0
        %1667 = vmatprep.subr.mxu0 0.0
        %1668 = vmatpush1.msra.mxu0 0.0
        %1669 = vmatprep.subr.mxu0 0.0
        %1670 = vmatpush1.msra.mxu0 0.0
        %1671 = vmatprep.subr.mxu0 0.0
        %1672 = vmatpush1.msra.mxu0 0.0
        %1673 = vmatprep.subr.mxu0 0.0
        %1674 = vmatpush1.msra.mxu0 0.0
        %1675 = vmatprep.subr.mxu0 0.0
        %1676 = vmatpush1.msra.mxu0 0.0
        %1677 = vmatprep.subr.mxu0 0.0
        %1678 = vmatpush1.msra.mxu0 0.0
        %1679 = vmatprep.subr.mxu0 0.0
        %1680 = vmatpush1.msra.mxu0 0.0
        %1681 = vmatprep.subr.mxu0 0.0
        %1682 = vmatpush1.msra.mxu0 0.0
        %1683 = vmatprep.subr.mxu0 0.0
        %1684 = vmatpush1.msra.mxu0 0.0
        %1685 = vmatprep.subr.mxu0 0.0
        %1686 = vmatpush1.msra.mxu0 0.0
        %1687 = vmatprep.subr.mxu0 0.0
        %1688 = vmatpush1.msra.mxu0 0.0
        %1689 = vmatprep.subr.mxu0 0.0
        %1690 = vmatpush1.msra.mxu0 0.0
        %1691 = vmatprep.subr.mxu0 0.0
        %1692 = vmatpush1.msra.mxu0 0.0
        %1693 = vmatprep.subr.mxu0 0.0
        %1694 = vmatpush1.msra.mxu0 0.0
        %1695 = vmatprep.subr.mxu0 0.0
        %1696 = vmatpush1.msra.mxu0 0.0
        %1697 = vmatprep.subr.mxu0 0.0
        %1698 = vmatpush1.msra.mxu0 0.0
        %1699 = vmatprep.subr.mxu0 0.0
        %1700 = vmatpush1.msra.mxu0 0.0
        %1701 = vmatprep.subr.mxu0 0.0
        %1702 = vmatpush1.msra.mxu0 0.0
        %1703 = vmatprep.subr.mxu0 0.0
        %1704 = vmatpush1.msra.mxu0 0.0
        %1705 = vmatprep.subr.mxu0 0.0
        %1706 = vmatpush1.msra.mxu0 0.0
        %1707 = vmatprep.subr.mxu0 0.0
        %1708 = vmatpush1.msra.mxu0 0.0
        %1709 = vmatprep.subr.mxu0 0.0
        %1710 = vmatpush1.msra.mxu0 0.0
        %1711 = vmatprep.subr.mxu0 0.0
        %1712 = vmatpush1.msra.mxu0 0.0
        %1713 = vmatprep.subr.mxu0 0.0
        %1714 = vmatpush1.msra.mxu0 0.0
        %1715 = vmatprep.subr.mxu0 0.0
        %1716 = vmatpush1.msra.mxu0 0.0
        %1717 = vmatprep.subr.mxu0 0.0
        %1718 = vmatpush1.msra.mxu0 0.0
        %1719 = vmatprep.mubr.f32.mxu0 0.0
        %1720 = vmatmul.mubr.f32.gmra.mrb[0].mxu0 %v1650
        %v1721 = vpop.f32.mrb[0].mxu0
        %v1722 = vadd.f32 0.0, %v1721
        %v1723 = vpop.f32.mrb[0].mxu0
        %1724 = vmatprep.mubr.f32.mxu0 0.0
        %1725 = vmatmul.mubr.f32.gmra.mrb[0].mxu0 %v1653
        %v1726 = vpop.f32.mrb[0].mxu0
        %v1727 = vadd.f32 0.0, %v1726
        %v1728 = vpop.f32.mrb[0].mxu0
        %1729 = vdwg.mxu0
        %1730 = vrot.lane.b32.xlu0 %v956, 120
        %v1731 = vpop.permute.xlu0 %1730
        %1732 = vrot.lane.b32.xlu0 %v956, 88
        %v1733 = vpop.permute.xlu0 %1732
        %v1734 = vsel %vm965, %v1731, 0
        %v1736 = vsel %vm965, %v1733, 0
        %1738 = vmatprep.subr.mxu0 0.0
        %1739 = vmatpush1.xpose.msra.mxu0 %v1736
        %1740 = vmatprep.subr.mxu0 0.0
        %1741 = vmatpush1.xpose.msra.mxu0 0.0
        %1742 = vmatprep.subr.mxu0 0.0
        %1743 = vmatpush1.xpose.msra.mxu0 0.0
        %1744 = vmatprep.subr.mxu0 0.0
        %1745 = vmatpush1.xpose.msra.mxu0 0.0
        %1746 = vmatprep.subr.mxu0 0.0
        %1747 = vmatpush1.xpose.msra.mxu0 0.0
        %1748 = vmatprep.subr.mxu0 0.0
        %1749 = vmatpush1.xpose.msra.mxu0 0.0
        %1750 = vmatprep.subr.mxu0 0.0
        %1751 = vmatpush1.xpose.msra.mxu0 0.0
        %1752 = vmatprep.subr.mxu0 0.0
        %1753 = vmatpush1.xpose.msra.mxu0 0.0
        %1754 = vmatprep.subr.mxu0 0.0
        %1755 = vmatpush1.xpose.msra.mxu0 0.0
        %1756 = vmatprep.subr.mxu0 0.0
        %1757 = vmatpush1.xpose.msra.mxu0 0.0
        %1758 = vmatprep.subr.mxu0 0.0
        %1759 = vmatpush1.xpose.msra.mxu0 0.0
        %1760 = vmatprep.subr.mxu0 0.0
        %1761 = vmatpush1.xpose.msra.mxu0 0.0
        %1762 = vmatprep.subr.mxu0 0.0
        %1763 = vmatpush1.xpose.msra.mxu0 0.0
        %1764 = vmatprep.subr.mxu0 0.0
        %1765 = vmatpush1.xpose.msra.mxu0 0.0
        %1766 = vmatprep.subr.mxu0 0.0
        %1767 = vmatpush1.xpose.msra.mxu0 0.0
        %1768 = vmatprep.subr.mxu0 0.0
        %1769 = vmatpush1.xpose.msra.mxu0 0.0
        %1770 = vmatprep.subr.mxu0 0.0
        %1771 = vmatpush1.xpose.msra.mxu0 0.0
        %1772 = vmatprep.subr.mxu0 0.0
        %1773 = vmatpush1.xpose.msra.mxu0 0.0
        %1774 = vmatprep.subr.mxu0 0.0
        %1775 = vmatpush1.xpose.msra.mxu0 0.0
        %1776 = vmatprep.subr.mxu0 0.0
        %1777 = vmatpush1.xpose.msra.mxu0 0.0
        %1778 = vmatprep.subr.mxu0 0.0
        %1779 = vmatpush1.xpose.msra.mxu0 0.0
        %1780 = vmatprep.subr.mxu0 0.0
        %1781 = vmatpush1.xpose.msra.mxu0 0.0
        %1782 = vmatprep.subr.mxu0 0.0
        %1783 = vmatpush1.xpose.msra.mxu0 0.0
        %1784 = vmatprep.subr.mxu0 0.0
        %1785 = vmatpush1.xpose.msra.mxu0 0.0
        %1786 = vmatprep.subr.mxu0 0.0
        %1787 = vmatpush1.xpose.msra.mxu0 0.0
        %1788 = vmatprep.subr.mxu0 0.0
        %1789 = vmatpush1.xpose.msra.mxu0 0.0
        %1790 = vmatprep.subr.mxu0 0.0
        %1791 = vmatpush1.xpose.msra.mxu0 0.0
        %1792 = vmatprep.subr.mxu0 0.0
        %1793 = vmatpush1.xpose.msra.mxu0 0.0
        %1794 = vmatprep.subr.mxu0 0.0
        %1795 = vmatpush1.xpose.msra.mxu0 0.0
        %1796 = vmatprep.subr.mxu0 0.0
        %1797 = vmatpush1.xpose.msra.mxu0 0.0
        %1798 = vmatprep.subr.mxu0 0.0
        %1799 = vmatpush1.xpose.msra.mxu0 0.0
        %1800 = vmatprep.subr.mxu0 0.0
        %1801 = vmatpush1.xpose.msra.mxu0 0.0
        %1802 = vmatprep.mubr.f32.mxu0 0.0
        %1803 = vmatmul.mubr.f32.gmra.mrb[0].mxu0 %v1734
        %v1804 = vpop.f32.mrb[0].mxu0
        %v1805 = vadd.f32 0.0, %v1804
        %v1806 = vpop.f32.mrb[0].mxu0
        %1807 = vdwg.mxu0
        %v1808 = vmul.f32 %v1805, 0.35355338
        %v1809 = vadd.f32 %v1808, %v659
        %v1810 = vsel %vm1241, %v1809, -inf
        %1811 = vmax.xlane.f32.xlu0 %v1810
        %v1812 = vpop.xlane.xlu0 %1811
        %v1813 = vsub.f32 %v1809, %v1812
        %v1814 = vmul.f32 %v1813, 1.442695
        %v1815 = vpow.pop %v1814
        %v1816 = vsel %vm1241, %v1815, 0.0
        %1817 = vadd.xlane.f32.xlu0 %v1816
        %v1818 = vpop.xlane.xlu0 %1817
        %v1819 = vrcp.pop %v1818
        %v1820 = vmul.f32 %v1815, %v1819
        %v1822 = vsel %vm1253, %v1820, 0
        %1824 = vmatprep.subr.mxu0 0.0
        %1825 = vmatpush1.xpose.msra.mxu0 %v1822
        %1826 = vmatprep.subr.mxu0 0.0
        %1827 = vmatpush1.xpose.msra.mxu0 0.0
        %1828 = vmatprep.subr.mxu0 0.0
        %1829 = vmatpush1.xpose.msra.mxu0 0.0
        %1830 = vmatprep.subr.mxu0 0.0
        %1831 = vmatpush1.xpose.msra.mxu0 0.0
        %1832 = vmatprep.subr.mxu0 0.0
        %1833 = vmatpush1.xpose.msra.mxu0 0.0
        %1834 = vmatprep.subr.mxu0 0.0
        %1835 = vmatpush1.xpose.msra.mxu0 0.0
        %1836 = vmatprep.subr.mxu0 0.0
        %1837 = vmatpush1.xpose.msra.mxu0 0.0
        %1838 = vmatprep.subr.mxu0 0.0
        %1839 = vmatpush1.xpose.msra.mxu0 0.0
        %1840 = vmatprep.subr.mxu0 0.0
        %1841 = vmatpush1.xpose.msra.mxu0 0.0
        %1842 = vmatprep.subr.mxu0 0.0
        %1843 = vmatpush1.xpose.msra.mxu0 0.0
        %1844 = vmatprep.subr.mxu0 0.0
        %1845 = vmatpush1.xpose.msra.mxu0 0.0
        %1846 = vmatprep.subr.mxu0 0.0
        %1847 = vmatpush1.xpose.msra.mxu0 0.0
        %1848 = vmatprep.subr.mxu0 0.0
        %1849 = vmatpush1.xpose.msra.mxu0 0.0
        %1850 = vmatprep.subr.mxu0 0.0
        %1851 = vmatpush1.xpose.msra.mxu0 0.0
        %1852 = vmatprep.subr.mxu0 0.0
        %1853 = vmatpush1.xpose.msra.mxu0 0.0
        %1854 = vmatprep.subr.mxu0 0.0
        %1855 = vmatpush1.xpose.msra.mxu0 0.0
        %1856 = vmatprep.subr.mxu0 0.0
        %1857 = vmatpush1.xpose.msra.mxu0 0.0
        %1858 = vmatprep.subr.mxu0 0.0
        %1859 = vmatpush1.xpose.msra.mxu0 0.0
        %1860 = vmatprep.subr.mxu0 0.0
        %1861 = vmatpush1.xpose.msra.mxu0 0.0
        %1862 = vmatprep.subr.mxu0 0.0
        %1863 = vmatpush1.xpose.msra.mxu0 0.0
        %1864 = vmatprep.subr.mxu0 0.0
        %1865 = vmatpush1.xpose.msra.mxu0 0.0
        %1866 = vmatprep.subr.mxu0 0.0
        %1867 = vmatpush1.xpose.msra.mxu0 0.0
        %1868 = vmatprep.subr.mxu0 0.0
        %1869 = vmatpush1.xpose.msra.mxu0 0.0
        %1870 = vmatprep.subr.mxu0 0.0
        %1871 = vmatpush1.xpose.msra.mxu0 0.0
        %1872 = vmatprep.subr.mxu0 0.0
        %1873 = vmatpush1.xpose.msra.mxu0 0.0
        %1874 = vmatprep.subr.mxu0 0.0
        %1875 = vmatpush1.xpose.msra.mxu0 0.0
        %1876 = vmatprep.subr.mxu0 0.0
        %1877 = vmatpush1.xpose.msra.mxu0 0.0
        %1878 = vmatprep.subr.mxu0 0.0
        %1879 = vmatpush1.xpose.msra.mxu0 0.0
        %1880 = vmatprep.subr.mxu0 0.0
        %1881 = vmatpush1.xpose.msra.mxu0 0.0
        %1882 = vmatprep.subr.mxu0 0.0
        %1883 = vmatpush1.xpose.msra.mxu0 0.0
        %1884 = vmatprep.subr.mxu0 0.0
        %1885 = vmatpush1.xpose.msra.mxu0 0.0
        %1886 = vmatprep.subr.mxu0 0.0
        %1887 = vmatpush1.xpose.msra.mxu0 0.0
        %1888 = vmatprep.mubr.f32.mxu0 0.0
        %1889 = vmatmul.mubr.f32.gmra.mrb[0].mxu0 %v1255
        %v1890 = vpop.f32.mrb[0].mxu0
        %v1891 = vadd.f32 0.0, %v1890
        %v1892 = vpop.f32.mrb[0].mxu0
        %1893 = vmatprep.mubr.f32.mxu0 0.0
        %1894 = vmatmul.mubr.f32.gmra.mrb[0].mxu0 %v1258
        %v1895 = vpop.f32.mrb[0].mxu0
        %v1896 = vadd.f32 0.0, %v1895
        %v1897 = vpop.f32.mrb[0].mxu0
        %1898 = vdwg.mxu0
        %1900 = vset.pattern.permute.xlu0 0
        %1901 = vperm.xlu0 %1900, %v1891
        %v1902 = vpop.permute.xlu0 %1901
        %1905 = vset.pattern.permute.xlu0 0
        %1906 = vperm.xlu0 %1905, %v1896
        %v1907 = vpop.permute.xlu0 %1906
        %v1909 = vmul.f32 %v1902, %v793
        %v1910 = vmul.f32 %v1907, %v798
        %1913 = vrot.lane.b32.xlu0 %v1909, 56
        %v1914 = vpop.permute.xlu0 %1913
        %1915 = vrot.lane.b32.xlu0 %v1910, 56
        %v1916 = vpop.permute.xlu0 %1915
        %v1920 = vsel %vm801, %v1609, 0
        %1922 = vmatprep.subr.mxu0 0.0
        %1923 = vmatpush1.msra.mxu0 %v1914
        %1924 = vmatprep.subr.mxu0 0.0
        %1925 = vmatpush1.msra.mxu0 %v1916
        %1926 = vmatprep.subr.mxu0 0.0
        %1927 = vmatpush1.msra.mxu0 0.0
        %1928 = vmatprep.subr.mxu0 0.0
        %1929 = vmatpush1.msra.mxu0 0.0
        %1930 = vmatprep.subr.mxu0 0.0
        %1931 = vmatpush1.msra.mxu0 0.0
        %1932 = vmatprep.subr.mxu0 0.0
        %1933 = vmatpush1.msra.mxu0 0.0
        %1934 = vmatprep.subr.mxu0 0.0
        %1935 = vmatpush1.msra.mxu0 0.0
        %1936 = vmatprep.subr.mxu0 0.0
        %1937 = vmatpush1.msra.mxu0 0.0
        %1938 = vmatprep.subr.mxu0 0.0
        %1939 = vmatpush1.msra.mxu0 0.0
        %1940 = vmatprep.subr.mxu0 0.0
        %1941 = vmatpush1.msra.mxu0 0.0
        %1942 = vmatprep.subr.mxu0 0.0
        %1943 = vmatpush1.msra.mxu0 0.0
        %1944 = vmatprep.subr.mxu0 0.0
        %1945 = vmatpush1.msra.mxu0 0.0
        %1946 = vmatprep.subr.mxu0 0.0
        %1947 = vmatpush1.msra.mxu0 0.0
        %1948 = vmatprep.subr.mxu0 0.0
        %1949 = vmatpush1.msra.mxu0 0.0
        %1950 = vmatprep.subr.mxu0 0.0
        %1951 = vmatpush1.msra.mxu0 0.0
        %1952 = vmatprep.subr.mxu0 0.0
        %1953 = vmatpush1.msra.mxu0 0.0
        %1954 = vmatprep.subr.mxu0 0.0
        %1955 = vmatpush1.msra.mxu0 0.0
        %1956 = vmatprep.subr.mxu0 0.0
        %1957 = vmatpush1.msra.mxu0 0.0
        %1958 = vmatprep.subr.mxu0 0.0
        %1959 = vmatpush1.msra.mxu0 0.0
        %1960 = vmatprep.subr.mxu0 0.0
        %1961 = vmatpush1.msra.mxu0 0.0
        %1962 = vmatprep.subr.mxu0 0.0
        %1963 = vmatpush1.msra.mxu0 0.0
        %1964 = vmatprep.subr.mxu0 0.0
        %1965 = vmatpush1.msra.mxu0 0.0
        %1966 = vmatprep.subr.mxu0 0.0
        %1967 = vmatpush1.msra.mxu0 0.0
        %1968 = vmatprep.subr.mxu0 0.0
        %1969 = vmatpush1.msra.mxu0 0.0
        %1970 = vmatprep.subr.mxu0 0.0
        %1971 = vmatpush1.msra.mxu0 0.0
        %1972 = vmatprep.subr.mxu0 0.0
        %1973 = vmatpush1.msra.mxu0 0.0
        %1974 = vmatprep.subr.mxu0 0.0
        %1975 = vmatpush1.msra.mxu0 0.0
        %1976 = vmatprep.subr.mxu0 0.0
        %1977 = vmatpush1.msra.mxu0 0.0
        %1978 = vmatprep.subr.mxu0 0.0
        %1979 = vmatpush1.msra.mxu0 0.0
        %1980 = vmatprep.subr.mxu0 0.0
        %1981 = vmatpush1.msra.mxu0 0.0
        %1982 = vmatprep.subr.mxu0 0.0
        %1983 = vmatpush1.msra.mxu0 0.0
        %1984 = vmatprep.subr.mxu0 0.0
        %1985 = vmatpush1.msra.mxu0 0.0
        %1986 = vmatprep.mubr.f32.mxu0 0.0
        %1987 = vmatmul.mubr.f32.gmra.mrb[0].mxu0 %v1920
        %v1988 = vpop.f32.mrb[0].mxu0
        %v1989 = vadd.f32 0.0, %v1988
        %v1990 = vpop.f32.mrb[0].mxu0
        %1991 = vdwg.mxu0
        %v1992 = vadd.f32 %v1722, %v1989
        %1994 = vrot.lane.b32.xlu0 %v1992, 8
        %v1995 = vpop.permute.xlu0 %1994
        %vm1997 = vcmask 130112
        %1998 = vst.msk [vmem:[#allocation2] sm:$0xff] %vm1997, %v1995
        %1999 = vset.pattern.permute.xlu0 1
        %2000 = vperm.xlu0 %1999, %v1891
        %v2001 = vpop.permute.xlu0 %2000
        %2003 = vset.pattern.permute.xlu0 1
        %2004 = vperm.xlu0 %2003, %v1896
        %v2005 = vpop.permute.xlu0 %2004
        %v2007 = vmul.f32 %v2001, %v793
        %v2008 = vmul.f32 %v2005, %v798
        %2011 = vrot.lane.b32.xlu0 %v2007, 56
        %v2012 = vpop.permute.xlu0 %2011
        %2013 = vrot.lane.b32.xlu0 %v2008, 56
        %v2014 = vpop.permute.xlu0 %2013
        %v2018 = vsel %vm801, %v1614, 0
        %2020 = vmatprep.subr.mxu0 0.0
        %2021 = vmatpush1.msra.mxu0 %v2012
        %2022 = vmatprep.subr.mxu0 0.0
        %2023 = vmatpush1.msra.mxu0 %v2014
        %2024 = vmatprep.subr.mxu0 0.0
        %2025 = vmatpush1.msra.mxu0 0.0
        %2026 = vmatprep.subr.mxu0 0.0
        %2027 = vmatpush1.msra.mxu0 0.0
        %2028 = vmatprep.subr.mxu0 0.0
        %2029 = vmatpush1.msra.mxu0 0.0
        %2030 = vmatprep.subr.mxu0 0.0
        %2031 = vmatpush1.msra.mxu0 0.0
        %2032 = vmatprep.subr.mxu0 0.0
        %2033 = vmatpush1.msra.mxu0 0.0
        %2034 = vmatprep.subr.mxu0 0.0
        %2035 = vmatpush1.msra.mxu0 0.0
        %2036 = vmatprep.subr.mxu0 0.0
        %2037 = vmatpush1.msra.mxu0 0.0
        %2038 = vmatprep.subr.mxu0 0.0
        %2039 = vmatpush1.msra.mxu0 0.0
        %2040 = vmatprep.subr.mxu0 0.0
        %2041 = vmatpush1.msra.mxu0 0.0
        %2042 = vmatprep.subr.mxu0 0.0
        %2043 = vmatpush1.msra.mxu0 0.0
        %2044 = vmatprep.subr.mxu0 0.0
        %2045 = vmatpush1.msra.mxu0 0.0
        %2046 = vmatprep.subr.mxu0 0.0
        %2047 = vmatpush1.msra.mxu0 0.0
        %2048 = vmatprep.subr.mxu0 0.0
        %2049 = vmatpush1.msra.mxu0 0.0
        %2050 = vmatprep.subr.mxu0 0.0
        %2051 = vmatpush1.msra.mxu0 0.0
        %2052 = vmatprep.subr.mxu0 0.0
        %2053 = vmatpush1.msra.mxu0 0.0
        %2054 = vmatprep.subr.mxu0 0.0
        %2055 = vmatpush1.msra.mxu0 0.0
        %2056 = vmatprep.subr.mxu0 0.0
        %2057 = vmatpush1.msra.mxu0 0.0
        %2058 = vmatprep.subr.mxu0 0.0
        %2059 = vmatpush1.msra.mxu0 0.0
        %2060 = vmatprep.subr.mxu0 0.0
        %2061 = vmatpush1.msra.mxu0 0.0
        %2062 = vmatprep.subr.mxu0 0.0
        %2063 = vmatpush1.msra.mxu0 0.0
        %2064 = vmatprep.subr.mxu0 0.0
        %2065 = vmatpush1.msra.mxu0 0.0
        %2066 = vmatprep.subr.mxu0 0.0
        %2067 = vmatpush1.msra.mxu0 0.0
        %2068 = vmatprep.subr.mxu0 0.0
        %2069 = vmatpush1.msra.mxu0 0.0
        %2070 = vmatprep.subr.mxu0 0.0
        %2071 = vmatpush1.msra.mxu0 0.0
        %2072 = vmatprep.subr.mxu0 0.0
        %2073 = vmatpush1.msra.mxu0 0.0
        %2074 = vmatprep.subr.mxu0 0.0
        %2075 = vmatpush1.msra.mxu0 0.0
        %2076 = vmatprep.subr.mxu0 0.0
        %2077 = vmatpush1.msra.mxu0 0.0
        %2078 = vmatprep.subr.mxu0 0.0
        %2079 = vmatpush1.msra.mxu0 0.0
        %2080 = vmatprep.subr.mxu0 0.0
        %2081 = vmatpush1.msra.mxu0 0.0
        %2082 = vmatprep.subr.mxu0 0.0
        %2083 = vmatpush1.msra.mxu0 0.0
        %2084 = vmatprep.mubr.f32.mxu0 0.0
        %2085 = vmatmul.mubr.f32.gmra.mrb[0].mxu0 %v2018
        %v2086 = vpop.f32.mrb[0].mxu0
        %v2087 = vadd.f32 0.0, %v2086
        %v2088 = vpop.f32.mrb[0].mxu0
        %2089 = vdwg.mxu0
        %v2090 = vadd.f32 %v1727, %v2087
        %2092 = vrot.lane.b32.xlu0 %v2090, 8
        %v2093 = vpop.permute.xlu0 %2092
        %2095 = vst.msk [vmem:[#allocation2 + $0x8] sm:$0xff] %vm1997, %v2093
        %2096 = vrot.lane.b32.xlu0 %v793, 112
        %v2097 = vpop.permute.xlu0 %2096
        %2098 = vrot.lane.b32.xlu0 %v798, 112
        %v2099 = vpop.permute.xlu0 %2098
        %2100 = vrot.lane.b32.xlu0 %v793, 80
        %v2101 = vpop.permute.xlu0 %2100
        %2102 = vrot.lane.b32.xlu0 %v798, 80
        %v2103 = vpop.permute.xlu0 %2102
        %v2104 = vsel %vm965, %v2097, 0
        %v2106 = vsel %vm965, %v2099, 0
        %v2108 = vsel %vm965, %v2101, 0
        %v2110 = vsel %vm965, %v2103, 0
        %2112 = vmatprep.subr.mxu0 0.0
        %2113 = vmatpush1.xpose.msra.mxu0 %v2108
        %2114 = vmatprep.subr.mxu0 0.0
        %2115 = vmatpush1.xpose.msra.mxu0 %v2110
        %2116 = vmatprep.subr.mxu0 0.0
        %2117 = vmatpush1.xpose.msra.mxu0 0.0
        %2118 = vmatprep.subr.mxu0 0.0
        %2119 = vmatpush1.xpose.msra.mxu0 0.0
        %2120 = vmatprep.subr.mxu0 0.0
        %2121 = vmatpush1.xpose.msra.mxu0 0.0
        %2122 = vmatprep.subr.mxu0 0.0
        %2123 = vmatpush1.xpose.msra.mxu0 0.0
        %2124 = vmatprep.subr.mxu0 0.0
        %2125 = vmatpush1.xpose.msra.mxu0 0.0
        %2126 = vmatprep.subr.mxu0 0.0
        %2127 = vmatpush1.xpose.msra.mxu0 0.0
        %2128 = vmatprep.subr.mxu0 0.0
        %2129 = vmatpush1.xpose.msra.mxu0 0.0
        %2130 = vmatprep.subr.mxu0 0.0
        %2131 = vmatpush1.xpose.msra.mxu0 0.0
        %2132 = vmatprep.subr.mxu0 0.0
        %2133 = vmatpush1.xpose.msra.mxu0 0.0
        %2134 = vmatprep.subr.mxu0 0.0
        %2135 = vmatpush1.xpose.msra.mxu0 0.0
        %2136 = vmatprep.subr.mxu0 0.0
        %2137 = vmatpush1.xpose.msra.mxu0 0.0
        %2138 = vmatprep.subr.mxu0 0.0
        %2139 = vmatpush1.xpose.msra.mxu0 0.0
        %2140 = vmatprep.subr.mxu0 0.0
        %2141 = vmatpush1.xpose.msra.mxu0 0.0
        %2142 = vmatprep.subr.mxu0 0.0
        %2143 = vmatpush1.xpose.msra.mxu0 0.0
        %2144 = vmatprep.subr.mxu0 0.0
        %2145 = vmatpush1.xpose.msra.mxu0 0.0
        %2146 = vmatprep.subr.mxu0 0.0
        %2147 = vmatpush1.xpose.msra.mxu0 0.0
        %2148 = vmatprep.subr.mxu0 0.0
        %2149 = vmatpush1.xpose.msra.mxu0 0.0
        %2150 = vmatprep.subr.mxu0 0.0
        %2151 = vmatpush1.xpose.msra.mxu0 0.0
        %2152 = vmatprep.subr.mxu0 0.0
        %2153 = vmatpush1.xpose.msra.mxu0 0.0
        %2154 = vmatprep.subr.mxu0 0.0
        %2155 = vmatpush1.xpose.msra.mxu0 0.0
        %2156 = vmatprep.subr.mxu0 0.0
        %2157 = vmatpush1.xpose.msra.mxu0 0.0
        %2158 = vmatprep.subr.mxu0 0.0
        %2159 = vmatpush1.xpose.msra.mxu0 0.0
        %2160 = vmatprep.subr.mxu0 0.0
        %2161 = vmatpush1.xpose.msra.mxu0 0.0
        %2162 = vmatprep.subr.mxu0 0.0
        %2163 = vmatpush1.xpose.msra.mxu0 0.0
        %2164 = vmatprep.subr.mxu0 0.0
        %2165 = vmatpush1.xpose.msra.mxu0 0.0
        %2166 = vmatprep.subr.mxu0 0.0
        %2167 = vmatpush1.xpose.msra.mxu0 0.0
        %2168 = vmatprep.subr.mxu0 0.0
        %2169 = vmatpush1.xpose.msra.mxu0 0.0
        %2170 = vmatprep.subr.mxu0 0.0
        %2171 = vmatpush1.xpose.msra.mxu0 0.0
        %2172 = vmatprep.subr.mxu0 0.0
        %2173 = vmatpush1.xpose.msra.mxu0 0.0
        %2174 = vmatprep.subr.mxu0 0.0
        %2175 = vmatpush1.xpose.msra.mxu0 0.0
        %2176 = vmatprep.mubr.f32.mxu0 0.0
        %2177 = vmatmul.mubr.f32.gmra.mrb[0].mxu0 %v2104
        %v2178 = vpop.f32.mrb[0].mxu0
        %v2179 = vadd.f32 0.0, %v2178
        %v2180 = vpop.f32.mrb[0].mxu0
        %2181 = vmatprep.mubr.f32.mxu0 0.0
        %2182 = vmatmul.mubr.f32.gmra.mrb[0].mxu0 %v2106
        %v2183 = vpop.f32.mrb[0].mxu0
        %v2184 = vadd.f32 0.0, %v2183
        %v2185 = vpop.f32.mrb[0].mxu0
        %2186 = vdwg.mxu0
        %v2187 = vmul.f32 %v2179, 0.35355338
        %v2188 = vmul.f32 %v2184, 0.35355338
        %v2189 = vadd.f32 %v2187, %v657
        %v2190 = vadd.f32 %v2188, %v658
        %v2191 = vsel %vm801, %v2189, -inf
        %2192 = vmax.xlane.f32.xlu0 %v2191
        %v2193 = vpop.xlane.xlu0 %2192
        %v2194 = vsel %vm801, %v2190, -inf
        %2195 = vmax.xlane.f32.xlu0 %v2194
        %v2196 = vpop.xlane.xlu0 %2195
        %v2197 = vsub.f32 %v2189, %v2193
        %v2198 = vsub.f32 %v2190, %v2196
        %v2199 = vmul.f32 %v2197, 1.442695
        %v2200 = vpow.pop %v2199
        %v2201 = vmul.f32 %v2198, 1.442695
        %v2202 = vpow.pop %v2201
        %v2203 = vsel %vm801, %v2200, 0.0
        %2204 = vadd.xlane.f32.xlu0 %v2203
        %v2205 = vpop.xlane.xlu0 %2204
        %v2206 = vsel %vm801, %v2202, 0.0
        %2207 = vadd.xlane.f32.xlu0 %v2206
        %v2208 = vpop.xlane.xlu0 %2207
        %v2209 = vrcp.pop %v2205
        %v2210 = vrcp.pop %v2208
        %v2211 = vmul.f32 %v2200, %v2209
        %v2212 = vmul.f32 %v2202, %v2210
        %2213 = vrot.lane.b32.xlu0 %v793, 48
        %v2214 = vpop.permute.xlu0 %2213
        %2215 = vrot.lane.b32.xlu0 %v798, 48
        %v2216 = vpop.permute.xlu0 %2215
        %v2220 = vsel %vm801, %v2211, 0
        %v2223 = vsel %vm801, %v2212, 0
        %2225 = vmatprep.subr.mxu0 0.0
        %2226 = vmatpush1.msra.mxu0 %v2214
        %2227 = vmatprep.subr.mxu0 0.0
        %2228 = vmatpush1.msra.mxu0 %v2216
        %2229 = vmatprep.subr.mxu0 0.0
        %2230 = vmatpush1.msra.mxu0 0.0
        %2231 = vmatprep.subr.mxu0 0.0
        %2232 = vmatpush1.msra.mxu0 0.0
        %2233 = vmatprep.subr.mxu0 0.0
        %2234 = vmatpush1.msra.mxu0 0.0
        %2235 = vmatprep.subr.mxu0 0.0
        %2236 = vmatpush1.msra.mxu0 0.0
        %2237 = vmatprep.subr.mxu0 0.0
        %2238 = vmatpush1.msra.mxu0 0.0
        %2239 = vmatprep.subr.mxu0 0.0
        %2240 = vmatpush1.msra.mxu0 0.0
        %2241 = vmatprep.subr.mxu0 0.0
        %2242 = vmatpush1.msra.mxu0 0.0
        %2243 = vmatprep.subr.mxu0 0.0
        %2244 = vmatpush1.msra.mxu0 0.0
        %2245 = vmatprep.subr.mxu0 0.0
        %2246 = vmatpush1.msra.mxu0 0.0
        %2247 = vmatprep.subr.mxu0 0.0
        %2248 = vmatpush1.msra.mxu0 0.0
        %2249 = vmatprep.subr.mxu0 0.0
        %2250 = vmatpush1.msra.mxu0 0.0
        %2251 = vmatprep.subr.mxu0 0.0
        %2252 = vmatpush1.msra.mxu0 0.0
        %2253 = vmatprep.subr.mxu0 0.0
        %2254 = vmatpush1.msra.mxu0 0.0
        %2255 = vmatprep.subr.mxu0 0.0
        %2256 = vmatpush1.msra.mxu0 0.0
        %2257 = vmatprep.subr.mxu0 0.0
        %2258 = vmatpush1.msra.mxu0 0.0
        %2259 = vmatprep.subr.mxu0 0.0
        %2260 = vmatpush1.msra.mxu0 0.0
        %2261 = vmatprep.subr.mxu0 0.0
        %2262 = vmatpush1.msra.mxu0 0.0
        %2263 = vmatprep.subr.mxu0 0.0
        %2264 = vmatpush1.msra.mxu0 0.0
        %2265 = vmatprep.subr.mxu0 0.0
        %2266 = vmatpush1.msra.mxu0 0.0
        %2267 = vmatprep.subr.mxu0 0.0
        %2268 = vmatpush1.msra.mxu0 0.0
        %2269 = vmatprep.subr.mxu0 0.0
        %2270 = vmatpush1.msra.mxu0 0.0
        %2271 = vmatprep.subr.mxu0 0.0
        %2272 = vmatpush1.msra.mxu0 0.0
        %2273 = vmatprep.subr.mxu0 0.0
        %2274 = vmatpush1.msra.mxu0 0.0
        %2275 = vmatprep.subr.mxu0 0.0
        %2276 = vmatpush1.msra.mxu0 0.0
        %2277 = vmatprep.subr.mxu0 0.0
        %2278 = vmatpush1.msra.mxu0 0.0
        %2279 = vmatprep.subr.mxu0 0.0
        %2280 = vmatpush1.msra.mxu0 0.0
        %2281 = vmatprep.subr.mxu0 0.0
        %2282 = vmatpush1.msra.mxu0 0.0
        %2283 = vmatprep.subr.mxu0 0.0
        %2284 = vmatpush1.msra.mxu0 0.0
        %2285 = vmatprep.subr.mxu0 0.0
        %2286 = vmatpush1.msra.mxu0 0.0
        %2287 = vmatprep.subr.mxu0 0.0
        %2288 = vmatpush1.msra.mxu0 0.0
        %2289 = vmatprep.mubr.f32.mxu0 0.0
        %2290 = vmatmul.mubr.f32.gmra.mrb[0].mxu0 %v2220
        %v2291 = vpop.f32.mrb[0].mxu0
        %v2292 = vadd.f32 0.0, %v2291
        %v2293 = vpop.f32.mrb[0].mxu0
        %2294 = vmatprep.mubr.f32.mxu0 0.0
        %2295 = vmatmul.mubr.f32.gmra.mrb[0].mxu0 %v2223
        %v2296 = vpop.f32.mrb[0].mxu0
        %v2297 = vadd.f32 0.0, %v2296
        %v2298 = vpop.f32.mrb[0].mxu0
        %2299 = vdwg.mxu0
        %2300 = vrot.lane.b32.xlu0 %v956, 112
        %v2301 = vpop.permute.xlu0 %2300
        %2302 = vrot.lane.b32.xlu0 %v956, 80
        %v2303 = vpop.permute.xlu0 %2302
        %v2304 = vsel %vm965, %v2301, 0
        %v2306 = vsel %vm965, %v2303, 0
        %2308 = vmatprep.subr.mxu0 0.0
        %2309 = vmatpush1.xpose.msra.mxu0 %v2306
        %2310 = vmatprep.subr.mxu0 0.0
        %2311 = vmatpush1.xpose.msra.mxu0 0.0
        %2312 = vmatprep.subr.mxu0 0.0
        %2313 = vmatpush1.xpose.msra.mxu0 0.0
        %2314 = vmatprep.subr.mxu0 0.0
        %2315 = vmatpush1.xpose.msra.mxu0 0.0
        %2316 = vmatprep.subr.mxu0 0.0
        %2317 = vmatpush1.xpose.msra.mxu0 0.0
        %2318 = vmatprep.subr.mxu0 0.0
        %2319 = vmatpush1.xpose.msra.mxu0 0.0
        %2320 = vmatprep.subr.mxu0 0.0
        %2321 = vmatpush1.xpose.msra.mxu0 0.0
        %2322 = vmatprep.subr.mxu0 0.0
        %2323 = vmatpush1.xpose.msra.mxu0 0.0
        %2324 = vmatprep.subr.mxu0 0.0
        %2325 = vmatpush1.xpose.msra.mxu0 0.0
        %2326 = vmatprep.subr.mxu0 0.0
        %2327 = vmatpush1.xpose.msra.mxu0 0.0
        %2328 = vmatprep.subr.mxu0 0.0
        %2329 = vmatpush1.xpose.msra.mxu0 0.0
        %2330 = vmatprep.subr.mxu0 0.0
        %2331 = vmatpush1.xpose.msra.mxu0 0.0
        %2332 = vmatprep.subr.mxu0 0.0
        %2333 = vmatpush1.xpose.msra.mxu0 0.0
        %2334 = vmatprep.subr.mxu0 0.0
        %2335 = vmatpush1.xpose.msra.mxu0 0.0
        %2336 = vmatprep.subr.mxu0 0.0
        %2337 = vmatpush1.xpose.msra.mxu0 0.0
        %2338 = vmatprep.subr.mxu0 0.0
        %2339 = vmatpush1.xpose.msra.mxu0 0.0
        %2340 = vmatprep.subr.mxu0 0.0
        %2341 = vmatpush1.xpose.msra.mxu0 0.0
        %2342 = vmatprep.subr.mxu0 0.0
        %2343 = vmatpush1.xpose.msra.mxu0 0.0
        %2344 = vmatprep.subr.mxu0 0.0
        %2345 = vmatpush1.xpose.msra.mxu0 0.0
        %2346 = vmatprep.subr.mxu0 0.0
        %2347 = vmatpush1.xpose.msra.mxu0 0.0
        %2348 = vmatprep.subr.mxu0 0.0
        %2349 = vmatpush1.xpose.msra.mxu0 0.0
        %2350 = vmatprep.subr.mxu0 0.0
        %2351 = vmatpush1.xpose.msra.mxu0 0.0
        %2352 = vmatprep.subr.mxu0 0.0
        %2353 = vmatpush1.xpose.msra.mxu0 0.0
        %2354 = vmatprep.subr.mxu0 0.0
        %2355 = vmatpush1.xpose.msra.mxu0 0.0
        %2356 = vmatprep.subr.mxu0 0.0
        %2357 = vmatpush1.xpose.msra.mxu0 0.0
        %2358 = vmatprep.subr.mxu0 0.0
        %2359 = vmatpush1.xpose.msra.mxu0 0.0
        %2360 = vmatprep.subr.mxu0 0.0
        %2361 = vmatpush1.xpose.msra.mxu0 0.0
        %2362 = vmatprep.subr.mxu0 0.0
        %2363 = vmatpush1.xpose.msra.mxu0 0.0
        %2364 = vmatprep.subr.mxu0 0.0
        %2365 = vmatpush1.xpose.msra.mxu0 0.0
        %2366 = vmatprep.subr.mxu0 0.0
        %2367 = vmatpush1.xpose.msra.mxu0 0.0
        %2368 = vmatprep.subr.mxu0 0.0
        %2369 = vmatpush1.xpose.msra.mxu0 0.0
        %2370 = vmatprep.subr.mxu0 0.0
        %2371 = vmatpush1.xpose.msra.mxu0 0.0
        %2372 = vmatprep.mubr.f32.mxu0 0.0
        %2373 = vmatmul.mubr.f32.gmra.mrb[0].mxu0 %v2304
        %v2374 = vpop.f32.mrb[0].mxu0
        %v2375 = vadd.f32 0.0, %v2374
        %v2376 = vpop.f32.mrb[0].mxu0
        %2377 = vdwg.mxu0
        %v2378 = vmul.f32 %v2375, 0.35355338
        %v2379 = vadd.f32 %v2378, %v659
        %v2380 = vsel %vm1241, %v2379, -inf
        %2381 = vmax.xlane.f32.xlu0 %v2380
        %v2382 = vpop.xlane.xlu0 %2381
        %v2383 = vsub.f32 %v2379, %v2382
        %v2384 = vmul.f32 %v2383, 1.442695
        %v2385 = vpow.pop %v2384
        %v2386 = vsel %vm1241, %v2385, 0.0
        %2387 = vadd.xlane.f32.xlu0 %v2386
        %v2388 = vpop.xlane.xlu0 %2387
        %v2389 = vrcp.pop %v2388
        %v2390 = vmul.f32 %v2385, %v2389
        %v2392 = vsel %vm1253, %v2390, 0
        %2394 = vmatprep.subr.mxu0 0.0
        %2395 = vmatpush1.xpose.msra.mxu0 %v2392
        %2396 = vmatprep.subr.mxu0 0.0
        %2397 = vmatpush1.xpose.msra.mxu0 0.0
        %2398 = vmatprep.subr.mxu0 0.0
        %2399 = vmatpush1.xpose.msra.mxu0 0.0
        %2400 = vmatprep.subr.mxu0 0.0
        %2401 = vmatpush1.xpose.msra.mxu0 0.0
        %2402 = vmatprep.subr.mxu0 0.0
        %2403 = vmatpush1.xpose.msra.mxu0 0.0
        %2404 = vmatprep.subr.mxu0 0.0
        %2405 = vmatpush1.xpose.msra.mxu0 0.0
        %2406 = vmatprep.subr.mxu0 0.0
        %2407 = vmatpush1.xpose.msra.mxu0 0.0
        %2408 = vmatprep.subr.mxu0 0.0
        %2409 = vmatpush1.xpose.msra.mxu0 0.0
        %2410 = vmatprep.subr.mxu0 0.0
        %2411 = vmatpush1.xpose.msra.mxu0 0.0
        %2412 = vmatprep.subr.mxu0 0.0
        %2413 = vmatpush1.xpose.msra.mxu0 0.0
        %2414 = vmatprep.subr.mxu0 0.0
        %2415 = vmatpush1.xpose.msra.mxu0 0.0
        %2416 = vmatprep.subr.mxu0 0.0
        %2417 = vmatpush1.xpose.msra.mxu0 0.0
        %2418 = vmatprep.subr.mxu0 0.0
        %2419 = vmatpush1.xpose.msra.mxu0 0.0
        %2420 = vmatprep.subr.mxu0 0.0
        %2421 = vmatpush1.xpose.msra.mxu0 0.0
        %2422 = vmatprep.subr.mxu0 0.0
        %2423 = vmatpush1.xpose.msra.mxu0 0.0
        %2424 = vmatprep.subr.mxu0 0.0
        %2425 = vmatpush1.xpose.msra.mxu0 0.0
        %2426 = vmatprep.subr.mxu0 0.0
        %2427 = vmatpush1.xpose.msra.mxu0 0.0
        %2428 = vmatprep.subr.mxu0 0.0
        %2429 = vmatpush1.xpose.msra.mxu0 0.0
        %2430 = vmatprep.subr.mxu0 0.0
        %2431 = vmatpush1.xpose.msra.mxu0 0.0
        %2432 = vmatprep.subr.mxu0 0.0
        %2433 = vmatpush1.xpose.msra.mxu0 0.0
        %2434 = vmatprep.subr.mxu0 0.0
        %2435 = vmatpush1.xpose.msra.mxu0 0.0
        %2436 = vmatprep.subr.mxu0 0.0
        %2437 = vmatpush1.xpose.msra.mxu0 0.0
        %2438 = vmatprep.subr.mxu0 0.0
        %2439 = vmatpush1.xpose.msra.mxu0 0.0
        %2440 = vmatprep.subr.mxu0 0.0
        %2441 = vmatpush1.xpose.msra.mxu0 0.0
        %2442 = vmatprep.subr.mxu0 0.0
        %2443 = vmatpush1.xpose.msra.mxu0 0.0
        %2444 = vmatprep.subr.mxu0 0.0
        %2445 = vmatpush1.xpose.msra.mxu0 0.0
        %2446 = vmatprep.subr.mxu0 0.0
        %2447 = vmatpush1.xpose.msra.mxu0 0.0
        %2448 = vmatprep.subr.mxu0 0.0
        %2449 = vmatpush1.xpose.msra.mxu0 0.0
        %2450 = vmatprep.subr.mxu0 0.0
        %2451 = vmatpush1.xpose.msra.mxu0 0.0
        %2452 = vmatprep.subr.mxu0 0.0
        %2453 = vmatpush1.xpose.msra.mxu0 0.0
        %2454 = vmatprep.subr.mxu0 0.0
        %2455 = vmatpush1.xpose.msra.mxu0 0.0
        %2456 = vmatprep.subr.mxu0 0.0
        %2457 = vmatpush1.xpose.msra.mxu0 0.0
        %2458 = vmatprep.mubr.f32.mxu0 0.0
        %2459 = vmatmul.mubr.f32.gmra.mrb[0].mxu0 %v1255
        %v2460 = vpop.f32.mrb[0].mxu0
        %v2461 = vadd.f32 0.0, %v2460
        %v2462 = vpop.f32.mrb[0].mxu0
        %2463 = vmatprep.mubr.f32.mxu0 0.0
        %2464 = vmatmul.mubr.f32.gmra.mrb[0].mxu0 %v1258
        %v2465 = vpop.f32.mrb[0].mxu0
        %v2466 = vadd.f32 0.0, %v2465
        %v2467 = vpop.f32.mrb[0].mxu0
        %2468 = vdwg.mxu0
        %2470 = vset.pattern.permute.xlu0 0
        %2471 = vperm.xlu0 %2470, %v2461
        %v2472 = vpop.permute.xlu0 %2471
        %2475 = vset.pattern.permute.xlu0 0
        %2476 = vperm.xlu0 %2475, %v2466
        %v2477 = vpop.permute.xlu0 %2476
        %v2479 = vmul.f32 %v2472, %v793
        %v2480 = vmul.f32 %v2477, %v798
        %2483 = vrot.lane.b32.xlu0 %v2479, 48
        %v2484 = vpop.permute.xlu0 %2483
        %2485 = vrot.lane.b32.xlu0 %v2480, 48
        %v2486 = vpop.permute.xlu0 %2485
        %v2490 = vsel %vm801, %v2179, 0
        %2492 = vmatprep.subr.mxu0 0.0
        %2493 = vmatpush1.msra.mxu0 %v2484
        %2494 = vmatprep.subr.mxu0 0.0
        %2495 = vmatpush1.msra.mxu0 %v2486
        %2496 = vmatprep.subr.mxu0 0.0
        %2497 = vmatpush1.msra.mxu0 0.0
        %2498 = vmatprep.subr.mxu0 0.0
        %2499 = vmatpush1.msra.mxu0 0.0
        %2500 = vmatprep.subr.mxu0 0.0
        %2501 = vmatpush1.msra.mxu0 0.0
        %2502 = vmatprep.subr.mxu0 0.0
        %2503 = vmatpush1.msra.mxu0 0.0
        %2504 = vmatprep.subr.mxu0 0.0
        %2505 = vmatpush1.msra.mxu0 0.0
        %2506 = vmatprep.subr.mxu0 0.0
        %2507 = vmatpush1.msra.mxu0 0.0
        %2508 = vmatprep.subr.mxu0 0.0
        %2509 = vmatpush1.msra.mxu0 0.0
        %2510 = vmatprep.subr.mxu0 0.0
        %2511 = vmatpush1.msra.mxu0 0.0
        %2512 = vmatprep.subr.mxu0 0.0
        %2513 = vmatpush1.msra.mxu0 0.0
        %2514 = vmatprep.subr.mxu0 0.0
        %2515 = vmatpush1.msra.mxu0 0.0
        %2516 = vmatprep.subr.mxu0 0.0
        %2517 = vmatpush1.msra.mxu0 0.0
        %2518 = vmatprep.subr.mxu0 0.0
        %2519 = vmatpush1.msra.mxu0 0.0
        %2520 = vmatprep.subr.mxu0 0.0
        %2521 = vmatpush1.msra.mxu0 0.0
        %2522 = vmatprep.subr.mxu0 0.0
        %2523 = vmatpush1.msra.mxu0 0.0
        %2524 = vmatprep.subr.mxu0 0.0
        %2525 = vmatpush1.msra.mxu0 0.0
        %2526 = vmatprep.subr.mxu0 0.0
        %2527 = vmatpush1.msra.mxu0 0.0
        %2528 = vmatprep.subr.mxu0 0.0
        %2529 = vmatpush1.msra.mxu0 0.0
        %2530 = vmatprep.subr.mxu0 0.0
        %2531 = vmatpush1.msra.mxu0 0.0
        %2532 = vmatprep.subr.mxu0 0.0
        %2533 = vmatpush1.msra.mxu0 0.0
        %2534 = vmatprep.subr.mxu0 0.0
        %2535 = vmatpush1.msra.mxu0 0.0
        %2536 = vmatprep.subr.mxu0 0.0
        %2537 = vmatpush1.msra.mxu0 0.0
        %2538 = vmatprep.subr.mxu0 0.0
        %2539 = vmatpush1.msra.mxu0 0.0
        %2540 = vmatprep.subr.mxu0 0.0
        %2541 = vmatpush1.msra.mxu0 0.0
        %2542 = vmatprep.subr.mxu0 0.0
        %2543 = vmatpush1.msra.mxu0 0.0
        %2544 = vmatprep.subr.mxu0 0.0
        %2545 = vmatpush1.msra.mxu0 0.0
        %2546 = vmatprep.subr.mxu0 0.0
        %2547 = vmatpush1.msra.mxu0 0.0
        %2548 = vmatprep.subr.mxu0 0.0
        %2549 = vmatpush1.msra.mxu0 0.0
        %2550 = vmatprep.subr.mxu0 0.0
        %2551 = vmatpush1.msra.mxu0 0.0
        %2552 = vmatprep.subr.mxu0 0.0
        %2553 = vmatpush1.msra.mxu0 0.0
        %2554 = vmatprep.subr.mxu0 0.0
        %2555 = vmatpush1.msra.mxu0 0.0
        %2556 = vmatprep.mubr.f32.mxu0 0.0
        %2557 = vmatmul.mubr.f32.gmra.mrb[0].mxu0 %v2490
        %v2558 = vpop.f32.mrb[0].mxu0
        %v2559 = vadd.f32 0.0, %v2558
        %v2560 = vpop.f32.mrb[0].mxu0
        %2561 = vdwg.mxu0
        %v2562 = vadd.f32 %v2292, %v2559
        %2564 = vrot.lane.b32.xlu0 %v2562, 16
        %v2565 = vpop.permute.xlu0 %2564
        %vm2567 = vcmask 195712
        %2568 = vst.msk [vmem:[#allocation2] sm:$0xff] %vm2567, %v2565
        %2569 = vset.pattern.permute.xlu0 1
        %2570 = vperm.xlu0 %2569, %v2461
        %v2571 = vpop.permute.xlu0 %2570
        %2573 = vset.pattern.permute.xlu0 1
        %2574 = vperm.xlu0 %2573, %v2466
        %v2575 = vpop.permute.xlu0 %2574
        %v2577 = vmul.f32 %v2571, %v793
        %v2578 = vmul.f32 %v2575, %v798
        %2581 = vrot.lane.b32.xlu0 %v2577, 48
        %v2582 = vpop.permute.xlu0 %2581
        %2583 = vrot.lane.b32.xlu0 %v2578, 48
        %v2584 = vpop.permute.xlu0 %2583
        %v2588 = vsel %vm801, %v2184, 0
        %2590 = vmatprep.subr.mxu0 0.0
        %2591 = vmatpush1.msra.mxu0 %v2582
        %2592 = vmatprep.subr.mxu0 0.0
        %2593 = vmatpush1.msra.mxu0 %v2584
        %2594 = vmatprep.subr.mxu0 0.0
        %2595 = vmatpush1.msra.mxu0 0.0
        %2596 = vmatprep.subr.mxu0 0.0
        %2597 = vmatpush1.msra.mxu0 0.0
        %2598 = vmatprep.subr.mxu0 0.0
        %2599 = vmatpush1.msra.mxu0 0.0
        %2600 = vmatprep.subr.mxu0 0.0
        %2601 = vmatpush1.msra.mxu0 0.0
        %2602 = vmatprep.subr.mxu0 0.0
        %2603 = vmatpush1.msra.mxu0 0.0
        %2604 = vmatprep.subr.mxu0 0.0
        %2605 = vmatpush1.msra.mxu0 0.0
        %2606 = vmatprep.subr.mxu0 0.0
        %2607 = vmatpush1.msra.mxu0 0.0
        %2608 = vmatprep.subr.mxu0 0.0
        %2609 = vmatpush1.msra.mxu0 0.0
        %2610 = vmatprep.subr.mxu0 0.0
        %2611 = vmatpush1.msra.mxu0 0.0
        %2612 = vmatprep.subr.mxu0 0.0
        %2613 = vmatpush1.msra.mxu0 0.0
        %2614 = vmatprep.subr.mxu0 0.0
        %2615 = vmatpush1.msra.mxu0 0.0
        %2616 = vmatprep.subr.mxu0 0.0
        %2617 = vmatpush1.msra.mxu0 0.0
        %2618 = vmatprep.subr.mxu0 0.0
        %2619 = vmatpush1.msra.mxu0 0.0
        %2620 = vmatprep.subr.mxu0 0.0
        %2621 = vmatpush1.msra.mxu0 0.0
        %2622 = vmatprep.subr.mxu0 0.0
        %2623 = vmatpush1.msra.mxu0 0.0
        %2624 = vmatprep.subr.mxu0 0.0
        %2625 = vmatpush1.msra.mxu0 0.0
        %2626 = vmatprep.subr.mxu0 0.0
        %2627 = vmatpush1.msra.mxu0 0.0
        %2628 = vmatprep.subr.mxu0 0.0
        %2629 = vmatpush1.msra.mxu0 0.0
        %2630 = vmatprep.subr.mxu0 0.0
        %2631 = vmatpush1.msra.mxu0 0.0
        %2632 = vmatprep.subr.mxu0 0.0
        %2633 = vmatpush1.msra.mxu0 0.0
        %2634 = vmatprep.subr.mxu0 0.0
        %2635 = vmatpush1.msra.mxu0 0.0
        %2636 = vmatprep.subr.mxu0 0.0
        %2637 = vmatpush1.msra.mxu0 0.0
        %2638 = vmatprep.subr.mxu0 0.0
        %2639 = vmatpush1.msra.mxu0 0.0
        %2640 = vmatprep.subr.mxu0 0.0
        %2641 = vmatpush1.msra.mxu0 0.0
        %2642 = vmatprep.subr.mxu0 0.0
        %2643 = vmatpush1.msra.mxu0 0.0
        %2644 = vmatprep.subr.mxu0 0.0
        %2645 = vmatpush1.msra.mxu0 0.0
        %2646 = vmatprep.subr.mxu0 0.0
        %2647 = vmatpush1.msra.mxu0 0.0
        %2648 = vmatprep.subr.mxu0 0.0
        %2649 = vmatpush1.msra.mxu0 0.0
        %2650 = vmatprep.subr.mxu0 0.0
        %2651 = vmatpush1.msra.mxu0 0.0
        %2652 = vmatprep.subr.mxu0 0.0
        %2653 = vmatpush1.msra.mxu0 0.0
        %2654 = vmatprep.mubr.f32.mxu0 0.0
        %2655 = vmatmul.mubr.f32.gmra.mrb[0].mxu0 %v2588
        %v2656 = vpop.f32.mrb[0].mxu0
        %v2657 = vadd.f32 0.0, %v2656
        %v2658 = vpop.f32.mrb[0].mxu0
        %2659 = vdwg.mxu0
        %v2660 = vadd.f32 %v2297, %v2657
        %2662 = vrot.lane.b32.xlu0 %v2660, 16
        %v2663 = vpop.permute.xlu0 %2662
        %2665 = vst.msk [vmem:[#allocation2 + $0x8] sm:$0xff] %vm2567, %v2663
        %2666 = vrot.lane.b32.xlu0 %v793, 104
        %v2667 = vpop.permute.xlu0 %2666
        %2668 = vrot.lane.b32.xlu0 %v798, 104
        %v2669 = vpop.permute.xlu0 %2668
        %2670 = vrot.lane.b32.xlu0 %v793, 72
        %v2671 = vpop.permute.xlu0 %2670
        %2672 = vrot.lane.b32.xlu0 %v798, 72
        %v2673 = vpop.permute.xlu0 %2672
        %v2674 = vsel %vm965, %v2667, 0
        %v2676 = vsel %vm965, %v2669, 0
        %v2678 = vsel %vm965, %v2671, 0
        %v2680 = vsel %vm965, %v2673, 0
        %2682 = vmatprep.subr.mxu0 0.0
        %2683 = vmatpush1.xpose.msra.mxu0 %v2678
        %2684 = vmatprep.subr.mxu0 0.0
        %2685 = vmatpush1.xpose.msra.mxu0 %v2680
        %2686 = vmatprep.subr.mxu0 0.0
        %2687 = vmatpush1.xpose.msra.mxu0 0.0
        %2688 = vmatprep.subr.mxu0 0.0
        %2689 = vmatpush1.xpose.msra.mxu0 0.0
        %2690 = vmatprep.subr.mxu0 0.0
        %2691 = vmatpush1.xpose.msra.mxu0 0.0
        %2692 = vmatprep.subr.mxu0 0.0
        %2693 = vmatpush1.xpose.msra.mxu0 0.0
        %2694 = vmatprep.subr.mxu0 0.0
        %2695 = vmatpush1.xpose.msra.mxu0 0.0
        %2696 = vmatprep.subr.mxu0 0.0
        %2697 = vmatpush1.xpose.msra.mxu0 0.0
        %2698 = vmatprep.subr.mxu0 0.0
        %2699 = vmatpush1.xpose.msra.mxu0 0.0
        %2700 = vmatprep.subr.mxu0 0.0
        %2701 = vmatpush1.xpose.msra.mxu0 0.0
        %2702 = vmatprep.subr.mxu0 0.0
        %2703 = vmatpush1.xpose.msra.mxu0 0.0
        %2704 = vmatprep.subr.mxu0 0.0
        %2705 = vmatpush1.xpose.msra.mxu0 0.0
        %2706 = vmatprep.subr.mxu0 0.0
        %2707 = vmatpush1.xpose.msra.mxu0 0.0
        %2708 = vmatprep.subr.mxu0 0.0
        %2709 = vmatpush1.xpose.msra.mxu0 0.0
        %2710 = vmatprep.subr.mxu0 0.0
        %2711 = vmatpush1.xpose.msra.mxu0 0.0
        %2712 = vmatprep.subr.mxu0 0.0
        %2713 = vmatpush1.xpose.msra.mxu0 0.0
        %2714 = vmatprep.subr.mxu0 0.0
        %2715 = vmatpush1.xpose.msra.mxu0 0.0
        %2716 = vmatprep.subr.mxu0 0.0
        %2717 = vmatpush1.xpose.msra.mxu0 0.0
        %2718 = vmatprep.subr.mxu0 0.0
        %2719 = vmatpush1.xpose.msra.mxu0 0.0
        %2720 = vmatprep.subr.mxu0 0.0
        %2721 = vmatpush1.xpose.msra.mxu0 0.0
        %2722 = vmatprep.subr.mxu0 0.0
        %2723 = vmatpush1.xpose.msra.mxu0 0.0
        %2724 = vmatprep.subr.mxu0 0.0
        %2725 = vmatpush1.xpose.msra.mxu0 0.0
        %2726 = vmatprep.subr.mxu0 0.0
        %2727 = vmatpush1.xpose.msra.mxu0 0.0
        %2728 = vmatprep.subr.mxu0 0.0
        %2729 = vmatpush1.xpose.msra.mxu0 0.0
        %2730 = vmatprep.subr.mxu0 0.0
        %2731 = vmatpush1.xpose.msra.mxu0 0.0
        %2732 = vmatprep.subr.mxu0 0.0
        %2733 = vmatpush1.xpose.msra.mxu0 0.0
        %2734 = vmatprep.subr.mxu0 0.0
        %2735 = vmatpush1.xpose.msra.mxu0 0.0
        %2736 = vmatprep.subr.mxu0 0.0
        %2737 = vmatpush1.xpose.msra.mxu0 0.0
        %2738 = vmatprep.subr.mxu0 0.0
        %2739 = vmatpush1.xpose.msra.mxu0 0.0
        %2740 = vmatprep.subr.mxu0 0.0
        %2741 = vmatpush1.xpose.msra.mxu0 0.0
        %2742 = vmatprep.subr.mxu0 0.0
        %2743 = vmatpush1.xpose.msra.mxu0 0.0
        %2744 = vmatprep.subr.mxu0 0.0
        %2745 = vmatpush1.xpose.msra.mxu0 0.0
        %2746 = vmatprep.mubr.f32.mxu0 0.0
        %2747 = vmatmul.mubr.f32.gmra.mrb[0].mxu0 %v2674
        %v2748 = vpop.f32.mrb[0].mxu0
        %v2749 = vadd.f32 0.0, %v2748
        %v2750 = vpop.f32.mrb[0].mxu0
        %2751 = vmatprep.mubr.f32.mxu0 0.0
        %2752 = vmatmul.mubr.f32.gmra.mrb[0].mxu0 %v2676
        %v2753 = vpop.f32.mrb[0].mxu0
        %v2754 = vadd.f32 0.0, %v2753
        %v2755 = vpop.f32.mrb[0].mxu0
        %2756 = vdwg.mxu0
        %v2757 = vmul.f32 %v2749, 0.35355338
        %v2758 = vmul.f32 %v2754, 0.35355338
        %v2759 = vadd.f32 %v2757, %v657
        %v2760 = vadd.f32 %v2758, %v658
        %v2761 = vsel %vm801, %v2759, -inf
        %2762 = vmax.xlane.f32.xlu0 %v2761
        %v2763 = vpop.xlane.xlu0 %2762
        %v2764 = vsel %vm801, %v2760, -inf
        %2765 = vmax.xlane.f32.xlu0 %v2764
        %v2766 = vpop.xlane.xlu0 %2765
        %v2767 = vsub.f32 %v2759, %v2763
        %v2768 = vsub.f32 %v2760, %v2766
        %v2769 = vmul.f32 %v2767, 1.442695
        %v2770 = vpow.pop %v2769
        %v2771 = vmul.f32 %v2768, 1.442695
        %v2772 = vpow.pop %v2771
        %v2773 = vsel %vm801, %v2770, 0.0
        %2774 = vadd.xlane.f32.xlu0 %v2773
        %v2775 = vpop.xlane.xlu0 %2774
        %v2776 = vsel %vm801, %v2772, 0.0
        %2777 = vadd.xlane.f32.xlu0 %v2776
        %v2778 = vpop.xlane.xlu0 %2777
        %v2779 = vrcp.pop %v2775
        %v2780 = vrcp.pop %v2778
        %v2781 = vmul.f32 %v2770, %v2779
        %v2782 = vmul.f32 %v2772, %v2780
        %2783 = vrot.lane.b32.xlu0 %v793, 40
        %v2784 = vpop.permute.xlu0 %2783
        %2785 = vrot.lane.b32.xlu0 %v798, 40
        %v2786 = vpop.permute.xlu0 %2785
        %v2790 = vsel %vm801, %v2781, 0
        %v2793 = vsel %vm801, %v2782, 0
        %2795 = vmatprep.subr.mxu0 0.0
        %2796 = vmatpush1.msra.mxu0 %v2784
        %2797 = vmatprep.subr.mxu0 0.0
        %2798 = vmatpush1.msra.mxu0 %v2786
        %2799 = vmatprep.subr.mxu0 0.0
        %2800 = vmatpush1.msra.mxu0 0.0
        %2801 = vmatprep.subr.mxu0 0.0
        %2802 = vmatpush1.msra.mxu0 0.0
        %2803 = vmatprep.subr.mxu0 0.0
        %2804 = vmatpush1.msra.mxu0 0.0
        %2805 = vmatprep.subr.mxu0 0.0
        %2806 = vmatpush1.msra.mxu0 0.0
        %2807 = vmatprep.subr.mxu0 0.0
        %2808 = vmatpush1.msra.mxu0 0.0
        %2809 = vmatprep.subr.mxu0 0.0
        %2810 = vmatpush1.msra.mxu0 0.0
        %2811 = vmatprep.subr.mxu0 0.0
        %2812 = vmatpush1.msra.mxu0 0.0
        %2813 = vmatprep.subr.mxu0 0.0
        %2814 = vmatpush1.msra.mxu0 0.0
        %2815 = vmatprep.subr.mxu0 0.0
        %2816 = vmatpush1.msra.mxu0 0.0
        %2817 = vmatprep.subr.mxu0 0.0
        %2818 = vmatpush1.msra.mxu0 0.0
        %2819 = vmatprep.subr.mxu0 0.0
        %2820 = vmatpush1.msra.mxu0 0.0
        %2821 = vmatprep.subr.mxu0 0.0
        %2822 = vmatpush1.msra.mxu0 0.0
        %2823 = vmatprep.subr.mxu0 0.0
        %2824 = vmatpush1.msra.mxu0 0.0
        %2825 = vmatprep.subr.mxu0 0.0
        %2826 = vmatpush1.msra.mxu0 0.0
        %2827 = vmatprep.subr.mxu0 0.0
        %2828 = vmatpush1.msra.mxu0 0.0
        %2829 = vmatprep.subr.mxu0 0.0
        %2830 = vmatpush1.msra.mxu0 0.0
        %2831 = vmatprep.subr.mxu0 0.0
        %2832 = vmatpush1.msra.mxu0 0.0
        %2833 = vmatprep.subr.mxu0 0.0
        %2834 = vmatpush1.msra.mxu0 0.0
        %2835 = vmatprep.subr.mxu0 0.0
        %2836 = vmatpush1.msra.mxu0 0.0
        %2837 = vmatprep.subr.mxu0 0.0
        %2838 = vmatpush1.msra.mxu0 0.0
        %2839 = vmatprep.subr.mxu0 0.0
        %2840 = vmatpush1.msra.mxu0 0.0
        %2841 = vmatprep.subr.mxu0 0.0
        %2842 = vmatpush1.msra.mxu0 0.0
        %2843 = vmatprep.subr.mxu0 0.0
        %2844 = vmatpush1.msra.mxu0 0.0
        %2845 = vmatprep.subr.mxu0 0.0
        %2846 = vmatpush1.msra.mxu0 0.0
        %2847 = vmatprep.subr.mxu0 0.0
        %2848 = vmatpush1.msra.mxu0 0.0
        %2849 = vmatprep.subr.mxu0 0.0
        %2850 = vmatpush1.msra.mxu0 0.0
        %2851 = vmatprep.subr.mxu0 0.0
        %2852 = vmatpush1.msra.mxu0 0.0
        %2853 = vmatprep.subr.mxu0 0.0
        %2854 = vmatpush1.msra.mxu0 0.0
        %2855 = vmatprep.subr.mxu0 0.0
        %2856 = vmatpush1.msra.mxu0 0.0
        %2857 = vmatprep.subr.mxu0 0.0
        %2858 = vmatpush1.msra.mxu0 0.0
        %2859 = vmatprep.mubr.f32.mxu0 0.0
        %2860 = vmatmul.mubr.f32.gmra.mrb[0].mxu0 %v2790
        %v2861 = vpop.f32.mrb[0].mxu0
        %v2862 = vadd.f32 0.0, %v2861
        %v2863 = vpop.f32.mrb[0].mxu0
        %2864 = vmatprep.mubr.f32.mxu0 0.0
        %2865 = vmatmul.mubr.f32.gmra.mrb[0].mxu0 %v2793
        %v2866 = vpop.f32.mrb[0].mxu0
        %v2867 = vadd.f32 0.0, %v2866
        %v2868 = vpop.f32.mrb[0].mxu0
        %2869 = vdwg.mxu0
        %2870 = vrot.lane.b32.xlu0 %v956, 104
        %v2871 = vpop.permute.xlu0 %2870
        %2872 = vrot.lane.b32.xlu0 %v956, 72
        %v2873 = vpop.permute.xlu0 %2872
        %v2874 = vsel %vm965, %v2871, 0
        %v2876 = vsel %vm965, %v2873, 0
        %2878 = vmatprep.subr.mxu0 0.0
        %2879 = vmatpush1.xpose.msra.mxu0 %v2876
        %2880 = vmatprep.subr.mxu0 0.0
        %2881 = vmatpush1.xpose.msra.mxu0 0.0
        %2882 = vmatprep.subr.mxu0 0.0
        %2883 = vmatpush1.xpose.msra.mxu0 0.0
        %2884 = vmatprep.subr.mxu0 0.0
        %2885 = vmatpush1.xpose.msra.mxu0 0.0
        %2886 = vmatprep.subr.mxu0 0.0
        %2887 = vmatpush1.xpose.msra.mxu0 0.0
        %2888 = vmatprep.subr.mxu0 0.0
        %2889 = vmatpush1.xpose.msra.mxu0 0.0
        %2890 = vmatprep.subr.mxu0 0.0
        %2891 = vmatpush1.xpose.msra.mxu0 0.0
        %2892 = vmatprep.subr.mxu0 0.0
        %2893 = vmatpush1.xpose.msra.mxu0 0.0
        %2894 = vmatprep.subr.mxu0 0.0
        %2895 = vmatpush1.xpose.msra.mxu0 0.0
        %2896 = vmatprep.subr.mxu0 0.0
        %2897 = vmatpush1.xpose.msra.mxu0 0.0
        %2898 = vmatprep.subr.mxu0 0.0
        %2899 = vmatpush1.xpose.msra.mxu0 0.0
        %2900 = vmatprep.subr.mxu0 0.0
        %2901 = vmatpush1.xpose.msra.mxu0 0.0
        %2902 = vmatprep.subr.mxu0 0.0
        %2903 = vmatpush1.xpose.msra.mxu0 0.0
        %2904 = vmatprep.subr.mxu0 0.0
        %2905 = vmatpush1.xpose.msra.mxu0 0.0
        %2906 = vmatprep.subr.mxu0 0.0
        %2907 = vmatpush1.xpose.msra.mxu0 0.0
        %2908 = vmatprep.subr.mxu0 0.0
        %2909 = vmatpush1.xpose.msra.mxu0 0.0
        %2910 = vmatprep.subr.mxu0 0.0
        %2911 = vmatpush1.xpose.msra.mxu0 0.0
        %2912 = vmatprep.subr.mxu0 0.0
        %2913 = vmatpush1.xpose.msra.mxu0 0.0
        %2914 = vmatprep.subr.mxu0 0.0
        %2915 = vmatpush1.xpose.msra.mxu0 0.0
        %2916 = vmatprep.subr.mxu0 0.0
        %2917 = vmatpush1.xpose.msra.mxu0 0.0
        %2918 = vmatprep.subr.mxu0 0.0
        %2919 = vmatpush1.xpose.msra.mxu0 0.0
        %2920 = vmatprep.subr.mxu0 0.0
        %2921 = vmatpush1.xpose.msra.mxu0 0.0
        %2922 = vmatprep.subr.mxu0 0.0
        %2923 = vmatpush1.xpose.msra.mxu0 0.0
        %2924 = vmatprep.subr.mxu0 0.0
        %2925 = vmatpush1.xpose.msra.mxu0 0.0
        %2926 = vmatprep.subr.mxu0 0.0
        %2927 = vmatpush1.xpose.msra.mxu0 0.0
        %2928 = vmatprep.subr.mxu0 0.0
        %2929 = vmatpush1.xpose.msra.mxu0 0.0
        %2930 = vmatprep.subr.mxu0 0.0
        %2931 = vmatpush1.xpose.msra.mxu0 0.0
        %2932 = vmatprep.subr.mxu0 0.0
        %2933 = vmatpush1.xpose.msra.mxu0 0.0
        %2934 = vmatprep.subr.mxu0 0.0
        %2935 = vmatpush1.xpose.msra.mxu0 0.0
        %2936 = vmatprep.subr.mxu0 0.0
        %2937 = vmatpush1.xpose.msra.mxu0 0.0
        %2938 = vmatprep.subr.mxu0 0.0
        %2939 = vmatpush1.xpose.msra.mxu0 0.0
        %2940 = vmatprep.subr.mxu0 0.0
        %2941 = vmatpush1.xpose.msra.mxu0 0.0
        %2942 = vmatprep.mubr.f32.mxu0 0.0
        %2943 = vmatmul.mubr.f32.gmra.mrb[0].mxu0 %v2874
        %v2944 = vpop.f32.mrb[0].mxu0
        %v2945 = vadd.f32 0.0, %v2944
        %v2946 = vpop.f32.mrb[0].mxu0
        %2947 = vdwg.mxu0
        %v2948 = vmul.f32 %v2945, 0.35355338
        %v2949 = vadd.f32 %v2948, %v659
        %v2950 = vsel %vm1241, %v2949, -inf
        %2951 = vmax.xlane.f32.xlu0 %v2950
        %v2952 = vpop.xlane.xlu0 %2951
        %v2953 = vsub.f32 %v2949, %v2952
        %v2954 = vmul.f32 %v2953, 1.442695
        %v2955 = vpow.pop %v2954
        %v2956 = vsel %vm1241, %v2955, 0.0
        %2957 = vadd.xlane.f32.xlu0 %v2956
        %v2958 = vpop.xlane.xlu0 %2957
        %v2959 = vrcp.pop %v2958
        %v2960 = vmul.f32 %v2955, %v2959
        %v2962 = vsel %vm1253, %v2960, 0
        %2964 = vmatprep.subr.mxu0 0.0
        %2965 = vmatpush1.xpose.msra.mxu0 %v2962
        %2966 = vmatprep.subr.mxu0 0.0
        %2967 = vmatpush1.xpose.msra.mxu0 0.0
        %2968 = vmatprep.subr.mxu0 0.0
        %2969 = vmatpush1.xpose.msra.mxu0 0.0
        %2970 = vmatprep.subr.mxu0 0.0
        %2971 = vmatpush1.xpose.msra.mxu0 0.0
        %2972 = vmatprep.subr.mxu0 0.0
        %2973 = vmatpush1.xpose.msra.mxu0 0.0
        %2974 = vmatprep.subr.mxu0 0.0
        %2975 = vmatpush1.xpose.msra.mxu0 0.0
        %2976 = vmatprep.subr.mxu0 0.0
        %2977 = vmatpush1.xpose.msra.mxu0 0.0
        %2978 = vmatprep.subr.mxu0 0.0
        %2979 = vmatpush1.xpose.msra.mxu0 0.0
        %2980 = vmatprep.subr.mxu0 0.0
        %2981 = vmatpush1.xpose.msra.mxu0 0.0
        %2982 = vmatprep.subr.mxu0 0.0
        %2983 = vmatpush1.xpose.msra.mxu0 0.0
        %2984 = vmatprep.subr.mxu0 0.0
        %2985 = vmatpush1.xpose.msra.mxu0 0.0
        %2986 = vmatprep.subr.mxu0 0.0
        %2987 = vmatpush1.xpose.msra.mxu0 0.0
        %2988 = vmatprep.subr.mxu0 0.0
        %2989 = vmatpush1.xpose.msra.mxu0 0.0
        %2990 = vmatprep.subr.mxu0 0.0
        %2991 = vmatpush1.xpose.msra.mxu0 0.0
        %2992 = vmatprep.subr.mxu0 0.0
        %2993 = vmatpush1.xpose.msra.mxu0 0.0
        %2994 = vmatprep.subr.mxu0 0.0
        %2995 = vmatpush1.xpose.msra.mxu0 0.0
        %2996 = vmatprep.subr.mxu0 0.0
        %2997 = vmatpush1.xpose.msra.mxu0 0.0
        %2998 = vmatprep.subr.mxu0 0.0
        %2999 = vmatpush1.xpose.msra.mxu0 0.0
        %3000 = vmatprep.subr.mxu0 0.0
        %3001 = vmatpush1.xpose.msra.mxu0 0.0
        %3002 = vmatprep.subr.mxu0 0.0
        %3003 = vmatpush1.xpose.msra.mxu0 0.0
        %3004 = vmatprep.subr.mxu0 0.0
        %3005 = vmatpush1.xpose.msra.mxu0 0.0
        %3006 = vmatprep.subr.mxu0 0.0
        %3007 = vmatpush1.xpose.msra.mxu0 0.0
        %3008 = vmatprep.subr.mxu0 0.0
        %3009 = vmatpush1.xpose.msra.mxu0 0.0
        %3010 = vmatprep.subr.mxu0 0.0
        %3011 = vmatpush1.xpose.msra.mxu0 0.0
        %3012 = vmatprep.subr.mxu0 0.0
        %3013 = vmatpush1.xpose.msra.mxu0 0.0
        %3014 = vmatprep.subr.mxu0 0.0
        %3015 = vmatpush1.xpose.msra.mxu0 0.0
        %3016 = vmatprep.subr.mxu0 0.0
        %3017 = vmatpush1.xpose.msra.mxu0 0.0
        %3018 = vmatprep.subr.mxu0 0.0
        %3019 = vmatpush1.xpose.msra.mxu0 0.0
        %3020 = vmatprep.subr.mxu0 0.0
        %3021 = vmatpush1.xpose.msra.mxu0 0.0
        %3022 = vmatprep.subr.mxu0 0.0
        %3023 = vmatpush1.xpose.msra.mxu0 0.0
        %3024 = vmatprep.subr.mxu0 0.0
        %3025 = vmatpush1.xpose.msra.mxu0 0.0
        %3026 = vmatprep.subr.mxu0 0.0
        %3027 = vmatpush1.xpose.msra.mxu0 0.0
        %3028 = vmatprep.mubr.f32.mxu0 0.0
        %3029 = vmatmul.mubr.f32.gmra.mrb[0].mxu0 %v1255
        %v3030 = vpop.f32.mrb[0].mxu0
        %v3031 = vadd.f32 0.0, %v3030
        %v3032 = vpop.f32.mrb[0].mxu0
        %3033 = vmatprep.mubr.f32.mxu0 0.0
        %3034 = vmatmul.mubr.f32.gmra.mrb[0].mxu0 %v1258
        %v3035 = vpop.f32.mrb[0].mxu0
        %v3036 = vadd.f32 0.0, %v3035
        %v3037 = vpop.f32.mrb[0].mxu0
        %3038 = vdwg.mxu0
        %3040 = vset.pattern.permute.xlu0 0
        %3041 = vperm.xlu0 %3040, %v3031
        %v3042 = vpop.permute.xlu0 %3041
        %3045 = vset.pattern.permute.xlu0 0
        %3046 = vperm.xlu0 %3045, %v3036
        %v3047 = vpop.permute.xlu0 %3046
        %v3049 = vmul.f32 %v3042, %v793
        %v3050 = vmul.f32 %v3047, %v798
        %3053 = vrot.lane.b32.xlu0 %v3049, 40
        %v3054 = vpop.permute.xlu0 %3053
        %3055 = vrot.lane.b32.xlu0 %v3050, 40
        %v3056 = vpop.permute.xlu0 %3055
        %v3060 = vsel %vm801, %v2749, 0
        %3062 = vmatprep.subr.mxu0 0.0
        %3063 = vmatpush1.msra.mxu0 %v3054
        %3064 = vmatprep.subr.mxu0 0.0
        %3065 = vmatpush1.msra.mxu0 %v3056
        %3066 = vmatprep.subr.mxu0 0.0
        %3067 = vmatpush1.msra.mxu0 0.0
        %3068 = vmatprep.subr.mxu0 0.0
        %3069 = vmatpush1.msra.mxu0 0.0
        %3070 = vmatprep.subr.mxu0 0.0
        %3071 = vmatpush1.msra.mxu0 0.0
        %3072 = vmatprep.subr.mxu0 0.0
        %3073 = vmatpush1.msra.mxu0 0.0
        %3074 = vmatprep.subr.mxu0 0.0
        %3075 = vmatpush1.msra.mxu0 0.0
        %3076 = vmatprep.subr.mxu0 0.0
        %3077 = vmatpush1.msra.mxu0 0.0
        %3078 = vmatprep.subr.mxu0 0.0
        %3079 = vmatpush1.msra.mxu0 0.0
        %3080 = vmatprep.subr.mxu0 0.0
        %3081 = vmatpush1.msra.mxu0 0.0
        %3082 = vmatprep.subr.mxu0 0.0
        %3083 = vmatpush1.msra.mxu0 0.0
        %3084 = vmatprep.subr.mxu0 0.0
        %3085 = vmatpush1.msra.mxu0 0.0
        %3086 = vmatprep.subr.mxu0 0.0
        %3087 = vmatpush1.msra.mxu0 0.0
        %3088 = vmatprep.subr.mxu0 0.0
        %3089 = vmatpush1.msra.mxu0 0.0
        %3090 = vmatprep.subr.mxu0 0.0
        %3091 = vmatpush1.msra.mxu0 0.0
        %3092 = vmatprep.subr.mxu0 0.0
        %3093 = vmatpush1.msra.mxu0 0.0
        %3094 = vmatprep.subr.mxu0 0.0
        %3095 = vmatpush1.msra.mxu0 0.0
        %3096 = vmatprep.subr.mxu0 0.0
        %3097 = vmatpush1.msra.mxu0 0.0
        %3098 = vmatprep.subr.mxu0 0.0
        %3099 = vmatpush1.msra.mxu0 0.0
        %3100 = vmatprep.subr.mxu0 0.0
        %3101 = vmatpush1.msra.mxu0 0.0
        %3102 = vmatprep.subr.mxu0 0.0
        %3103 = vmatpush1.msra.mxu0 0.0
        %3104 = vmatprep.subr.mxu0 0.0
        %3105 = vmatpush1.msra.mxu0 0.0
        %3106 = vmatprep.subr.mxu0 0.0
        %3107 = vmatpush1.msra.mxu0 0.0
        %3108 = vmatprep.subr.mxu0 0.0
        %3109 = vmatpush1.msra.mxu0 0.0
        %3110 = vmatprep.subr.mxu0 0.0
        %3111 = vmatpush1.msra.mxu0 0.0
        %3112 = vmatprep.subr.mxu0 0.0
        %3113 = vmatpush1.msra.mxu0 0.0
        %3114 = vmatprep.subr.mxu0 0.0
        %3115 = vmatpush1.msra.mxu0 0.0
        %3116 = vmatprep.subr.mxu0 0.0
        %3117 = vmatpush1.msra.mxu0 0.0
        %3118 = vmatprep.subr.mxu0 0.0
        %3119 = vmatpush1.msra.mxu0 0.0
        %3120 = vmatprep.subr.mxu0 0.0
        %3121 = vmatpush1.msra.mxu0 0.0
        %3122 = vmatprep.subr.mxu0 0.0
        %3123 = vmatpush1.msra.mxu0 0.0
        %3124 = vmatprep.subr.mxu0 0.0
        %3125 = vmatpush1.msra.mxu0 0.0
        %3126 = vmatprep.mubr.f32.mxu0 0.0
        %3127 = vmatmul.mubr.f32.gmra.mrb[0].mxu0 %v3060
        %v3128 = vpop.f32.mrb[0].mxu0
        %v3129 = vadd.f32 0.0, %v3128
        %v3130 = vpop.f32.mrb[0].mxu0
        %3131 = vdwg.mxu0
        %v3132 = vadd.f32 %v2862, %v3129
        %3134 = vrot.lane.b32.xlu0 %v3132, 24
        %v3135 = vpop.permute.xlu0 %3134
        %vm3137 = vcmask 261312
        %3138 = vst.msk [vmem:[#allocation2] sm:$0xff] %vm3137, %v3135
        %3139 = vset.pattern.permute.xlu0 1
        %3140 = vperm.xlu0 %3139, %v3031
        %v3141 = vpop.permute.xlu0 %3140
        %3143 = vset.pattern.permute.xlu0 1
        %3144 = vperm.xlu0 %3143, %v3036
        %v3145 = vpop.permute.xlu0 %3144
        %v3147 = vmul.f32 %v3141, %v793
        %v3148 = vmul.f32 %v3145, %v798
        %3151 = vrot.lane.b32.xlu0 %v3147, 40
        %v3152 = vpop.permute.xlu0 %3151
        %3153 = vrot.lane.b32.xlu0 %v3148, 40
        %v3154 = vpop.permute.xlu0 %3153
        %v3158 = vsel %vm801, %v2754, 0
        %3160 = vmatprep.subr.mxu0 0.0
        %3161 = vmatpush1.msra.mxu0 %v3152
        %3162 = vmatprep.subr.mxu0 0.0
        %3163 = vmatpush1.msra.mxu0 %v3154
        %3164 = vmatprep.subr.mxu0 0.0
        %3165 = vmatpush1.msra.mxu0 0.0
        %3166 = vmatprep.subr.mxu0 0.0
        %3167 = vmatpush1.msra.mxu0 0.0
        %3168 = vmatprep.subr.mxu0 0.0
        %3169 = vmatpush1.msra.mxu0 0.0
        %3170 = vmatprep.subr.mxu0 0.0
        %3171 = vmatpush1.msra.mxu0 0.0
        %3172 = vmatprep.subr.mxu0 0.0
        %3173 = vmatpush1.msra.mxu0 0.0
        %3174 = vmatprep.subr.mxu0 0.0
        %3175 = vmatpush1.msra.mxu0 0.0
        %3176 = vmatprep.subr.mxu0 0.0
        %3177 = vmatpush1.msra.mxu0 0.0
        %3178 = vmatprep.subr.mxu0 0.0
        %3179 = vmatpush1.msra.mxu0 0.0
        %3180 = vmatprep.subr.mxu0 0.0
        %3181 = vmatpush1.msra.mxu0 0.0
        %3182 = vmatprep.subr.mxu0 0.0
        %3183 = vmatpush1.msra.mxu0 0.0
        %3184 = vmatprep.subr.mxu0 0.0
        %3185 = vmatpush1.msra.mxu0 0.0
        %3186 = vmatprep.subr.mxu0 0.0
        %3187 = vmatpush1.msra.mxu0 0.0
        %3188 = vmatprep.subr.mxu0 0.0
        %3189 = vmatpush1.msra.mxu0 0.0
        %3190 = vmatprep.subr.mxu0 0.0
        %3191 = vmatpush1.msra.mxu0 0.0
        %3192 = vmatprep.subr.mxu0 0.0
        %3193 = vmatpush1.msra.mxu0 0.0
        %3194 = vmatprep.subr.mxu0 0.0
        %3195 = vmatpush1.msra.mxu0 0.0
        %3196 = vmatprep.subr.mxu0 0.0
        %3197 = vmatpush1.msra.mxu0 0.0
        %3198 = vmatprep.subr.mxu0 0.0
        %3199 = vmatpush1.msra.mxu0 0.0
        %3200 = vmatprep.subr.mxu0 0.0
        %3201 = vmatpush1.msra.mxu0 0.0
        %3202 = vmatprep.subr.mxu0 0.0
        %3203 = vmatpush1.msra.mxu0 0.0
        %3204 = vmatprep.subr.mxu0 0.0
        %3205 = vmatpush1.msra.mxu0 0.0
        %3206 = vmatprep.subr.mxu0 0.0
        %3207 = vmatpush1.msra.mxu0 0.0
        %3208 = vmatprep.subr.mxu0 0.0
        %3209 = vmatpush1.msra.mxu0 0.0
        %3210 = vmatprep.subr.mxu0 0.0
        %3211 = vmatpush1.msra.mxu0 0.0
        %3212 = vmatprep.subr.mxu0 0.0
        %3213 = vmatpush1.msra.mxu0 0.0
        %3214 = vmatprep.subr.mxu0 0.0
        %3215 = vmatpush1.msra.mxu0 0.0
        %3216 = vmatprep.subr.mxu0 0.0
        %3217 = vmatpush1.msra.mxu0 0.0
        %3218 = vmatprep.subr.mxu0 0.0
        %3219 = vmatpush1.msra.mxu0 0.0
        %3220 = vmatprep.subr.mxu0 0.0
        %3221 = vmatpush1.msra.mxu0 0.0
        %3222 = vmatprep.subr.mxu0 0.0
        %3223 = vmatpush1.msra.mxu0 0.0
        %3224 = vmatprep.mubr.f32.mxu0 0.0
        %3225 = vmatmul.mubr.f32.gmra.mrb[0].mxu0 %v3158
        %v3226 = vpop.f32.mrb[0].mxu0
        %v3227 = vadd.f32 0.0, %v3226
        %v3228 = vpop.f32.mrb[0].mxu0
        %3229 = vdwg.mxu0
        %v3230 = vadd.f32 %v2867, %v3227
        %3232 = vrot.lane.b32.xlu0 %v3230, 24
        %v3233 = vpop.permute.xlu0 %3232
        %3235 = vst.msk [vmem:[#allocation2 + $0x8] sm:$0xff] %vm3137, %v3233
        %v3236 = vld [vmem:[#allocation2] sm:$0xff]
        %v3237 = vld [vmem:[#allocation2 + $0x8] sm:$0xff]
        %v3238 = vld [vmem:[%s11] sm:$0xff]
        %v3239 = vld [vmem:[%s11 + $0x8] sm:$0xff]
        %v3240 = vld [vmem:[%s11 + $0x10] sm:$0xff]
        %v3241 = vld [vmem:[%s11 + $0x18] sm:$0xff]
        %v3242 = vld [vmem:[%s12] sm:$0x1]
        %v3244 = vlaneseq
        %v3245 = vshrl.u32 %v3244, 7
        %v3246 = vsub.s32 0, %v3245
        %v3247 = vrot.slane %v3242, %v3246
        %v3250 = vsel %vm665, %v3236, 0
        %v3253 = vsel %vm665, %v3237, 0
        %3255 = vmatprep.subr.mxu0 0.0
        %3256 = vmatpush1.msra.mxu0 %v3238
        %3257 = vmatprep.subr.mxu0 0.0
        %3258 = vmatpush1.msra.mxu0 %v3239
        %3259 = vmatprep.subr.mxu0 0.0
        %3260 = vmatpush1.msra.mxu0 %v3240
        %3261 = vmatprep.subr.mxu0 0.0
        %3262 = vmatpush1.msra.mxu0 %v3241
        %3263 = vmatprep.subr.mxu0 0.0
        %3264 = vmatpush1.msra.mxu0 0.0
        %3265 = vmatprep.subr.mxu0 0.0
        %3266 = vmatpush1.msra.mxu0 0.0
        %3267 = vmatprep.subr.mxu0 0.0
        %3268 = vmatpush1.msra.mxu0 0.0
        %3269 = vmatprep.subr.mxu0 0.0
        %3270 = vmatpush1.msra.mxu0 0.0
        %3271 = vmatprep.subr.mxu0 0.0
        %3272 = vmatpush1.msra.mxu0 0.0
        %3273 = vmatprep.subr.mxu0 0.0
        %3274 = vmatpush1.msra.mxu0 0.0
        %3275 = vmatprep.subr.mxu0 0.0
        %3276 = vmatpush1.msra.mxu0 0.0
        %3277 = vmatprep.subr.mxu0 0.0
        %3278 = vmatpush1.msra.mxu0 0.0
        %3279 = vmatprep.subr.mxu0 0.0
        %3280 = vmatpush1.msra.mxu0 0.0
        %3281 = vmatprep.subr.mxu0 0.0
        %3282 = vmatpush1.msra.mxu0 0.0
        %3283 = vmatprep.subr.mxu0 0.0
        %3284 = vmatpush1.msra.mxu0 0.0
        %3285 = vmatprep.subr.mxu0 0.0
        %3286 = vmatpush1.msra.mxu0 0.0
        %3287 = vmatprep.subr.mxu0 0.0
        %3288 = vmatpush1.msra.mxu0 0.0
        %3289 = vmatprep.subr.mxu0 0.0
        %3290 = vmatpush1.msra.mxu0 0.0
        %3291 = vmatprep.subr.mxu0 0.0
        %3292 = vmatpush1.msra.mxu0 0.0
        %3293 = vmatprep.subr.mxu0 0.0
        %3294 = vmatpush1.msra.mxu0 0.0
        %3295 = vmatprep.subr.mxu0 0.0
        %3296 = vmatpush1.msra.mxu0 0.0
        %3297 = vmatprep.subr.mxu0 0.0
        %3298 = vmatpush1.msra.mxu0 0.0
        %3299 = vmatprep.subr.mxu0 0.0
        %3300 = vmatpush1.msra.mxu0 0.0
        %3301 = vmatprep.subr.mxu0 0.0
        %3302 = vmatpush1.msra.mxu0 0.0
        %3303 = vmatprep.subr.mxu0 0.0
        %3304 = vmatpush1.msra.mxu0 0.0
        %3305 = vmatprep.subr.mxu0 0.0
        %3306 = vmatpush1.msra.mxu0 0.0
        %3307 = vmatprep.subr.mxu0 0.0
        %3308 = vmatpush1.msra.mxu0 0.0
        %3309 = vmatprep.subr.mxu0 0.0
        %3310 = vmatpush1.msra.mxu0 0.0
        %3311 = vmatprep.subr.mxu0 0.0
        %3312 = vmatpush1.msra.mxu0 0.0
        %3313 = vmatprep.subr.mxu0 0.0
        %3314 = vmatpush1.msra.mxu0 0.0
        %3315 = vmatprep.subr.mxu0 0.0
        %3316 = vmatpush1.msra.mxu0 0.0
        %3317 = vmatprep.subr.mxu0 0.0
        %3318 = vmatpush1.msra.mxu0 0.0
        %3319 = vmatprep.mubr.f32.mxu0 0.0
        %3320 = vmatmul.mubr.f32.gmra.mrb[0].mxu0 %v3250
        %v3321 = vpop.f32.mrb[0].mxu0
        %v3322 = vadd.f32 %v3247, %v3321
        %v3323 = vpop.f32.mrb[0].mxu0
        %3324 = vmatprep.mubr.f32.mxu0 0.0
        %3325 = vmatmul.mubr.f32.gmra.mrb[0].mxu0 %v3253
        %v3326 = vpop.f32.mrb[0].mxu0
        %v3327 = vadd.f32 %v3247, %v3326
        %v3328 = vpop.f32.mrb[0].mxu0
        %3329 = vdwg.mxu0
        %v3330 = vadd.f32 %v655, %v3322
        %v3331 = vadd.f32 %v656, %v3327
        %v3332 = vld [vmem:[%s13] sm:$0x1]
        %v3333 = vld [vmem:[%s14] sm:$0x1]
        %v3334 = vsel %vm665, %v3330, 0.0
        %3335 = vadd.xlane.f32.xlu0 %v3334
        %v3336 = vpop.xlane.xlu0 %3335
        %v3337 = vsel %vm665, %v3331, 0.0
        %3338 = vadd.xlane.f32.xlu0 %v3337
        %v3339 = vpop.xlane.xlu0 %3338
        %v3340 = vmul.f32 %v3336, %v672
        %v3341 = vmul.f32 %v3339, %v672
        %v3342 = vsub.f32 %v3330, %v3340
        %v3343 = vsub.f32 %v3331, %v3341
        %v3344 = vmul.f32 %v3342, %v3342
        %v3345 = vmul.f32 %v3343, %v3343
        %v3346 = vsel %vm665, %v3344, 0.0
        %3347 = vadd.xlane.f32.xlu0 %v3346
        %v3348 = vpop.xlane.xlu0 %3347
        %v3349 = vsel %vm665, %v3345, 0.0
        %3350 = vadd.xlane.f32.xlu0 %v3349
        %v3351 = vpop.xlane.xlu0 %3350
        %v3352 = vmul.f32 %v3348, %v672
        %v3353 = vmul.f32 %v3351, %v672
        %v3354 = vadd.f32 %v3352, 1e-05
        %v3355 = vadd.f32 %v3353, 1e-05
        %v3356 = vrsqrt.pop %v3354
        %v3357 = vrsqrt.pop %v3355
        %v3358 = vmul.f32 %v3342, %v3356
        %v3359 = vmul.f32 %v3343, %v3357
        %v3361 = vlaneseq
        %v3362 = vshrl.u32 %v3361, 7
        %v3363 = vsub.s32 0, %v3362
        %v3364 = vrot.slane %v3332, %v3363
        %v3366 = vmul.f32 %v3358, %v3364
        %v3367 = vmul.f32 %v3359, %v3364
        %v3369 = vlaneseq
        %v3370 = vshrl.u32 %v3369, 7
        %v3371 = vsub.s32 0, %v3370
        %v3372 = vrot.slane %v3333, %v3371
        %v3374 = vadd.f32 %v3366, %v3372
        %v3375 = vadd.f32 %v3367, %v3372
        %v3376 = vld [vmem:[%s15] sm:$0xff]
        %v3377 = vld [vmem:[%s15 + $0x8] sm:$0xff]
        %v3378 = vld [vmem:[%s15 + $0x10] sm:$0xff]
        %v3379 = vld [vmem:[%s15 + $0x18] sm:$0xff]
        %v3380 = vld [vmem:[%s16] sm:$0x1]
        %v3382 = vlaneseq
        %v3383 = vshrl.u32 %v3382, 7
        %v3384 = vsub.s32 0, %v3383
        %v3385 = vrot.slane %v3380, %v3384
        %v3388 = vsel %vm665, %v3374, 0
        %v3391 = vsel %vm665, %v3375, 0
        %3393 = vmatprep.subr.mxu0 0.0
        %3394 = vmatpush1.msra.mxu0 %v3376
        %3395 = vmatprep.subr.mxu0 0.0
        %3396 = vmatpush1.msra.mxu0 %v3377
        %3397 = vmatprep.subr.mxu0 0.0
        %3398 = vmatpush1.msra.mxu0 %v3378
        %3399 = vmatprep.subr.mxu0 0.0
        %3400 = vmatpush1.msra.mxu0 %v3379
        %3401 = vmatprep.subr.mxu0 0.0
        %3402 = vmatpush1.msra.mxu0 0.0
        %3403 = vmatprep.subr.mxu0 0.0
        %3404 = vmatpush1.msra.mxu0 0.0
        %3405 = vmatprep.subr.mxu0 0.0
        %3406 = vmatpush1.msra.mxu0 0.0
        %3407 = vmatprep.subr.mxu0 0.0
        %3408 = vmatpush1.msra.mxu0 0.0
        %3409 = vmatprep.subr.mxu0 0.0
        %3410 = vmatpush1.msra.mxu0 0.0
        %3411 = vmatprep.subr.mxu0 0.0
        %3412 = vmatpush1.msra.mxu0 0.0
        %3413 = vmatprep.subr.mxu0 0.0
        %3414 = vmatpush1.msra.mxu0 0.0
        %3415 = vmatprep.subr.mxu0 0.0
        %3416 = vmatpush1.msra.mxu0 0.0
        %3417 = vmatprep.subr.mxu0 0.0
        %3418 = vmatpush1.msra.mxu0 0.0
        %3419 = vmatprep.subr.mxu0 0.0
        %3420 = vmatpush1.msra.mxu0 0.0
        %3421 = vmatprep.subr.mxu0 0.0
        %3422 = vmatpush1.msra.mxu0 0.0
        %3423 = vmatprep.subr.mxu0 0.0
        %3424 = vmatpush1.msra.mxu0 0.0
        %3425 = vmatprep.subr.mxu0 0.0
        %3426 = vmatpush1.msra.mxu0 0.0
        %3427 = vmatprep.subr.mxu0 0.0
        %3428 = vmatpush1.msra.mxu0 0.0
        %3429 = vmatprep.subr.mxu0 0.0
        %3430 = vmatpush1.msra.mxu0 0.0
        %3431 = vmatprep.subr.mxu0 0.0
        %3432 = vmatpush1.msra.mxu0 0.0
        %3433 = vmatprep.subr.mxu0 0.0
        %3434 = vmatpush1.msra.mxu0 0.0
        %3435 = vmatprep.subr.mxu0 0.0
        %3436 = vmatpush1.msra.mxu0 0.0
        %3437 = vmatprep.subr.mxu0 0.0
        %3438 = vmatpush1.msra.mxu0 0.0
        %3439 = vmatprep.subr.mxu0 0.0
        %3440 = vmatpush1.msra.mxu0 0.0
        %3441 = vmatprep.subr.mxu0 0.0
        %3442 = vmatpush1.msra.mxu0 0.0
        %3443 = vmatprep.subr.mxu0 0.0
        %3444 = vmatpush1.msra.mxu0 0.0
        %3445 = vmatprep.subr.mxu0 0.0
        %3446 = vmatpush1.msra.mxu0 0.0
        %3447 = vmatprep.subr.mxu0 0.0
        %3448 = vmatpush1.msra.mxu0 0.0
        %3449 = vmatprep.subr.mxu0 0.0
        %3450 = vmatpush1.msra.mxu0 0.0
        %3451 = vmatprep.subr.mxu0 0.0
        %3452 = vmatpush1.msra.mxu0 0.0
        %3453 = vmatprep.subr.mxu0 0.0
        %3454 = vmatpush1.msra.mxu0 0.0
        %3455 = vmatprep.subr.mxu0 0.0
        %3456 = vmatpush1.msra.mxu0 0.0
        %3457 = vmatprep.mubr.f32.mxu0 0.0
        %3458 = vmatmul.mubr.f32.gmra.mrb[0].mxu0 %v3388
        %v3459 = vpop.f32.mrb[0].mxu0
        %v3460 = vadd.f32 %v3385, %v3459
        %v3461 = vpop.f32.mrb[0].mxu0
        %3462 = vmatprep.mubr.f32.mxu0 0.0
        %3463 = vmatmul.mubr.f32.gmra.mrb[0].mxu0 %v3391
        %v3464 = vpop.f32.mrb[0].mxu0
        %v3465 = vadd.f32 %v3385, %v3464
        %v3466 = vpop.f32.mrb[0].mxu0
        %3467 = vdwg.mxu0
        %v3468 = vmul.f32 %v3460, 0.5
        %v3469 = vmul.f32 %v3465, 0.5
        %v3470 = vmul.f32 %v3460, 0.70710677
        %v3471 = vmul.f32 %v3465, 0.70710677
        %v3472 = vand.u32 2147483647, %v3470
        %v3473 = vand.u32 2147483647, %v3471
        %v3474 = vmul.f32 %v3472, 0.3275911
        %v3475 = vmul.f32 %v3473, 0.3275911
        %v3476 = vadd.f32 %v3474, 1.0
        %v3477 = vadd.f32 %v3475, 1.0
        %v3478 = vrcp.pop %v3476
        %v3479 = vmul.f32 1.0, %v3478
        %v3480 = vrcp.pop %v3477
        %v3481 = vmul.f32 1.0, %v3480
        %v3482 = vmul.f32 %v3479, 1.0614054
        %v3483 = vmul.f32 %v3481, 1.0614054
        %v3484 = vadd.f32 %v3482, -1.4531521
        %v3485 = vadd.f32 %v3483, -1.4531521
        %v3486 = vmul.f32 %v3484, %v3479
        %v3487 = vmul.f32 %v3485, %v3481
        %v3488 = vadd.f32 %v3486, 1.4214138
        %v3489 = vadd.f32 %v3487, 1.4214138
        %v3490 = vmul.f32 %v3488, %v3479
        %v3491 = vmul.f32 %v3489, %v3481
        %v3492 = vadd.f32 %v3490, -0.28449672
        %v3493 = vadd.f32 %v3491, -0.28449672
        %v3494 = vmul.f32 %v3492, %v3479
        %v3495 = vmul.f32 %v3493, %v3481
        %v3496 = vadd.f32 %v3494, 0.2548296
        %v3497 = vadd.f32 %v3495, 0.2548296
        %v3498 = vmul.f32 %v3496, %v3479
        %v3499 = vmul.f32 %v3497, %v3481
        %v3500 = vsub.f32 0.0, %v3472
        %v3501 = vsub.f32 0.0, %v3473
        %v3502 = vmul.f32 %v3500, %v3472
        %v3503 = vmul.f32 %v3501, %v3473
        %v3504 = vmul.f32 %v3502, 1.442695
        %v3505 = vpow.pop %v3504
        %v3506 = vmul.f32 %v3503, 1.442695
        %v3507 = vpow.pop %v3506
        %v3508 = vmul.f32 %v3498, %v3505
        %v3509 = vmul.f32 %v3499, %v3507
        %v3510 = vsub.f32 1.0, %v3508
        %v3511 = vsub.f32 1.0, %v3509
        %vm3512 = vcmp.ge.f32.partialorder %v3470, 0.0
        %vm3513 = vcmp.ge.f32.partialorder %v3471, 0.0
        %v3514 = vsub.f32 0.0, %v3510
        %v3515 = vsub.f32 0.0, %v3511
        %v3516 = vsel %vm3512, %v3510, %v3514
        %v3517 = vsel %vm3513, %v3511, %v3515
        %v3518 = vadd.f32 %v3516, 1.0
        %v3519 = vadd.f32 %v3517, 1.0
        %v3520 = vmul.f32 %v3468, %v3518
        %v3521 = vmul.f32 %v3469, %v3519
        %v3522 = vld [vmem:[%s17] sm:$0xff]
        %v3523 = vld [vmem:[%s17 + $0x8] sm:$0xff]
        %v3524 = vld [vmem:[%s17 + $0x10] sm:$0xff]
        %v3525 = vld [vmem:[%s17 + $0x18] sm:$0xff]
        %v3526 = vld [vmem:[%s17 + $0x20] sm:$0xff]
        %v3527 = vld [vmem:[%s17 + $0x28] sm:$0xff]
        %v3528 = vld [vmem:[%s17 + $0x30] sm:$0xff]
        %v3529 = vld [vmem:[%s17 + $0x38] sm:$0xff]
        %v3530 = vld [vmem:[%s18] sm:$0x1]
        %v3532 = vlaneseq
        %v3533 = vshrl.u32 %v3532, 7
        %v3534 = vsub.s32 0, %v3533
        %v3535 = vrot.slane %v3530, %v3534
        %vm3537 = vcmask 523264
        %v3539 = vsel %vm3537, %v3520, 0
        %v3542 = vsel %vm3537, %v3521, 0
        %3544 = vmatprep.subr.mxu0 0.0
        %3545 = vmatpush1.msra.mxu0 %v3522
        %3546 = vmatprep.subr.mxu0 0.0
        %3547 = vmatpush1.msra.mxu0 %v3523
        %3548 = vmatprep.subr.mxu0 0.0
        %3549 = vmatpush1.msra.mxu0 %v3524
        %3550 = vmatprep.subr.mxu0 0.0
        %3551 = vmatpush1.msra.mxu0 %v3525
        %3552 = vmatprep.subr.mxu0 0.0
        %3553 = vmatpush1.msra.mxu0 %v3526
        %3554 = vmatprep.subr.mxu0 0.0
        %3555 = vmatpush1.msra.mxu0 %v3527
        %3556 = vmatprep.subr.mxu0 0.0
        %3557 = vmatpush1.msra.mxu0 %v3528
        %3558 = vmatprep.subr.mxu0 0.0
        %3559 = vmatpush1.msra.mxu0 %v3529
        %3560 = vmatprep.subr.mxu0 0.0
        %3561 = vmatpush1.msra.mxu0 0.0
        %3562 = vmatprep.subr.mxu0 0.0
        %3563 = vmatpush1.msra.mxu0 0.0
        %3564 = vmatprep.subr.mxu0 0.0
        %3565 = vmatpush1.msra.mxu0 0.0
        %3566 = vmatprep.subr.mxu0 0.0
        %3567 = vmatpush1.msra.mxu0 0.0
        %3568 = vmatprep.subr.mxu0 0.0
        %3569 = vmatpush1.msra.mxu0 0.0
        %3570 = vmatprep.subr.mxu0 0.0
        %3571 = vmatpush1.msra.mxu0 0.0
        %3572 = vmatprep.subr.mxu0 0.0
        %3573 = vmatpush1.msra.mxu0 0.0
        %3574 = vmatprep.subr.mxu0 0.0
        %3575 = vmatpush1.msra.mxu0 0.0
        %3576 = vmatprep.subr.mxu0 0.0
        %3577 = vmatpush1.msra.mxu0 0.0
        %3578 = vmatprep.subr.mxu0 0.0
        %3579 = vmatpush1.msra.mxu0 0.0
        %3580 = vmatprep.subr.mxu0 0.0
        %3581 = vmatpush1.msra.mxu0 0.0
        %3582 = vmatprep.subr.mxu0 0.0
        %3583 = vmatpush1.msra.mxu0 0.0
        %3584 = vmatprep.subr.mxu0 0.0
        %3585 = vmatpush1.msra.mxu0 0.0
        %3586 = vmatprep.subr.mxu0 0.0
        %3587 = vmatpush1.msra.mxu0 0.0
        %3588 = vmatprep.subr.mxu0 0.0
        %3589 = vmatpush1.msra.mxu0 0.0
        %3590 = vmatprep.subr.mxu0 0.0
        %3591 = vmatpush1.msra.mxu0 0.0
        %3592 = vmatprep.subr.mxu0 0.0
        %3593 = vmatpush1.msra.mxu0 0.0
        %3594 = vmatprep.subr.mxu0 0.0
        %3595 = vmatpush1.msra.mxu0 0.0
        %3596 = vmatprep.subr.mxu0 0.0
        %3597 = vmatpush1.msra.mxu0 0.0
        %3598 = vmatprep.subr.mxu0 0.0
        %3599 = vmatpush1.msra.mxu0 0.0
        %3600 = vmatprep.subr.mxu0 0.0
        %3601 = vmatpush1.msra.mxu0 0.0
        %3602 = vmatprep.subr.mxu0 0.0
        %3603 = vmatpush1.msra.mxu0 0.0
        %3604 = vmatprep.subr.mxu0 0.0
        %3605 = vmatpush1.msra.mxu0 0.0
        %3606 = vmatprep.subr.mxu0 0.0
        %3607 = vmatpush1.msra.mxu0 0.0
        %3608 = vmatprep.mubr.f32.mxu0 0.0
        %3609 = vmatmul.mubr.f32.gmra.mrb[0].mxu0 %v3539
        %v3610 = vpop.f32.mrb[0].mxu0
        %v3611 = vadd.f32 %v3535, %v3610
        %v3612 = vpop.f32.mrb[0].mxu0
        %3613 = vmatprep.mubr.f32.mxu0 0.0
        %3614 = vmatmul.mubr.f32.gmra.mrb[0].mxu0 %v3542
        %v3615 = vpop.f32.mrb[0].mxu0
        %v3616 = vadd.f32 %v3535, %v3615
        %v3617 = vpop.f32.mrb[0].mxu0
        %3618 = vdwg.mxu0
        %v3619 = vadd.f32 %v3330, %v3611
        %v3620 = vadd.f32 %v3331, %v3616
        %s3621 = scalar_lea.vmem %s5, 1
        %v3622 = vld [vmem:[%s3621] sm:$0x1]
        %s3623 = scalar_lea.vmem %s6, 1
        %v3624 = vld [vmem:[%s3623] sm:$0x1]
        %v3625 = vsel %vm665, %v3619, 0.0
        %3626 = vadd.xlane.f32.xlu0 %v3625
        %v3627 = vpop.xlane.xlu0 %3626
        %v3628 = vsel %vm665, %v3620, 0.0
        %3629 = vadd.xlane.f32.xlu0 %v3628
        %v3630 = vpop.xlane.xlu0 %3629
        %v3631 = vmul.f32 %v3627, %v672
        %v3632 = vmul.f32 %v3630, %v672
        %v3633 = vsub.f32 %v3619, %v3631
        %v3634 = vsub.f32 %v3620, %v3632
        %v3635 = vmul.f32 %v3633, %v3633
        %v3636 = vmul.f32 %v3634, %v3634
        %v3637 = vsel %vm665, %v3635, 0.0
        %3638 = vadd.xlane.f32.xlu0 %v3637
        %v3639 = vpop.xlane.xlu0 %3638
        %v3640 = vsel %vm665, %v3636, 0.0
        %3641 = vadd.xlane.f32.xlu0 %v3640
        %v3642 = vpop.xlane.xlu0 %3641
        %v3643 = vmul.f32 %v3639, %v672
        %v3644 = vmul.f32 %v3642, %v672
        %v3645 = vadd.f32 %v3643, 1e-05
        %v3646 = vadd.f32 %v3644, 1e-05
        %v3647 = vrsqrt.pop %v3645
        %v3648 = vrsqrt.pop %v3646
        %v3649 = vmul.f32 %v3633, %v3647
        %v3650 = vmul.f32 %v3634, %v3648
        %v3652 = vlaneseq
        %v3653 = vshrl.u32 %v3652, 7
        %v3654 = vsub.s32 0, %v3653
        %v3655 = vrot.slane %v3622, %v3654
        %v3657 = vmul.f32 %v3649, %v3655
        %v3658 = vmul.f32 %v3650, %v3655
        %v3660 = vlaneseq
        %v3661 = vshrl.u32 %v3660, 7
        %v3662 = vsub.s32 0, %v3661
        %v3663 = vrot.slane %v3624, %v3662
        %v3665 = vadd.f32 %v3657, %v3663
        %v3666 = vadd.f32 %v3658, %v3663
        %s3667 = scalar_lea.vmem %s7, 32
        %v3668 = vld [vmem:[%s3667] sm:$0xff]
        %v3669 = vld [vmem:[%s3667 + $0x8] sm:$0xff]
        %v3670 = vld [vmem:[%s3667 + $0x10] sm:$0xff]
        %v3671 = vld [vmem:[%s3667 + $0x18] sm:$0xff]
        %s3672 = scalar_lea.vmem %s8, 1
        %v3673 = vld [vmem:[%s3672] sm:$0x1]
        %v3675 = vlaneseq
        %v3676 = vshrl.u32 %v3675, 7
        %v3677 = vsub.s32 0, %v3676
        %v3678 = vrot.slane %v3673, %v3677
        %v3681 = vsel %vm665, %v3665, 0
        %v3684 = vsel %vm665, %v3666, 0
        %3686 = vmatprep.subr.mxu0 0.0
        %3687 = vmatpush1.msra.mxu0 %v3668
        %3688 = vmatprep.subr.mxu0 0.0
        %3689 = vmatpush1.msra.mxu0 %v3669
        %3690 = vmatprep.subr.mxu0 0.0
        %3691 = vmatpush1.msra.mxu0 %v3670
        %3692 = vmatprep.subr.mxu0 0.0
        %3693 = vmatpush1.msra.mxu0 %v3671
        %3694 = vmatprep.subr.mxu0 0.0
        %3695 = vmatpush1.msra.mxu0 0.0
        %3696 = vmatprep.subr.mxu0 0.0
        %3697 = vmatpush1.msra.mxu0 0.0
        %3698 = vmatprep.subr.mxu0 0.0
        %3699 = vmatpush1.msra.mxu0 0.0
        %3700 = vmatprep.subr.mxu0 0.0
        %3701 = vmatpush1.msra.mxu0 0.0
        %3702 = vmatprep.subr.mxu0 0.0
        %3703 = vmatpush1.msra.mxu0 0.0
        %3704 = vmatprep.subr.mxu0 0.0
        %3705 = vmatpush1.msra.mxu0 0.0
        %3706 = vmatprep.subr.mxu0 0.0
        %3707 = vmatpush1.msra.mxu0 0.0
        %3708 = vmatprep.subr.mxu0 0.0
        %3709 = vmatpush1.msra.mxu0 0.0
        %3710 = vmatprep.subr.mxu0 0.0
        %3711 = vmatpush1.msra.mxu0 0.0
        %3712 = vmatprep.subr.mxu0 0.0
        %3713 = vmatpush1.msra.mxu0 0.0
        %3714 = vmatprep.subr.mxu0 0.0
        %3715 = vmatpush1.msra.mxu0 0.0
        %3716 = vmatprep.subr.mxu0 0.0
        %3717 = vmatpush1.msra.mxu0 0.0
        %3718 = vmatprep.subr.mxu0 0.0
        %3719 = vmatpush1.msra.mxu0 0.0
        %3720 = vmatprep.subr.mxu0 0.0
        %3721 = vmatpush1.msra.mxu0 0.0
        %3722 = vmatprep.subr.mxu0 0.0
        %3723 = vmatpush1.msra.mxu0 0.0
        %3724 = vmatprep.subr.mxu0 0.0
        %3725 = vmatpush1.msra.mxu0 0.0
        %3726 = vmatprep.subr.mxu0 0.0
        %3727 = vmatpush1.msra.mxu0 0.0
        %3728 = vmatprep.subr.mxu0 0.0
        %3729 = vmatpush1.msra.mxu0 0.0
        %3730 = vmatprep.subr.mxu0 0.0
        %3731 = vmatpush1.msra.mxu0 0.0
        %3732 = vmatprep.subr.mxu0 0.0
        %3733 = vmatpush1.msra.mxu0 0.0
        %3734 = vmatprep.subr.mxu0 0.0
        %3735 = vmatpush1.msra.mxu0 0.0
        %3736 = vmatprep.subr.mxu0 0.0
        %3737 = vmatpush1.msra.mxu0 0.0
        %3738 = vmatprep.subr.mxu0 0.0
        %3739 = vmatpush1.msra.mxu0 0.0
        %3740 = vmatprep.subr.mxu0 0.0
        %3741 = vmatpush1.msra.mxu0 0.0
        %3742 = vmatprep.subr.mxu0 0.0
        %3743 = vmatpush1.msra.mxu0 0.0
        %3744 = vmatprep.subr.mxu0 0.0
        %3745 = vmatpush1.msra.mxu0 0.0
        %3746 = vmatprep.subr.mxu0 0.0
        %3747 = vmatpush1.msra.mxu0 0.0
        %3748 = vmatprep.subr.mxu0 0.0
        %3749 = vmatpush1.msra.mxu0 0.0
        %3750 = vmatprep.mubr.f32.mxu0 0.0
        %3751 = vmatmul.mubr.f32.gmra.mrb[0].mxu0 %v3681
        %v3752 = vpop.f32.mrb[0].mxu0
        %v3753 = vadd.f32 %v3678, %v3752
        %v3754 = vpop.f32.mrb[0].mxu0
        %3755 = vmatprep.mubr.f32.mxu0 0.0
        %3756 = vmatmul.mubr.f32.gmra.mrb[0].mxu0 %v3684
        %v3757 = vpop.f32.mrb[0].mxu0
        %v3758 = vadd.f32 %v3678, %v3757
        %v3759 = vpop.f32.mrb[0].mxu0
        %3760 = vdwg.mxu0
        %3761 = vmatprep.subr.mxu0 0.0
        %3762 = vmatpush1.msra.mxu0 %v3665
        %3763 = vmatprep.subr.mxu0 0.0
        %3764 = vmatpush1.msra.mxu0 %v3666
        %3765 = vmatprep.subr.mxu0 0.0
        %3766 = vmatpush1.msra.mxu0 0.0
        %3767 = vmatprep.subr.mxu0 0.0
        %3768 = vmatpush1.msra.mxu0 0.0
        %3769 = vmatprep.subr.mxu0 0.0
        %3770 = vmatpush1.msra.mxu0 0.0
        %3771 = vmatprep.subr.mxu0 0.0
        %3772 = vmatpush1.msra.mxu0 0.0
        %3773 = vmatprep.subr.mxu0 0.0
        %3774 = vmatpush1.msra.mxu0 0.0
        %3775 = vmatprep.subr.mxu0 0.0
        %3776 = vmatpush1.msra.mxu0 0.0
        %3777 = vmatprep.subr.mxu0 0.0
        %3778 = vmatpush1.msra.mxu0 0.0
        %3779 = vmatprep.subr.mxu0 0.0
        %3780 = vmatpush1.msra.mxu0 0.0
        %3781 = vmatprep.subr.mxu0 0.0
        %3782 = vmatpush1.msra.mxu0 0.0
        %3783 = vmatprep.subr.mxu0 0.0
        %3784 = vmatpush1.msra.mxu0 0.0
        %3785 = vmatprep.subr.mxu0 0.0
        %3786 = vmatpush1.msra.mxu0 0.0
        %3787 = vmatprep.subr.mxu0 0.0
        %3788 = vmatpush1.msra.mxu0 0.0
        %3789 = vmatprep.subr.mxu0 0.0
        %3790 = vmatpush1.msra.mxu0 0.0
        %3791 = vmatprep.subr.mxu0 0.0
        %3792 = vmatpush1.msra.mxu0 0.0
        %3793 = vmatprep.subr.mxu0 0.0
        %3794 = vmatpush1.msra.mxu0 0.0
        %3795 = vmatprep.subr.mxu0 0.0
        %3796 = vmatpush1.msra.mxu0 0.0
        %3797 = vmatprep.subr.mxu0 0.0
        %3798 = vmatpush1.msra.mxu0 0.0
        %3799 = vmatprep.subr.mxu0 0.0
        %3800 = vmatpush1.msra.mxu0 0.0
        %3801 = vmatprep.subr.mxu0 0.0
        %3802 = vmatpush1.msra.mxu0 0.0
        %3803 = vmatprep.subr.mxu0 0.0
        %3804 = vmatpush1.msra.mxu0 0.0
        %3805 = vmatprep.subr.mxu0 0.0
        %3806 = vmatpush1.msra.mxu0 0.0
        %3807 = vmatprep.subr.mxu0 0.0
        %3808 = vmatpush1.msra.mxu0 0.0
        %3809 = vmatprep.subr.mxu0 0.0
        %3810 = vmatpush1.msra.mxu0 0.0
        %3811 = vmatprep.subr.mxu0 0.0
        %3812 = vmatpush1.msra.mxu0 0.0
        %3813 = vmatprep.subr.mxu0 0.0
        %3814 = vmatpush1.msra.mxu0 0.0
        %3815 = vmatprep.subr.mxu0 0.0
        %3816 = vmatpush1.msra.mxu0 0.0
        %3817 = vmatprep.subr.mxu0 0.0
        %3818 = vmatpush1.msra.mxu0 0.0
        %3819 = vmatprep.subr.mxu0 0.0
        %3820 = vmatpush1.msra.mxu0 0.0
        %3821 = vmatprep.subr.mxu0 0.0
        %3822 = vmatpush1.msra.mxu0 0.0
        %3823 = vmatprep.subr.mxu0 0.0
        %3824 = vmatpush1.msra.mxu0 0.0
        %3825 = vmatprep.mubr.f32.mxu0 0.0
        %3826 = vmatmul.mubr.f32.gmra.mrb[0].mxu0 %v803
        %v3827 = vpop.f32.mrb[0].mxu0
        %v3828 = vadd.f32 0.0, %v3827
        %v3829 = vpop.f32.mrb[0].mxu0
        %3830 = vdwg.mxu0
        %s3831 = scalar_lea.vmem %s9, 32
        %v3832 = vld [vmem:[%s3831] sm:$0xff]
        %v3833 = vld [vmem:[%s3831 + $0x8] sm:$0xff]
        %v3834 = vld [vmem:[%s3831 + $0x10] sm:$0xff]
        %v3835 = vld [vmem:[%s3831 + $0x18] sm:$0xff]
        %s3836 = scalar_lea.vmem %s10, 1
        %v3837 = vld [vmem:[%s3836] sm:$0x1]
        %v3839 = vlaneseq
        %v3840 = vshrl.u32 %v3839, 7
        %v3841 = vsub.s32 0, %v3840
        %v3842 = vrot.slane %v3837, %v3841
        %v3845 = vsel %vm665, %v3828, 0
        %3847 = vmatprep.subr.mxu0 0.0
        %3848 = vmatpush1.msra.mxu0 %v3832
        %3849 = vmatprep.subr.mxu0 0.0
        %3850 = vmatpush1.msra.mxu0 %v3833
        %3851 = vmatprep.subr.mxu0 0.0
        %3852 = vmatpush1.msra.mxu0 %v3834
        %3853 = vmatprep.subr.mxu0 0.0
        %3854 = vmatpush1.msra.mxu0 %v3835
        %3855 = vmatprep.subr.mxu0 0.0
        %3856 = vmatpush1.msra.mxu0 0.0
        %3857 = vmatprep.subr.mxu0 0.0
        %3858 = vmatpush1.msra.mxu0 0.0
        %3859 = vmatprep.subr.mxu0 0.0
        %3860 = vmatpush1.msra.mxu0 0.0
        %3861 = vmatprep.subr.mxu0 0.0
        %3862 = vmatpush1.msra.mxu0 0.0
        %3863 = vmatprep.subr.mxu0 0.0
        %3864 = vmatpush1.msra.mxu0 0.0
        %3865 = vmatprep.subr.mxu0 0.0
        %3866 = vmatpush1.msra.mxu0 0.0
        %3867 = vmatprep.subr.mxu0 0.0
        %3868 = vmatpush1.msra.mxu0 0.0
        %3869 = vmatprep.subr.mxu0 0.0
        %3870 = vmatpush1.msra.mxu0 0.0
        %3871 = vmatprep.subr.mxu0 0.0
        %3872 = vmatpush1.msra.mxu0 0.0
        %3873 = vmatprep.subr.mxu0 0.0
        %3874 = vmatpush1.msra.mxu0 0.0
        %3875 = vmatprep.subr.mxu0 0.0
        %3876 = vmatpush1.msra.mxu0 0.0
        %3877 = vmatprep.subr.mxu0 0.0
        %3878 = vmatpush1.msra.mxu0 0.0
        %3879 = vmatprep.subr.mxu0 0.0
        %3880 = vmatpush1.msra.mxu0 0.0
        %3881 = vmatprep.subr.mxu0 0.0
        %3882 = vmatpush1.msra.mxu0 0.0
        %3883 = vmatprep.subr.mxu0 0.0
        %3884 = vmatpush1.msra.mxu0 0.0
        %3885 = vmatprep.subr.mxu0 0.0
        %3886 = vmatpush1.msra.mxu0 0.0
        %3887 = vmatprep.subr.mxu0 0.0
        %3888 = vmatpush1.msra.mxu0 0.0
        %3889 = vmatprep.subr.mxu0 0.0
        %3890 = vmatpush1.msra.mxu0 0.0
        %3891 = vmatprep.subr.mxu0 0.0
        %3892 = vmatpush1.msra.mxu0 0.0
        %3893 = vmatprep.subr.mxu0 0.0
        %3894 = vmatpush1.msra.mxu0 0.0
        %3895 = vmatprep.subr.mxu0 0.0
        %3896 = vmatpush1.msra.mxu0 0.0
        %3897 = vmatprep.subr.mxu0 0.0
        %3898 = vmatpush1.msra.mxu0 0.0
        %3899 = vmatprep.subr.mxu0 0.0
        %3900 = vmatpush1.msra.mxu0 0.0
        %3901 = vmatprep.subr.mxu0 0.0
        %3902 = vmatpush1.msra.mxu0 0.0
        %3903 = vmatprep.subr.mxu0 0.0
        %3904 = vmatpush1.msra.mxu0 0.0
        %3905 = vmatprep.subr.mxu0 0.0
        %3906 = vmatpush1.msra.mxu0 0.0
        %3907 = vmatprep.subr.mxu0 0.0
        %3908 = vmatpush1.msra.mxu0 0.0
        %3909 = vmatprep.subr.mxu0 0.0
        %3910 = vmatpush1.msra.mxu0 0.0
        %3911 = vmatprep.mubr.f32.mxu0 0.0
        %3912 = vmatmul.mubr.f32.gmra.mrb[0].mxu0 %v3845
        %v3913 = vpop.f32.mrb[0].mxu0
        %v3914 = vadd.f32 %v3842, %v3913
        %v3915 = vpop.f32.mrb[0].mxu0
        %3916 = vdwg.mxu0
        %3919 = vrot.lane.b32.xlu0 %v3753, 96
        %v3920 = vpop.permute.xlu0 %3919
        %3921 = vrot.lane.b32.xlu0 %v3758, 96
        %v3922 = vpop.permute.xlu0 %3921
        %v3923 = vsel %vm965, %v3753, 0
        %v3925 = vsel %vm965, %v3758, 0
        %v3927 = vsel %vm965, %v3920, 0
        %v3929 = vsel %vm965, %v3922, 0
        %3931 = vmatprep.subr.mxu0 0.0
        %3932 = vmatpush1.xpose.msra.mxu0 %v3927
        %3933 = vmatprep.subr.mxu0 0.0
        %3934 = vmatpush1.xpose.msra.mxu0 %v3929
        %3935 = vmatprep.subr.mxu0 0.0
        %3936 = vmatpush1.xpose.msra.mxu0 0.0
        %3937 = vmatprep.subr.mxu0 0.0
        %3938 = vmatpush1.xpose.msra.mxu0 0.0
        %3939 = vmatprep.subr.mxu0 0.0
        %3940 = vmatpush1.xpose.msra.mxu0 0.0
        %3941 = vmatprep.subr.mxu0 0.0
        %3942 = vmatpush1.xpose.msra.mxu0 0.0
        %3943 = vmatprep.subr.mxu0 0.0
        %3944 = vmatpush1.xpose.msra.mxu0 0.0
        %3945 = vmatprep.subr.mxu0 0.0
        %3946 = vmatpush1.xpose.msra.mxu0 0.0
        %3947 = vmatprep.subr.mxu0 0.0
        %3948 = vmatpush1.xpose.msra.mxu0 0.0
        %3949 = vmatprep.subr.mxu0 0.0
        %3950 = vmatpush1.xpose.msra.mxu0 0.0
        %3951 = vmatprep.subr.mxu0 0.0
        %3952 = vmatpush1.xpose.msra.mxu0 0.0
        %3953 = vmatprep.subr.mxu0 0.0
        %3954 = vmatpush1.xpose.msra.mxu0 0.0
        %3955 = vmatprep.subr.mxu0 0.0
        %3956 = vmatpush1.xpose.msra.mxu0 0.0
        %3957 = vmatprep.subr.mxu0 0.0
        %3958 = vmatpush1.xpose.msra.mxu0 0.0
        %3959 = vmatprep.subr.mxu0 0.0
        %3960 = vmatpush1.xpose.msra.mxu0 0.0
        %3961 = vmatprep.subr.mxu0 0.0
        %3962 = vmatpush1.xpose.msra.mxu0 0.0
        %3963 = vmatprep.subr.mxu0 0.0
        %3964 = vmatpush1.xpose.msra.mxu0 0.0
        %3965 = vmatprep.subr.mxu0 0.0
        %3966 = vmatpush1.xpose.msra.mxu0 0.0
        %3967 = vmatprep.subr.mxu0 0.0
        %3968 = vmatpush1.xpose.msra.mxu0 0.0
        %3969 = vmatprep.subr.mxu0 0.0
        %3970 = vmatpush1.xpose.msra.mxu0 0.0
        %3971 = vmatprep.subr.mxu0 0.0
        %3972 = vmatpush1.xpose.msra.mxu0 0.0
        %3973 = vmatprep.subr.mxu0 0.0
        %3974 = vmatpush1.xpose.msra.mxu0 0.0
        %3975 = vmatprep.subr.mxu0 0.0
        %3976 = vmatpush1.xpose.msra.mxu0 0.0
        %3977 = vmatprep.subr.mxu0 0.0
        %3978 = vmatpush1.xpose.msra.mxu0 0.0
        %3979 = vmatprep.subr.mxu0 0.0
        %3980 = vmatpush1.xpose.msra.mxu0 0.0
        %3981 = vmatprep.subr.mxu0 0.0
        %3982 = vmatpush1.xpose.msra.mxu0 0.0
        %3983 = vmatprep.subr.mxu0 0.0
        %3984 = vmatpush1.xpose.msra.mxu0 0.0
        %3985 = vmatprep.subr.mxu0 0.0
        %3986 = vmatpush1.xpose.msra.mxu0 0.0
        %3987 = vmatprep.subr.mxu0 0.0
        %3988 = vmatpush1.xpose.msra.mxu0 0.0
        %3989 = vmatprep.subr.mxu0 0.0
        %3990 = vmatpush1.xpose.msra.mxu0 0.0
        %3991 = vmatprep.subr.mxu0 0.0
        %3992 = vmatpush1.xpose.msra.mxu0 0.0
        %3993 = vmatprep.subr.mxu0 0.0
        %3994 = vmatpush1.xpose.msra.mxu0 0.0
        %3995 = vmatprep.mubr.f32.mxu0 0.0
        %3996 = vmatmul.mubr.f32.gmra.mrb[0].mxu0 %v3923
        %v3997 = vpop.f32.mrb[0].mxu0
        %v3998 = vadd.f32 0.0, %v3997
        %v3999 = vpop.f32.mrb[0].mxu0
        %4000 = vmatprep.mubr.f32.mxu0 0.0
        %4001 = vmatmul.mubr.f32.gmra.mrb[0].mxu0 %v3925
        %v4002 = vpop.f32.mrb[0].mxu0
        %v4003 = vadd.f32 0.0, %v4002
        %v4004 = vpop.f32.mrb[0].mxu0
        %4005 = vdwg.mxu0
        %v4006 = vmul.f32 %v3998, 0.35355338
        %v4007 = vmul.f32 %v4003, 0.35355338
        %v4008 = vadd.f32 %v4006, %v657
        %v4009 = vadd.f32 %v4007, %v658
        %v4010 = vsel %vm801, %v4008, -inf
        %4011 = vmax.xlane.f32.xlu0 %v4010
        %v4012 = vpop.xlane.xlu0 %4011
        %v4013 = vsel %vm801, %v4009, -inf
        %4014 = vmax.xlane.f32.xlu0 %v4013
        %v4015 = vpop.xlane.xlu0 %4014
        %v4016 = vsub.f32 %v4008, %v4012
        %v4017 = vsub.f32 %v4009, %v4015
        %v4018 = vmul.f32 %v4016, 1.442695
        %v4019 = vpow.pop %v4018
        %v4020 = vmul.f32 %v4017, 1.442695
        %v4021 = vpow.pop %v4020
        %v4022 = vsel %vm801, %v4019, 0.0
        %4023 = vadd.xlane.f32.xlu0 %v4022
        %v4024 = vpop.xlane.xlu0 %4023
        %v4025 = vsel %vm801, %v4021, 0.0
        %4026 = vadd.xlane.f32.xlu0 %v4025
        %v4027 = vpop.xlane.xlu0 %4026
        %v4028 = vrcp.pop %v4024
        %v4029 = vrcp.pop %v4027
        %v4030 = vmul.f32 %v4019, %v4028
        %v4031 = vmul.f32 %v4021, %v4029
        %4032 = vrot.lane.b32.xlu0 %v3753, 64
        %v4033 = vpop.permute.xlu0 %4032
        %4034 = vrot.lane.b32.xlu0 %v3758, 64
        %v4035 = vpop.permute.xlu0 %4034
        %v4039 = vsel %vm801, %v4030, 0
        %v4042 = vsel %vm801, %v4031, 0
        %4044 = vmatprep.subr.mxu0 0.0
        %4045 = vmatpush1.msra.mxu0 %v4033
        %4046 = vmatprep.subr.mxu0 0.0
        %4047 = vmatpush1.msra.mxu0 %v4035
        %4048 = vmatprep.subr.mxu0 0.0
        %4049 = vmatpush1.msra.mxu0 0.0
        %4050 = vmatprep.subr.mxu0 0.0
        %4051 = vmatpush1.msra.mxu0 0.0
        %4052 = vmatprep.subr.mxu0 0.0
        %4053 = vmatpush1.msra.mxu0 0.0
        %4054 = vmatprep.subr.mxu0 0.0
        %4055 = vmatpush1.msra.mxu0 0.0
        %4056 = vmatprep.subr.mxu0 0.0
        %4057 = vmatpush1.msra.mxu0 0.0
        %4058 = vmatprep.subr.mxu0 0.0
        %4059 = vmatpush1.msra.mxu0 0.0
        %4060 = vmatprep.subr.mxu0 0.0
        %4061 = vmatpush1.msra.mxu0 0.0
        %4062 = vmatprep.subr.mxu0 0.0
        %4063 = vmatpush1.msra.mxu0 0.0
        %4064 = vmatprep.subr.mxu0 0.0
        %4065 = vmatpush1.msra.mxu0 0.0
        %4066 = vmatprep.subr.mxu0 0.0
        %4067 = vmatpush1.msra.mxu0 0.0
        %4068 = vmatprep.subr.mxu0 0.0
        %4069 = vmatpush1.msra.mxu0 0.0
        %4070 = vmatprep.subr.mxu0 0.0
        %4071 = vmatpush1.msra.mxu0 0.0
        %4072 = vmatprep.subr.mxu0 0.0
        %4073 = vmatpush1.msra.mxu0 0.0
        %4074 = vmatprep.subr.mxu0 0.0
        %4075 = vmatpush1.msra.mxu0 0.0
        %4076 = vmatprep.subr.mxu0 0.0
        %4077 = vmatpush1.msra.mxu0 0.0
        %4078 = vmatprep.subr.mxu0 0.0
        %4079 = vmatpush1.msra.mxu0 0.0
        %4080 = vmatprep.subr.mxu0 0.0
        %4081 = vmatpush1.msra.mxu0 0.0
        %4082 = vmatprep.subr.mxu0 0.0
        %4083 = vmatpush1.msra.mxu0 0.0
        %4084 = vmatprep.subr.mxu0 0.0
        %4085 = vmatpush1.msra.mxu0 0.0
        %4086 = vmatprep.subr.mxu0 0.0
        %4087 = vmatpush1.msra.mxu0 0.0
        %4088 = vmatprep.subr.mxu0 0.0
        %4089 = vmatpush1.msra.mxu0 0.0
        %4090 = vmatprep.subr.mxu0 0.0
        %4091 = vmatpush1.msra.mxu0 0.0
        %4092 = vmatprep.subr.mxu0 0.0
        %4093 = vmatpush1.msra.mxu0 0.0
        %4094 = vmatprep.subr.mxu0 0.0
        %4095 = vmatpush1.msra.mxu0 0.0
        %4096 = vmatprep.subr.mxu0 0.0
        %4097 = vmatpush1.msra.mxu0 0.0
        %4098 = vmatprep.subr.mxu0 0.0
        %4099 = vmatpush1.msra.mxu0 0.0
        %4100 = vmatprep.subr.mxu0 0.0
        %4101 = vmatpush1.msra.mxu0 0.0
        %4102 = vmatprep.subr.mxu0 0.0
        %4103 = vmatpush1.msra.mxu0 0.0
        %4104 = vmatprep.subr.mxu0 0.0
        %4105 = vmatpush1.msra.mxu0 0.0
        %4106 = vmatprep.subr.mxu0 0.0
        %4107 = vmatpush1.msra.mxu0 0.0
        %4108 = vmatprep.mubr.f32.mxu0 0.0
        %4109 = vmatmul.mubr.f32.gmra.mrb[0].mxu0 %v4039
        %v4110 = vpop.f32.mrb[0].mxu0
        %v4111 = vadd.f32 0.0, %v4110
        %v4112 = vpop.f32.mrb[0].mxu0
        %4113 = vmatprep.mubr.f32.mxu0 0.0
        %4114 = vmatmul.mubr.f32.gmra.mrb[0].mxu0 %v4042
        %v4115 = vpop.f32.mrb[0].mxu0
        %v4116 = vadd.f32 0.0, %v4115
        %v4117 = vpop.f32.mrb[0].mxu0
        %4118 = vdwg.mxu0
        %4120 = vrot.lane.b32.xlu0 %v3914, 96
        %v4121 = vpop.permute.xlu0 %4120
        %v4122 = vsel %vm965, %v3914, 0
        %v4124 = vsel %vm965, %v4121, 0
        %4126 = vmatprep.subr.mxu0 0.0
        %4127 = vmatpush1.xpose.msra.mxu0 %v4124
        %4128 = vmatprep.subr.mxu0 0.0
        %4129 = vmatpush1.xpose.msra.mxu0 0.0
        %4130 = vmatprep.subr.mxu0 0.0
        %4131 = vmatpush1.xpose.msra.mxu0 0.0
        %4132 = vmatprep.subr.mxu0 0.0
        %4133 = vmatpush1.xpose.msra.mxu0 0.0
        %4134 = vmatprep.subr.mxu0 0.0
        %4135 = vmatpush1.xpose.msra.mxu0 0.0
        %4136 = vmatprep.subr.mxu0 0.0
        %4137 = vmatpush1.xpose.msra.mxu0 0.0
        %4138 = vmatprep.subr.mxu0 0.0
        %4139 = vmatpush1.xpose.msra.mxu0 0.0
        %4140 = vmatprep.subr.mxu0 0.0
        %4141 = vmatpush1.xpose.msra.mxu0 0.0
        %4142 = vmatprep.subr.mxu0 0.0
        %4143 = vmatpush1.xpose.msra.mxu0 0.0
        %4144 = vmatprep.subr.mxu0 0.0
        %4145 = vmatpush1.xpose.msra.mxu0 0.0
        %4146 = vmatprep.subr.mxu0 0.0
        %4147 = vmatpush1.xpose.msra.mxu0 0.0
        %4148 = vmatprep.subr.mxu0 0.0
        %4149 = vmatpush1.xpose.msra.mxu0 0.0
        %4150 = vmatprep.subr.mxu0 0.0
        %4151 = vmatpush1.xpose.msra.mxu0 0.0
        %4152 = vmatprep.subr.mxu0 0.0
        %4153 = vmatpush1.xpose.msra.mxu0 0.0
        %4154 = vmatprep.subr.mxu0 0.0
        %4155 = vmatpush1.xpose.msra.mxu0 0.0
        %4156 = vmatprep.subr.mxu0 0.0
        %4157 = vmatpush1.xpose.msra.mxu0 0.0
        %4158 = vmatprep.subr.mxu0 0.0
        %4159 = vmatpush1.xpose.msra.mxu0 0.0
        %4160 = vmatprep.subr.mxu0 0.0
        %4161 = vmatpush1.xpose.msra.mxu0 0.0
        %4162 = vmatprep.subr.mxu0 0.0
        %4163 = vmatpush1.xpose.msra.mxu0 0.0
        %4164 = vmatprep.subr.mxu0 0.0
        %4165 = vmatpush1.xpose.msra.mxu0 0.0
        %4166 = vmatprep.subr.mxu0 0.0
        %4167 = vmatpush1.xpose.msra.mxu0 0.0
        %4168 = vmatprep.subr.mxu0 0.0
        %4169 = vmatpush1.xpose.msra.mxu0 0.0
        %4170 = vmatprep.subr.mxu0 0.0
        %4171 = vmatpush1.xpose.msra.mxu0 0.0
        %4172 = vmatprep.subr.mxu0 0.0
        %4173 = vmatpush1.xpose.msra.mxu0 0.0
        %4174 = vmatprep.subr.mxu0 0.0
        %4175 = vmatpush1.xpose.msra.mxu0 0.0
        %4176 = vmatprep.subr.mxu0 0.0
        %4177 = vmatpush1.xpose.msra.mxu0 0.0
        %4178 = vmatprep.subr.mxu0 0.0
        %4179 = vmatpush1.xpose.msra.mxu0 0.0
        %4180 = vmatprep.subr.mxu0 0.0
        %4181 = vmatpush1.xpose.msra.mxu0 0.0
        %4182 = vmatprep.subr.mxu0 0.0
        %4183 = vmatpush1.xpose.msra.mxu0 0.0
        %4184 = vmatprep.subr.mxu0 0.0
        %4185 = vmatpush1.xpose.msra.mxu0 0.0
        %4186 = vmatprep.subr.mxu0 0.0
        %4187 = vmatpush1.xpose.msra.mxu0 0.0
        %4188 = vmatprep.subr.mxu0 0.0
        %4189 = vmatpush1.xpose.msra.mxu0 0.0
        %4190 = vmatprep.mubr.f32.mxu0 0.0
        %4191 = vmatmul.mubr.f32.gmra.mrb[0].mxu0 %v4122
        %v4192 = vpop.f32.mrb[0].mxu0
        %v4193 = vadd.f32 0.0, %v4192
        %v4194 = vpop.f32.mrb[0].mxu0
        %4195 = vdwg.mxu0
        %v4196 = vmul.f32 %v4193, 0.35355338
        %v4197 = vadd.f32 %v4196, %v659
        %v4198 = vsel %vm1241, %v4197, -inf
        %4199 = vmax.xlane.f32.xlu0 %v4198
        %v4200 = vpop.xlane.xlu0 %4199
        %v4201 = vsub.f32 %v4197, %v4200
        %v4202 = vmul.f32 %v4201, 1.442695
        %v4203 = vpow.pop %v4202
        %v4204 = vsel %vm1241, %v4203, 0.0
        %4205 = vadd.xlane.f32.xlu0 %v4204
        %v4206 = vpop.xlane.xlu0 %4205
        %v4207 = vrcp.pop %v4206
        %v4208 = vmul.f32 %v4203, %v4207
        %v4210 = vsel %vm1253, %v4208, 0
        %4212 = vmatprep.subr.mxu0 0.0
        %4213 = vmatpush1.xpose.msra.mxu0 %v4210
        %4214 = vmatprep.subr.mxu0 0.0
        %4215 = vmatpush1.xpose.msra.mxu0 0.0
        %4216 = vmatprep.subr.mxu0 0.0
        %4217 = vmatpush1.xpose.msra.mxu0 0.0
        %4218 = vmatprep.subr.mxu0 0.0
        %4219 = vmatpush1.xpose.msra.mxu0 0.0
        %4220 = vmatprep.subr.mxu0 0.0
        %4221 = vmatpush1.xpose.msra.mxu0 0.0
        %4222 = vmatprep.subr.mxu0 0.0
        %4223 = vmatpush1.xpose.msra.mxu0 0.0
        %4224 = vmatprep.subr.mxu0 0.0
        %4225 = vmatpush1.xpose.msra.mxu0 0.0
        %4226 = vmatprep.subr.mxu0 0.0
        %4227 = vmatpush1.xpose.msra.mxu0 0.0
        %4228 = vmatprep.subr.mxu0 0.0
        %4229 = vmatpush1.xpose.msra.mxu0 0.0
        %4230 = vmatprep.subr.mxu0 0.0
        %4231 = vmatpush1.xpose.msra.mxu0 0.0
        %4232 = vmatprep.subr.mxu0 0.0
        %4233 = vmatpush1.xpose.msra.mxu0 0.0
        %4234 = vmatprep.subr.mxu0 0.0
        %4235 = vmatpush1.xpose.msra.mxu0 0.0
        %4236 = vmatprep.subr.mxu0 0.0
        %4237 = vmatpush1.xpose.msra.mxu0 0.0
        %4238 = vmatprep.subr.mxu0 0.0
        %4239 = vmatpush1.xpose.msra.mxu0 0.0
        %4240 = vmatprep.subr.mxu0 0.0
        %4241 = vmatpush1.xpose.msra.mxu0 0.0
        %4242 = vmatprep.subr.mxu0 0.0
        %4243 = vmatpush1.xpose.msra.mxu0 0.0
        %4244 = vmatprep.subr.mxu0 0.0
        %4245 = vmatpush1.xpose.msra.mxu0 0.0
        %4246 = vmatprep.subr.mxu0 0.0
        %4247 = vmatpush1.xpose.msra.mxu0 0.0
        %4248 = vmatprep.subr.mxu0 0.0
        %4249 = vmatpush1.xpose.msra.mxu0 0.0
        %4250 = vmatprep.subr.mxu0 0.0
        %4251 = vmatpush1.xpose.msra.mxu0 0.0
        %4252 = vmatprep.subr.mxu0 0.0
        %4253 = vmatpush1.xpose.msra.mxu0 0.0
        %4254 = vmatprep.subr.mxu0 0.0
        %4255 = vmatpush1.xpose.msra.mxu0 0.0
        %4256 = vmatprep.subr.mxu0 0.0
        %4257 = vmatpush1.xpose.msra.mxu0 0.0
        %4258 = vmatprep.subr.mxu0 0.0
        %4259 = vmatpush1.xpose.msra.mxu0 0.0
        %4260 = vmatprep.subr.mxu0 0.0
        %4261 = vmatpush1.xpose.msra.mxu0 0.0
        %4262 = vmatprep.subr.mxu0 0.0
        %4263 = vmatpush1.xpose.msra.mxu0 0.0
        %4264 = vmatprep.subr.mxu0 0.0
        %4265 = vmatpush1.xpose.msra.mxu0 0.0
        %4266 = vmatprep.subr.mxu0 0.0
        %4267 = vmatpush1.xpose.msra.mxu0 0.0
        %4268 = vmatprep.subr.mxu0 0.0
        %4269 = vmatpush1.xpose.msra.mxu0 0.0
        %4270 = vmatprep.subr.mxu0 0.0
        %4271 = vmatpush1.xpose.msra.mxu0 0.0
        %4272 = vmatprep.subr.mxu0 0.0
        %4273 = vmatpush1.xpose.msra.mxu0 0.0
        %4274 = vmatprep.subr.mxu0 0.0
        %4275 = vmatpush1.xpose.msra.mxu0 0.0
        %4276 = vmatprep.mubr.f32.mxu0 0.0
        %4277 = vmatmul.mubr.f32.gmra.mrb[0].mxu0 %v1255
        %v4278 = vpop.f32.mrb[0].mxu0
        %v4279 = vadd.f32 0.0, %v4278
        %v4280 = vpop.f32.mrb[0].mxu0
        %4281 = vmatprep.mubr.f32.mxu0 0.0
        %4282 = vmatmul.mubr.f32.gmra.mrb[0].mxu0 %v1258
        %v4283 = vpop.f32.mrb[0].mxu0
        %v4284 = vadd.f32 0.0, %v4283
        %v4285 = vpop.f32.mrb[0].mxu0
        %4286 = vdwg.mxu0
        %4288 = vset.pattern.permute.xlu0 0
        %4289 = vperm.xlu0 %4288, %v4279
        %v4290 = vpop.permute.xlu0 %4289
        %4293 = vset.pattern.permute.xlu0 0
        %4294 = vperm.xlu0 %4293, %v4284
        %v4295 = vpop.permute.xlu0 %4294
        %v4297 = vmul.f32 %v4290, %v3753
        %v4298 = vmul.f32 %v4295, %v3758
        %4301 = vrot.lane.b32.xlu0 %v4297, 64
        %v4302 = vpop.permute.xlu0 %4301
        %4303 = vrot.lane.b32.xlu0 %v4298, 64
        %v4304 = vpop.permute.xlu0 %4303
        %v4308 = vsel %vm801, %v3998, 0
        %4310 = vmatprep.subr.mxu0 0.0
        %4311 = vmatpush1.msra.mxu0 %v4302
        %4312 = vmatprep.subr.mxu0 0.0
        %4313 = vmatpush1.msra.mxu0 %v4304
        %4314 = vmatprep.subr.mxu0 0.0
        %4315 = vmatpush1.msra.mxu0 0.0
        %4316 = vmatprep.subr.mxu0 0.0
        %4317 = vmatpush1.msra.mxu0 0.0
        %4318 = vmatprep.subr.mxu0 0.0
        %4319 = vmatpush1.msra.mxu0 0.0
        %4320 = vmatprep.subr.mxu0 0.0
        %4321 = vmatpush1.msra.mxu0 0.0
        %4322 = vmatprep.subr.mxu0 0.0
        %4323 = vmatpush1.msra.mxu0 0.0
        %4324 = vmatprep.subr.mxu0 0.0
        %4325 = vmatpush1.msra.mxu0 0.0
        %4326 = vmatprep.subr.mxu0 0.0
        %4327 = vmatpush1.msra.mxu0 0.0
        %4328 = vmatprep.subr.mxu0 0.0
        %4329 = vmatpush1.msra.mxu0 0.0
        %4330 = vmatprep.subr.mxu0 0.0
        %4331 = vmatpush1.msra.mxu0 0.0
        %4332 = vmatprep.subr.mxu0 0.0
        %4333 = vmatpush1.msra.mxu0 0.0
        %4334 = vmatprep.subr.mxu0 0.0
        %4335 = vmatpush1.msra.mxu0 0.0
        %4336 = vmatprep.subr.mxu0 0.0
        %4337 = vmatpush1.msra.mxu0 0.0
        %4338 = vmatprep.subr.mxu0 0.0
        %4339 = vmatpush1.msra.mxu0 0.0
        %4340 = vmatprep.subr.mxu0 0.0
        %4341 = vmatpush1.msra.mxu0 0.0
        %4342 = vmatprep.subr.mxu0 0.0
        %4343 = vmatpush1.msra.mxu0 0.0
        %4344 = vmatprep.subr.mxu0 0.0
        %4345 = vmatpush1.msra.mxu0 0.0
        %4346 = vmatprep.subr.mxu0 0.0
        %4347 = vmatpush1.msra.mxu0 0.0
        %4348 = vmatprep.subr.mxu0 0.0
        %4349 = vmatpush1.msra.mxu0 0.0
        %4350 = vmatprep.subr.mxu0 0.0
        %4351 = vmatpush1.msra.mxu0 0.0
        %4352 = vmatprep.subr.mxu0 0.0
        %4353 = vmatpush1.msra.mxu0 0.0
        %4354 = vmatprep.subr.mxu0 0.0
        %4355 = vmatpush1.msra.mxu0 0.0
        %4356 = vmatprep.subr.mxu0 0.0
        %4357 = vmatpush1.msra.mxu0 0.0
        %4358 = vmatprep.subr.mxu0 0.0
        %4359 = vmatpush1.msra.mxu0 0.0
        %4360 = vmatprep.subr.mxu0 0.0
        %4361 = vmatpush1.msra.mxu0 0.0
        %4362 = vmatprep.subr.mxu0 0.0
        %4363 = vmatpush1.msra.mxu0 0.0
        %4364 = vmatprep.subr.mxu0 0.0
        %4365 = vmatpush1.msra.mxu0 0.0
        %4366 = vmatprep.subr.mxu0 0.0
        %4367 = vmatpush1.msra.mxu0 0.0
        %4368 = vmatprep.subr.mxu0 0.0
        %4369 = vmatpush1.msra.mxu0 0.0
        %4370 = vmatprep.subr.mxu0 0.0
        %4371 = vmatpush1.msra.mxu0 0.0
        %4372 = vmatprep.subr.mxu0 0.0
        %4373 = vmatpush1.msra.mxu0 0.0
        %4374 = vmatprep.mubr.f32.mxu0 0.0
        %4375 = vmatmul.mubr.f32.gmra.mrb[0].mxu0 %v4308
        %v4376 = vpop.f32.mrb[0].mxu0
        %v4377 = vadd.f32 0.0, %v4376
        %v4378 = vpop.f32.mrb[0].mxu0
        %4379 = vdwg.mxu0
        %v4380 = vadd.f32 %v4111, %v4377
        %4381 = vst.msk [vmem:[#allocation2] sm:$0xff] %vm965, %v4380
        %4382 = vset.pattern.permute.xlu0 1
        %4383 = vperm.xlu0 %4382, %v4279
        %v4384 = vpop.permute.xlu0 %4383
        %4386 = vset.pattern.permute.xlu0 1
        %4387 = vperm.xlu0 %4386, %v4284
        %v4388 = vpop.permute.xlu0 %4387
        %v4390 = vmul.f32 %v4384, %v3753
        %v4391 = vmul.f32 %v4388, %v3758
        %4394 = vrot.lane.b32.xlu0 %v4390, 64
        %v4395 = vpop.permute.xlu0 %4394
        %4396 = vrot.lane.b32.xlu0 %v4391, 64
        %v4397 = vpop.permute.xlu0 %4396
        %v4401 = vsel %vm801, %v4003, 0
        %4403 = vmatprep.subr.mxu0 0.0
        %4404 = vmatpush1.msra.mxu0 %v4395
        %4405 = vmatprep.subr.mxu0 0.0
        %4406 = vmatpush1.msra.mxu0 %v4397
        %4407 = vmatprep.subr.mxu0 0.0
        %4408 = vmatpush1.msra.mxu0 0.0
        %4409 = vmatprep.subr.mxu0 0.0
        %4410 = vmatpush1.msra.mxu0 0.0
        %4411 = vmatprep.subr.mxu0 0.0
        %4412 = vmatpush1.msra.mxu0 0.0
        %4413 = vmatprep.subr.mxu0 0.0
        %4414 = vmatpush1.msra.mxu0 0.0
        %4415 = vmatprep.subr.mxu0 0.0
        %4416 = vmatpush1.msra.mxu0 0.0
        %4417 = vmatprep.subr.mxu0 0.0
        %4418 = vmatpush1.msra.mxu0 0.0
        %4419 = vmatprep.subr.mxu0 0.0
        %4420 = vmatpush1.msra.mxu0 0.0
        %4421 = vmatprep.subr.mxu0 0.0
        %4422 = vmatpush1.msra.mxu0 0.0
        %4423 = vmatprep.subr.mxu0 0.0
        %4424 = vmatpush1.msra.mxu0 0.0
        %4425 = vmatprep.subr.mxu0 0.0
        %4426 = vmatpush1.msra.mxu0 0.0
        %4427 = vmatprep.subr.mxu0 0.0
        %4428 = vmatpush1.msra.mxu0 0.0
        %4429 = vmatprep.subr.mxu0 0.0
        %4430 = vmatpush1.msra.mxu0 0.0
        %4431 = vmatprep.subr.mxu0 0.0
        %4432 = vmatpush1.msra.mxu0 0.0
        %4433 = vmatprep.subr.mxu0 0.0
        %4434 = vmatpush1.msra.mxu0 0.0
        %4435 = vmatprep.subr.mxu0 0.0
        %4436 = vmatpush1.msra.mxu0 0.0
        %4437 = vmatprep.subr.mxu0 0.0
        %4438 = vmatpush1.msra.mxu0 0.0
        %4439 = vmatprep.subr.mxu0 0.0
        %4440 = vmatpush1.msra.mxu0 0.0
        %4441 = vmatprep.subr.mxu0 0.0
        %4442 = vmatpush1.msra.mxu0 0.0
        %4443 = vmatprep.subr.mxu0 0.0
        %4444 = vmatpush1.msra.mxu0 0.0
        %4445 = vmatprep.subr.mxu0 0.0
        %4446 = vmatpush1.msra.mxu0 0.0
        %4447 = vmatprep.subr.mxu0 0.0
        %4448 = vmatpush1.msra.mxu0 0.0
        %4449 = vmatprep.subr.mxu0 0.0
        %4450 = vmatpush1.msra.mxu0 0.0
        %4451 = vmatprep.subr.mxu0 0.0
        %4452 = vmatpush1.msra.mxu0 0.0
        %4453 = vmatprep.subr.mxu0 0.0
        %4454 = vmatpush1.msra.mxu0 0.0
        %4455 = vmatprep.subr.mxu0 0.0
        %4456 = vmatpush1.msra.mxu0 0.0
        %4457 = vmatprep.subr.mxu0 0.0
        %4458 = vmatpush1.msra.mxu0 0.0
        %4459 = vmatprep.subr.mxu0 0.0
        %4460 = vmatpush1.msra.mxu0 0.0
        %4461 = vmatprep.subr.mxu0 0.0
        %4462 = vmatpush1.msra.mxu0 0.0
        %4463 = vmatprep.subr.mxu0 0.0
        %4464 = vmatpush1.msra.mxu0 0.0
        %4465 = vmatprep.subr.mxu0 0.0
        %4466 = vmatpush1.msra.mxu0 0.0
        %4467 = vmatprep.mubr.f32.mxu0 0.0
        %4468 = vmatmul.mubr.f32.gmra.mrb[0].mxu0 %v4401
        %v4469 = vpop.f32.mrb[0].mxu0
        %v4470 = vadd.f32 0.0, %v4469
        %v4471 = vpop.f32.mrb[0].mxu0
        %4472 = vdwg.mxu0
        %v4473 = vadd.f32 %v4116, %v4470
        %4474 = vst.msk [vmem:[#allocation2 + $0x8] sm:$0xff] %vm965, %v4473
        %4475 = vrot.lane.b32.xlu0 %v3753, 120
        %v4476 = vpop.permute.xlu0 %4475
        %4477 = vrot.lane.b32.xlu0 %v3758, 120
        %v4478 = vpop.permute.xlu0 %4477
        %4479 = vrot.lane.b32.xlu0 %v3753, 88
        %v4480 = vpop.permute.xlu0 %4479
        %4481 = vrot.lane.b32.xlu0 %v3758, 88
        %v4482 = vpop.permute.xlu0 %4481
        %v4483 = vsel %vm965, %v4476, 0
        %v4485 = vsel %vm965, %v4478, 0
        %v4487 = vsel %vm965, %v4480, 0
        %v4489 = vsel %vm965, %v4482, 0
        %4491 = vmatprep.subr.mxu0 0.0
        %4492 = vmatpush1.xpose.msra.mxu0 %v4487
        %4493 = vmatprep.subr.mxu0 0.0
        %4494 = vmatpush1.xpose.msra.mxu0 %v4489
        %4495 = vmatprep.subr.mxu0 0.0
        %4496 = vmatpush1.xpose.msra.mxu0 0.0
        %4497 = vmatprep.subr.mxu0 0.0
        %4498 = vmatpush1.xpose.msra.mxu0 0.0
        %4499 = vmatprep.subr.mxu0 0.0
        %4500 = vmatpush1.xpose.msra.mxu0 0.0
        %4501 = vmatprep.subr.mxu0 0.0
        %4502 = vmatpush1.xpose.msra.mxu0 0.0
        %4503 = vmatprep.subr.mxu0 0.0
        %4504 = vmatpush1.xpose.msra.mxu0 0.0
        %4505 = vmatprep.subr.mxu0 0.0
        %4506 = vmatpush1.xpose.msra.mxu0 0.0
        %4507 = vmatprep.subr.mxu0 0.0
        %4508 = vmatpush1.xpose.msra.mxu0 0.0
        %4509 = vmatprep.subr.mxu0 0.0
        %4510 = vmatpush1.xpose.msra.mxu0 0.0
        %4511 = vmatprep.subr.mxu0 0.0
        %4512 = vmatpush1.xpose.msra.mxu0 0.0
        %4513 = vmatprep.subr.mxu0 0.0
        %4514 = vmatpush1.xpose.msra.mxu0 0.0
        %4515 = vmatprep.subr.mxu0 0.0
        %4516 = vmatpush1.xpose.msra.mxu0 0.0
        %4517 = vmatprep.subr.mxu0 0.0
        %4518 = vmatpush1.xpose.msra.mxu0 0.0
        %4519 = vmatprep.subr.mxu0 0.0
        %4520 = vmatpush1.xpose.msra.mxu0 0.0
        %4521 = vmatprep.subr.mxu0 0.0
        %4522 = vmatpush1.xpose.msra.mxu0 0.0
        %4523 = vmatprep.subr.mxu0 0.0
        %4524 = vmatpush1.xpose.msra.mxu0 0.0
        %4525 = vmatprep.subr.mxu0 0.0
        %4526 = vmatpush1.xpose.msra.mxu0 0.0
        %4527 = vmatprep.subr.mxu0 0.0
        %4528 = vmatpush1.xpose.msra.mxu0 0.0
        %4529 = vmatprep.subr.mxu0 0.0
        %4530 = vmatpush1.xpose.msra.mxu0 0.0
        %4531 = vmatprep.subr.mxu0 0.0
        %4532 = vmatpush1.xpose.msra.mxu0 0.0
        %4533 = vmatprep.subr.mxu0 0.0
        %4534 = vmatpush1.xpose.msra.mxu0 0.0
        %4535 = vmatprep.subr.mxu0 0.0
        %4536 = vmatpush1.xpose.msra.mxu0 0.0
        %4537 = vmatprep.subr.mxu0 0.0
        %4538 = vmatpush1.xpose.msra.mxu0 0.0
        %4539 = vmatprep.subr.mxu0 0.0
        %4540 = vmatpush1.xpose.msra.mxu0 0.0
        %4541 = vmatprep.subr.mxu0 0.0
        %4542 = vmatpush1.xpose.msra.mxu0 0.0
        %4543 = vmatprep.subr.mxu0 0.0
        %4544 = vmatpush1.xpose.msra.mxu0 0.0
        %4545 = vmatprep.subr.mxu0 0.0
        %4546 = vmatpush1.xpose.msra.mxu0 0.0
        %4547 = vmatprep.subr.mxu0 0.0
        %4548 = vmatpush1.xpose.msra.mxu0 0.0
        %4549 = vmatprep.subr.mxu0 0.0
        %4550 = vmatpush1.xpose.msra.mxu0 0.0
        %4551 = vmatprep.subr.mxu0 0.0
        %4552 = vmatpush1.xpose.msra.mxu0 0.0
        %4553 = vmatprep.subr.mxu0 0.0
        %4554 = vmatpush1.xpose.msra.mxu0 0.0
        %4555 = vmatprep.mubr.f32.mxu0 0.0
        %4556 = vmatmul.mubr.f32.gmra.mrb[0].mxu0 %v4483
        %v4557 = vpop.f32.mrb[0].mxu0
        %v4558 = vadd.f32 0.0, %v4557
        %v4559 = vpop.f32.mrb[0].mxu0
        %4560 = vmatprep.mubr.f32.mxu0 0.0
        %4561 = vmatmul.mubr.f32.gmra.mrb[0].mxu0 %v4485
        %v4562 = vpop.f32.mrb[0].mxu0
        %v4563 = vadd.f32 0.0, %v4562
        %v4564 = vpop.f32.mrb[0].mxu0
        %4565 = vdwg.mxu0
        %v4566 = vmul.f32 %v4558, 0.35355338
        %v4567 = vmul.f32 %v4563, 0.35355338
        %v4568 = vadd.f32 %v4566, %v657
        %v4569 = vadd.f32 %v4567, %v658
        %v4570 = vsel %vm801, %v4568, -inf
        %4571 = vmax.xlane.f32.xlu0 %v4570
        %v4572 = vpop.xlane.xlu0 %4571
        %v4573 = vsel %vm801, %v4569, -inf
        %4574 = vmax.xlane.f32.xlu0 %v4573
        %v4575 = vpop.xlane.xlu0 %4574
        %v4576 = vsub.f32 %v4568, %v4572
        %v4577 = vsub.f32 %v4569, %v4575
        %v4578 = vmul.f32 %v4576, 1.442695
        %v4579 = vpow.pop %v4578
        %v4580 = vmul.f32 %v4577, 1.442695
        %v4581 = vpow.pop %v4580
        %v4582 = vsel %vm801, %v4579, 0.0
        %4583 = vadd.xlane.f32.xlu0 %v4582
        %v4584 = vpop.xlane.xlu0 %4583
        %v4585 = vsel %vm801, %v4581, 0.0
        %4586 = vadd.xlane.f32.xlu0 %v4585
        %v4587 = vpop.xlane.xlu0 %4586
        %v4588 = vrcp.pop %v4584
        %v4589 = vrcp.pop %v4587
        %v4590 = vmul.f32 %v4579, %v4588
        %v4591 = vmul.f32 %v4581, %v4589
        %4592 = vrot.lane.b32.xlu0 %v3753, 56
        %v4593 = vpop.permute.xlu0 %4592
        %4594 = vrot.lane.b32.xlu0 %v3758, 56
        %v4595 = vpop.permute.xlu0 %4594
        %v4599 = vsel %vm801, %v4590, 0
        %v4602 = vsel %vm801, %v4591, 0
        %4604 = vmatprep.subr.mxu0 0.0
        %4605 = vmatpush1.msra.mxu0 %v4593
        %4606 = vmatprep.subr.mxu0 0.0
        %4607 = vmatpush1.msra.mxu0 %v4595
        %4608 = vmatprep.subr.mxu0 0.0
        %4609 = vmatpush1.msra.mxu0 0.0
        %4610 = vmatprep.subr.mxu0 0.0
        %4611 = vmatpush1.msra.mxu0 0.0
        %4612 = vmatprep.subr.mxu0 0.0
        %4613 = vmatpush1.msra.mxu0 0.0
        %4614 = vmatprep.subr.mxu0 0.0
        %4615 = vmatpush1.msra.mxu0 0.0
        %4616 = vmatprep.subr.mxu0 0.0
        %4617 = vmatpush1.msra.mxu0 0.0
        %4618 = vmatprep.subr.mxu0 0.0
        %4619 = vmatpush1.msra.mxu0 0.0
        %4620 = vmatprep.subr.mxu0 0.0
        %4621 = vmatpush1.msra.mxu0 0.0
        %4622 = vmatprep.subr.mxu0 0.0
        %4623 = vmatpush1.msra.mxu0 0.0
        %4624 = vmatprep.subr.mxu0 0.0
        %4625 = vmatpush1.msra.mxu0 0.0
        %4626 = vmatprep.subr.mxu0 0.0
        %4627 = vmatpush1.msra.mxu0 0.0
        %4628 = vmatprep.subr.mxu0 0.0
        %4629 = vmatpush1.msra.mxu0 0.0
        %4630 = vmatprep.subr.mxu0 0.0
        %4631 = vmatpush1.msra.mxu0 0.0
        %4632 = vmatprep.subr.mxu0 0.0
        %4633 = vmatpush1.msra.mxu0 0.0
        %4634 = vmatprep.subr.mxu0 0.0
        %4635 = vmatpush1.msra.mxu0 0.0
        %4636 = vmatprep.subr.mxu0 0.0
        %4637 = vmatpush1.msra.mxu0 0.0
        %4638 = vmatprep.subr.mxu0 0.0
        %4639 = vmatpush1.msra.mxu0 0.0
        %4640 = vmatprep.subr.mxu0 0.0
        %4641 = vmatpush1.msra.mxu0 0.0
        %4642 = vmatprep.subr.mxu0 0.0
        %4643 = vmatpush1.msra.mxu0 0.0
        %4644 = vmatprep.subr.mxu0 0.0
        %4645 = vmatpush1.msra.mxu0 0.0
        %4646 = vmatprep.subr.mxu0 0.0
        %4647 = vmatpush1.msra.mxu0 0.0
        %4648 = vmatprep.subr.mxu0 0.0
        %4649 = vmatpush1.msra.mxu0 0.0
        %4650 = vmatprep.subr.mxu0 0.0
        %4651 = vmatpush1.msra.mxu0 0.0
        %4652 = vmatprep.subr.mxu0 0.0
        %4653 = vmatpush1.msra.mxu0 0.0
        %4654 = vmatprep.subr.mxu0 0.0
        %4655 = vmatpush1.msra.mxu0 0.0
        %4656 = vmatprep.subr.mxu0 0.0
        %4657 = vmatpush1.msra.mxu0 0.0
        %4658 = vmatprep.subr.mxu0 0.0
        %4659 = vmatpush1.msra.mxu0 0.0
        %4660 = vmatprep.subr.mxu0 0.0
        %4661 = vmatpush1.msra.mxu0 0.0
        %4662 = vmatprep.subr.mxu0 0.0
        %4663 = vmatpush1.msra.mxu0 0.0
        %4664 = vmatprep.subr.mxu0 0.0
        %4665 = vmatpush1.msra.mxu0 0.0
        %4666 = vmatprep.subr.mxu0 0.0
        %4667 = vmatpush1.msra.mxu0 0.0
        %4668 = vmatprep.mubr.f32.mxu0 0.0
        %4669 = vmatmul.mubr.f32.gmra.mrb[0].mxu0 %v4599
        %v4670 = vpop.f32.mrb[0].mxu0
        %v4671 = vadd.f32 0.0, %v4670
        %v4672 = vpop.f32.mrb[0].mxu0
        %4673 = vmatprep.mubr.f32.mxu0 0.0
        %4674 = vmatmul.mubr.f32.gmra.mrb[0].mxu0 %v4602
        %v4675 = vpop.f32.mrb[0].mxu0
        %v4676 = vadd.f32 0.0, %v4675
        %v4677 = vpop.f32.mrb[0].mxu0
        %4678 = vdwg.mxu0
        %4679 = vrot.lane.b32.xlu0 %v3914, 120
        %v4680 = vpop.permute.xlu0 %4679
        %4681 = vrot.lane.b32.xlu0 %v3914, 88
        %v4682 = vpop.permute.xlu0 %4681
        %v4683 = vsel %vm965, %v4680, 0
        %v4685 = vsel %vm965, %v4682, 0
        %4687 = vmatprep.subr.mxu0 0.0
        %4688 = vmatpush1.xpose.msra.mxu0 %v4685
        %4689 = vmatprep.subr.mxu0 0.0
        %4690 = vmatpush1.xpose.msra.mxu0 0.0
        %4691 = vmatprep.subr.mxu0 0.0
        %4692 = vmatpush1.xpose.msra.mxu0 0.0
        %4693 = vmatprep.subr.mxu0 0.0
        %4694 = vmatpush1.xpose.msra.mxu0 0.0
        %4695 = vmatprep.subr.mxu0 0.0
        %4696 = vmatpush1.xpose.msra.mxu0 0.0
        %4697 = vmatprep.subr.mxu0 0.0
        %4698 = vmatpush1.xpose.msra.mxu0 0.0
        %4699 = vmatprep.subr.mxu0 0.0
        %4700 = vmatpush1.xpose.msra.mxu0 0.0
        %4701 = vmatprep.subr.mxu0 0.0
        %4702 = vmatpush1.xpose.msra.mxu0 0.0
        %4703 = vmatprep.subr.mxu0 0.0
        %4704 = vmatpush1.xpose.msra.mxu0 0.0
        %4705 = vmatprep.subr.mxu0 0.0
        %4706 = vmatpush1.xpose.msra.mxu0 0.0
        %4707 = vmatprep.subr.mxu0 0.0
        %4708 = vmatpush1.xpose.msra.mxu0 0.0
        %4709 = vmatprep.subr.mxu0 0.0
        %4710 = vmatpush1.xpose.msra.mxu0 0.0
        %4711 = vmatprep.subr.mxu0 0.0
        %4712 = vmatpush1.xpose.msra.mxu0 0.0
        %4713 = vmatprep.subr.mxu0 0.0
        %4714 = vmatpush1.xpose.msra.mxu0 0.0
        %4715 = vmatprep.subr.mxu0 0.0
        %4716 = vmatpush1.xpose.msra.mxu0 0.0
        %4717 = vmatprep.subr.mxu0 0.0
        %4718 = vmatpush1.xpose.msra.mxu0 0.0
        %4719 = vmatprep.subr.mxu0 0.0
        %4720 = vmatpush1.xpose.msra.mxu0 0.0
        %4721 = vmatprep.subr.mxu0 0.0
        %4722 = vmatpush1.xpose.msra.mxu0 0.0
        %4723 = vmatprep.subr.mxu0 0.0
        %4724 = vmatpush1.xpose.msra.mxu0 0.0
        %4725 = vmatprep.subr.mxu0 0.0
        %4726 = vmatpush1.xpose.msra.mxu0 0.0
        %4727 = vmatprep.subr.mxu0 0.0
        %4728 = vmatpush1.xpose.msra.mxu0 0.0
        %4729 = vmatprep.subr.mxu0 0.0
        %4730 = vmatpush1.xpose.msra.mxu0 0.0
        %4731 = vmatprep.subr.mxu0 0.0
        %4732 = vmatpush1.xpose.msra.mxu0 0.0
        %4733 = vmatprep.subr.mxu0 0.0
        %4734 = vmatpush1.xpose.msra.mxu0 0.0
        %4735 = vmatprep.subr.mxu0 0.0
        %4736 = vmatpush1.xpose.msra.mxu0 0.0
        %4737 = vmatprep.subr.mxu0 0.0
        %4738 = vmatpush1.xpose.msra.mxu0 0.0
        %4739 = vmatprep.subr.mxu0 0.0
        %4740 = vmatpush1.xpose.msra.mxu0 0.0
        %4741 = vmatprep.subr.mxu0 0.0
        %4742 = vmatpush1.xpose.msra.mxu0 0.0
        %4743 = vmatprep.subr.mxu0 0.0
        %4744 = vmatpush1.xpose.msra.mxu0 0.0
        %4745 = vmatprep.subr.mxu0 0.0
        %4746 = vmatpush1.xpose.msra.mxu0 0.0
        %4747 = vmatprep.subr.mxu0 0.0
        %4748 = vmatpush1.xpose.msra.mxu0 0.0
        %4749 = vmatprep.subr.mxu0 0.0
        %4750 = vmatpush1.xpose.msra.mxu0 0.0
        %4751 = vmatprep.mubr.f32.mxu0 0.0
        %4752 = vmatmul.mubr.f32.gmra.mrb[0].mxu0 %v4683
        %v4753 = vpop.f32.mrb[0].mxu0
        %v4754 = vadd.f32 0.0, %v4753
        %v4755 = vpop.f32.mrb[0].mxu0
        %4756 = vdwg.mxu0
        %v4757 = vmul.f32 %v4754, 0.35355338
        %v4758 = vadd.f32 %v4757, %v659
        %v4759 = vsel %vm1241, %v4758, -inf
        %4760 = vmax.xlane.f32.xlu0 %v4759
        %v4761 = vpop.xlane.xlu0 %4760
        %v4762 = vsub.f32 %v4758, %v4761
        %v4763 = vmul.f32 %v4762, 1.442695
        %v4764 = vpow.pop %v4763
        %v4765 = vsel %vm1241, %v4764, 0.0
        %4766 = vadd.xlane.f32.xlu0 %v4765
        %v4767 = vpop.xlane.xlu0 %4766
        %v4768 = vrcp.pop %v4767
        %v4769 = vmul.f32 %v4764, %v4768
        %v4771 = vsel %vm1253, %v4769, 0
        %4773 = vmatprep.subr.mxu0 0.0
        %4774 = vmatpush1.xpose.msra.mxu0 %v4771
        %4775 = vmatprep.subr.mxu0 0.0
        %4776 = vmatpush1.xpose.msra.mxu0 0.0
        %4777 = vmatprep.subr.mxu0 0.0
        %4778 = vmatpush1.xpose.msra.mxu0 0.0
        %4779 = vmatprep.subr.mxu0 0.0
        %4780 = vmatpush1.xpose.msra.mxu0 0.0
        %4781 = vmatprep.subr.mxu0 0.0
        %4782 = vmatpush1.xpose.msra.mxu0 0.0
        %4783 = vmatprep.subr.mxu0 0.0
        %4784 = vmatpush1.xpose.msra.mxu0 0.0
        %4785 = vmatprep.subr.mxu0 0.0
        %4786 = vmatpush1.xpose.msra.mxu0 0.0
        %4787 = vmatprep.subr.mxu0 0.0
        %4788 = vmatpush1.xpose.msra.mxu0 0.0
        %4789 = vmatprep.subr.mxu0 0.0
        %4790 = vmatpush1.xpose.msra.mxu0 0.0
        %4791 = vmatprep.subr.mxu0 0.0
        %4792 = vmatpush1.xpose.msra.mxu0 0.0
        %4793 = vmatprep.subr.mxu0 0.0
        %4794 = vmatpush1.xpose.msra.mxu0 0.0
        %4795 = vmatprep.subr.mxu0 0.0
        %4796 = vmatpush1.xpose.msra.mxu0 0.0
        %4797 = vmatprep.subr.mxu0 0.0
        %4798 = vmatpush1.xpose.msra.mxu0 0.0
        %4799 = vmatprep.subr.mxu0 0.0
        %4800 = vmatpush1.xpose.msra.mxu0 0.0
        %4801 = vmatprep.subr.mxu0 0.0
        %4802 = vmatpush1.xpose.msra.mxu0 0.0
        %4803 = vmatprep.subr.mxu0 0.0
        %4804 = vmatpush1.xpose.msra.mxu0 0.0
        %4805 = vmatprep.subr.mxu0 0.0
        %4806 = vmatpush1.xpose.msra.mxu0 0.0
        %4807 = vmatprep.subr.mxu0 0.0
        %4808 = vmatpush1.xpose.msra.mxu0 0.0
        %4809 = vmatprep.subr.mxu0 0.0
        %4810 = vmatpush1.xpose.msra.mxu0 0.0
        %4811 = vmatprep.subr.mxu0 0.0
        %4812 = vmatpush1.xpose.msra.mxu0 0.0
        %4813 = vmatprep.subr.mxu0 0.0
        %4814 = vmatpush1.xpose.msra.mxu0 0.0
        %4815 = vmatprep.subr.mxu0 0.0
        %4816 = vmatpush1.xpose.msra.mxu0 0.0
        %4817 = vmatprep.subr.mxu0 0.0
        %4818 = vmatpush1.xpose.msra.mxu0 0.0
        %4819 = vmatprep.subr.mxu0 0.0
        %4820 = vmatpush1.xpose.msra.mxu0 0.0
        %4821 = vmatprep.subr.mxu0 0.0
        %4822 = vmatpush1.xpose.msra.mxu0 0.0
        %4823 = vmatprep.subr.mxu0 0.0
        %4824 = vmatpush1.xpose.msra.mxu0 0.0
        %4825 = vmatprep.subr.mxu0 0.0
        %4826 = vmatpush1.xpose.msra.mxu0 0.0
        %4827 = vmatprep.subr.mxu0 0.0
        %4828 = vmatpush1.xpose.msra.mxu0 0.0
        %4829 = vmatprep.subr.mxu0 0.0
        %4830 = vmatpush1.xpose.msra.mxu0 0.0
        %4831 = vmatprep.subr.mxu0 0.0
        %4832 = vmatpush1.xpose.msra.mxu0 0.0
        %4833 = vmatprep.subr.mxu0 0.0
        %4834 = vmatpush1.xpose.msra.mxu0 0.0
        %4835 = vmatprep.subr.mxu0 0.0
        %4836 = vmatpush1.xpose.msra.mxu0 0.0
        %4837 = vmatprep.mubr.f32.mxu0 0.0
        %4838 = vmatmul.mubr.f32.gmra.mrb[0].mxu0 %v1255
        %v4839 = vpop.f32.mrb[0].mxu0
        %v4840 = vadd.f32 0.0, %v4839
        %v4841 = vpop.f32.mrb[0].mxu0
        %4842 = vmatprep.mubr.f32.mxu0 0.0
        %4843 = vmatmul.mubr.f32.gmra.mrb[0].mxu0 %v1258
        %v4844 = vpop.f32.mrb[0].mxu0
        %v4845 = vadd.f32 0.0, %v4844
        %v4846 = vpop.f32.mrb[0].mxu0
        %4847 = vdwg.mxu0
        %4849 = vset.pattern.permute.xlu0 0
        %4850 = vperm.xlu0 %4849, %v4840
        %v4851 = vpop.permute.xlu0 %4850
        %4854 = vset.pattern.permute.xlu0 0
        %4855 = vperm.xlu0 %4854, %v4845
        %v4856 = vpop.permute.xlu0 %4855
        %v4858 = vmul.f32 %v4851, %v3753
        %v4859 = vmul.f32 %v4856, %v3758
        %4862 = vrot.lane.b32.xlu0 %v4858, 56
        %v4863 = vpop.permute.xlu0 %4862
        %4864 = vrot.lane.b32.xlu0 %v4859, 56
        %v4865 = vpop.permute.xlu0 %4864
        %v4869 = vsel %vm801, %v4558, 0
        %4871 = vmatprep.subr.mxu0 0.0
        %4872 = vmatpush1.msra.mxu0 %v4863
        %4873 = vmatprep.subr.mxu0 0.0
        %4874 = vmatpush1.msra.mxu0 %v4865
        %4875 = vmatprep.subr.mxu0 0.0
        %4876 = vmatpush1.msra.mxu0 0.0
        %4877 = vmatprep.subr.mxu0 0.0
        %4878 = vmatpush1.msra.mxu0 0.0
        %4879 = vmatprep.subr.mxu0 0.0
        %4880 = vmatpush1.msra.mxu0 0.0
        %4881 = vmatprep.subr.mxu0 0.0
        %4882 = vmatpush1.msra.mxu0 0.0
        %4883 = vmatprep.subr.mxu0 0.0
        %4884 = vmatpush1.msra.mxu0 0.0
        %4885 = vmatprep.subr.mxu0 0.0
        %4886 = vmatpush1.msra.mxu0 0.0
        %4887 = vmatprep.subr.mxu0 0.0
        %4888 = vmatpush1.msra.mxu0 0.0
        %4889 = vmatprep.subr.mxu0 0.0
        %4890 = vmatpush1.msra.mxu0 0.0
        %4891 = vmatprep.subr.mxu0 0.0
        %4892 = vmatpush1.msra.mxu0 0.0
        %4893 = vmatprep.subr.mxu0 0.0
        %4894 = vmatpush1.msra.mxu0 0.0
        %4895 = vmatprep.subr.mxu0 0.0
        %4896 = vmatpush1.msra.mxu0 0.0
        %4897 = vmatprep.subr.mxu0 0.0
        %4898 = vmatpush1.msra.mxu0 0.0
        %4899 = vmatprep.subr.mxu0 0.0
        %4900 = vmatpush1.msra.mxu0 0.0
        %4901 = vmatprep.subr.mxu0 0.0
        %4902 = vmatpush1.msra.mxu0 0.0
        %4903 = vmatprep.subr.mxu0 0.0
        %4904 = vmatpush1.msra.mxu0 0.0
        %4905 = vmatprep.subr.mxu0 0.0
        %4906 = vmatpush1.msra.mxu0 0.0
        %4907 = vmatprep.subr.mxu0 0.0
        %4908 = vmatpush1.msra.mxu0 0.0
        %4909 = vmatprep.subr.mxu0 0.0
        %4910 = vmatpush1.msra.mxu0 0.0
        %4911 = vmatprep.subr.mxu0 0.0
        %4912 = vmatpush1.msra.mxu0 0.0
        %4913 = vmatprep.subr.mxu0 0.0
        %4914 = vmatpush1.msra.mxu0 0.0
        %4915 = vmatprep.subr.mxu0 0.0
        %4916 = vmatpush1.msra.mxu0 0.0
        %4917 = vmatprep.subr.mxu0 0.0
        %4918 = vmatpush1.msra.mxu0 0.0
        %4919 = vmatprep.subr.mxu0 0.0
        %4920 = vmatpush1.msra.mxu0 0.0
        %4921 = vmatprep.subr.mxu0 0.0
        %4922 = vmatpush1.msra.mxu0 0.0
        %4923 = vmatprep.subr.mxu0 0.0
        %4924 = vmatpush1.msra.mxu0 0.0
        %4925 = vmatprep.subr.mxu0 0.0
        %4926 = vmatpush1.msra.mxu0 0.0
        %4927 = vmatprep.subr.mxu0 0.0
        %4928 = vmatpush1.msra.mxu0 0.0
        %4929 = vmatprep.subr.mxu0 0.0
        %4930 = vmatpush1.msra.mxu0 0.0
        %4931 = vmatprep.subr.mxu0 0.0
        %4932 = vmatpush1.msra.mxu0 0.0
        %4933 = vmatprep.subr.mxu0 0.0
        %4934 = vmatpush1.msra.mxu0 0.0
        %4935 = vmatprep.mubr.f32.mxu0 0.0
        %4936 = vmatmul.mubr.f32.gmra.mrb[0].mxu0 %v4869
        %v4937 = vpop.f32.mrb[0].mxu0
        %v4938 = vadd.f32 0.0, %v4937
        %v4939 = vpop.f32.mrb[0].mxu0
        %4940 = vdwg.mxu0
        %v4941 = vadd.f32 %v4671, %v4938
        %4943 = vrot.lane.b32.xlu0 %v4941, 8
        %v4944 = vpop.permute.xlu0 %4943
        %4946 = vst.msk [vmem:[#allocation2] sm:$0xff] %vm1997, %v4944
        %4947 = vset.pattern.permute.xlu0 1
        %4948 = vperm.xlu0 %4947, %v4840
        %v4949 = vpop.permute.xlu0 %4948
        %4951 = vset.pattern.permute.xlu0 1
        %4952 = vperm.xlu0 %4951, %v4845
        %v4953 = vpop.permute.xlu0 %4952
        %v4955 = vmul.f32 %v4949, %v3753
        %v4956 = vmul.f32 %v4953, %v3758
        %4959 = vrot.lane.b32.xlu0 %v4955, 56
        %v4960 = vpop.permute.xlu0 %4959
        %4961 = vrot.lane.b32.xlu0 %v4956, 56
        %v4962 = vpop.permute.xlu0 %4961
        %v4966 = vsel %vm801, %v4563, 0
        %4968 = vmatprep.subr.mxu0 0.0
        %4969 = vmatpush1.msra.mxu0 %v4960
        %4970 = vmatprep.subr.mxu0 0.0
        %4971 = vmatpush1.msra.mxu0 %v4962
        %4972 = vmatprep.subr.mxu0 0.0
        %4973 = vmatpush1.msra.mxu0 0.0
        %4974 = vmatprep.subr.mxu0 0.0
        %4975 = vmatpush1.msra.mxu0 0.0
        %4976 = vmatprep.subr.mxu0 0.0
        %4977 = vmatpush1.msra.mxu0 0.0
        %4978 = vmatprep.subr.mxu0 0.0
        %4979 = vmatpush1.msra.mxu0 0.0
        %4980 = vmatprep.subr.mxu0 0.0
        %4981 = vmatpush1.msra.mxu0 0.0
        %4982 = vmatprep.subr.mxu0 0.0
        %4983 = vmatpush1.msra.mxu0 0.0
        %4984 = vmatprep.subr.mxu0 0.0
        %4985 = vmatpush1.msra.mxu0 0.0
        %4986 = vmatprep.subr.mxu0 0.0
        %4987 = vmatpush1.msra.mxu0 0.0
        %4988 = vmatprep.subr.mxu0 0.0
        %4989 = vmatpush1.msra.mxu0 0.0
        %4990 = vmatprep.subr.mxu0 0.0
        %4991 = vmatpush1.msra.mxu0 0.0
        %4992 = vmatprep.subr.mxu0 0.0
        %4993 = vmatpush1.msra.mxu0 0.0
        %4994 = vmatprep.subr.mxu0 0.0
        %4995 = vmatpush1.msra.mxu0 0.0
        %4996 = vmatprep.subr.mxu0 0.0
        %4997 = vmatpush1.msra.mxu0 0.0
        %4998 = vmatprep.subr.mxu0 0.0
        %4999 = vmatpush1.msra.mxu0 0.0
        %5000 = vmatprep.subr.mxu0 0.0
        %5001 = vmatpush1.msra.mxu0 0.0
        %5002 = vmatprep.subr.mxu0 0.0
        %5003 = vmatpush1.msra.mxu0 0.0
        %5004 = vmatprep.subr.mxu0 0.0
        %5005 = vmatpush1.msra.mxu0 0.0
        %5006 = vmatprep.subr.mxu0 0.0
        %5007 = vmatpush1.msra.mxu0 0.0
        %5008 = vmatprep.subr.mxu0 0.0
        %5009 = vmatpush1.msra.mxu0 0.0
        %5010 = vmatprep.subr.mxu0 0.0
        %5011 = vmatpush1.msra.mxu0 0.0
        %5012 = vmatprep.subr.mxu0 0.0
        %5013 = vmatpush1.msra.mxu0 0.0
        %5014 = vmatprep.subr.mxu0 0.0
        %5015 = vmatpush1.msra.mxu0 0.0
        %5016 = vmatprep.subr.mxu0 0.0
        %5017 = vmatpush1.msra.mxu0 0.0
        %5018 = vmatprep.subr.mxu0 0.0
        %5019 = vmatpush1.msra.mxu0 0.0
        %5020 = vmatprep.subr.mxu0 0.0
        %5021 = vmatpush1.msra.mxu0 0.0
        %5022 = vmatprep.subr.mxu0 0.0
        %5023 = vmatpush1.msra.mxu0 0.0
        %5024 = vmatprep.subr.mxu0 0.0
        %5025 = vmatpush1.msra.mxu0 0.0
        %5026 = vmatprep.subr.mxu0 0.0
        %5027 = vmatpush1.msra.mxu0 0.0
        %5028 = vmatprep.subr.mxu0 0.0
        %5029 = vmatpush1.msra.mxu0 0.0
        %5030 = vmatprep.subr.mxu0 0.0
        %5031 = vmatpush1.msra.mxu0 0.0
        %5032 = vmatprep.mubr.f32.mxu0 0.0
        %5033 = vmatmul.mubr.f32.gmra.mrb[0].mxu0 %v4966
        %v5034 = vpop.f32.mrb[0].mxu0
        %v5035 = vadd.f32 0.0, %v5034
        %v5036 = vpop.f32.mrb[0].mxu0
        %5037 = vdwg.mxu0
        %v5038 = vadd.f32 %v4676, %v5035
        %5040 = vrot.lane.b32.xlu0 %v5038, 8
        %v5041 = vpop.permute.xlu0 %5040
        %5043 = vst.msk [vmem:[#allocation2 + $0x8] sm:$0xff] %vm1997, %v5041
        %5044 = vrot.lane.b32.xlu0 %v3753, 112
        %v5045 = vpop.permute.xlu0 %5044
        %5046 = vrot.lane.b32.xlu0 %v3758, 112
        %v5047 = vpop.permute.xlu0 %5046
        %5048 = vrot.lane.b32.xlu0 %v3753, 80
        %v5049 = vpop.permute.xlu0 %5048
        %5050 = vrot.lane.b32.xlu0 %v3758, 80
        %v5051 = vpop.permute.xlu0 %5050
        %v5052 = vsel %vm965, %v5045, 0
        %v5054 = vsel %vm965, %v5047, 0
        %v5056 = vsel %vm965, %v5049, 0
        %v5058 = vsel %vm965, %v5051, 0
        %5060 = vmatprep.subr.mxu0 0.0
        %5061 = vmatpush1.xpose.msra.mxu0 %v5056
        %5062 = vmatprep.subr.mxu0 0.0
        %5063 = vmatpush1.xpose.msra.mxu0 %v5058
        %5064 = vmatprep.subr.mxu0 0.0
        %5065 = vmatpush1.xpose.msra.mxu0 0.0
        %5066 = vmatprep.subr.mxu0 0.0
        %5067 = vmatpush1.xpose.msra.mxu0 0.0
        %5068 = vmatprep.subr.mxu0 0.0
        %5069 = vmatpush1.xpose.msra.mxu0 0.0
        %5070 = vmatprep.subr.mxu0 0.0
        %5071 = vmatpush1.xpose.msra.mxu0 0.0
        %5072 = vmatprep.subr.mxu0 0.0
        %5073 = vmatpush1.xpose.msra.mxu0 0.0
        %5074 = vmatprep.subr.mxu0 0.0
        %5075 = vmatpush1.xpose.msra.mxu0 0.0
        %5076 = vmatprep.subr.mxu0 0.0
        %5077 = vmatpush1.xpose.msra.mxu0 0.0
        %5078 = vmatprep.subr.mxu0 0.0
        %5079 = vmatpush1.xpose.msra.mxu0 0.0
        %5080 = vmatprep.subr.mxu0 0.0
        %5081 = vmatpush1.xpose.msra.mxu0 0.0
        %5082 = vmatprep.subr.mxu0 0.0
        %5083 = vmatpush1.xpose.msra.mxu0 0.0
        %5084 = vmatprep.subr.mxu0 0.0
        %5085 = vmatpush1.xpose.msra.mxu0 0.0
        %5086 = vmatprep.subr.mxu0 0.0
        %5087 = vmatpush1.xpose.msra.mxu0 0.0
        %5088 = vmatprep.subr.mxu0 0.0
        %5089 = vmatpush1.xpose.msra.mxu0 0.0
        %5090 = vmatprep.subr.mxu0 0.0
        %5091 = vmatpush1.xpose.msra.mxu0 0.0
        %5092 = vmatprep.subr.mxu0 0.0
        %5093 = vmatpush1.xpose.msra.mxu0 0.0
        %5094 = vmatprep.subr.mxu0 0.0
        %5095 = vmatpush1.xpose.msra.mxu0 0.0
        %5096 = vmatprep.subr.mxu0 0.0
        %5097 = vmatpush1.xpose.msra.mxu0 0.0
        %5098 = vmatprep.subr.mxu0 0.0
        %5099 = vmatpush1.xpose.msra.mxu0 0.0
        %5100 = vmatprep.subr.mxu0 0.0
        %5101 = vmatpush1.xpose.msra.mxu0 0.0
        %5102 = vmatprep.subr.mxu0 0.0
        %5103 = vmatpush1.xpose.msra.mxu0 0.0
        %5104 = vmatprep.subr.mxu0 0.0
        %5105 = vmatpush1.xpose.msra.mxu0 0.0
        %5106 = vmatprep.subr.mxu0 0.0
        %5107 = vmatpush1.xpose.msra.mxu0 0.0
        %5108 = vmatprep.subr.mxu0 0.0
        %5109 = vmatpush1.xpose.msra.mxu0 0.0
        %5110 = vmatprep.subr.mxu0 0.0
        %5111 = vmatpush1.xpose.msra.mxu0 0.0
        %5112 = vmatprep.subr.mxu0 0.0
        %5113 = vmatpush1.xpose.msra.mxu0 0.0
        %5114 = vmatprep.subr.mxu0 0.0
        %5115 = vmatpush1.xpose.msra.mxu0 0.0
        %5116 = vmatprep.subr.mxu0 0.0
        %5117 = vmatpush1.xpose.msra.mxu0 0.0
        %5118 = vmatprep.subr.mxu0 0.0
        %5119 = vmatpush1.xpose.msra.mxu0 0.0
        %5120 = vmatprep.subr.mxu0 0.0
        %5121 = vmatpush1.xpose.msra.mxu0 0.0
        %5122 = vmatprep.subr.mxu0 0.0
        %5123 = vmatpush1.xpose.msra.mxu0 0.0
        %5124 = vmatprep.mubr.f32.mxu0 0.0
        %5125 = vmatmul.mubr.f32.gmra.mrb[0].mxu0 %v5052
        %v5126 = vpop.f32.mrb[0].mxu0
        %v5127 = vadd.f32 0.0, %v5126
        %v5128 = vpop.f32.mrb[0].mxu0
        %5129 = vmatprep.mubr.f32.mxu0 0.0
        %5130 = vmatmul.mubr.f32.gmra.mrb[0].mxu0 %v5054
        %v5131 = vpop.f32.mrb[0].mxu0
        %v5132 = vadd.f32 0.0, %v5131
        %v5133 = vpop.f32.mrb[0].mxu0
        %5134 = vdwg.mxu0
        %v5135 = vmul.f32 %v5127, 0.35355338
        %v5136 = vmul.f32 %v5132, 0.35355338
        %v5137 = vadd.f32 %v5135, %v657
        %v5138 = vadd.f32 %v5136, %v658
        %v5139 = vsel %vm801, %v5137, -inf
        %5140 = vmax.xlane.f32.xlu0 %v5139
        %v5141 = vpop.xlane.xlu0 %5140
        %v5142 = vsel %vm801, %v5138, -inf
        %5143 = vmax.xlane.f32.xlu0 %v5142
        %v5144 = vpop.xlane.xlu0 %5143
        %v5145 = vsub.f32 %v5137, %v5141
        %v5146 = vsub.f32 %v5138, %v5144
        %v5147 = vmul.f32 %v5145, 1.442695
        %v5148 = vpow.pop %v5147
        %v5149 = vmul.f32 %v5146, 1.442695
        %v5150 = vpow.pop %v5149
        %v5151 = vsel %vm801, %v5148, 0.0
        %5152 = vadd.xlane.f32.xlu0 %v5151
        %v5153 = vpop.xlane.xlu0 %5152
        %v5154 = vsel %vm801, %v5150, 0.0
        %5155 = vadd.xlane.f32.xlu0 %v5154
        %v5156 = vpop.xlane.xlu0 %5155
        %v5157 = vrcp.pop %v5153
        %v5158 = vrcp.pop %v5156
        %v5159 = vmul.f32 %v5148, %v5157
        %v5160 = vmul.f32 %v5150, %v5158
        %5161 = vrot.lane.b32.xlu0 %v3753, 48
        %v5162 = vpop.permute.xlu0 %5161
        %5163 = vrot.lane.b32.xlu0 %v3758, 48
        %v5164 = vpop.permute.xlu0 %5163
        %v5168 = vsel %vm801, %v5159, 0
        %v5171 = vsel %vm801, %v5160, 0
        %5173 = vmatprep.subr.mxu0 0.0
        %5174 = vmatpush1.msra.mxu0 %v5162
        %5175 = vmatprep.subr.mxu0 0.0
        %5176 = vmatpush1.msra.mxu0 %v5164
        %5177 = vmatprep.subr.mxu0 0.0
        %5178 = vmatpush1.msra.mxu0 0.0
        %5179 = vmatprep.subr.mxu0 0.0
        %5180 = vmatpush1.msra.mxu0 0.0
        %5181 = vmatprep.subr.mxu0 0.0
        %5182 = vmatpush1.msra.mxu0 0.0
        %5183 = vmatprep.subr.mxu0 0.0
        %5184 = vmatpush1.msra.mxu0 0.0
        %5185 = vmatprep.subr.mxu0 0.0
        %5186 = vmatpush1.msra.mxu0 0.0
        %5187 = vmatprep.subr.mxu0 0.0
        %5188 = vmatpush1.msra.mxu0 0.0
        %5189 = vmatprep.subr.mxu0 0.0
        %5190 = vmatpush1.msra.mxu0 0.0
        %5191 = vmatprep.subr.mxu0 0.0
        %5192 = vmatpush1.msra.mxu0 0.0
        %5193 = vmatprep.subr.mxu0 0.0
        %5194 = vmatpush1.msra.mxu0 0.0
        %5195 = vmatprep.subr.mxu0 0.0
        %5196 = vmatpush1.msra.mxu0 0.0
        %5197 = vmatprep.subr.mxu0 0.0
        %5198 = vmatpush1.msra.mxu0 0.0
        %5199 = vmatprep.subr.mxu0 0.0
        %5200 = vmatpush1.msra.mxu0 0.0
        %5201 = vmatprep.subr.mxu0 0.0
        %5202 = vmatpush1.msra.mxu0 0.0
        %5203 = vmatprep.subr.mxu0 0.0
        %5204 = vmatpush1.msra.mxu0 0.0
        %5205 = vmatprep.subr.mxu0 0.0
        %5206 = vmatpush1.msra.mxu0 0.0
        %5207 = vmatprep.subr.mxu0 0.0
        %5208 = vmatpush1.msra.mxu0 0.0
        %5209 = vmatprep.subr.mxu0 0.0
        %5210 = vmatpush1.msra.mxu0 0.0
        %5211 = vmatprep.subr.mxu0 0.0
        %5212 = vmatpush1.msra.mxu0 0.0
        %5213 = vmatprep.subr.mxu0 0.0
        %5214 = vmatpush1.msra.mxu0 0.0
        %5215 = vmatprep.subr.mxu0 0.0
        %5216 = vmatpush1.msra.mxu0 0.0
        %5217 = vmatprep.subr.mxu0 0.0
        %5218 = vmatpush1.msra.mxu0 0.0
        %5219 = vmatprep.subr.mxu0 0.0
        %5220 = vmatpush1.msra.mxu0 0.0
        %5221 = vmatprep.subr.mxu0 0.0
        %5222 = vmatpush1.msra.mxu0 0.0
        %5223 = vmatprep.subr.mxu0 0.0
        %5224 = vmatpush1.msra.mxu0 0.0
        %5225 = vmatprep.subr.mxu0 0.0
        %5226 = vmatpush1.msra.mxu0 0.0
        %5227 = vmatprep.subr.mxu0 0.0
        %5228 = vmatpush1.msra.mxu0 0.0
        %5229 = vmatprep.subr.mxu0 0.0
        %5230 = vmatpush1.msra.mxu0 0.0
        %5231 = vmatprep.subr.mxu0 0.0
        %5232 = vmatpush1.msra.mxu0 0.0
        %5233 = vmatprep.subr.mxu0 0.0
        %5234 = vmatpush1.msra.mxu0 0.0
        %5235 = vmatprep.subr.mxu0 0.0
        %5236 = vmatpush1.msra.mxu0 0.0
        %5237 = vmatprep.mubr.f32.mxu0 0.0
        %5238 = vmatmul.mubr.f32.gmra.mrb[0].mxu0 %v5168
        %v5239 = vpop.f32.mrb[0].mxu0
        %v5240 = vadd.f32 0.0, %v5239
        %v5241 = vpop.f32.mrb[0].mxu0
        %5242 = vmatprep.mubr.f32.mxu0 0.0
        %5243 = vmatmul.mubr.f32.gmra.mrb[0].mxu0 %v5171
        %v5244 = vpop.f32.mrb[0].mxu0
        %v5245 = vadd.f32 0.0, %v5244
        %v5246 = vpop.f32.mrb[0].mxu0
        %5247 = vdwg.mxu0
        %5248 = vrot.lane.b32.xlu0 %v3914, 112
        %v5249 = vpop.permute.xlu0 %5248
        %5250 = vrot.lane.b32.xlu0 %v3914, 80
        %v5251 = vpop.permute.xlu0 %5250
        %v5252 = vsel %vm965, %v5249, 0
        %v5254 = vsel %vm965, %v5251, 0
        %5256 = vmatprep.subr.mxu0 0.0
        %5257 = vmatpush1.xpose.msra.mxu0 %v5254
        %5258 = vmatprep.subr.mxu0 0.0
        %5259 = vmatpush1.xpose.msra.mxu0 0.0
        %5260 = vmatprep.subr.mxu0 0.0
        %5261 = vmatpush1.xpose.msra.mxu0 0.0
        %5262 = vmatprep.subr.mxu0 0.0
        %5263 = vmatpush1.xpose.msra.mxu0 0.0
        %5264 = vmatprep.subr.mxu0 0.0
        %5265 = vmatpush1.xpose.msra.mxu0 0.0
        %5266 = vmatprep.subr.mxu0 0.0
        %5267 = vmatpush1.xpose.msra.mxu0 0.0
        %5268 = vmatprep.subr.mxu0 0.0
        %5269 = vmatpush1.xpose.msra.mxu0 0.0
        %5270 = vmatprep.subr.mxu0 0.0
        %5271 = vmatpush1.xpose.msra.mxu0 0.0
        %5272 = vmatprep.subr.mxu0 0.0
        %5273 = vmatpush1.xpose.msra.mxu0 0.0
        %5274 = vmatprep.subr.mxu0 0.0
        %5275 = vmatpush1.xpose.msra.mxu0 0.0
        %5276 = vmatprep.subr.mxu0 0.0
        %5277 = vmatpush1.xpose.msra.mxu0 0.0
        %5278 = vmatprep.subr.mxu0 0.0
        %5279 = vmatpush1.xpose.msra.mxu0 0.0
        %5280 = vmatprep.subr.mxu0 0.0
        %5281 = vmatpush1.xpose.msra.mxu0 0.0
        %5282 = vmatprep.subr.mxu0 0.0
        %5283 = vmatpush1.xpose.msra.mxu0 0.0
        %5284 = vmatprep.subr.mxu0 0.0
        %5285 = vmatpush1.xpose.msra.mxu0 0.0
        %5286 = vmatprep.subr.mxu0 0.0
        %5287 = vmatpush1.xpose.msra.mxu0 0.0
        %5288 = vmatprep.subr.mxu0 0.0
        %5289 = vmatpush1.xpose.msra.mxu0 0.0
        %5290 = vmatprep.subr.mxu0 0.0
        %5291 = vmatpush1.xpose.msra.mxu0 0.0
        %5292 = vmatprep.subr.mxu0 0.0
        %5293 = vmatpush1.xpose.msra.mxu0 0.0
        %5294 = vmatprep.subr.mxu0 0.0
        %5295 = vmatpush1.xpose.msra.mxu0 0.0
        %5296 = vmatprep.subr.mxu0 0.0
        %5297 = vmatpush1.xpose.msra.mxu0 0.0
        %5298 = vmatprep.subr.mxu0 0.0
        %5299 = vmatpush1.xpose.msra.mxu0 0.0
        %5300 = vmatprep.subr.mxu0 0.0
        %5301 = vmatpush1.xpose.msra.mxu0 0.0
        %5302 = vmatprep.subr.mxu0 0.0
        %5303 = vmatpush1.xpose.msra.mxu0 0.0
        %5304 = vmatprep.subr.mxu0 0.0
        %5305 = vmatpush1.xpose.msra.mxu0 0.0
        %5306 = vmatprep.subr.mxu0 0.0
        %5307 = vmatpush1.xpose.msra.mxu0 0.0
        %5308 = vmatprep.subr.mxu0 0.0
        %5309 = vmatpush1.xpose.msra.mxu0 0.0
        %5310 = vmatprep.subr.mxu0 0.0
        %5311 = vmatpush1.xpose.msra.mxu0 0.0
        %5312 = vmatprep.subr.mxu0 0.0
        %5313 = vmatpush1.xpose.msra.mxu0 0.0
        %5314 = vmatprep.subr.mxu0 0.0
        %5315 = vmatpush1.xpose.msra.mxu0 0.0
        %5316 = vmatprep.subr.mxu0 0.0
        %5317 = vmatpush1.xpose.msra.mxu0 0.0
        %5318 = vmatprep.subr.mxu0 0.0
        %5319 = vmatpush1.xpose.msra.mxu0 0.0
        %5320 = vmatprep.mubr.f32.mxu0 0.0
        %5321 = vmatmul.mubr.f32.gmra.mrb[0].mxu0 %v5252
        %v5322 = vpop.f32.mrb[0].mxu0
        %v5323 = vadd.f32 0.0, %v5322
        %v5324 = vpop.f32.mrb[0].mxu0
        %5325 = vdwg.mxu0
        %v5326 = vmul.f32 %v5323, 0.35355338
        %v5327 = vadd.f32 %v5326, %v659
        %v5328 = vsel %vm1241, %v5327, -inf
        %5329 = vmax.xlane.f32.xlu0 %v5328
        %v5330 = vpop.xlane.xlu0 %5329
        %v5331 = vsub.f32 %v5327, %v5330
        %v5332 = vmul.f32 %v5331, 1.442695
        %v5333 = vpow.pop %v5332
        %v5334 = vsel %vm1241, %v5333, 0.0
        %5335 = vadd.xlane.f32.xlu0 %v5334
        %v5336 = vpop.xlane.xlu0 %5335
        %v5337 = vrcp.pop %v5336
        %v5338 = vmul.f32 %v5333, %v5337
        %v5340 = vsel %vm1253, %v5338, 0
        %5342 = vmatprep.subr.mxu0 0.0
        %5343 = vmatpush1.xpose.msra.mxu0 %v5340
        %5344 = vmatprep.subr.mxu0 0.0
        %5345 = vmatpush1.xpose.msra.mxu0 0.0
        %5346 = vmatprep.subr.mxu0 0.0
        %5347 = vmatpush1.xpose.msra.mxu0 0.0
        %5348 = vmatprep.subr.mxu0 0.0
        %5349 = vmatpush1.xpose.msra.mxu0 0.0
        %5350 = vmatprep.subr.mxu0 0.0
        %5351 = vmatpush1.xpose.msra.mxu0 0.0
        %5352 = vmatprep.subr.mxu0 0.0
        %5353 = vmatpush1.xpose.msra.mxu0 0.0
        %5354 = vmatprep.subr.mxu0 0.0
        %5355 = vmatpush1.xpose.msra.mxu0 0.0
        %5356 = vmatprep.subr.mxu0 0.0
        %5357 = vmatpush1.xpose.msra.mxu0 0.0
        %5358 = vmatprep.subr.mxu0 0.0
        %5359 = vmatpush1.xpose.msra.mxu0 0.0
        %5360 = vmatprep.subr.mxu0 0.0
        %5361 = vmatpush1.xpose.msra.mxu0 0.0
        %5362 = vmatprep.subr.mxu0 0.0
        %5363 = vmatpush1.xpose.msra.mxu0 0.0
        %5364 = vmatprep.subr.mxu0 0.0
        %5365 = vmatpush1.xpose.msra.mxu0 0.0
        %5366 = vmatprep.subr.mxu0 0.0
        %5367 = vmatpush1.xpose.msra.mxu0 0.0
        %5368 = vmatprep.subr.mxu0 0.0
        %5369 = vmatpush1.xpose.msra.mxu0 0.0
        %5370 = vmatprep.subr.mxu0 0.0
        %5371 = vmatpush1.xpose.msra.mxu0 0.0
        %5372 = vmatprep.subr.mxu0 0.0
        %5373 = vmatpush1.xpose.msra.mxu0 0.0
        %5374 = vmatprep.subr.mxu0 0.0
        %5375 = vmatpush1.xpose.msra.mxu0 0.0
        %5376 = vmatprep.subr.mxu0 0.0
        %5377 = vmatpush1.xpose.msra.mxu0 0.0
        %5378 = vmatprep.subr.mxu0 0.0
        %5379 = vmatpush1.xpose.msra.mxu0 0.0
        %5380 = vmatprep.subr.mxu0 0.0
        %5381 = vmatpush1.xpose.msra.mxu0 0.0
        %5382 = vmatprep.subr.mxu0 0.0
        %5383 = vmatpush1.xpose.msra.mxu0 0.0
        %5384 = vmatprep.subr.mxu0 0.0
        %5385 = vmatpush1.xpose.msra.mxu0 0.0
        %5386 = vmatprep.subr.mxu0 0.0
        %5387 = vmatpush1.xpose.msra.mxu0 0.0
        %5388 = vmatprep.subr.mxu0 0.0
        %5389 = vmatpush1.xpose.msra.mxu0 0.0
        %5390 = vmatprep.subr.mxu0 0.0
        %5391 = vmatpush1.xpose.msra.mxu0 0.0
        %5392 = vmatprep.subr.mxu0 0.0
        %5393 = vmatpush1.xpose.msra.mxu0 0.0
        %5394 = vmatprep.subr.mxu0 0.0
        %5395 = vmatpush1.xpose.msra.mxu0 0.0
        %5396 = vmatprep.subr.mxu0 0.0
        %5397 = vmatpush1.xpose.msra.mxu0 0.0
        %5398 = vmatprep.subr.mxu0 0.0
        %5399 = vmatpush1.xpose.msra.mxu0 0.0
        %5400 = vmatprep.subr.mxu0 0.0
        %5401 = vmatpush1.xpose.msra.mxu0 0.0
        %5402 = vmatprep.subr.mxu0 0.0
        %5403 = vmatpush1.xpose.msra.mxu0 0.0
        %5404 = vmatprep.subr.mxu0 0.0
        %5405 = vmatpush1.xpose.msra.mxu0 0.0
        %5406 = vmatprep.mubr.f32.mxu0 0.0
        %5407 = vmatmul.mubr.f32.gmra.mrb[0].mxu0 %v1255
        %v5408 = vpop.f32.mrb[0].mxu0
        %v5409 = vadd.f32 0.0, %v5408
        %v5410 = vpop.f32.mrb[0].mxu0
        %5411 = vmatprep.mubr.f32.mxu0 0.0
        %5412 = vmatmul.mubr.f32.gmra.mrb[0].mxu0 %v1258
        %v5413 = vpop.f32.mrb[0].mxu0
        %v5414 = vadd.f32 0.0, %v5413
        %v5415 = vpop.f32.mrb[0].mxu0
        %5416 = vdwg.mxu0
        %5418 = vset.pattern.permute.xlu0 0
        %5419 = vperm.xlu0 %5418, %v5409
        %v5420 = vpop.permute.xlu0 %5419
        %5423 = vset.pattern.permute.xlu0 0
        %5424 = vperm.xlu0 %5423, %v5414
        %v5425 = vpop.permute.xlu0 %5424
        %v5427 = vmul.f32 %v5420, %v3753
        %v5428 = vmul.f32 %v5425, %v3758
        %5431 = vrot.lane.b32.xlu0 %v5427, 48
        %v5432 = vpop.permute.xlu0 %5431
        %5433 = vrot.lane.b32.xlu0 %v5428, 48
        %v5434 = vpop.permute.xlu0 %5433
        %v5438 = vsel %vm801, %v5127, 0
        %5440 = vmatprep.subr.mxu0 0.0
        %5441 = vmatpush1.msra.mxu0 %v5432
        %5442 = vmatprep.subr.mxu0 0.0
        %5443 = vmatpush1.msra.mxu0 %v5434
        %5444 = vmatprep.subr.mxu0 0.0
        %5445 = vmatpush1.msra.mxu0 0.0
        %5446 = vmatprep.subr.mxu0 0.0
        %5447 = vmatpush1.msra.mxu0 0.0
        %5448 = vmatprep.subr.mxu0 0.0
        %5449 = vmatpush1.msra.mxu0 0.0
        %5450 = vmatprep.subr.mxu0 0.0
        %5451 = vmatpush1.msra.mxu0 0.0
        %5452 = vmatprep.subr.mxu0 0.0
        %5453 = vmatpush1.msra.mxu0 0.0
        %5454 = vmatprep.subr.mxu0 0.0
        %5455 = vmatpush1.msra.mxu0 0.0
        %5456 = vmatprep.subr.mxu0 0.0
        %5457 = vmatpush1.msra.mxu0 0.0
        %5458 = vmatprep.subr.mxu0 0.0
        %5459 = vmatpush1.msra.mxu0 0.0
        %5460 = vmatprep.subr.mxu0 0.0
        %5461 = vmatpush1.msra.mxu0 0.0
        %5462 = vmatprep.subr.mxu0 0.0
        %5463 = vmatpush1.msra.mxu0 0.0
        %5464 = vmatprep.subr.mxu0 0.0
        %5465 = vmatpush1.msra.mxu0 0.0
        %5466 = vmatprep.subr.mxu0 0.0
        %5467 = vmatpush1.msra.mxu0 0.0
        %5468 = vmatprep.subr.mxu0 0.0
        %5469 = vmatpush1.msra.mxu0 0.0
        %5470 = vmatprep.subr.mxu0 0.0
        %5471 = vmatpush1.msra.mxu0 0.0
        %5472 = vmatprep.subr.mxu0 0.0
        %5473 = vmatpush1.msra.mxu0 0.0
        %5474 = vmatprep.subr.mxu0 0.0
        %5475 = vmatpush1.msra.mxu0 0.0
        %5476 = vmatprep.subr.mxu0 0.0
        %5477 = vmatpush1.msra.mxu0 0.0
        %5478 = vmatprep.subr.mxu0 0.0
        %5479 = vmatpush1.msra.mxu0 0.0
        %5480 = vmatprep.subr.mxu0 0.0
        %5481 = vmatpush1.msra.mxu0 0.0
        %5482 = vmatprep.subr.mxu0 0.0
        %5483 = vmatpush1.msra.mxu0 0.0
        %5484 = vmatprep.subr.mxu0 0.0
        %5485 = vmatpush1.msra.mxu0 0.0
        %5486 = vmatprep.subr.mxu0 0.0
        %5487 = vmatpush1.msra.mxu0 0.0
        %5488 = vmatprep.subr.mxu0 0.0
        %5489 = vmatpush1.msra.mxu0 0.0
        %5490 = vmatprep.subr.mxu0 0.0
        %5491 = vmatpush1.msra.mxu0 0.0
        %5492 = vmatprep.subr.mxu0 0.0
        %5493 = vmatpush1.msra.mxu0 0.0
        %5494 = vmatprep.subr.mxu0 0.0
        %5495 = vmatpush1.msra.mxu0 0.0
        %5496 = vmatprep.subr.mxu0 0.0
        %5497 = vmatpush1.msra.mxu0 0.0
        %5498 = vmatprep.subr.mxu0 0.0
        %5499 = vmatpush1.msra.mxu0 0.0
        %5500 = vmatprep.subr.mxu0 0.0
        %5501 = vmatpush1.msra.mxu0 0.0
        %5502 = vmatprep.subr.mxu0 0.0
        %5503 = vmatpush1.msra.mxu0 0.0
        %5504 = vmatprep.mubr.f32.mxu0 0.0
        %5505 = vmatmul.mubr.f32.gmra.mrb[0].mxu0 %v5438
        %v5506 = vpop.f32.mrb[0].mxu0
        %v5507 = vadd.f32 0.0, %v5506
        %v5508 = vpop.f32.mrb[0].mxu0
        %5509 = vdwg.mxu0
        %v5510 = vadd.f32 %v5240, %v5507
        %5512 = vrot.lane.b32.xlu0 %v5510, 16
        %v5513 = vpop.permute.xlu0 %5512
        %5515 = vst.msk [vmem:[#allocation2] sm:$0xff] %vm2567, %v5513
        %5516 = vset.pattern.permute.xlu0 1
        %5517 = vperm.xlu0 %5516, %v5409
        %v5518 = vpop.permute.xlu0 %5517
        %5520 = vset.pattern.permute.xlu0 1
        %5521 = vperm.xlu0 %5520, %v5414
        %v5522 = vpop.permute.xlu0 %5521
        %v5524 = vmul.f32 %v5518, %v3753
        %v5525 = vmul.f32 %v5522, %v3758
        %5528 = vrot.lane.b32.xlu0 %v5524, 48
        %v5529 = vpop.permute.xlu0 %5528
        %5530 = vrot.lane.b32.xlu0 %v5525, 48
        %v5531 = vpop.permute.xlu0 %5530
        %v5535 = vsel %vm801, %v5132, 0
        %5537 = vmatprep.subr.mxu0 0.0
        %5538 = vmatpush1.msra.mxu0 %v5529
        %5539 = vmatprep.subr.mxu0 0.0
        %5540 = vmatpush1.msra.mxu0 %v5531
        %5541 = vmatprep.subr.mxu0 0.0
        %5542 = vmatpush1.msra.mxu0 0.0
        %5543 = vmatprep.subr.mxu0 0.0
        %5544 = vmatpush1.msra.mxu0 0.0
        %5545 = vmatprep.subr.mxu0 0.0
        %5546 = vmatpush1.msra.mxu0 0.0
        %5547 = vmatprep.subr.mxu0 0.0
        %5548 = vmatpush1.msra.mxu0 0.0
        %5549 = vmatprep.subr.mxu0 0.0
        %5550 = vmatpush1.msra.mxu0 0.0
        %5551 = vmatprep.subr.mxu0 0.0
        %5552 = vmatpush1.msra.mxu0 0.0
        %5553 = vmatprep.subr.mxu0 0.0
        %5554 = vmatpush1.msra.mxu0 0.0
        %5555 = vmatprep.subr.mxu0 0.0
        %5556 = vmatpush1.msra.mxu0 0.0
        %5557 = vmatprep.subr.mxu0 0.0
        %5558 = vmatpush1.msra.mxu0 0.0
        %5559 = vmatprep.subr.mxu0 0.0
        %5560 = vmatpush1.msra.mxu0 0.0
        %5561 = vmatprep.subr.mxu0 0.0
        %5562 = vmatpush1.msra.mxu0 0.0
        %5563 = vmatprep.subr.mxu0 0.0
        %5564 = vmatpush1.msra.mxu0 0.0
        %5565 = vmatprep.subr.mxu0 0.0
        %5566 = vmatpush1.msra.mxu0 0.0
        %5567 = vmatprep.subr.mxu0 0.0
        %5568 = vmatpush1.msra.mxu0 0.0
        %5569 = vmatprep.subr.mxu0 0.0
        %5570 = vmatpush1.msra.mxu0 0.0
        %5571 = vmatprep.subr.mxu0 0.0
        %5572 = vmatpush1.msra.mxu0 0.0
        %5573 = vmatprep.subr.mxu0 0.0
        %5574 = vmatpush1.msra.mxu0 0.0
        %5575 = vmatprep.subr.mxu0 0.0
        %5576 = vmatpush1.msra.mxu0 0.0
        %5577 = vmatprep.subr.mxu0 0.0
        %5578 = vmatpush1.msra.mxu0 0.0
        %5579 = vmatprep.subr.mxu0 0.0
        %5580 = vmatpush1.msra.mxu0 0.0
        %5581 = vmatprep.subr.mxu0 0.0
        %5582 = vmatpush1.msra.mxu0 0.0
        %5583 = vmatprep.subr.mxu0 0.0
        %5584 = vmatpush1.msra.mxu0 0.0
        %5585 = vmatprep.subr.mxu0 0.0
        %5586 = vmatpush1.msra.mxu0 0.0
        %5587 = vmatprep.subr.mxu0 0.0
        %5588 = vmatpush1.msra.mxu0 0.0
        %5589 = vmatprep.subr.mxu0 0.0
        %5590 = vmatpush1.msra.mxu0 0.0
        %5591 = vmatprep.subr.mxu0 0.0
        %5592 = vmatpush1.msra.mxu0 0.0
        %5593 = vmatprep.subr.mxu0 0.0
        %5594 = vmatpush1.msra.mxu0 0.0
        %5595 = vmatprep.subr.mxu0 0.0
        %5596 = vmatpush1.msra.mxu0 0.0
        %5597 = vmatprep.subr.mxu0 0.0
        %5598 = vmatpush1.msra.mxu0 0.0
        %5599 = vmatprep.subr.mxu0 0.0
        %5600 = vmatpush1.msra.mxu0 0.0
        %5601 = vmatprep.mubr.f32.mxu0 0.0
        %5602 = vmatmul.mubr.f32.gmra.mrb[0].mxu0 %v5535
        %v5603 = vpop.f32.mrb[0].mxu0
        %v5604 = vadd.f32 0.0, %v5603
        %v5605 = vpop.f32.mrb[0].mxu0
        %5606 = vdwg.mxu0
        %v5607 = vadd.f32 %v5245, %v5604
        %5609 = vrot.lane.b32.xlu0 %v5607, 16
        %v5610 = vpop.permute.xlu0 %5609
        %5612 = vst.msk [vmem:[#allocation2 + $0x8] sm:$0xff] %vm2567, %v5610
        %5613 = vrot.lane.b32.xlu0 %v3753, 104
        %v5614 = vpop.permute.xlu0 %5613
        %5615 = vrot.lane.b32.xlu0 %v3758, 104
        %v5616 = vpop.permute.xlu0 %5615
        %5617 = vrot.lane.b32.xlu0 %v3753, 72
        %v5618 = vpop.permute.xlu0 %5617
        %5619 = vrot.lane.b32.xlu0 %v3758, 72
        %v5620 = vpop.permute.xlu0 %5619
        %v5621 = vsel %vm965, %v5614, 0
        %v5623 = vsel %vm965, %v5616, 0
        %v5625 = vsel %vm965, %v5618, 0
        %v5627 = vsel %vm965, %v5620, 0
        %5629 = vmatprep.subr.mxu0 0.0
        %5630 = vmatpush1.xpose.msra.mxu0 %v5625
        %5631 = vmatprep.subr.mxu0 0.0
        %5632 = vmatpush1.xpose.msra.mxu0 %v5627
        %5633 = vmatprep.subr.mxu0 0.0
        %5634 = vmatpush1.xpose.msra.mxu0 0.0
        %5635 = vmatprep.subr.mxu0 0.0
        %5636 = vmatpush1.xpose.msra.mxu0 0.0
        %5637 = vmatprep.subr.mxu0 0.0
        %5638 = vmatpush1.xpose.msra.mxu0 0.0
        %5639 = vmatprep.subr.mxu0 0.0
        %5640 = vmatpush1.xpose.msra.mxu0 0.0
        %5641 = vmatprep.subr.mxu0 0.0
        %5642 = vmatpush1.xpose.msra.mxu0 0.0
        %5643 = vmatprep.subr.mxu0 0.0
        %5644 = vmatpush1.xpose.msra.mxu0 0.0
        %5645 = vmatprep.subr.mxu0 0.0
        %5646 = vmatpush1.xpose.msra.mxu0 0.0
        %5647 = vmatprep.subr.mxu0 0.0
        %5648 = vmatpush1.xpose.msra.mxu0 0.0
        %5649 = vmatprep.subr.mxu0 0.0
        %5650 = vmatpush1.xpose.msra.mxu0 0.0
        %5651 = vmatprep.subr.mxu0 0.0
        %5652 = vmatpush1.xpose.msra.mxu0 0.0
        %5653 = vmatprep.subr.mxu0 0.0
        %5654 = vmatpush1.xpose.msra.mxu0 0.0
        %5655 = vmatprep.subr.mxu0 0.0
        %5656 = vmatpush1.xpose.msra.mxu0 0.0
        %5657 = vmatprep.subr.mxu0 0.0
        %5658 = vmatpush1.xpose.msra.mxu0 0.0
        %5659 = vmatprep.subr.mxu0 0.0
        %5660 = vmatpush1.xpose.msra.mxu0 0.0
        %5661 = vmatprep.subr.mxu0 0.0
        %5662 = vmatpush1.xpose.msra.mxu0 0.0
        %5663 = vmatprep.subr.mxu0 0.0
        %5664 = vmatpush1.xpose.msra.mxu0 0.0
        %5665 = vmatprep.subr.mxu0 0.0
        %5666 = vmatpush1.xpose.msra.mxu0 0.0
        %5667 = vmatprep.subr.mxu0 0.0
        %5668 = vmatpush1.xpose.msra.mxu0 0.0
        %5669 = vmatprep.subr.mxu0 0.0
        %5670 = vmatpush1.xpose.msra.mxu0 0.0
        %5671 = vmatprep.subr.mxu0 0.0
        %5672 = vmatpush1.xpose.msra.mxu0 0.0
        %5673 = vmatprep.subr.mxu0 0.0
        %5674 = vmatpush1.xpose.msra.mxu0 0.0
        %5675 = vmatprep.subr.mxu0 0.0
        %5676 = vmatpush1.xpose.msra.mxu0 0.0
        %5677 = vmatprep.subr.mxu0 0.0
        %5678 = vmatpush1.xpose.msra.mxu0 0.0
        %5679 = vmatprep.subr.mxu0 0.0
        %5680 = vmatpush1.xpose.msra.mxu0 0.0
        %5681 = vmatprep.subr.mxu0 0.0
        %5682 = vmatpush1.xpose.msra.mxu0 0.0
        %5683 = vmatprep.subr.mxu0 0.0
        %5684 = vmatpush1.xpose.msra.mxu0 0.0
        %5685 = vmatprep.subr.mxu0 0.0
        %5686 = vmatpush1.xpose.msra.mxu0 0.0
        %5687 = vmatprep.subr.mxu0 0.0
        %5688 = vmatpush1.xpose.msra.mxu0 0.0
        %5689 = vmatprep.subr.mxu0 0.0
        %5690 = vmatpush1.xpose.msra.mxu0 0.0
        %5691 = vmatprep.subr.mxu0 0.0
        %5692 = vmatpush1.xpose.msra.mxu0 0.0
        %5693 = vmatprep.mubr.f32.mxu0 0.0
        %5694 = vmatmul.mubr.f32.gmra.mrb[0].mxu0 %v5621
        %v5695 = vpop.f32.mrb[0].mxu0
        %v5696 = vadd.f32 0.0, %v5695
        %v5697 = vpop.f32.mrb[0].mxu0
        %5698 = vmatprep.mubr.f32.mxu0 0.0
        %5699 = vmatmul.mubr.f32.gmra.mrb[0].mxu0 %v5623
        %v5700 = vpop.f32.mrb[0].mxu0
        %v5701 = vadd.f32 0.0, %v5700
        %v5702 = vpop.f32.mrb[0].mxu0
        %5703 = vdwg.mxu0
        %v5704 = vmul.f32 %v5696, 0.35355338
        %v5705 = vmul.f32 %v5701, 0.35355338
        %v5706 = vadd.f32 %v5704, %v657
        %v5707 = vadd.f32 %v5705, %v658
        %v5708 = vsel %vm801, %v5706, -inf
        %5709 = vmax.xlane.f32.xlu0 %v5708
        %v5710 = vpop.xlane.xlu0 %5709
        %v5711 = vsel %vm801, %v5707, -inf
        %5712 = vmax.xlane.f32.xlu0 %v5711
        %v5713 = vpop.xlane.xlu0 %5712
        %v5714 = vsub.f32 %v5706, %v5710
        %v5715 = vsub.f32 %v5707, %v5713
        %v5716 = vmul.f32 %v5714, 1.442695
        %v5717 = vpow.pop %v5716
        %v5718 = vmul.f32 %v5715, 1.442695
        %v5719 = vpow.pop %v5718
        %v5720 = vsel %vm801, %v5717, 0.0
        %5721 = vadd.xlane.f32.xlu0 %v5720
        %v5722 = vpop.xlane.xlu0 %5721
        %v5723 = vsel %vm801, %v5719, 0.0
        %5724 = vadd.xlane.f32.xlu0 %v5723
        %v5725 = vpop.xlane.xlu0 %5724
        %v5726 = vrcp.pop %v5722
        %v5727 = vrcp.pop %v5725
        %v5728 = vmul.f32 %v5717, %v5726
        %v5729 = vmul.f32 %v5719, %v5727
        %5730 = vrot.lane.b32.xlu0 %v3753, 40
        %v5731 = vpop.permute.xlu0 %5730
        %5732 = vrot.lane.b32.xlu0 %v3758, 40
        %v5733 = vpop.permute.xlu0 %5732
        %v5737 = vsel %vm801, %v5728, 0
        %v5740 = vsel %vm801, %v5729, 0
        %5742 = vmatprep.subr.mxu0 0.0
        %5743 = vmatpush1.msra.mxu0 %v5731
        %5744 = vmatprep.subr.mxu0 0.0
        %5745 = vmatpush1.msra.mxu0 %v5733
        %5746 = vmatprep.subr.mxu0 0.0
        %5747 = vmatpush1.msra.mxu0 0.0
        %5748 = vmatprep.subr.mxu0 0.0
        %5749 = vmatpush1.msra.mxu0 0.0
        %5750 = vmatprep.subr.mxu0 0.0
        %5751 = vmatpush1.msra.mxu0 0.0
        %5752 = vmatprep.subr.mxu0 0.0
        %5753 = vmatpush1.msra.mxu0 0.0
        %5754 = vmatprep.subr.mxu0 0.0
        %5755 = vmatpush1.msra.mxu0 0.0
        %5756 = vmatprep.subr.mxu0 0.0
        %5757 = vmatpush1.msra.mxu0 0.0
        %5758 = vmatprep.subr.mxu0 0.0
        %5759 = vmatpush1.msra.mxu0 0.0
        %5760 = vmatprep.subr.mxu0 0.0
        %5761 = vmatpush1.msra.mxu0 0.0
        %5762 = vmatprep.subr.mxu0 0.0
        %5763 = vmatpush1.msra.mxu0 0.0
        %5764 = vmatprep.subr.mxu0 0.0
        %5765 = vmatpush1.msra.mxu0 0.0
        %5766 = vmatprep.subr.mxu0 0.0
        %5767 = vmatpush1.msra.mxu0 0.0
        %5768 = vmatprep.subr.mxu0 0.0
        %5769 = vmatpush1.msra.mxu0 0.0
        %5770 = vmatprep.subr.mxu0 0.0
        %5771 = vmatpush1.msra.mxu0 0.0
        %5772 = vmatprep.subr.mxu0 0.0
        %5773 = vmatpush1.msra.mxu0 0.0
        %5774 = vmatprep.subr.mxu0 0.0
        %5775 = vmatpush1.msra.mxu0 0.0
        %5776 = vmatprep.subr.mxu0 0.0
        %5777 = vmatpush1.msra.mxu0 0.0
        %5778 = vmatprep.subr.mxu0 0.0
        %5779 = vmatpush1.msra.mxu0 0.0
        %5780 = vmatprep.subr.mxu0 0.0
        %5781 = vmatpush1.msra.mxu0 0.0
        %5782 = vmatprep.subr.mxu0 0.0
        %5783 = vmatpush1.msra.mxu0 0.0
        %5784 = vmatprep.subr.mxu0 0.0
        %5785 = vmatpush1.msra.mxu0 0.0
        %5786 = vmatprep.subr.mxu0 0.0
        %5787 = vmatpush1.msra.mxu0 0.0
        %5788 = vmatprep.subr.mxu0 0.0
        %5789 = vmatpush1.msra.mxu0 0.0
        %5790 = vmatprep.subr.mxu0 0.0
        %5791 = vmatpush1.msra.mxu0 0.0
        %5792 = vmatprep.subr.mxu0 0.0
        %5793 = vmatpush1.msra.mxu0 0.0
        %5794 = vmatprep.subr.mxu0 0.0
        %5795 = vmatpush1.msra.mxu0 0.0
        %5796 = vmatprep.subr.mxu0 0.0
        %5797 = vmatpush1.msra.mxu0 0.0
        %5798 = vmatprep.subr.mxu0 0.0
        %5799 = vmatpush1.msra.mxu0 0.0
        %5800 = vmatprep.subr.mxu0 0.0
        %5801 = vmatpush1.msra.mxu0 0.0
        %5802 = vmatprep.subr.mxu0 0.0
        %5803 = vmatpush1.msra.mxu0 0.0
        %5804 = vmatprep.subr.mxu0 0.0
        %5805 = vmatpush1.msra.mxu0 0.0
        %5806 = vmatprep.mubr.f32.mxu0 0.0
        %5807 = vmatmul.mubr.f32.gmra.mrb[0].mxu0 %v5737
        %v5808 = vpop.f32.mrb[0].mxu0
        %v5809 = vadd.f32 0.0, %v5808
        %v5810 = vpop.f32.mrb[0].mxu0
        %5811 = vmatprep.mubr.f32.mxu0 0.0
        %5812 = vmatmul.mubr.f32.gmra.mrb[0].mxu0 %v5740
        %v5813 = vpop.f32.mrb[0].mxu0
        %v5814 = vadd.f32 0.0, %v5813
        %v5815 = vpop.f32.mrb[0].mxu0
        %5816 = vdwg.mxu0
        %5817 = vrot.lane.b32.xlu0 %v3914, 104
        %v5818 = vpop.permute.xlu0 %5817
        %5819 = vrot.lane.b32.xlu0 %v3914, 72
        %v5820 = vpop.permute.xlu0 %5819
        %v5821 = vsel %vm965, %v5818, 0
        %v5823 = vsel %vm965, %v5820, 0
        %5825 = vmatprep.subr.mxu0 0.0
        %5826 = vmatpush1.xpose.msra.mxu0 %v5823
        %5827 = vmatprep.subr.mxu0 0.0
        %5828 = vmatpush1.xpose.msra.mxu0 0.0
        %5829 = vmatprep.subr.mxu0 0.0
        %5830 = vmatpush1.xpose.msra.mxu0 0.0
        %5831 = vmatprep.subr.mxu0 0.0
        %5832 = vmatpush1.xpose.msra.mxu0 0.0
        %5833 = vmatprep.subr.mxu0 0.0
        %5834 = vmatpush1.xpose.msra.mxu0 0.0
        %5835 = vmatprep.subr.mxu0 0.0
        %5836 = vmatpush1.xpose.msra.mxu0 0.0
        %5837 = vmatprep.subr.mxu0 0.0
        %5838 = vmatpush1.xpose.msra.mxu0 0.0
        %5839 = vmatprep.subr.mxu0 0.0
        %5840 = vmatpush1.xpose.msra.mxu0 0.0
        %5841 = vmatprep.subr.mxu0 0.0
        %5842 = vmatpush1.xpose.msra.mxu0 0.0
        %5843 = vmatprep.subr.mxu0 0.0
        %5844 = vmatpush1.xpose.msra.mxu0 0.0
        %5845 = vmatprep.subr.mxu0 0.0
        %5846 = vmatpush1.xpose.msra.mxu0 0.0
        %5847 = vmatprep.subr.mxu0 0.0
        %5848 = vmatpush1.xpose.msra.mxu0 0.0
        %5849 = vmatprep.subr.mxu0 0.0
        %5850 = vmatpush1.xpose.msra.mxu0 0.0
        %5851 = vmatprep.subr.mxu0 0.0
        %5852 = vmatpush1.xpose.msra.mxu0 0.0
        %5853 = vmatprep.subr.mxu0 0.0
        %5854 = vmatpush1.xpose.msra.mxu0 0.0
        %5855 = vmatprep.subr.mxu0 0.0
        %5856 = vmatpush1.xpose.msra.mxu0 0.0
        %5857 = vmatprep.subr.mxu0 0.0
        %5858 = vmatpush1.xpose.msra.mxu0 0.0
        %5859 = vmatprep.subr.mxu0 0.0
        %5860 = vmatpush1.xpose.msra.mxu0 0.0
        %5861 = vmatprep.subr.mxu0 0.0
        %5862 = vmatpush1.xpose.msra.mxu0 0.0
        %5863 = vmatprep.subr.mxu0 0.0
        %5864 = vmatpush1.xpose.msra.mxu0 0.0
        %5865 = vmatprep.subr.mxu0 0.0
        %5866 = vmatpush1.xpose.msra.mxu0 0.0
        %5867 = vmatprep.subr.mxu0 0.0
        %5868 = vmatpush1.xpose.msra.mxu0 0.0
        %5869 = vmatprep.subr.mxu0 0.0
        %5870 = vmatpush1.xpose.msra.mxu0 0.0
        %5871 = vmatprep.subr.mxu0 0.0
        %5872 = vmatpush1.xpose.msra.mxu0 0.0
        %5873 = vmatprep.subr.mxu0 0.0
        %5874 = vmatpush1.xpose.msra.mxu0 0.0
        %5875 = vmatprep.subr.mxu0 0.0
        %5876 = vmatpush1.xpose.msra.mxu0 0.0
        %5877 = vmatprep.subr.mxu0 0.0
        %5878 = vmatpush1.xpose.msra.mxu0 0.0
        %5879 = vmatprep.subr.mxu0 0.0
        %5880 = vmatpush1.xpose.msra.mxu0 0.0
        %5881 = vmatprep.subr.mxu0 0.0
        %5882 = vmatpush1.xpose.msra.mxu0 0.0
        %5883 = vmatprep.subr.mxu0 0.0
        %5884 = vmatpush1.xpose.msra.mxu0 0.0
        %5885 = vmatprep.subr.mxu0 0.0
        %5886 = vmatpush1.xpose.msra.mxu0 0.0
        %5887 = vmatprep.subr.mxu0 0.0
        %5888 = vmatpush1.xpose.msra.mxu0 0.0
        %5889 = vmatprep.mubr.f32.mxu0 0.0
        %5890 = vmatmul.mubr.f32.gmra.mrb[0].mxu0 %v5821
        %v5891 = vpop.f32.mrb[0].mxu0
        %v5892 = vadd.f32 0.0, %v5891
        %v5893 = vpop.f32.mrb[0].mxu0
        %5894 = vdwg.mxu0
        %v5895 = vmul.f32 %v5892, 0.35355338
        %v5896 = vadd.f32 %v5895, %v659
        %v5897 = vsel %vm1241, %v5896, -inf
        %5898 = vmax.xlane.f32.xlu0 %v5897
        %v5899 = vpop.xlane.xlu0 %5898
        %v5900 = vsub.f32 %v5896, %v5899
        %v5901 = vmul.f32 %v5900, 1.442695
        %v5902 = vpow.pop %v5901
        %v5903 = vsel %vm1241, %v5902, 0.0
        %5904 = vadd.xlane.f32.xlu0 %v5903
        %v5905 = vpop.xlane.xlu0 %5904
        %v5906 = vrcp.pop %v5905
        %v5907 = vmul.f32 %v5902, %v5906
        %v5909 = vsel %vm1253, %v5907, 0
        %5911 = vmatprep.subr.mxu0 0.0
        %5912 = vmatpush1.xpose.msra.mxu0 %v5909
        %5913 = vmatprep.subr.mxu0 0.0
        %5914 = vmatpush1.xpose.msra.mxu0 0.0
        %5915 = vmatprep.subr.mxu0 0.0
        %5916 = vmatpush1.xpose.msra.mxu0 0.0
        %5917 = vmatprep.subr.mxu0 0.0
        %5918 = vmatpush1.xpose.msra.mxu0 0.0
        %5919 = vmatprep.subr.mxu0 0.0
        %5920 = vmatpush1.xpose.msra.mxu0 0.0
        %5921 = vmatprep.subr.mxu0 0.0
        %5922 = vmatpush1.xpose.msra.mxu0 0.0
        %5923 = vmatprep.subr.mxu0 0.0
        %5924 = vmatpush1.xpose.msra.mxu0 0.0
        %5925 = vmatprep.subr.mxu0 0.0
        %5926 = vmatpush1.xpose.msra.mxu0 0.0
        %5927 = vmatprep.subr.mxu0 0.0
        %5928 = vmatpush1.xpose.msra.mxu0 0.0
        %5929 = vmatprep.subr.mxu0 0.0
        %5930 = vmatpush1.xpose.msra.mxu0 0.0
        %5931 = vmatprep.subr.mxu0 0.0
        %5932 = vmatpush1.xpose.msra.mxu0 0.0
        %5933 = vmatprep.subr.mxu0 0.0
        %5934 = vmatpush1.xpose.msra.mxu0 0.0
        %5935 = vmatprep.subr.mxu0 0.0
        %5936 = vmatpush1.xpose.msra.mxu0 0.0
        %5937 = vmatprep.subr.mxu0 0.0
        %5938 = vmatpush1.xpose.msra.mxu0 0.0
        %5939 = vmatprep.subr.mxu0 0.0
        %5940 = vmatpush1.xpose.msra.mxu0 0.0
        %5941 = vmatprep.subr.mxu0 0.0
        %5942 = vmatpush1.xpose.msra.mxu0 0.0
        %5943 = vmatprep.subr.mxu0 0.0
        %5944 = vmatpush1.xpose.msra.mxu0 0.0
        %5945 = vmatprep.subr.mxu0 0.0
        %5946 = vmatpush1.xpose.msra.mxu0 0.0
        %5947 = vmatprep.subr.mxu0 0.0
        %5948 = vmatpush1.xpose.msra.mxu0 0.0
        %5949 = vmatprep.subr.mxu0 0.0
        %5950 = vmatpush1.xpose.msra.mxu0 0.0
        %5951 = vmatprep.subr.mxu0 0.0
        %5952 = vmatpush1.xpose.msra.mxu0 0.0
        %5953 = vmatprep.subr.mxu0 0.0
        %5954 = vmatpush1.xpose.msra.mxu0 0.0
        %5955 = vmatprep.subr.mxu0 0.0
        %5956 = vmatpush1.xpose.msra.mxu0 0.0
        %5957 = vmatprep.subr.mxu0 0.0
        %5958 = vmatpush1.xpose.msra.mxu0 0.0
        %5959 = vmatprep.subr.mxu0 0.0
        %5960 = vmatpush1.xpose.msra.mxu0 0.0
        %5961 = vmatprep.subr.mxu0 0.0
        %5962 = vmatpush1.xpose.msra.mxu0 0.0
        %5963 = vmatprep.subr.mxu0 0.0
        %5964 = vmatpush1.xpose.msra.mxu0 0.0
        %5965 = vmatprep.subr.mxu0 0.0
        %5966 = vmatpush1.xpose.msra.mxu0 0.0
        %5967 = vmatprep.subr.mxu0 0.0
        %5968 = vmatpush1.xpose.msra.mxu0 0.0
        %5969 = vmatprep.subr.mxu0 0.0
        %5970 = vmatpush1.xpose.msra.mxu0 0.0
        %5971 = vmatprep.subr.mxu0 0.0
        %5972 = vmatpush1.xpose.msra.mxu0 0.0
        %5973 = vmatprep.subr.mxu0 0.0
        %5974 = vmatpush1.xpose.msra.mxu0 0.0
        %5975 = vmatprep.mubr.f32.mxu0 0.0
        %5976 = vmatmul.mubr.f32.gmra.mrb[0].mxu0 %v1255
        %v5977 = vpop.f32.mrb[0].mxu0
        %v5978 = vadd.f32 0.0, %v5977
        %v5979 = vpop.f32.mrb[0].mxu0
        %5980 = vmatprep.mubr.f32.mxu0 0.0
        %5981 = vmatmul.mubr.f32.gmra.mrb[0].mxu0 %v1258
        %v5982 = vpop.f32.mrb[0].mxu0
        %v5983 = vadd.f32 0.0, %v5982
        %v5984 = vpop.f32.mrb[0].mxu0
        %5985 = vdwg.mxu0
        %5987 = vset.pattern.permute.xlu0 0
        %5988 = vperm.xlu0 %5987, %v5978
        %v5989 = vpop.permute.xlu0 %5988
        %5992 = vset.pattern.permute.xlu0 0
        %5993 = vperm.xlu0 %5992, %v5983
        %v5994 = vpop.permute.xlu0 %5993
        %v5996 = vmul.f32 %v5989, %v3753
        %v5997 = vmul.f32 %v5994, %v3758
        %6000 = vrot.lane.b32.xlu0 %v5996, 40
        %v6001 = vpop.permute.xlu0 %6000
        %6002 = vrot.lane.b32.xlu0 %v5997, 40
        %v6003 = vpop.permute.xlu0 %6002
        %v6007 = vsel %vm801, %v5696, 0
        %6009 = vmatprep.subr.mxu0 0.0
        %6010 = vmatpush1.msra.mxu0 %v6001
        %6011 = vmatprep.subr.mxu0 0.0
        %6012 = vmatpush1.msra.mxu0 %v6003
        %6013 = vmatprep.subr.mxu0 0.0
        %6014 = vmatpush1.msra.mxu0 0.0
        %6015 = vmatprep.subr.mxu0 0.0
        %6016 = vmatpush1.msra.mxu0 0.0
        %6017 = vmatprep.subr.mxu0 0.0
        %6018 = vmatpush1.msra.mxu0 0.0
        %6019 = vmatprep.subr.mxu0 0.0
        %6020 = vmatpush1.msra.mxu0 0.0
        %6021 = vmatprep.subr.mxu0 0.0
        %6022 = vmatpush1.msra.mxu0 0.0
        %6023 = vmatprep.subr.mxu0 0.0
        %6024 = vmatpush1.msra.mxu0 0.0
        %6025 = vmatprep.subr.mxu0 0.0
        %6026 = vmatpush1.msra.mxu0 0.0
        %6027 = vmatprep.subr.mxu0 0.0
        %6028 = vmatpush1.msra.mxu0 0.0
        %6029 = vmatprep.subr.mxu0 0.0
        %6030 = vmatpush1.msra.mxu0 0.0
        %6031 = vmatprep.subr.mxu0 0.0
        %6032 = vmatpush1.msra.mxu0 0.0
        %6033 = vmatprep.subr.mxu0 0.0
        %6034 = vmatpush1.msra.mxu0 0.0
        %6035 = vmatprep.subr.mxu0 0.0
        %6036 = vmatpush1.msra.mxu0 0.0
        %6037 = vmatprep.subr.mxu0 0.0
        %6038 = vmatpush1.msra.mxu0 0.0
        %6039 = vmatprep.subr.mxu0 0.0
        %6040 = vmatpush1.msra.mxu0 0.0
        %6041 = vmatprep.subr.mxu0 0.0
        %6042 = vmatpush1.msra.mxu0 0.0
        %6043 = vmatprep.subr.mxu0 0.0
        %6044 = vmatpush1.msra.mxu0 0.0
        %6045 = vmatprep.subr.mxu0 0.0
        %6046 = vmatpush1.msra.mxu0 0.0
        %6047 = vmatprep.subr.mxu0 0.0
        %6048 = vmatpush1.msra.mxu0 0.0
        %6049 = vmatprep.subr.mxu0 0.0
        %6050 = vmatpush1.msra.mxu0 0.0
        %6051 = vmatprep.subr.mxu0 0.0
        %6052 = vmatpush1.msra.mxu0 0.0
        %6053 = vmatprep.subr.mxu0 0.0
        %6054 = vmatpush1.msra.mxu0 0.0
        %6055 = vmatprep.subr.mxu0 0.0
        %6056 = vmatpush1.msra.mxu0 0.0
        %6057 = vmatprep.subr.mxu0 0.0
        %6058 = vmatpush1.msra.mxu0 0.0
        %6059 = vmatprep.subr.mxu0 0.0
        %6060 = vmatpush1.msra.mxu0 0.0
        %6061 = vmatprep.subr.mxu0 0.0
        %6062 = vmatpush1.msra.mxu0 0.0
        %6063 = vmatprep.subr.mxu0 0.0
        %6064 = vmatpush1.msra.mxu0 0.0
        %6065 = vmatprep.subr.mxu0 0.0
        %6066 = vmatpush1.msra.mxu0 0.0
        %6067 = vmatprep.subr.mxu0 0.0
        %6068 = vmatpush1.msra.mxu0 0.0
        %6069 = vmatprep.subr.mxu0 0.0
        %6070 = vmatpush1.msra.mxu0 0.0
        %6071 = vmatprep.subr.mxu0 0.0
        %6072 = vmatpush1.msra.mxu0 0.0
        %6073 = vmatprep.mubr.f32.mxu0 0.0
        %6074 = vmatmul.mubr.f32.gmra.mrb[0].mxu0 %v6007
        %v6075 = vpop.f32.mrb[0].mxu0
        %v6076 = vadd.f32 0.0, %v6075
        %v6077 = vpop.f32.mrb[0].mxu0
        %6078 = vdwg.mxu0
        %v6079 = vadd.f32 %v5809, %v6076
        %6081 = vrot.lane.b32.xlu0 %v6079, 24
        %v6082 = vpop.permute.xlu0 %6081
        %6084 = vst.msk [vmem:[#allocation2] sm:$0xff] %vm3137, %v6082
        %6085 = vset.pattern.permute.xlu0 1
        %6086 = vperm.xlu0 %6085, %v5978
        %v6087 = vpop.permute.xlu0 %6086
        %6089 = vset.pattern.permute.xlu0 1
        %6090 = vperm.xlu0 %6089, %v5983
        %v6091 = vpop.permute.xlu0 %6090
        %v6093 = vmul.f32 %v6087, %v3753
        %v6094 = vmul.f32 %v6091, %v3758
        %6097 = vrot.lane.b32.xlu0 %v6093, 40
        %v6098 = vpop.permute.xlu0 %6097
        %6099 = vrot.lane.b32.xlu0 %v6094, 40
        %v6100 = vpop.permute.xlu0 %6099
        %v6104 = vsel %vm801, %v5701, 0
        %6106 = vmatprep.subr.mxu0 0.0
        %6107 = vmatpush1.msra.mxu0 %v6098
        %6108 = vmatprep.subr.mxu0 0.0
        %6109 = vmatpush1.msra.mxu0 %v6100
        %6110 = vmatprep.subr.mxu0 0.0
        %6111 = vmatpush1.msra.mxu0 0.0
        %6112 = vmatprep.subr.mxu0 0.0
        %6113 = vmatpush1.msra.mxu0 0.0
        %6114 = vmatprep.subr.mxu0 0.0
        %6115 = vmatpush1.msra.mxu0 0.0
        %6116 = vmatprep.subr.mxu0 0.0
        %6117 = vmatpush1.msra.mxu0 0.0
        %6118 = vmatprep.subr.mxu0 0.0
        %6119 = vmatpush1.msra.mxu0 0.0
        %6120 = vmatprep.subr.mxu0 0.0
        %6121 = vmatpush1.msra.mxu0 0.0
        %6122 = vmatprep.subr.mxu0 0.0
        %6123 = vmatpush1.msra.mxu0 0.0
        %6124 = vmatprep.subr.mxu0 0.0
        %6125 = vmatpush1.msra.mxu0 0.0
        %6126 = vmatprep.subr.mxu0 0.0
        %6127 = vmatpush1.msra.mxu0 0.0
        %6128 = vmatprep.subr.mxu0 0.0
        %6129 = vmatpush1.msra.mxu0 0.0
        %6130 = vmatprep.subr.mxu0 0.0
        %6131 = vmatpush1.msra.mxu0 0.0
        %6132 = vmatprep.subr.mxu0 0.0
        %6133 = vmatpush1.msra.mxu0 0.0
        %6134 = vmatprep.subr.mxu0 0.0
        %6135 = vmatpush1.msra.mxu0 0.0
        %6136 = vmatprep.subr.mxu0 0.0
        %6137 = vmatpush1.msra.mxu0 0.0
        %6138 = vmatprep.subr.mxu0 0.0
        %6139 = vmatpush1.msra.mxu0 0.0
        %6140 = vmatprep.subr.mxu0 0.0
        %6141 = vmatpush1.msra.mxu0 0.0
        %6142 = vmatprep.subr.mxu0 0.0
        %6143 = vmatpush1.msra.mxu0 0.0
        %6144 = vmatprep.subr.mxu0 0.0
        %6145 = vmatpush1.msra.mxu0 0.0
        %6146 = vmatprep.subr.mxu0 0.0
        %6147 = vmatpush1.msra.mxu0 0.0
        %6148 = vmatprep.subr.mxu0 0.0
        %6149 = vmatpush1.msra.mxu0 0.0
        %6150 = vmatprep.subr.mxu0 0.0
        %6151 = vmatpush1.msra.mxu0 0.0
        %6152 = vmatprep.subr.mxu0 0.0
        %6153 = vmatpush1.msra.mxu0 0.0
        %6154 = vmatprep.subr.mxu0 0.0
        %6155 = vmatpush1.msra.mxu0 0.0
        %6156 = vmatprep.subr.mxu0 0.0
        %6157 = vmatpush1.msra.mxu0 0.0
        %6158 = vmatprep.subr.mxu0 0.0
        %6159 = vmatpush1.msra.mxu0 0.0
        %6160 = vmatprep.subr.mxu0 0.0
        %6161 = vmatpush1.msra.mxu0 0.0
        %6162 = vmatprep.subr.mxu0 0.0
        %6163 = vmatpush1.msra.mxu0 0.0
        %6164 = vmatprep.subr.mxu0 0.0
        %6165 = vmatpush1.msra.mxu0 0.0
        %6166 = vmatprep.subr.mxu0 0.0
        %6167 = vmatpush1.msra.mxu0 0.0
        %6168 = vmatprep.subr.mxu0 0.0
        %6169 = vmatpush1.msra.mxu0 0.0
        %6170 = vmatprep.mubr.f32.mxu0 0.0
        %6171 = vmatmul.mubr.f32.gmra.mrb[0].mxu0 %v6104
        %v6172 = vpop.f32.mrb[0].mxu0
        %v6173 = vadd.f32 0.0, %v6172
        %v6174 = vpop.f32.mrb[0].mxu0
        %6175 = vdwg.mxu0
        %v6176 = vadd.f32 %v5814, %v6173
        %6178 = vrot.lane.b32.xlu0 %v6176, 24
        %v6179 = vpop.permute.xlu0 %6178
        %6181 = vst.msk [vmem:[#allocation2 + $0x8] sm:$0xff] %vm3137, %v6179
        %v6182 = vld [vmem:[#allocation2] sm:$0xff]
        %v6183 = vld [vmem:[#allocation2 + $0x8] sm:$0xff]
        %s6184 = scalar_lea.vmem %s11, 32
        %v6185 = vld [vmem:[%s6184] sm:$0xff]
        %v6186 = vld [vmem:[%s6184 + $0x8] sm:$0xff]
        %v6187 = vld [vmem:[%s6184 + $0x10] sm:$0xff]
        %v6188 = vld [vmem:[%s6184 + $0x18] sm:$0xff]
        %s6189 = scalar_lea.vmem %s12, 1
        %v6190 = vld [vmem:[%s6189] sm:$0x1]
        %v6192 = vlaneseq
        %v6193 = vshrl.u32 %v6192, 7
        %v6194 = vsub.s32 0, %v6193
        %v6195 = vrot.slane %v6190, %v6194
        %v6198 = vsel %vm665, %v6182, 0
        %v6201 = vsel %vm665, %v6183, 0
        %6203 = vmatprep.subr.mxu0 0.0
        %6204 = vmatpush1.msra.mxu0 %v6185
        %6205 = vmatprep.subr.mxu0 0.0
        %6206 = vmatpush1.msra.mxu0 %v6186
        %6207 = vmatprep.subr.mxu0 0.0
        %6208 = vmatpush1.msra.mxu0 %v6187
        %6209 = vmatprep.subr.mxu0 0.0
        %6210 = vmatpush1.msra.mxu0 %v6188
        %6211 = vmatprep.subr.mxu0 0.0
        %6212 = vmatpush1.msra.mxu0 0.0
        %6213 = vmatprep.subr.mxu0 0.0
        %6214 = vmatpush1.msra.mxu0 0.0
        %6215 = vmatprep.subr.mxu0 0.0
        %6216 = vmatpush1.msra.mxu0 0.0
        %6217 = vmatprep.subr.mxu0 0.0
        %6218 = vmatpush1.msra.mxu0 0.0
        %6219 = vmatprep.subr.mxu0 0.0
        %6220 = vmatpush1.msra.mxu0 0.0
        %6221 = vmatprep.subr.mxu0 0.0
        %6222 = vmatpush1.msra.mxu0 0.0
        %6223 = vmatprep.subr.mxu0 0.0
        %6224 = vmatpush1.msra.mxu0 0.0
        %6225 = vmatprep.subr.mxu0 0.0
        %6226 = vmatpush1.msra.mxu0 0.0
        %6227 = vmatprep.subr.mxu0 0.0
        %6228 = vmatpush1.msra.mxu0 0.0
        %6229 = vmatprep.subr.mxu0 0.0
        %6230 = vmatpush1.msra.mxu0 0.0
        %6231 = vmatprep.subr.mxu0 0.0
        %6232 = vmatpush1.msra.mxu0 0.0
        %6233 = vmatprep.subr.mxu0 0.0
        %6234 = vmatpush1.msra.mxu0 0.0
        %6235 = vmatprep.subr.mxu0 0.0
        %6236 = vmatpush1.msra.mxu0 0.0
        %6237 = vmatprep.subr.mxu0 0.0
        %6238 = vmatpush1.msra.mxu0 0.0
        %6239 = vmatprep.subr.mxu0 0.0
        %6240 = vmatpush1.msra.mxu0 0.0
        %6241 = vmatprep.subr.mxu0 0.0
        %6242 = vmatpush1.msra.mxu0 0.0
        %6243 = vmatprep.subr.mxu0 0.0
        %6244 = vmatpush1.msra.mxu0 0.0
        %6245 = vmatprep.subr.mxu0 0.0
        %6246 = vmatpush1.msra.mxu0 0.0
        %6247 = vmatprep.subr.mxu0 0.0
        %6248 = vmatpush1.msra.mxu0 0.0
        %6249 = vmatprep.subr.mxu0 0.0
        %6250 = vmatpush1.msra.mxu0 0.0
        %6251 = vmatprep.subr.mxu0 0.0
        %6252 = vmatpush1.msra.mxu0 0.0
        %6253 = vmatprep.subr.mxu0 0.0
        %6254 = vmatpush1.msra.mxu0 0.0
        %6255 = vmatprep.subr.mxu0 0.0
        %6256 = vmatpush1.msra.mxu0 0.0
        %6257 = vmatprep.subr.mxu0 0.0
        %6258 = vmatpush1.msra.mxu0 0.0
        %6259 = vmatprep.subr.mxu0 0.0
        %6260 = vmatpush1.msra.mxu0 0.0
        %6261 = vmatprep.subr.mxu0 0.0
        %6262 = vmatpush1.msra.mxu0 0.0
        %6263 = vmatprep.subr.mxu0 0.0
        %6264 = vmatpush1.msra.mxu0 0.0
        %6265 = vmatprep.subr.mxu0 0.0
        %6266 = vmatpush1.msra.mxu0 0.0
        %6267 = vmatprep.mubr.f32.mxu0 0.0
        %6268 = vmatmul.mubr.f32.gmra.mrb[0].mxu0 %v6198
        %v6269 = vpop.f32.mrb[0].mxu0
        %v6270 = vadd.f32 %v6195, %v6269
        %v6271 = vpop.f32.mrb[0].mxu0
        %6272 = vmatprep.mubr.f32.mxu0 0.0
        %6273 = vmatmul.mubr.f32.gmra.mrb[0].mxu0 %v6201
        %v6274 = vpop.f32.mrb[0].mxu0
        %v6275 = vadd.f32 %v6195, %v6274
        %v6276 = vpop.f32.mrb[0].mxu0
        %6277 = vdwg.mxu0
        %v6278 = vadd.f32 %v3619, %v6270
        %v6279 = vadd.f32 %v3620, %v6275
        %s6280 = scalar_lea.vmem %s13, 1
        %v6281 = vld [vmem:[%s6280] sm:$0x1]
        %s6282 = scalar_lea.vmem %s14, 1
        %v6283 = vld [vmem:[%s6282] sm:$0x1]
        %v6284 = vsel %vm665, %v6278, 0.0
        %6285 = vadd.xlane.f32.xlu0 %v6284
        %v6286 = vpop.xlane.xlu0 %6285
        %v6287 = vsel %vm665, %v6279, 0.0
        %6288 = vadd.xlane.f32.xlu0 %v6287
        %v6289 = vpop.xlane.xlu0 %6288
        %v6290 = vmul.f32 %v6286, %v672
        %v6291 = vmul.f32 %v6289, %v672
        %v6292 = vsub.f32 %v6278, %v6290
        %v6293 = vsub.f32 %v6279, %v6291
        %v6294 = vmul.f32 %v6292, %v6292
        %v6295 = vmul.f32 %v6293, %v6293
        %v6296 = vsel %vm665, %v6294, 0.0
        %6297 = vadd.xlane.f32.xlu0 %v6296
        %v6298 = vpop.xlane.xlu0 %6297
        %v6299 = vsel %vm665, %v6295, 0.0
        %6300 = vadd.xlane.f32.xlu0 %v6299
        %v6301 = vpop.xlane.xlu0 %6300
        %v6302 = vmul.f32 %v6298, %v672
        %v6303 = vmul.f32 %v6301, %v672
        %v6304 = vadd.f32 %v6302, 1e-05
        %v6305 = vadd.f32 %v6303, 1e-05
        %v6306 = vrsqrt.pop %v6304
        %v6307 = vrsqrt.pop %v6305
        %v6308 = vmul.f32 %v6292, %v6306
        %v6309 = vmul.f32 %v6293, %v6307
        %v6311 = vlaneseq
        %v6312 = vshrl.u32 %v6311, 7
        %v6313 = vsub.s32 0, %v6312
        %v6314 = vrot.slane %v6281, %v6313
        %v6316 = vmul.f32 %v6308, %v6314
        %v6317 = vmul.f32 %v6309, %v6314
        %v6319 = vlaneseq
        %v6320 = vshrl.u32 %v6319, 7
        %v6321 = vsub.s32 0, %v6320
        %v6322 = vrot.slane %v6283, %v6321
        %v6324 = vadd.f32 %v6316, %v6322
        %v6325 = vadd.f32 %v6317, %v6322
        %s6326 = scalar_lea.vmem %s15, 32
        %v6327 = vld [vmem:[%s6326] sm:$0xff]
        %v6328 = vld [vmem:[%s6326 + $0x8] sm:$0xff]
        %v6329 = vld [vmem:[%s6326 + $0x10] sm:$0xff]
        %v6330 = vld [vmem:[%s6326 + $0x18] sm:$0xff]
        %s6331 = scalar_lea.vmem %s16, 1
        %v6332 = vld [vmem:[%s6331] sm:$0x1]
        %v6334 = vlaneseq
        %v6335 = vshrl.u32 %v6334, 7
        %v6336 = vsub.s32 0, %v6335
        %v6337 = vrot.slane %v6332, %v6336
        %v6340 = vsel %vm665, %v6324, 0
        %v6343 = vsel %vm665, %v6325, 0
        %6345 = vmatprep.subr.mxu0 0.0
        %6346 = vmatpush1.msra.mxu0 %v6327
        %6347 = vmatprep.subr.mxu0 0.0
        %6348 = vmatpush1.msra.mxu0 %v6328
        %6349 = vmatprep.subr.mxu0 0.0
        %6350 = vmatpush1.msra.mxu0 %v6329
        %6351 = vmatprep.subr.mxu0 0.0
        %6352 = vmatpush1.msra.mxu0 %v6330
        %6353 = vmatprep.subr.mxu0 0.0
        %6354 = vmatpush1.msra.mxu0 0.0
        %6355 = vmatprep.subr.mxu0 0.0
        %6356 = vmatpush1.msra.mxu0 0.0
        %6357 = vmatprep.subr.mxu0 0.0
        %6358 = vmatpush1.msra.mxu0 0.0
        %6359 = vmatprep.subr.mxu0 0.0
        %6360 = vmatpush1.msra.mxu0 0.0
        %6361 = vmatprep.subr.mxu0 0.0
        %6362 = vmatpush1.msra.mxu0 0.0
        %6363 = vmatprep.subr.mxu0 0.0
        %6364 = vmatpush1.msra.mxu0 0.0
        %6365 = vmatprep.subr.mxu0 0.0
        %6366 = vmatpush1.msra.mxu0 0.0
        %6367 = vmatprep.subr.mxu0 0.0
        %6368 = vmatpush1.msra.mxu0 0.0
        %6369 = vmatprep.subr.mxu0 0.0
        %6370 = vmatpush1.msra.mxu0 0.0
        %6371 = vmatprep.subr.mxu0 0.0
        %6372 = vmatpush1.msra.mxu0 0.0
        %6373 = vmatprep.subr.mxu0 0.0
        %6374 = vmatpush1.msra.mxu0 0.0
        %6375 = vmatprep.subr.mxu0 0.0
        %6376 = vmatpush1.msra.mxu0 0.0
        %6377 = vmatprep.subr.mxu0 0.0
        %6378 = vmatpush1.msra.mxu0 0.0
        %6379 = vmatprep.subr.mxu0 0.0
        %6380 = vmatpush1.msra.mxu0 0.0
        %6381 = vmatprep.subr.mxu0 0.0
        %6382 = vmatpush1.msra.mxu0 0.0
        %6383 = vmatprep.subr.mxu0 0.0
        %6384 = vmatpush1.msra.mxu0 0.0
        %6385 = vmatprep.subr.mxu0 0.0
        %6386 = vmatpush1.msra.mxu0 0.0
        %6387 = vmatprep.subr.mxu0 0.0
        %6388 = vmatpush1.msra.mxu0 0.0
        %6389 = vmatprep.subr.mxu0 0.0
        %6390 = vmatpush1.msra.mxu0 0.0
        %6391 = vmatprep.subr.mxu0 0.0
        %6392 = vmatpush1.msra.mxu0 0.0
        %6393 = vmatprep.subr.mxu0 0.0
        %6394 = vmatpush1.msra.mxu0 0.0
        %6395 = vmatprep.subr.mxu0 0.0
        %6396 = vmatpush1.msra.mxu0 0.0
        %6397 = vmatprep.subr.mxu0 0.0
        %6398 = vmatpush1.msra.mxu0 0.0
        %6399 = vmatprep.subr.mxu0 0.0
        %6400 = vmatpush1.msra.mxu0 0.0
        %6401 = vmatprep.subr.mxu0 0.0
        %6402 = vmatpush1.msra.mxu0 0.0
        %6403 = vmatprep.subr.mxu0 0.0
        %6404 = vmatpush1.msra.mxu0 0.0
        %6405 = vmatprep.subr.mxu0 0.0
        %6406 = vmatpush1.msra.mxu0 0.0
        %6407 = vmatprep.subr.mxu0 0.0
        %6408 = vmatpush1.msra.mxu0 0.0
        %6409 = vmatprep.mubr.f32.mxu0 0.0
        %6410 = vmatmul.mubr.f32.gmra.mrb[0].mxu0 %v6340
        %v6411 = vpop.f32.mrb[0].mxu0
        %v6412 = vadd.f32 %v6337, %v6411
        %v6413 = vpop.f32.mrb[0].mxu0
        %6414 = vmatprep.mubr.f32.mxu0 0.0
        %6415 = vmatmul.mubr.f32.gmra.mrb[0].mxu0 %v6343
        %v6416 = vpop.f32.mrb[0].mxu0
        %v6417 = vadd.f32 %v6337, %v6416
        %v6418 = vpop.f32.mrb[0].mxu0
        %6419 = vdwg.mxu0
        %v6420 = vmul.f32 %v6412, 0.5
        %v6421 = vmul.f32 %v6417, 0.5
        %v6422 = vmul.f32 %v6412, 0.70710677
        %v6423 = vmul.f32 %v6417, 0.70710677
        %v6424 = vand.u32 2147483647, %v6422
        %v6425 = vand.u32 2147483647, %v6423
        %v6426 = vmul.f32 %v6424, 0.3275911
        %v6427 = vmul.f32 %v6425, 0.3275911
        %v6428 = vadd.f32 %v6426, 1.0
        %v6429 = vadd.f32 %v6427, 1.0
        %v6430 = vrcp.pop %v6428
        %v6431 = vmul.f32 1.0, %v6430
        %v6432 = vrcp.pop %v6429
        %v6433 = vmul.f32 1.0, %v6432
        %v6434 = vmul.f32 %v6431, 1.0614054
        %v6435 = vmul.f32 %v6433, 1.0614054
        %v6436 = vadd.f32 %v6434, -1.4531521
        %v6437 = vadd.f32 %v6435, -1.4531521
        %v6438 = vmul.f32 %v6436, %v6431
        %v6439 = vmul.f32 %v6437, %v6433
        %v6440 = vadd.f32 %v6438, 1.4214138
        %v6441 = vadd.f32 %v6439, 1.4214138
        %v6442 = vmul.f32 %v6440, %v6431
        %v6443 = vmul.f32 %v6441, %v6433
        %v6444 = vadd.f32 %v6442, -0.28449672
        %v6445 = vadd.f32 %v6443, -0.28449672
        %v6446 = vmul.f32 %v6444, %v6431
        %v6447 = vmul.f32 %v6445, %v6433
        %v6448 = vadd.f32 %v6446, 0.2548296
        %v6449 = vadd.f32 %v6447, 0.2548296
        %v6450 = vmul.f32 %v6448, %v6431
        %v6451 = vmul.f32 %v6449, %v6433
        %v6452 = vsub.f32 0.0, %v6424
        %v6453 = vsub.f32 0.0, %v6425
        %v6454 = vmul.f32 %v6452, %v6424
        %v6455 = vmul.f32 %v6453, %v6425
        %v6456 = vmul.f32 %v6454, 1.442695
        %v6457 = vpow.pop %v6456
        %v6458 = vmul.f32 %v6455, 1.442695
        %v6459 = vpow.pop %v6458
        %v6460 = vmul.f32 %v6450, %v6457
        %v6461 = vmul.f32 %v6451, %v6459
        %v6462 = vsub.f32 1.0, %v6460
        %v6463 = vsub.f32 1.0, %v6461
        %vm6464 = vcmp.ge.f32.partialorder %v6422, 0.0
        %vm6465 = vcmp.ge.f32.partialorder %v6423, 0.0
        %v6466 = vsub.f32 0.0, %v6462
        %v6467 = vsub.f32 0.0, %v6463
        %v6468 = vsel %vm6464, %v6462, %v6466
        %v6469 = vsel %vm6465, %v6463, %v6467
        %v6470 = vadd.f32 %v6468, 1.0
        %v6471 = vadd.f32 %v6469, 1.0
        %v6472 = vmul.f32 %v6420, %v6470
        %v6473 = vmul.f32 %v6421, %v6471
        %s6474 = scalar_lea.vmem %s17, 64
        %v6475 = vld [vmem:[%s6474] sm:$0xff]
        %v6476 = vld [vmem:[%s6474 + $0x8] sm:$0xff]
        %v6477 = vld [vmem:[%s6474 + $0x10] sm:$0xff]
        %v6478 = vld [vmem:[%s6474 + $0x18] sm:$0xff]
        %v6479 = vld [vmem:[%s6474 + $0x20] sm:$0xff]
        %v6480 = vld [vmem:[%s6474 + $0x28] sm:$0xff]
        %v6481 = vld [vmem:[%s6474 + $0x30] sm:$0xff]
        %v6482 = vld [vmem:[%s6474 + $0x38] sm:$0xff]
        %s6483 = scalar_lea.vmem %s18, 1
        %v6484 = vld [vmem:[%s6483] sm:$0x1]
        %v6486 = vlaneseq
        %v6487 = vshrl.u32 %v6486, 7
        %v6488 = vsub.s32 0, %v6487
        %v6489 = vrot.slane %v6484, %v6488
        %v6492 = vsel %vm3537, %v6472, 0
        %v6495 = vsel %vm3537, %v6473, 0
        %6497 = vmatprep.subr.mxu0 0.0
        %6498 = vmatpush1.msra.mxu0 %v6475
        %6499 = vmatprep.subr.mxu0 0.0
        %6500 = vmatpush1.msra.mxu0 %v6476
        %6501 = vmatprep.subr.mxu0 0.0
        %6502 = vmatpush1.msra.mxu0 %v6477
        %6503 = vmatprep.subr.mxu0 0.0
        %6504 = vmatpush1.msra.mxu0 %v6478
        %6505 = vmatprep.subr.mxu0 0.0
        %6506 = vmatpush1.msra.mxu0 %v6479
        %6507 = vmatprep.subr.mxu0 0.0
        %6508 = vmatpush1.msra.mxu0 %v6480
        %6509 = vmatprep.subr.mxu0 0.0
        %6510 = vmatpush1.msra.mxu0 %v6481
        %6511 = vmatprep.subr.mxu0 0.0
        %6512 = vmatpush1.msra.mxu0 %v6482
        %6513 = vmatprep.subr.mxu0 0.0
        %6514 = vmatpush1.msra.mxu0 0.0
        %6515 = vmatprep.subr.mxu0 0.0
        %6516 = vmatpush1.msra.mxu0 0.0
        %6517 = vmatprep.subr.mxu0 0.0
        %6518 = vmatpush1.msra.mxu0 0.0
        %6519 = vmatprep.subr.mxu0 0.0
        %6520 = vmatpush1.msra.mxu0 0.0
        %6521 = vmatprep.subr.mxu0 0.0
        %6522 = vmatpush1.msra.mxu0 0.0
        %6523 = vmatprep.subr.mxu0 0.0
        %6524 = vmatpush1.msra.mxu0 0.0
        %6525 = vmatprep.subr.mxu0 0.0
        %6526 = vmatpush1.msra.mxu0 0.0
        %6527 = vmatprep.subr.mxu0 0.0
        %6528 = vmatpush1.msra.mxu0 0.0
        %6529 = vmatprep.subr.mxu0 0.0
        %6530 = vmatpush1.msra.mxu0 0.0
        %6531 = vmatprep.subr.mxu0 0.0
        %6532 = vmatpush1.msra.mxu0 0.0
        %6533 = vmatprep.subr.mxu0 0.0
        %6534 = vmatpush1.msra.mxu0 0.0
        %6535 = vmatprep.subr.mxu0 0.0
        %6536 = vmatpush1.msra.mxu0 0.0
        %6537 = vmatprep.subr.mxu0 0.0
        %6538 = vmatpush1.msra.mxu0 0.0
        %6539 = vmatprep.subr.mxu0 0.0
        %6540 = vmatpush1.msra.mxu0 0.0
        %6541 = vmatprep.subr.mxu0 0.0
        %6542 = vmatpush1.msra.mxu0 0.0
        %6543 = vmatprep.subr.mxu0 0.0
        %6544 = vmatpush1.msra.mxu0 0.0
        %6545 = vmatprep.subr.mxu0 0.0
        %6546 = vmatpush1.msra.mxu0 0.0
        %6547 = vmatprep.subr.mxu0 0.0
        %6548 = vmatpush1.msra.mxu0 0.0
        %6549 = vmatprep.subr.mxu0 0.0
        %6550 = vmatpush1.msra.mxu0 0.0
        %6551 = vmatprep.subr.mxu0 0.0
        %6552 = vmatpush1.msra.mxu0 0.0
        %6553 = vmatprep.subr.mxu0 0.0
        %6554 = vmatpush1.msra.mxu0 0.0
        %6555 = vmatprep.subr.mxu0 0.0
        %6556 = vmatpush1.msra.mxu0 0.0
        %6557 = vmatprep.subr.mxu0 0.0
        %6558 = vmatpush1.msra.mxu0 0.0
        %6559 = vmatprep.subr.mxu0 0.0
        %6560 = vmatpush1.msra.mxu0 0.0
        %6561 = vmatprep.mubr.f32.mxu0 0.0
        %6562 = vmatmul.mubr.f32.gmra.mrb[0].mxu0 %v6492
        %v6563 = vpop.f32.mrb[0].mxu0
        %v6564 = vadd.f32 %v6489, %v6563
        %v6565 = vpop.f32.mrb[0].mxu0
        %6566 = vmatprep.mubr.f32.mxu0 0.0
        %6567 = vmatmul.mubr.f32.gmra.mrb[0].mxu0 %v6495
        %v6568 = vpop.f32.mrb[0].mxu0
        %v6569 = vadd.f32 %v6489, %v6568
        %v6570 = vpop.f32.mrb[0].mxu0
        %6571 = vdwg.mxu0
        %v6572 = vadd.f32 %v6278, %v6564
        %v6573 = vadd.f32 %v6279, %v6569
        %v6574 = vld [vmem:[%s19] sm:$0x1]
        %v6575 = vld [vmem:[%s20] sm:$0x1]
        %v6576 = vsel %vm665, %v6572, 0.0
        %6577 = vadd.xlane.f32.xlu0 %v6576
        %v6578 = vpop.xlane.xlu0 %6577
        %v6579 = vsel %vm665, %v6573, 0.0
        %6580 = vadd.xlane.f32.xlu0 %v6579
        %v6581 = vpop.xlane.xlu0 %6580
        %v6582 = vmul.f32 %v6578, %v672
        %v6583 = vmul.f32 %v6581, %v672
        %v6584 = vsub.f32 %v6572, %v6582
        %v6585 = vsub.f32 %v6573, %v6583
        %v6586 = vmul.f32 %v6584, %v6584
        %v6587 = vmul.f32 %v6585, %v6585
        %v6588 = vsel %vm665, %v6586, 0.0
        %6589 = vadd.xlane.f32.xlu0 %v6588
        %v6590 = vpop.xlane.xlu0 %6589
        %v6591 = vsel %vm665, %v6587, 0.0
        %6592 = vadd.xlane.f32.xlu0 %v6591
        %v6593 = vpop.xlane.xlu0 %6592
        %v6594 = vmul.f32 %v6590, %v672
        %v6595 = vmul.f32 %v6593, %v672
        %v6596 = vadd.f32 %v6594, 1e-05
        %v6597 = vadd.f32 %v6595, 1e-05
        %v6598 = vrsqrt.pop %v6596
        %v6599 = vrsqrt.pop %v6597
        %v6600 = vmul.f32 %v6584, %v6598
        %v6601 = vmul.f32 %v6585, %v6599
        %v6603 = vlaneseq
        %v6604 = vshrl.u32 %v6603, 7
        %v6605 = vsub.s32 0, %v6604
        %v6606 = vrot.slane %v6574, %v6605
        %v6608 = vmul.f32 %v6600, %v6606
        %v6609 = vmul.f32 %v6601, %v6606
        %v6611 = vlaneseq
        %v6612 = vshrl.u32 %v6611, 7
        %v6613 = vsub.s32 0, %v6612
        %v6614 = vrot.slane %v6575, %v6613
        %v6616 = vadd.f32 %v6608, %v6614
        %v6617 = vadd.f32 %v6609, %v6614
        %6618 = vst.msk [vmem:[%s649] sm:$0xff] %vm665, %v6616
        %6619 = vst.msk [vmem:[%s649 + $0x8] sm:$0xff] %vm665, %v6617
        %s6620 = sand.u32 %s489, 1
        %s6621 = scalar_lea.sflag [#allocation4], %s6620
        %s6622 = sand.u32 %s489, 1
        %s6623 = smul.addr %s6622, 16
        %s6624 = scalar_lea.vmem [#allocation3], %s6623
        // Predicated region
        $region105: #{bsbr_model.1} parent=103 // pred_check
          %p6625 = pneg %p499
        $region106: #{bsbr_model.1} parent=103 // pred_check_branch
          %6627 = sbr.rel (%p6625) target = $region108
        $region107: #{bsbr_model.1} parent=103 // pred_region
          %s6629 = ssub.s32 256, 256
          %6630 = vsyncadd %s6621, %s6629
          %s6631 = smul.addr %s35, 2
          %s6632 = smul.addr %s6631, 128
          %s6633 = scalar_lea.hbm %s21, %s6632
          %s6634 = sshll.u32 %s6624, 4
          %s6635 = int_to_ptr.vmem [resolvable:$true] %s6634
          %6640 = dma.vmem_to_hbm [thread:$0]  %s6635, 256, %s6633, %s6621, 128, 128, 8
        $region108: #{bsbr_model.1} parent=103 // pred_fallthru
          _
      $region104: #{bsbr_model.1} parent=5 // pred_fallthru
        _
      %p6641 = scmp.le.s32.totalorder 2, %s30
      // Predicated region
      $region109: #{bsbr_model.1} parent=5 // pred_check
        %p6642 = pneg %p6641
      $region110: #{bsbr_model.1} parent=5 // pred_check_branch
        %6644 = sbr.rel (%p6642) target = $region112
      $region111: #{bsbr_model.1} parent=5 // pred_region
        %s6645 = ssub.s32 %s30, 2
        // Predicated region
        $region113: #{bsbr_model.1} parent=111 // pred_check
          %p6646 = pneg %p505
        $region114: #{bsbr_model.1} parent=111 // pred_check_branch
          %6648 = sbr.rel (%p6646) target = $region116
        $region115: #{bsbr_model.1} parent=111 // pred_region
          %s6649 = sand.u32 %s490, 1
          %s6650 = scalar_lea.sflag [#allocation4], %s6649
          %s6651 = sand.u32 %s490, 1
          %s6652 = smul.addr %s6651, 16
          %s6653 = scalar_lea.vmem [#allocation3], %s6652
          %6654 = dma.done %s6650, 256
        $region116: #{bsbr_model.1} parent=111 // pred_fallthru
          _
      $region112: #{bsbr_model.1} parent=5 // pred_fallthru
        _
    $region6: #{bsbr_model.1} parent=1 // loop_footer
      %s34 = sadd.s32 1, %s30
    $region7: #{bsbr_model.1} parent=1 // loop_footer_branch
      %29 = sbr.rel target = $region3
    $region8: #{bsbr_model.1} parent=1 // loop_exit
      _
    %6655 = vsyncpa [#allocation4], 1
    %s6656 = scalar_lea.sflag [#allocation4], 1
    %6657 = vsyncpa %s6656, 1

</llo_original>
